<compile_context>
chip_gen: v5e
topology: v5e:2x2
jax: 0.10.0
libtpu: 0.0.40
codegen_flags: <defaults>
</compile_context>

<pallas_src>
import math

import jax
import jax.numpy as jnp
from jax import lax
from jax.experimental import pallas as pl
from jax.experimental.pallas import tpu as pltpu

EPS = 1e-5  # torch nn.LayerNorm default eps

_MAT_NAMES = ("ffn1_w1", "ffn1_w2", "wq_t", "wkv_t", "wpos_t", "wo_t",
              "cv_wbn", "cv_wd", "cv_wl", "ffn2_w1", "ffn2_w2")
_VECD_NAMES = ("ffn1_ln_g", "ffn1_ln_b", "ffn1_b2",
               "norm1_g", "norm1_b", "pos_bias_u", "pos_bias_v", "bo",
               "cv_ln1_g", "cv_ln1_b", "cv_bd", "cv_ln2_g", "cv_ln2_b", "cv_bl",
               "ffn2_ln_g", "ffn2_ln_b", "ffn2_b2", "norm2_g", "norm2_b")
_VECF_NAMES = ("ffn1_b1", "ffn2_b1")
_VD = {n: i for i, n in enumerate(_VECD_NAMES)}
_VF = {n: i for i, n in enumerate(_VECF_NAMES)}


# ----------------------------- fused Pallas layer -----------------------------

def conformer_decoder_layer(tgt, memory, pos_embs, params, nhead, ksize,
                            *, batch_block=None, mxu_dtype=None):
    """Fused forward pass. Returns (out, attn, attn) like the torch module."""
    B, Tq, D = map(int, tgt.shape)
    Tm = int(memory.shape[1])
    P = int(pos_embs.shape[-2])
    H, K = int(nhead), int(ksize)
    assert D % H == 0, "d_model must be divisible by nhead"
    dh = D // H
    assert P == 2 * Tm - 1, "RelPosMHAXL expects pos_embs with 2*Tm-1 positions"
    assert Tm >= Tq, "rel_shift slice assumes len(memory) >= len(tgt)"
    scale = 1.0 / math.sqrt(D)           # speechbrain RelPosMHAXL: 1/sqrt(embed_dim)
    nbits = (Tq - 1).bit_length()
    P_pad = max(128, ((P + 127) // 128) * 128)   # lane-dense pos scores / roll width

    # batch block: divisor of B; default keeps >= 2 parallel grid steps (megacore)
    if batch_block is None:
        batch_block = max(1, B // 2)
    Bblk = max(1, min(int(batch_block), B))
    while B % Bblk:
        Bblk -= 1
    n_blocks = B // Bblk
    M = Bblk * Tq

    f32 = jnp.float32
    pos2d = jnp.zeros((P_pad, D), f32).at[:P].set(pos_embs.reshape(P, D).astype(f32))
    vecD = jnp.concatenate(
        [jnp.reshape(params[n], (1, D)).astype(f32) for n in _VECD_NAMES], axis=0)
    vecF = jnp.concatenate(
        [jnp.reshape(params[n], (1, -1)).astype(f32) for n in _VECF_NAMES], axis=0)
    bbn = jnp.reshape(params["cv_bbn"], (1, 2 * D)).astype(f32)
    mats = []
    for n in _MAT_NAMES:
        w = params[n].astype(f32)
        if mxu_dtype is not None and n != "cv_wd":   # cv_wd is VPU-only (elementwise)
            w = w.astype(mxu_dtype)
        mats.append(w)

    nm = len(_MAT_NAMES)

    def kernel(tgt_ref, mem_ref, pos_ref, *rest):
        wm = {name: rest[i] for i, name in enumerate(_MAT_NAMES)}
        vd_ref, vf_ref, bbn_ref = rest[nm], rest[nm + 1], rest[nm + 2]
        o_ref, attn_ref = rest[nm + 3], rest[nm + 4]
        kv_sc, ctx_sc, conv_sc = rest[nm + 5], rest[nm + 6], rest[nm + 7]

        def vd(name):                            # (1, D) packed gain / bias row
            i = _VD[name]
            return vd_ref[i:i + 1, :]

        def vf(name):                            # (1, F)
            i = _VF[name]
            return vf_ref[i:i + 1, :]

        def cast(x):                             # bf16-at-MXU operands (f32 accumulate)
            return x if mxu_dtype is None else x.astype(mxu_dtype)

        def mm(a, w_ref, bias=None):
            w = w_ref[...]
            out = jnp.dot(a.astype(w.dtype), w, preferred_element_type=jnp.float32)
            return out if bias is None else out + bias

        def ln(x, g, b):
            mu = jnp.mean(x, axis=-1, keepdims=True)
            var = jnp.mean(jnp.square(x - mu), axis=-1, keepdims=True)
            return (x - mu) * lax.rsqrt(var + EPS) * g + b

        def swish(x):
            return x * jax.nn.sigmoid(x)

        def ffn_half(x, pfx):
            # x + 0.5 * Linear2(Swish(Linear1(LayerNorm(x))))  (dropout=0 -> identity)
            h = ln(x, vd(pfx + "ln_g"), vd(pfx + "ln_b"))
            h = swish(mm(h, wm[pfx + "w1"], vf(pfx + "b1")))
            return x + 0.5 * mm(h, wm[pfx + "w2"], vd(pfx + "b2"))

        # dense path folds the batch block into the MXU M dimension
        xf = tgt_ref[...].reshape(M, D)

        # ---------------- ffn_module1 (half-step residual) ----------------
        t = ffn_half(xf, "ffn1_")
        skip = t

        # ---------------- RelPosMHAXL cross-attention ----------------
        xn = ln(t, vd("norm1_g"), vd("norm1_b"))
        q = mm(xn, wm["wq_t"])                           # (M, D), heads lane-packed
        p = mm(pos_ref[...], wm["wpos_t"])               # (P_pad, D), zero rows >= P
        for bb in range(Bblk):                           # merged Wk|Wv per sequence
            kv_sc[bb] = mm(mem_ref[bb], wm["wkv_t"])     # (Tm, 2D)

        q3 = q.reshape(Bblk, Tq, D)
        qu3 = q3 + vd("pos_bias_u")                      # per-head bias (head-blocked)
        qv = q + vd("pos_bias_v")                        # stays flat for the pos matmul

        # rel_shift bookkeeping: shifted(i, j) = raw(i, Tq-1+j-i), future masked.
        row = lax.broadcasted_iota(jnp.int32, (Tq, Tm), 0)
        col = lax.broadcasted_iota(jnp.int32, (Tq, Tm), 1)
        keep = (col - row) <= (Tm - Tq)
        ridx = lax.broadcasted_iota(jnp.int32, (M, 1), 0)
        lshift = (Tq - 1) - (ridx % Tq)                  # per flat row left-roll amount

        # Static loop over heads; per-iteration results go straight to VMEM refs so
        # live ranges stay bounded.  TODO(synk): fori_loop once dynamic lane slicing
        # of the packed head dim is worthwhile (large H).
        for h in range(H):
            sl = slice(h * dh, (h + 1) * dh)
            k_h = kv_sc[:, :, sl]                                        # (Bblk,Tm,dh)
            v_h = kv_sc[:, :, D + h * dh:D + (h + 1) * dh]
            ac = jnp.einsum("bqd,bkd->bqk", cast(qu3[:, :, sl]), cast(k_h),
                            preferred_element_type=jnp.float32)          # (Bblk,Tq,Tm)
            bd = lax.dot_general(cast(qv[:, sl]), cast(p[:, sl]),
                                 (((1,), (1,)), ((), ())),
                                 preferred_element_type=jnp.float32)     # (M, P_pad)
            # per-row left roll by (Tq-1-i): log2(Tq)-step barrel shifter on the XLU
            for bit in range(nbits):
                amt = 1 << bit
                rolled = pltpu.roll(bd, P_pad - amt, 1)   # == left roll by amt
                bd = jnp.where((lshift & amt) > 0, rolled, bd)
            bd = jnp.where(keep, bd.reshape(Bblk, Tq, P_pad)[:, :, :Tm], 0.0)
            # TODO(synk): a single per-row strided roll (stride/stride_axis) would
            # replace the log2(Tq) select steps.

            s = (ac + bd) * scale
            mx = jnp.max(s, axis=-1, keepdims=True)
            e = jnp.exp(s - mx)
            den = jnp.sum(e, axis=-1, keepdims=True)
            r = pl.reciprocal(den, approx=True)           # EUP slot
            r = r * (2.0 - den * r)                       # one Newton step -> ~exact
            probs = e * r
            attn_ref[:, h] = probs
            ctx_sc[:, :, sl] = jnp.einsum("bqk,bkd->bqd", cast(probs), cast(v_h),
                                          preferred_element_type=jnp.float32)

        ctx = ctx_sc[...].reshape(M, D)
        x = mm(ctx, wm["wo_t"], vd("bo")) + skip

        # ---------------- ConvolutionModule (causal depthwise, dilation=1) -------
        hcv = ln(x, vd("cv_ln1_g"), vd("cv_ln1_b"))
        bg = mm(hcv, wm["cv_wbn"], bbn_ref[...])          # (M, 2D) bottleneck
        y = bg[:, :D] * jax.nn.sigmoid(bg[:, D:])         # GLU over channels
        if K > 1:                                         # left-padded staging scratch
            conv_sc[:, :K - 1, :] = jnp.zeros((Bblk, K - 1, D), jnp.float32)
        conv_sc[:, K - 1:, :] = y.reshape(Bblk, Tq, D)
        acc = jnp.zeros((Bblk, Tq, D), jnp.float32)
        for kk in range(K):                               # causal depthwise conv taps
            acc = acc + conv_sc[:, kk:kk + Tq, :] * wm["cv_wd"][kk:kk + 1, :]
        acc = acc + vd("cv_bd")
        z = swish(ln(acc, vd("cv_ln2_g"), vd("cv_ln2_b")))
        x = x + mm(z.reshape(M, D), wm["cv_wl"], vd("cv_bl"))

        # ---------------- ffn_module2 (half-step) + final norm ----------------
        x = ffn_half(x, "ffn2_")
        o_ref[...] = ln(x, vd("norm2_g"), vd("norm2_b")).reshape(
            Bblk, Tq, D).astype(o_ref.dtype)

    def _call(single_buffer_weights):
        def const_spec(arr):
            ndim = arr.ndim
            idx = lambda b, _nd=ndim: (0,) * _nd
            if single_buffer_weights:
                return pl.BlockSpec(arr.shape, idx, pipeline_mode=pl.Buffered(1))
            return pl.BlockSpec(arr.shape, idx)

        in_specs = ([pl.BlockSpec((Bblk, Tq, D), lambda b: (b, 0, 0)),
                     pl.BlockSpec((Bblk, Tm, D), lambda b: (b, 0, 0)),
                     const_spec(pos2d)]
                    + [const_spec(w) for w in mats]
                    + [const_spec(vecD), const_spec(vecF), const_spec(bbn)])
        out_specs = (pl.BlockSpec((Bblk, Tq, D), lambda b: (b, 0, 0)),
                     pl.BlockSpec((Bblk, H, Tq, Tm), lambda b: (b, 0, 0, 0)))
        out_shape = (jax.ShapeDtypeStruct((B, Tq, D), jnp.float32),
                     jax.ShapeDtypeStruct((B, H, Tq, Tm), jnp.float32))
        scratch_shapes = [
            pltpu.VMEM((Bblk, Tm, 2 * D), jnp.float32),        # packed K|V
            pltpu.VMEM((Bblk, Tq, D), jnp.float32),            # ctx, heads packed
            pltpu.VMEM((Bblk, Tq + K - 1, D), jnp.float32),    # causal-conv staging
        ]
        return pl.pallas_call(
            kernel,
            out_shape=out_shape,
            grid=(n_blocks,),
            in_specs=in_specs,
            out_specs=out_specs,
            scratch_shapes=scratch_shapes,
            compiler_params=pltpu.CompilerParams(
                dimension_semantics=("parallel",),
                vmem_limit_bytes=32 * 1024 * 1024),
        )(tgt.astype(f32), memory.astype(f32), pos2d, *mats, vecD, vecF, bbn)

    try:
        out, attn = _call(True)
    except Exception:
        # pipeline_mode / pl.Buffered(1) not available in this jax version:
        # fall back to default double-buffering of the constant blocks.
        out, attn = _call(False)
    return out, attn, attn


# --------------------------- plain-JAX reference ---------------------------

def _rel_shift_reference(x, mask_pos_future):
    # Mirror of RelPosMHAXL.rel_shift (zero-pad / reshape trick + tril mask).
    b, h, qlen, pos_len = x.shape
    zero_pad = jnp.zeros((b, h, qlen, 1), x.dtype)
    xp = jnp.concatenate([zero_pad, x], axis=-1)
    xp = xp.reshape(b, h, pos_len + 1, qlen)
    x = xp[:, :, 1:].reshape(b, h, qlen, pos_len)[..., : pos_len // 2 + 1]
    if mask_pos_future:
        ones = jnp.ones((x.shape[2], x.shape[3]), x.dtype)
        tri = jnp.tril(ones, x.shape[3] - x.shape[2])
        x = tri[None, None] * x
    return x


def reference_layer(tgt, memory, pos_embs, prm, nhead, ksize):
    B, Tq, D = tgt.shape
    Tm = memory.shape[1]
    H, K = nhead, ksize
    dh = D // H
    scale = 1.0 / math.sqrt(D)
    pos = pos_embs.reshape(-1, D)

    def ln(x, g, b):
        mu = jnp.mean(x, axis=-1, keepdims=True)
        var = jnp.mean((x - mu) ** 2, axis=-1, keepdims=True)
        return (x - mu) / jnp.sqrt(var + EPS) * g + b

    def swish(x):
        return x * jax.nn.sigmoid(x)

    def ffn_half(x, pfx):
        h = ln(x, prm[pfx + "ln_g"], prm[pfx + "ln_b"])
        h = swish(h @ prm[pfx + "w1"] + prm[pfx + "b1"])
        return x + 0.5 * (h @ prm[pfx + "w2"] + prm[pfx + "b2"])

    t = ffn_half(tgt, "ffn1_")
    skip = t
    xn = ln(t, prm["norm1_g"], prm["norm1_b"])

    q = xn @ prm["wq_t"]
    kv = memory @ prm["wkv_t"]
    k, v = kv[..., :D], kv[..., D:]
    p = pos @ prm["wpos_t"]

    qh = q.reshape(B, Tq, H, dh).transpose(0, 2, 1, 3)
    kh = k.reshape(B, Tm, H, dh).transpose(0, 2, 1, 3)
    vh = v.reshape(B, Tm, H, dh).transpose(0, 2, 1, 3)
    ph = p.reshape(-1, H, dh).transpose(1, 0, 2)
    u = prm["pos_bias_u"].reshape(H, dh)[None, :, None, :]
    vb = prm["pos_bias_v"].reshape(H, dh)[None, :, None, :]

    ac = jnp.einsum("bhqd,bhkd->bhqk", qh + u, kh)
    bd = _rel_shift_reference(jnp.einsum("bhqd,hpd->bhqp", qh + vb, ph), True)
    probs = jax.nn.softmax((ac + bd) * scale, axis=-1)
    ctx = jnp.einsum("bhqk,bhkd->bhqd", probs, vh)
    ctx = ctx.transpose(0, 2, 1, 3).reshape(B, Tq, D)
    x = ctx @ prm["wo_t"] + prm["bo"] + skip

    h = ln(x, prm["cv_ln1_g"], prm["cv_ln1_b"])
    bg = h @ prm["cv_wbn"] + prm["cv_bbn"]
    y = bg[..., :D] * jax.nn.sigmoid(bg[..., D:])
    yp = jnp.pad(y, ((0, 0), (K - 1, 0), (0, 0)))
    conv = sum(yp[:, kk:kk + Tq, :] * prm["cv_wd"][kk] for kk in range(K)) + prm["cv_bd"]
    z = swish(ln(conv, prm["cv_ln2_g"], prm["cv_ln2_b"]))
    x = x + (z @ prm["cv_wl"] + prm["cv_bl"])

    x = ffn_half(x, "ffn2_")
    out = ln(x, prm["norm2_g"], prm["norm2_b"])
    return out, probs


# --------------------------- deterministic params ---------------------------

def init_params(key, d_model, d_ffn, nhead, ksize):
    del nhead  # pos biases stored flattened / head-blocked as (1, d_model)
    keys = iter(jax.random.split(key, 32))
    D, F, K = d_model, d_ffn, ksize

    def w(shape, s=0.05):
        return jax.random.normal(next(keys), shape, jnp.float32) * s

    ones = lambda n: jnp.ones((1, n), jnp.float32)
    zeros = lambda n: jnp.zeros((1, n), jnp.float32)

    return {
        "ffn1_ln_g": ones(D), "ffn1_ln_b": zeros(D),
        "ffn1_w1": w((D, F)), "ffn1_b1": w((1, F)),
        "ffn1_w2": w((F, D)), "ffn1_b2": w((1, D)),
        "norm1_g": ones(D), "norm1_b": zeros(D),
        "wq_t": w((D, D)), "wkv_t": w((D, 2 * D)), "wpos_t": w((D, D)),
        "pos_bias_u": w((1, D)), "pos_bias_v": w((1, D)),
        "wo_t": w((D, D)), "bo": w((1, D)),
        "cv_ln1_g": ones(D), "cv_ln1_b": zeros(D),
        "cv_wbn": w((D, 2 * D)), "cv_bbn": w((1, 2 * D)),
        "cv_wd": w((K, D)), "cv_bd": w((1, D)),
        "cv_ln2_g": ones(D), "cv_ln2_b": zeros(D),
        "cv_wl": w((D, D)), "cv_bl": w((1, D)),
        "ffn2_ln_g": ones(D), "ffn2_ln_b": zeros(D),
        "ffn2_w1": w((D, F)), "ffn2_b1": w((1, F)),
        "ffn2_w2": w((F, D)), "ffn2_b2": w((1, D)),
        "norm2_g": ones(D), "norm2_b": zeros(D),
    }


if __name__ == "__main__":
    B, Tq, Tm = 4, 8, 12
    D, F, H, K = 64, 128, 4, 3          # d_model, d_ffn, nhead, conv kernel_size

    key = jax.random.PRNGKey(0)
    k1, k2, k3, kp = jax.random.split(key, 4)
    tgt = jax.random.normal(k1, (B, Tq, D), jnp.float32)
    memory = jax.random.normal(k2, (B, Tm, D), jnp.float32)
    pos_embs_src = jax.random.normal(k3, (1, 2 * Tm - 1, D), jnp.float32)

    params = init_params(kp, D, F, H, K)

    # f32 kernel (exact path): 2 batch elements per grid step, 2 parallel steps.
    out, attn, _ = conformer_decoder_layer(tgt, memory, pos_embs_src, params, H, K)
    out = jax.block_until_ready(out)
    attn = jax.block_until_ready(attn)

    assert out.shape == (B, Tq, D)
    assert attn.shape == (B, H, Tq, Tm)
    assert bool(jnp.all(jnp.isfinite(out))) and bool(jnp.all(jnp.isfinite(attn)))

    # Sanity-check against a high-precision plain-JAX/XLA reference.
    with jax.default_matmul_precision("highest"):
        ref_out, ref_attn = reference_layer(tgt, memory, pos_embs_src, params, H, K)
    max_out = float(jnp.max(jnp.abs(out - ref_out)))
    max_attn = float(jnp.max(jnp.abs(attn - ref_attn)))
    assert max_out < 1e-3 and max_attn < 5e-4, (max_out, max_attn)

    # bf16-at-MXU fast path (v6e / v7x): operands cast at matmuls, f32 accumulate.
    out16, attn16, _ = conformer_decoder_layer(tgt, memory, pos_embs_src, params, H, K,
                                               mxu_dtype=jnp.bfloat16)
    out16 = jax.block_until_ready(out16)
    assert bool(jnp.all(jnp.isfinite(out16)))
    assert float(jnp.max(jnp.abs(out16 - ref_out))) < 1e-1
    assert float(jnp.max(jnp.abs(attn16 - ref_attn))) < 5e-2

    print("KERNEL_OK")
</pallas_src>

<mosaic_0001>
module attributes {stable_mosaic.version = 11 : i64} {
  func.func @kernel(%arg0: i32, %arg1: memref<2x8x64xf32, #tpu.memory_space<vmem>>, %arg2: memref<2x12x64xf32, #tpu.memory_space<vmem>>, %arg3: memref<128x64xf32, #tpu.memory_space<vmem>>, %arg4: memref<64x128xf32, #tpu.memory_space<vmem>>, %arg5: memref<128x64xf32, #tpu.memory_space<vmem>>, %arg6: memref<64x64xf32, #tpu.memory_space<vmem>>, %arg7: memref<64x128xf32, #tpu.memory_space<vmem>>, %arg8: memref<64x64xf32, #tpu.memory_space<vmem>>, %arg9: memref<64x64xf32, #tpu.memory_space<vmem>>, %arg10: memref<64x128xf32, #tpu.memory_space<vmem>>, %arg11: memref<3x64xf32, #tpu.memory_space<vmem>>, %arg12: memref<64x64xf32, #tpu.memory_space<vmem>>, %arg13: memref<64x128xf32, #tpu.memory_space<vmem>>, %arg14: memref<128x64xf32, #tpu.memory_space<vmem>>, %arg15: memref<19x64xf32, #tpu.memory_space<vmem>>, %arg16: memref<2x128xf32, #tpu.memory_space<vmem>>, %arg17: memref<1x128xf32, #tpu.memory_space<vmem>>, %arg18: memref<2x8x64xf32, #tpu.memory_space<vmem>>, %arg19: memref<2x4x8x12xf32, #tpu.memory_space<vmem>>, %arg20: memref<2x12x128xf32, #tpu.memory_space<vmem>>, %arg21: memref<2x8x64xf32, #tpu.memory_space<vmem>>, %arg22: memref<2x10x64xf32, #tpu.memory_space<vmem>>) attributes {dimension_semantics = [#tpu.dimension_semantics<parallel>], iteration_bounds = array<i64: 2>, scalar_prefetch = 0 : i64, scratch_operands = 3 : i64, tpu.core_type = #tpu.core_type<tc>, window_params = [{transform_indices = @transform_0, window_bounds = array<i64: 2, 8, 64>}, {transform_indices = @transform_1, window_bounds = array<i64: 2, 12, 64>}, {pipeline_mode = #tpu.pipeline_mode<synchronous>, transform_indices = @transform_2, window_bounds = array<i64: 128, 64>}, {pipeline_mode = #tpu.pipeline_mode<synchronous>, transform_indices = @transform_3, window_bounds = array<i64: 64, 128>}, {pipeline_mode = #tpu.pipeline_mode<synchronous>, transform_indices = @transform_4, window_bounds = array<i64: 128, 64>}, {pipeline_mode = #tpu.pipeline_mode<synchronous>, transform_indices = @transform_5, window_bounds = array<i64: 64, 64>}, {pipeline_mode = #tpu.pipeline_mode<synchronous>, transform_indices = @transform_6, window_bounds = array<i64: 64, 128>}, {pipeline_mode = #tpu.pipeline_mode<synchronous>, transform_indices = @transform_7, window_bounds = array<i64: 64, 64>}, {pipeline_mode = #tpu.pipeline_mode<synchronous>, transform_indices = @transform_8, window_bounds = array<i64: 64, 64>}, {pipeline_mode = #tpu.pipeline_mode<synchronous>, transform_indices = @transform_9, window_bounds = array<i64: 64, 128>}, {pipeline_mode = #tpu.pipeline_mode<synchronous>, transform_indices = @transform_10, window_bounds = array<i64: 3, 64>}, {pipeline_mode = #tpu.pipeline_mode<synchronous>, transform_indices = @transform_11, window_bounds = array<i64: 64, 64>}, {pipeline_mode = #tpu.pipeline_mode<synchronous>, transform_indices = @transform_12, window_bounds = array<i64: 64, 128>}, {pipeline_mode = #tpu.pipeline_mode<synchronous>, transform_indices = @transform_13, window_bounds = array<i64: 128, 64>}, {pipeline_mode = #tpu.pipeline_mode<synchronous>, transform_indices = @transform_14, window_bounds = array<i64: 19, 64>}, {pipeline_mode = #tpu.pipeline_mode<synchronous>, transform_indices = @transform_15, window_bounds = array<i64: 2, 128>}, {pipeline_mode = #tpu.pipeline_mode<synchronous>, transform_indices = @transform_16, window_bounds = array<i64: 1, 128>}, {transform_indices = @transform_17, window_bounds = array<i64: 2, 8, 64>}, {transform_indices = @transform_18, window_bounds = array<i64: 2, 4, 8, 12>}]} {
    %c0 = arith.constant 0 : index
    %c0_0 = arith.constant 0 : index
    %c0_1 = arith.constant 0 : index
    %0 = vector.load %arg1[%c0, %c0_0, %c0_1] : memref<2x8x64xf32, #tpu.memory_space<vmem>>, vector<2x8x64xf32>
    %1 = vector.shape_cast %0 : vector<2x8x64xf32> to vector<16x64xf32>
    %c0_2 = arith.constant 0 : index
    %c0_3 = arith.constant 0 : index
    %2 = vector.load %arg15[%c0_2, %c0_3] : memref<19x64xf32, #tpu.memory_space<vmem>>, vector<1x64xf32>
    %c1 = arith.constant 1 : index
    %c0_4 = arith.constant 0 : index
    %3 = vector.load %arg15[%c1, %c0_4] : memref<19x64xf32, #tpu.memory_space<vmem>>, vector<1x64xf32>
    %cst = arith.constant dense<0.000000e+00> : vector<16xf32>
    %4 = vector.multi_reduction <add>, %1, %cst [1] : vector<16x64xf32> to vector<16xf32>
    %5 = vector.shape_cast %4 : vector<16xf32> to vector<16x1xf32>
    %cst_5 = arith.constant 6.400000e+01 : f32
    %6 = vector.broadcast %cst_5 : f32 to vector<16x1xf32>
    %7 = arith.divf %5, %6 : vector<16x1xf32>
    %8 = vector.broadcast %7 : vector<16x1xf32> to vector<16x64xf32>
    %9 = arith.subf %1, %8 : vector<16x64xf32>
    %10 = arith.mulf %9, %9 : vector<16x64xf32>
    %cst_6 = arith.constant dense<0.000000e+00> : vector<16xf32>
    %11 = vector.multi_reduction <add>, %10, %cst_6 [1] : vector<16x64xf32> to vector<16xf32>
    %12 = vector.shape_cast %11 : vector<16xf32> to vector<16x1xf32>
    %cst_7 = arith.constant 6.400000e+01 : f32
    %13 = vector.broadcast %cst_7 : f32 to vector<16x1xf32>
    %14 = arith.divf %12, %13 : vector<16x1xf32>
    %15 = vector.broadcast %7 : vector<16x1xf32> to vector<16x64xf32>
    %16 = arith.subf %1, %15 : vector<16x64xf32>
    %cst_8 = arith.constant 9.99999974E-6 : f32
    %17 = vector.broadcast %cst_8 : f32 to vector<16x1xf32>
    %18 = arith.addf %14, %17 : vector<16x1xf32>
    %19 = math.rsqrt %18 : vector<16x1xf32>
    %20 = vector.broadcast %19 : vector<16x1xf32> to vector<16x64xf32>
    %21 = arith.mulf %16, %20 : vector<16x64xf32>
    %22 = vector.broadcast %2 : vector<1x64xf32> to vector<16x64xf32>
    %23 = arith.mulf %21, %22 : vector<16x64xf32>
    %24 = vector.broadcast %3 : vector<1x64xf32> to vector<16x64xf32>
    %25 = arith.addf %23, %24 : vector<16x64xf32>
    %c0_9 = arith.constant 0 : index
    %c0_10 = arith.constant 0 : index
    %26 = vector.load %arg16[%c0_9, %c0_10] : memref<2x128xf32, #tpu.memory_space<vmem>>, vector<1x128xf32>
    %c0_11 = arith.constant 0 : index
    %c0_12 = arith.constant 0 : index
    %27 = vector.load %arg4[%c0_11, %c0_12] : memref<64x128xf32, #tpu.memory_space<vmem>>, vector<64x128xf32>
    %cst_13 = arith.constant dense<0.000000e+00> : vector<16x128xf32>
    %28 = tpu.matmul %25, %27, %cst_13 {dimension_numbers = #tpu.dot_dimension_numbers<[1], [0], [0], [1], [0, 0, 1, 1], [], []>} : vector<16x64xf32>, vector<64x128xf32>, vector<16x128xf32> -> vector<16x128xf32>
    %29 = vector.broadcast %26 : vector<1x128xf32> to vector<16x128xf32>
    %30 = arith.addf %28, %29 : vector<16x128xf32>
    %31 = arith.negf %30 : vector<16x128xf32>
    %32 = math.exp %31 : vector<16x128xf32>
    %cst_14 = arith.constant 1.000000e+00 : f32
    %33 = vector.broadcast %cst_14 : f32 to vector<16x128xf32>
    %34 = arith.addf %33, %32 : vector<16x128xf32>
    %35 = arith.divf %33, %34 : vector<16x128xf32>
    %36 = arith.mulf %30, %35 : vector<16x128xf32>
    %c2 = arith.constant 2 : index
    %c0_15 = arith.constant 0 : index
    %37 = vector.load %arg15[%c2, %c0_15] : memref<19x64xf32, #tpu.memory_space<vmem>>, vector<1x64xf32>
    %c0_16 = arith.constant 0 : index
    %c0_17 = arith.constant 0 : index
    %38 = vector.load %arg5[%c0_16, %c0_17] : memref<128x64xf32, #tpu.memory_space<vmem>>, vector<128x64xf32>
    %cst_18 = arith.constant dense<0.000000e+00> : vector<16x64xf32>
    %39 = tpu.matmul %36, %38, %cst_18 {dimension_numbers = #tpu.dot_dimension_numbers<[1], [0], [0], [1], [0, 0, 1, 1], [], []>} : vector<16x128xf32>, vector<128x64xf32>, vector<16x64xf32> -> vector<16x64xf32>
    %40 = vector.broadcast %37 : vector<1x64xf32> to vector<16x64xf32>
    %41 = arith.addf %39, %40 : vector<16x64xf32>
    %cst_19 = arith.constant 5.000000e-01 : f32
    %42 = vector.broadcast %cst_19 : f32 to vector<16x64xf32>
    %43 = arith.mulf %42, %41 : vector<16x64xf32>
    %44 = arith.addf %1, %43 : vector<16x64xf32>
    %c3 = arith.constant 3 : index
    %c0_20 = arith.constant 0 : index
    %45 = vector.load %arg15[%c3, %c0_20] : memref<19x64xf32, #tpu.memory_space<vmem>>, vector<1x64xf32>
    %c4 = arith.constant 4 : index
    %c0_21 = arith.constant 0 : index
    %46 = vector.load %arg15[%c4, %c0_21] : memref<19x64xf32, #tpu.memory_space<vmem>>, vector<1x64xf32>
    %cst_22 = arith.constant dense<0.000000e+00> : vector<16xf32>
    %47 = vector.multi_reduction <add>, %44, %cst_22 [1] : vector<16x64xf32> to vector<16xf32>
    %48 = vector.shape_cast %47 : vector<16xf32> to vector<16x1xf32>
    %cst_23 = arith.constant 6.400000e+01 : f32
    %49 = vector.broadcast %cst_23 : f32 to vector<16x1xf32>
    %50 = arith.divf %48, %49 : vector<16x1xf32>
    %51 = vector.broadcast %50 : vector<16x1xf32> to vector<16x64xf32>
    %52 = arith.subf %44, %51 : vector<16x64xf32>
    %53 = arith.mulf %52, %52 : vector<16x64xf32>
    %cst_24 = arith.constant dense<0.000000e+00> : vector<16xf32>
    %54 = vector.multi_reduction <add>, %53, %cst_24 [1] : vector<16x64xf32> to vector<16xf32>
    %55 = vector.shape_cast %54 : vector<16xf32> to vector<16x1xf32>
    %cst_25 = arith.constant 6.400000e+01 : f32
    %56 = vector.broadcast %cst_25 : f32 to vector<16x1xf32>
    %57 = arith.divf %55, %56 : vector<16x1xf32>
    %58 = vector.broadcast %50 : vector<16x1xf32> to vector<16x64xf32>
    %59 = arith.subf %44, %58 : vector<16x64xf32>
    %cst_26 = arith.constant 9.99999974E-6 : f32
    %60 = vector.broadcast %cst_26 : f32 to vector<16x1xf32>
    %61 = arith.addf %57, %60 : vector<16x1xf32>
    %62 = math.rsqrt %61 : vector<16x1xf32>
    %63 = vector.broadcast %62 : vector<16x1xf32> to vector<16x64xf32>
    %64 = arith.mulf %59, %63 : vector<16x64xf32>
    %65 = vector.broadcast %45 : vector<1x64xf32> to vector<16x64xf32>
    %66 = arith.mulf %64, %65 : vector<16x64xf32>
    %67 = vector.broadcast %46 : vector<1x64xf32> to vector<16x64xf32>
    %68 = arith.addf %66, %67 : vector<16x64xf32>
    %c0_27 = arith.constant 0 : index
    %c0_28 = arith.constant 0 : index
    %69 = vector.load %arg6[%c0_27, %c0_28] : memref<64x64xf32, #tpu.memory_space<vmem>>, vector<64x64xf32>
    %cst_29 = arith.constant dense<0.000000e+00> : vector<16x64xf32>
    %70 = tpu.matmul %68, %69, %cst_29 {dimension_numbers = #tpu.dot_dimension_numbers<[1], [0], [0], [1], [0, 0, 1, 1], [], []>} : vector<16x64xf32>, vector<64x64xf32>, vector<16x64xf32> -> vector<16x64xf32>
    %c0_30 = arith.constant 0 : index
    %c0_31 = arith.constant 0 : index
    %71 = vector.load %arg3[%c0_30, %c0_31] : memref<128x64xf32, #tpu.memory_space<vmem>>, vector<128x64xf32>
    %c0_32 = arith.constant 0 : index
    %c0_33 = arith.constant 0 : index
    %72 = vector.load %arg8[%c0_32, %c0_33] : memref<64x64xf32, #tpu.memory_space<vmem>>, vector<64x64xf32>
    %cst_34 = arith.constant dense<0.000000e+00> : vector<128x64xf32>
    %73 = tpu.matmul %71, %72, %cst_34 {dimension_numbers = #tpu.dot_dimension_numbers<[1], [0], [0], [1], [0, 0, 1, 1], [], []>} : vector<128x64xf32>, vector<64x64xf32>, vector<128x64xf32> -> vector<128x64xf32>
    %c0_35 = arith.constant 0 : index
    %c0_36 = arith.constant 0 : index
    %c0_37 = arith.constant 0 : index
    %74 = vector.load %arg2[%c0_35, %c0_36, %c0_37] : memref<2x12x64xf32, #tpu.memory_space<vmem>>, vector<1x12x64xf32>
    %75 = vector.shape_cast %74 : vector<1x12x64xf32> to vector<12x64xf32>
    %c0_38 = arith.constant 0 : index
    %c0_39 = arith.constant 0 : index
    %76 = vector.load %arg7[%c0_38, %c0_39] : memref<64x128xf32, #tpu.memory_space<vmem>>, vector<64x128xf32>
    %cst_40 = arith.constant dense<0.000000e+00> : vector<12x128xf32>
    %77 = tpu.matmul %75, %76, %cst_40 {dimension_numbers = #tpu.dot_dimension_numbers<[1], [0], [0], [1], [0, 0, 1, 1], [], []>} : vector<12x64xf32>, vector<64x128xf32>, vector<12x128xf32> -> vector<12x128xf32>
    %c0_41 = arith.constant 0 : index
    %c0_42 = arith.constant 0 : index
    %c0_43 = arith.constant 0 : index
    %78 = vector.load %arg20[%c0_41, %c0_42, %c0_43] : memref<2x12x128xf32, #tpu.memory_space<vmem>>, vector<1x12x128xf32>
    %79 = vector.shape_cast %78 : vector<1x12x128xf32> to vector<12x128xf32>
    %80 = vector.shape_cast %77 : vector<12x128xf32> to vector<1x12x128xf32>
    tpu.vector_store %arg20[%c0_41, %c0_42, %c0_43], %80 {strides = array<i32>} : memref<2x12x128xf32, #tpu.memory_space<vmem>>, vector<1x12x128xf32>,
    %c1_44 = arith.constant 1 : index
    %c0_45 = arith.constant 0 : index
    %c0_46 = arith.constant 0 : index
    %81 = vector.load %arg2[%c1_44, %c0_45, %c0_46] : memref<2x12x64xf32, #tpu.memory_space<vmem>>, vector<1x12x64xf32>
    %82 = vector.shape_cast %81 : vector<1x12x64xf32> to vector<12x64xf32>
    %c0_47 = arith.constant 0 : index
    %c0_48 = arith.constant 0 : index
    %83 = vector.load %arg7[%c0_47, %c0_48] : memref<64x128xf32, #tpu.memory_space<vmem>>, vector<64x128xf32>
    %cst_49 = arith.constant dense<0.000000e+00> : vector<12x128xf32>
    %84 = tpu.matmul %82, %83, %cst_49 {dimension_numbers = #tpu.dot_dimension_numbers<[1], [0], [0], [1], [0, 0, 1, 1], [], []>} : vector<12x64xf32>, vector<64x128xf32>, vector<12x128xf32> -> vector<12x128xf32>
    %c1_50 = arith.constant 1 : index
    %c0_51 = arith.constant 0 : index
    %c0_52 = arith.constant 0 : index
    %85 = vector.load %arg20[%c1_50, %c0_51, %c0_52] : memref<2x12x128xf32, #tpu.memory_space<vmem>>, vector<1x12x128xf32>
    %86 = vector.shape_cast %85 : vector<1x12x128xf32> to vector<12x128xf32>
    %87 = vector.shape_cast %84 : vector<12x128xf32> to vector<1x12x128xf32>
    tpu.vector_store %arg20[%c1_50, %c0_51, %c0_52], %87 {strides = array<i32>} : memref<2x12x128xf32, #tpu.memory_space<vmem>>, vector<1x12x128xf32>,
    %88 = vector.shape_cast %70 : vector<16x64xf32> to vector<2x8x64xf32>
    %c5 = arith.constant 5 : index
    %c0_53 = arith.constant 0 : index
    %89 = vector.load %arg15[%c5, %c0_53] : memref<19x64xf32, #tpu.memory_space<vmem>>, vector<1x64xf32>
    %90 = vector.shape_cast %89 : vector<1x64xf32> to vector<1x1x64xf32>
    %91 = vector.broadcast %90 : vector<1x1x64xf32> to vector<2x8x64xf32>
    %92 = arith.addf %88, %91 : vector<2x8x64xf32>
    %c6 = arith.constant 6 : index
    %c0_54 = arith.constant 0 : index
    %93 = vector.load %arg15[%c6, %c0_54] : memref<19x64xf32, #tpu.memory_space<vmem>>, vector<1x64xf32>
    %94 = vector.broadcast %93 : vector<1x64xf32> to vector<16x64xf32>
    %95 = arith.addf %70, %94 : vector<16x64xf32>
    %96 = tpu.iota {dimensions = array<i32: 0>} : vector<8x12xi32>
    %97 = tpu.iota {dimensions = array<i32: 1>} : vector<8x12xi32>
    %98 = arith.subi %97, %96 : vector<8x12xi32>
    %c4_i32 = arith.constant 4 : i32
    %99 = vector.broadcast %c4_i32 : i32 to vector<8x12xi32>
    %100 = arith.cmpi sle, %98, %99 : vector<8x12xi32>
    %101 = tpu.iota {dimensions = array<i32: 0>} : vector<16x1xi32>
    %c8_i32 = arith.constant 8 : i32
    %c0_i32 = arith.constant 0 : i32
    %102 = arith.cmpi eq, %c8_i32, %c0_i32 : i32
    %c1_i32 = arith.constant 1 : i32
    %103 = arith.select %102, %c1_i32, %c8_i32 : i32
    %104 = vector.broadcast %103 : i32 to vector<16x1xi32>
    %105 = arith.remsi %101, %104 : vector<16x1xi32>
    %c0_i32_55 = arith.constant 0 : i32
    %106 = vector.broadcast %c0_i32_55 : i32 to vector<16x1xi32>
    %107 = arith.cmpi ne, %105, %106 : vector<16x1xi32>
    %c0_i32_56 = arith.constant 0 : i32
    %108 = vector.broadcast %c0_i32_56 : i32 to vector<16x1xi32>
    %109 = arith.cmpi slt, %105, %108 : vector<16x1xi32>
    %c0_i32_57 = arith.constant 0 : i32
    %110 = arith.cmpi slt, %103, %c0_i32_57 : i32
    %111 = vector.broadcast %110 : i1 to vector<16x1xi1>
    %112 = vector.broadcast %111 : vector<16x1xi1> to vector<16x1xi1>
    %113 = arith.xori %109, %112 : vector<16x1xi1>
    %114 = arith.andi %113, %107 : vector<16x1xi1>
    %115 = vector.broadcast %103 : i32 to vector<16x1xi32>
    %116 = arith.addi %105, %115 : vector<16x1xi32>
    %117 = arith.select %114, %116, %105 : vector<16x1xi1>, vector<16x1xi32>
    %c7_i32 = arith.constant 7 : i32
    %118 = vector.broadcast %c7_i32 : i32 to vector<16x1xi32>
    %119 = arith.subi %118, %117 : vector<16x1xi32>
    %c0_58 = arith.constant 0 : index
    %c0_59 = arith.constant 0 : index
    %c0_60 = arith.constant 0 : index
    %120 = vector.load %arg20[%c0_58, %c0_59, %c0_60] : memref<2x12x128xf32, #tpu.memory_space<vmem>>, vector<2x12x16xf32>
    %c0_61 = arith.constant 0 : index
    %c0_62 = arith.constant 0 : index
    %c64 = arith.constant 64 : index
    %121 = vector.load %arg20[%c0_61, %c0_62, %c64] : memref<2x12x128xf32, #tpu.memory_space<vmem>>, vector<2x12x16xf32>
    %122 = vector.extract_strided_slice %92 {offsets = [0, 0, 0], sizes = [2, 8, 16], strides = [1, 1, 1]} : vector<2x8x64xf32> to vector<2x8x16xf32>
    "tpu.trace_start"() <{level = 10 : i32, message = "bqd,bkd->bqk"}> : () -> ()
    %cst_63 = arith.constant dense<0.000000e+00> : vector<2x8x12xf32>
    %123 = tpu.matmul %122, %120, %cst_63 {dimension_numbers = #tpu.dot_dimension_numbers<[2], [2], [1], [1], [0, 0, 0, 1, 1, 1], [0], [0]>} : vector<2x8x16xf32>, vector<2x12x16xf32>, vector<2x8x12xf32> -> vector<2x8x12xf32>
    "tpu.trace_stop"() : () -> ()
    %124 = vector.extract_strided_slice %95 {offsets = [0, 0], sizes = [16, 16], strides = [1, 1]} : vector<16x64xf32> to vector<16x16xf32>
    %125 = vector.extract_strided_slice %73 {offsets = [0, 0], sizes = [128, 16], strides = [1, 1]} : vector<128x64xf32> to vector<128x16xf32>
    %cst_64 = arith.constant dense<0.000000e+00> : vector<16x128xf32>
    %126 = tpu.matmul %124, %125, %cst_64 {dimension_numbers = #tpu.dot_dimension_numbers<[1], [1], [0], [0], [0, 0, 1, 0], [], []>} : vector<16x16xf32>, vector<128x16xf32>, vector<16x128xf32> -> vector<16x128xf32>
    %c127_i32 = arith.constant 127 : i32
    %127 = tpu.dynamic_rotate %126 by %c127_i32 dim 1 : vector<16x128xf32>, i32 -> vector<16x128xf32>
    %c1_i32_65 = arith.constant 1 : i32
    %128 = vector.broadcast %c1_i32_65 : i32 to vector<16x1xi32>
    %129 = arith.andi %119, %128 : vector<16x1xi32>
    %c0_i32_66 = arith.constant 0 : i32
    %130 = vector.broadcast %c0_i32_66 : i32 to vector<16x1xi32>
    %131 = arith.cmpi sgt, %129, %130 : vector<16x1xi32>
    %132 = vector.shape_cast %131 : vector<16x1xi1> to vector<16x1xi1>
    %133 = vector.broadcast %132 : vector<16x1xi1> to vector<16x128xi1>
    %134 = arith.select %133, %127, %126 : vector<16x128xi1>, vector<16x128xf32>
    %c126_i32 = arith.constant 126 : i32
    %135 = tpu.dynamic_rotate %134 by %c126_i32 dim 1 : vector<16x128xf32>, i32 -> vector<16x128xf32>
    %c2_i32 = arith.constant 2 : i32
    %136 = vector.broadcast %c2_i32 : i32 to vector<16x1xi32>
    %137 = arith.andi %119, %136 : vector<16x1xi32>
    %c0_i32_67 = arith.constant 0 : i32
    %138 = vector.broadcast %c0_i32_67 : i32 to vector<16x1xi32>
    %139 = arith.cmpi sgt, %137, %138 : vector<16x1xi32>
    %140 = vector.shape_cast %139 : vector<16x1xi1> to vector<16x1xi1>
    %141 = vector.broadcast %140 : vector<16x1xi1> to vector<16x128xi1>
    %142 = arith.select %141, %135, %134 : vector<16x128xi1>, vector<16x128xf32>
    %c124_i32 = arith.constant 124 : i32
    %143 = tpu.dynamic_rotate %142 by %c124_i32 dim 1 : vector<16x128xf32>, i32 -> vector<16x128xf32>
    %c4_i32_68 = arith.constant 4 : i32
    %144 = vector.broadcast %c4_i32_68 : i32 to vector<16x1xi32>
    %145 = arith.andi %119, %144 : vector<16x1xi32>
    %c0_i32_69 = arith.constant 0 : i32
    %146 = vector.broadcast %c0_i32_69 : i32 to vector<16x1xi32>
    %147 = arith.cmpi sgt, %145, %146 : vector<16x1xi32>
    %148 = vector.shape_cast %147 : vector<16x1xi1> to vector<16x1xi1>
    %149 = vector.broadcast %148 : vector<16x1xi1> to vector<16x128xi1>
    %150 = arith.select %149, %143, %142 : vector<16x128xi1>, vector<16x128xf32>
    %151 = vector.shape_cast %150 : vector<16x128xf32> to vector<2x8x128xf32>
    %152 = vector.extract_strided_slice %151 {offsets = [0, 0, 0], sizes = [2, 8, 12], strides = [1, 1, 1]} : vector<2x8x128xf32> to vector<2x8x12xf32>
    %cst_70 = arith.constant 0.000000e+00 : f32
    %153 = vector.shape_cast %100 : vector<8x12xi1> to vector<1x8x12xi1>
    %154 = vector.broadcast %153 : vector<1x8x12xi1> to vector<2x8x12xi1>
    %155 = vector.broadcast %cst_70 : f32 to vector<2x8x12xf32>
    %156 = arith.select %154, %152, %155 : vector<2x8x12xi1>, vector<2x8x12xf32>
    %157 = arith.addf %123, %156 : vector<2x8x12xf32>
    %cst_71 = arith.constant 1.250000e-01 : f32
    %158 = vector.broadcast %cst_71 : f32 to vector<2x8x12xf32>
    %159 = arith.mulf %157, %158 : vector<2x8x12xf32>
    %cst_72 = arith.constant dense<0xFF800000> : vector<2x8xf32>
    %160 = vector.multi_reduction <maximumf>, %159, %cst_72 [2] : vector<2x8x12xf32> to vector<2x8xf32>
    %161 = vector.shape_cast %160 : vector<2x8xf32> to vector<2x8x1xf32>
    %162 = vector.broadcast %161 : vector<2x8x1xf32> to vector<2x8x12xf32>
    %163 = arith.subf %159, %162 : vector<2x8x12xf32>
    %164 = math.exp %163 : vector<2x8x12xf32>
    %cst_73 = arith.constant dense<0.000000e+00> : vector<2x8xf32>
    %165 = vector.multi_reduction <add>, %164, %cst_73 [2] : vector<2x8x12xf32> to vector<2x8xf32>
    %166 = vector.shape_cast %165 : vector<2x8xf32> to vector<2x8x1xf32>
    %167 = tpu.reciprocal %166 {approx = true} : vector<2x8x1xf32> -> vector<2x8x1xf32>
    %168 = arith.mulf %166, %167 : vector<2x8x1xf32>
    %cst_74 = arith.constant 2.000000e+00 : f32
    %169 = vector.broadcast %cst_74 : f32 to vector<2x8x1xf32>
    %170 = arith.subf %169, %168 : vector<2x8x1xf32>
    %171 = arith.mulf %167, %170 : vector<2x8x1xf32>
    %172 = vector.broadcast %171 : vector<2x8x1xf32> to vector<2x8x12xf32>
    %173 = arith.mulf %164, %172 : vector<2x8x12xf32>
    %c0_75 = arith.constant 0 : index
    %c0_76 = arith.constant 0 : index
    %c0_77 = arith.constant 0 : index
    %c0_78 = arith.constant 0 : index
    %174 = vector.load %arg19[%c0_75, %c0_76, %c0_77, %c0_78] : memref<2x4x8x12xf32, #tpu.memory_space<vmem>>, vector<2x1x8x12xf32>
    %175 = vector.shape_cast %174 : vector<2x1x8x12xf32> to vector<2x8x12xf32>
    %176 = vector.shape_cast %173 : vector<2x8x12xf32> to vector<2x1x8x12xf32>
    tpu.vector_store %arg19[%c0_75, %c0_76, %c0_77, %c0_78], %176 {strides = array<i32>} : memref<2x4x8x12xf32, #tpu.memory_space<vmem>>, vector<2x1x8x12xf32>,
    "tpu.trace_start"() <{level = 10 : i32, message = "bqk,bkd->bqd"}> : () -> ()
    %cst_79 = arith.constant dense<0.000000e+00> : vector<2x8x16xf32>
    %177 = tpu.matmul %173, %121, %cst_79 {dimension_numbers = #tpu.dot_dimension_numbers<[2], [1], [1], [2], [0, 0, 0, 1, 1, 2], [0], [0]>} : vector<2x8x12xf32>, vector<2x12x16xf32>, vector<2x8x16xf32> -> vector<2x8x16xf32>
    "tpu.trace_stop"() : () -> ()
    %c0_80 = arith.constant 0 : index
    %c0_81 = arith.constant 0 : index
    %c0_82 = arith.constant 0 : index
    %178 = vector.load %arg21[%c0_80, %c0_81, %c0_82] : memref<2x8x64xf32, #tpu.memory_space<vmem>>, vector<2x8x16xf32>
    tpu.vector_store %arg21[%c0_80, %c0_81, %c0_82], %177 {strides = array<i32>} : memref<2x8x64xf32, #tpu.memory_space<vmem>>, vector<2x8x16xf32>,
    %c0_83 = arith.constant 0 : index
    %c0_84 = arith.constant 0 : index
    %c16 = arith.constant 16 : index
    %179 = vector.load %arg20[%c0_83, %c0_84, %c16] : memref<2x12x128xf32, #tpu.memory_space<vmem>>, vector<2x12x16xf32>
    %c0_85 = arith.constant 0 : index
    %c0_86 = arith.constant 0 : index
    %c80 = arith.constant 80 : index
    %180 = vector.load %arg20[%c0_85, %c0_86, %c80] : memref<2x12x128xf32, #tpu.memory_space<vmem>>, vector<2x12x16xf32>
    %181 = vector.extract_strided_slice %92 {offsets = [0, 0, 16], sizes = [2, 8, 16], strides = [1, 1, 1]} : vector<2x8x64xf32> to vector<2x8x16xf32>
    "tpu.trace_start"() <{level = 10 : i32, message = "bqd,bkd->bqk"}> : () -> ()
    %cst_87 = arith.constant dense<0.000000e+00> : vector<2x8x12xf32>
    %182 = tpu.matmul %181, %179, %cst_87 {dimension_numbers = #tpu.dot_dimension_numbers<[2], [2], [1], [1], [0, 0, 0, 1, 1, 1], [0], [0]>} : vector<2x8x16xf32>, vector<2x12x16xf32>, vector<2x8x12xf32> -> vector<2x8x12xf32>
    "tpu.trace_stop"() : () -> ()
    %183 = vector.extract_strided_slice %95 {offsets = [0, 16], sizes = [16, 16], strides = [1, 1]} : vector<16x64xf32> to vector<16x16xf32>
    %184 = vector.extract_strided_slice %73 {offsets = [0, 16], sizes = [128, 16], strides = [1, 1]} : vector<128x64xf32> to vector<128x16xf32>
    %cst_88 = arith.constant dense<0.000000e+00> : vector<16x128xf32>
    %185 = tpu.matmul %183, %184, %cst_88 {dimension_numbers = #tpu.dot_dimension_numbers<[1], [1], [0], [0], [0, 0, 1, 0], [], []>} : vector<16x16xf32>, vector<128x16xf32>, vector<16x128xf32> -> vector<16x128xf32>
    %c127_i32_89 = arith.constant 127 : i32
    %186 = tpu.dynamic_rotate %185 by %c127_i32_89 dim 1 : vector<16x128xf32>, i32 -> vector<16x128xf32>
    %c1_i32_90 = arith.constant 1 : i32
    %187 = vector.broadcast %c1_i32_90 : i32 to vector<16x1xi32>
    %188 = arith.andi %119, %187 : vector<16x1xi32>
    %c0_i32_91 = arith.constant 0 : i32
    %189 = vector.broadcast %c0_i32_91 : i32 to vector<16x1xi32>
    %190 = arith.cmpi sgt, %188, %189 : vector<16x1xi32>
    %191 = vector.shape_cast %190 : vector<16x1xi1> to vector<16x1xi1>
    %192 = vector.broadcast %191 : vector<16x1xi1> to vector<16x128xi1>
    %193 = arith.select %192, %186, %185 : vector<16x128xi1>, vector<16x128xf32>
    %c126_i32_92 = arith.constant 126 : i32
    %194 = tpu.dynamic_rotate %193 by %c126_i32_92 dim 1 : vector<16x128xf32>, i32 -> vector<16x128xf32>
    %c2_i32_93 = arith.constant 2 : i32
    %195 = vector.broadcast %c2_i32_93 : i32 to vector<16x1xi32>
    %196 = arith.andi %119, %195 : vector<16x1xi32>
    %c0_i32_94 = arith.constant 0 : i32
    %197 = vector.broadcast %c0_i32_94 : i32 to vector<16x1xi32>
    %198 = arith.cmpi sgt, %196, %197 : vector<16x1xi32>
    %199 = vector.shape_cast %198 : vector<16x1xi1> to vector<16x1xi1>
    %200 = vector.broadcast %199 : vector<16x1xi1> to vector<16x128xi1>
    %201 = arith.select %200, %194, %193 : vector<16x128xi1>, vector<16x128xf32>
    %c124_i32_95 = arith.constant 124 : i32
    %202 = tpu.dynamic_rotate %201 by %c124_i32_95 dim 1 : vector<16x128xf32>, i32 -> vector<16x128xf32>
    %c4_i32_96 = arith.constant 4 : i32
    %203 = vector.broadcast %c4_i32_96 : i32 to vector<16x1xi32>
    %204 = arith.andi %119, %203 : vector<16x1xi32>
    %c0_i32_97 = arith.constant 0 : i32
    %205 = vector.broadcast %c0_i32_97 : i32 to vector<16x1xi32>
    %206 = arith.cmpi sgt, %204, %205 : vector<16x1xi32>
    %207 = vector.shape_cast %206 : vector<16x1xi1> to vector<16x1xi1>
    %208 = vector.broadcast %207 : vector<16x1xi1> to vector<16x128xi1>
    %209 = arith.select %208, %202, %201 : vector<16x128xi1>, vector<16x128xf32>
    %210 = vector.shape_cast %209 : vector<16x128xf32> to vector<2x8x128xf32>
    %211 = vector.extract_strided_slice %210 {offsets = [0, 0, 0], sizes = [2, 8, 12], strides = [1, 1, 1]} : vector<2x8x128xf32> to vector<2x8x12xf32>
    %cst_98 = arith.constant 0.000000e+00 : f32
    %212 = vector.shape_cast %100 : vector<8x12xi1> to vector<1x8x12xi1>
    %213 = vector.broadcast %212 : vector<1x8x12xi1> to vector<2x8x12xi1>
    %214 = vector.broadcast %cst_98 : f32 to vector<2x8x12xf32>
    %215 = arith.select %213, %211, %214 : vector<2x8x12xi1>, vector<2x8x12xf32>
    %216 = arith.addf %182, %215 : vector<2x8x12xf32>
    %cst_99 = arith.constant 1.250000e-01 : f32
    %217 = vector.broadcast %cst_99 : f32 to vector<2x8x12xf32>
    %218 = arith.mulf %216, %217 : vector<2x8x12xf32>
    %cst_100 = arith.constant dense<0xFF800000> : vector<2x8xf32>
    %219 = vector.multi_reduction <maximumf>, %218, %cst_100 [2] : vector<2x8x12xf32> to vector<2x8xf32>
    %220 = vector.shape_cast %219 : vector<2x8xf32> to vector<2x8x1xf32>
    %221 = vector.broadcast %220 : vector<2x8x1xf32> to vector<2x8x12xf32>
    %222 = arith.subf %218, %221 : vector<2x8x12xf32>
    %223 = math.exp %222 : vector<2x8x12xf32>
    %cst_101 = arith.constant dense<0.000000e+00> : vector<2x8xf32>
    %224 = vector.multi_reduction <add>, %223, %cst_101 [2] : vector<2x8x12xf32> to vector<2x8xf32>
    %225 = vector.shape_cast %224 : vector<2x8xf32> to vector<2x8x1xf32>
    %226 = tpu.reciprocal %225 {approx = true} : vector<2x8x1xf32> -> vector<2x8x1xf32>
    %227 = arith.mulf %225, %226 : vector<2x8x1xf32>
    %cst_102 = arith.constant 2.000000e+00 : f32
    %228 = vector.broadcast %cst_102 : f32 to vector<2x8x1xf32>
    %229 = arith.subf %228, %227 : vector<2x8x1xf32>
    %230 = arith.mulf %226, %229 : vector<2x8x1xf32>
    %231 = vector.broadcast %230 : vector<2x8x1xf32> to vector<2x8x12xf32>
    %232 = arith.mulf %223, %231 : vector<2x8x12xf32>
    %c0_103 = arith.constant 0 : index
    %c1_104 = arith.constant 1 : index
    %c0_105 = arith.constant 0 : index
    %c0_106 = arith.constant 0 : index
    %233 = vector.load %arg19[%c0_103, %c1_104, %c0_105, %c0_106] : memref<2x4x8x12xf32, #tpu.memory_space<vmem>>, vector<2x1x8x12xf32>
    %234 = vector.shape_cast %233 : vector<2x1x8x12xf32> to vector<2x8x12xf32>
    %235 = vector.shape_cast %232 : vector<2x8x12xf32> to vector<2x1x8x12xf32>
    tpu.vector_store %arg19[%c0_103, %c1_104, %c0_105, %c0_106], %235 {strides = array<i32>} : memref<2x4x8x12xf32, #tpu.memory_space<vmem>>, vector<2x1x8x12xf32>,
    "tpu.trace_start"() <{level = 10 : i32, message = "bqk,bkd->bqd"}> : () -> ()
    %cst_107 = arith.constant dense<0.000000e+00> : vector<2x8x16xf32>
    %236 = tpu.matmul %232, %180, %cst_107 {dimension_numbers = #tpu.dot_dimension_numbers<[2], [1], [1], [2], [0, 0, 0, 1, 1, 2], [0], [0]>} : vector<2x8x12xf32>, vector<2x12x16xf32>, vector<2x8x16xf32> -> vector<2x8x16xf32>
    "tpu.trace_stop"() : () -> ()
    %c0_108 = arith.constant 0 : index
    %c0_109 = arith.constant 0 : index
    %c16_110 = arith.constant 16 : index
    %237 = vector.load %arg21[%c0_108, %c0_109, %c16_110] : memref<2x8x64xf32, #tpu.memory_space<vmem>>, vector<2x8x16xf32>
    tpu.vector_store %arg21[%c0_108, %c0_109, %c16_110], %236 {strides = array<i32>} : memref<2x8x64xf32, #tpu.memory_space<vmem>>, vector<2x8x16xf32>,
    %c0_111 = arith.constant 0 : index
    %c0_112 = arith.constant 0 : index
    %c32 = arith.constant 32 : index
    %238 = vector.load %arg20[%c0_111, %c0_112, %c32] : memref<2x12x128xf32, #tpu.memory_space<vmem>>, vector<2x12x16xf32>
    %c0_113 = arith.constant 0 : index
    %c0_114 = arith.constant 0 : index
    %c96 = arith.constant 96 : index
    %239 = vector.load %arg20[%c0_113, %c0_114, %c96] : memref<2x12x128xf32, #tpu.memory_space<vmem>>, vector<2x12x16xf32>
    %240 = vector.extract_strided_slice %92 {offsets = [0, 0, 32], sizes = [2, 8, 16], strides = [1, 1, 1]} : vector<2x8x64xf32> to vector<2x8x16xf32>
    "tpu.trace_start"() <{level = 10 : i32, message = "bqd,bkd->bqk"}> : () -> ()
    %cst_115 = arith.constant dense<0.000000e+00> : vector<2x8x12xf32>
    %241 = tpu.matmul %240, %238, %cst_115 {dimension_numbers = #tpu.dot_dimension_numbers<[2], [2], [1], [1], [0, 0, 0, 1, 1, 1], [0], [0]>} : vector<2x8x16xf32>, vector<2x12x16xf32>, vector<2x8x12xf32> -> vector<2x8x12xf32>
    "tpu.trace_stop"() : () -> ()
    %242 = vector.extract_strided_slice %95 {offsets = [0, 32], sizes = [16, 16], strides = [1, 1]} : vector<16x64xf32> to vector<16x16xf32>
    %243 = vector.extract_strided_slice %73 {offsets = [0, 32], sizes = [128, 16], strides = [1, 1]} : vector<128x64xf32> to vector<128x16xf32>
    %cst_116 = arith.constant dense<0.000000e+00> : vector<16x128xf32>
    %244 = tpu.matmul %242, %243, %cst_116 {dimension_numbers = #tpu.dot_dimension_numbers<[1], [1], [0], [0], [0, 0, 1, 0], [], []>} : vector<16x16xf32>, vector<128x16xf32>, vector<16x128xf32> -> vector<16x128xf32>
    %c127_i32_117 = arith.constant 127 : i32
    %245 = tpu.dynamic_rotate %244 by %c127_i32_117 dim 1 : vector<16x128xf32>, i32 -> vector<16x128xf32>
    %c1_i32_118 = arith.constant 1 : i32
    %246 = vector.broadcast %c1_i32_118 : i32 to vector<16x1xi32>
    %247 = arith.andi %119, %246 : vector<16x1xi32>
    %c0_i32_119 = arith.constant 0 : i32
    %248 = vector.broadcast %c0_i32_119 : i32 to vector<16x1xi32>
    %249 = arith.cmpi sgt, %247, %248 : vector<16x1xi32>
    %250 = vector.shape_cast %249 : vector<16x1xi1> to vector<16x1xi1>
    %251 = vector.broadcast %250 : vector<16x1xi1> to vector<16x128xi1>
    %252 = arith.select %251, %245, %244 : vector<16x128xi1>, vector<16x128xf32>
    %c126_i32_120 = arith.constant 126 : i32
    %253 = tpu.dynamic_rotate %252 by %c126_i32_120 dim 1 : vector<16x128xf32>, i32 -> vector<16x128xf32>
    %c2_i32_121 = arith.constant 2 : i32
    %254 = vector.broadcast %c2_i32_121 : i32 to vector<16x1xi32>
    %255 = arith.andi %119, %254 : vector<16x1xi32>
    %c0_i32_122 = arith.constant 0 : i32
    %256 = vector.broadcast %c0_i32_122 : i32 to vector<16x1xi32>
    %257 = arith.cmpi sgt, %255, %256 : vector<16x1xi32>
    %258 = vector.shape_cast %257 : vector<16x1xi1> to vector<16x1xi1>
    %259 = vector.broadcast %258 : vector<16x1xi1> to vector<16x128xi1>
    %260 = arith.select %259, %253, %252 : vector<16x128xi1>, vector<16x128xf32>
    %c124_i32_123 = arith.constant 124 : i32
    %261 = tpu.dynamic_rotate %260 by %c124_i32_123 dim 1 : vector<16x128xf32>, i32 -> vector<16x128xf32>
    %c4_i32_124 = arith.constant 4 : i32
    %262 = vector.broadcast %c4_i32_124 : i32 to vector<16x1xi32>
    %263 = arith.andi %119, %262 : vector<16x1xi32>
    %c0_i32_125 = arith.constant 0 : i32
    %264 = vector.broadcast %c0_i32_125 : i32 to vector<16x1xi32>
    %265 = arith.cmpi sgt, %263, %264 : vector<16x1xi32>
    %266 = vector.shape_cast %265 : vector<16x1xi1> to vector<16x1xi1>
    %267 = vector.broadcast %266 : vector<16x1xi1> to vector<16x128xi1>
    %268 = arith.select %267, %261, %260 : vector<16x128xi1>, vector<16x128xf32>
    %269 = vector.shape_cast %268 : vector<16x128xf32> to vector<2x8x128xf32>
    %270 = vector.extract_strided_slice %269 {offsets = [0, 0, 0], sizes = [2, 8, 12], strides = [1, 1, 1]} : vector<2x8x128xf32> to vector<2x8x12xf32>
    %cst_126 = arith.constant 0.000000e+00 : f32
    %271 = vector.shape_cast %100 : vector<8x12xi1> to vector<1x8x12xi1>
    %272 = vector.broadcast %271 : vector<1x8x12xi1> to vector<2x8x12xi1>
    %273 = vector.broadcast %cst_126 : f32 to vector<2x8x12xf32>
    %274 = arith.select %272, %270, %273 : vector<2x8x12xi1>, vector<2x8x12xf32>
    %275 = arith.addf %241, %274 : vector<2x8x12xf32>
    %cst_127 = arith.constant 1.250000e-01 : f32
    %276 = vector.broadcast %cst_127 : f32 to vector<2x8x12xf32>
    %277 = arith.mulf %275, %276 : vector<2x8x12xf32>
    %cst_128 = arith.constant dense<0xFF800000> : vector<2x8xf32>
    %278 = vector.multi_reduction <maximumf>, %277, %cst_128 [2] : vector<2x8x12xf32> to vector<2x8xf32>
    %279 = vector.shape_cast %278 : vector<2x8xf32> to vector<2x8x1xf32>
    %280 = vector.broadcast %279 : vector<2x8x1xf32> to vector<2x8x12xf32>
    %281 = arith.subf %277, %280 : vector<2x8x12xf32>
    %282 = math.exp %281 : vector<2x8x12xf32>
    %cst_129 = arith.constant dense<0.000000e+00> : vector<2x8xf32>
    %283 = vector.multi_reduction <add>, %282, %cst_129 [2] : vector<2x8x12xf32> to vector<2x8xf32>
    %284 = vector.shape_cast %283 : vector<2x8xf32> to vector<2x8x1xf32>
    %285 = tpu.reciprocal %284 {approx = true} : vector<2x8x1xf32> -> vector<2x8x1xf32>
    %286 = arith.mulf %284, %285 : vector<2x8x1xf32>
    %cst_130 = arith.constant 2.000000e+00 : f32
    %287 = vector.broadcast %cst_130 : f32 to vector<2x8x1xf32>
    %288 = arith.subf %287, %286 : vector<2x8x1xf32>
    %289 = arith.mulf %285, %288 : vector<2x8x1xf32>
    %290 = vector.broadcast %289 : vector<2x8x1xf32> to vector<2x8x12xf32>
    %291 = arith.mulf %282, %290 : vector<2x8x12xf32>
    %c0_131 = arith.constant 0 : index
    %c2_132 = arith.constant 2 : index
    %c0_133 = arith.constant 0 : index
    %c0_134 = arith.constant 0 : index
    %292 = vector.load %arg19[%c0_131, %c2_132, %c0_133, %c0_134] : memref<2x4x8x12xf32, #tpu.memory_space<vmem>>, vector<2x1x8x12xf32>
    %293 = vector.shape_cast %292 : vector<2x1x8x12xf32> to vector<2x8x12xf32>
    %294 = vector.shape_cast %291 : vector<2x8x12xf32> to vector<2x1x8x12xf32>
    tpu.vector_store %arg19[%c0_131, %c2_132, %c0_133, %c0_134], %294 {strides = array<i32>} : memref<2x4x8x12xf32, #tpu.memory_space<vmem>>, vector<2x1x8x12xf32>,
    "tpu.trace_start"() <{level = 10 : i32, message = "bqk,bkd->bqd"}> : () -> ()
    %cst_135 = arith.constant dense<0.000000e+00> : vector<2x8x16xf32>
    %295 = tpu.matmul %291, %239, %cst_135 {dimension_numbers = #tpu.dot_dimension_numbers<[2], [1], [1], [2], [0, 0, 0, 1, 1, 2], [0], [0]>} : vector<2x8x12xf32>, vector<2x12x16xf32>, vector<2x8x16xf32> -> vector<2x8x16xf32>
    "tpu.trace_stop"() : () -> ()
    %c0_136 = arith.constant 0 : index
    %c0_137 = arith.constant 0 : index
    %c32_138 = arith.constant 32 : index
    %296 = vector.load %arg21[%c0_136, %c0_137, %c32_138] : memref<2x8x64xf32, #tpu.memory_space<vmem>>, vector<2x8x16xf32>
    tpu.vector_store %arg21[%c0_136, %c0_137, %c32_138], %295 {strides = array<i32>} : memref<2x8x64xf32, #tpu.memory_space<vmem>>, vector<2x8x16xf32>,
    %c0_139 = arith.constant 0 : index
    %c0_140 = arith.constant 0 : index
    %c48 = arith.constant 48 : index
    %297 = vector.load %arg20[%c0_139, %c0_140, %c48] : memref<2x12x128xf32, #tpu.memory_space<vmem>>, vector<2x12x16xf32>
    %c0_141 = arith.constant 0 : index
    %c0_142 = arith.constant 0 : index
    %c112 = arith.constant 112 : index
    %298 = vector.load %arg20[%c0_141, %c0_142, %c112] : memref<2x12x128xf32, #tpu.memory_space<vmem>>, vector<2x12x16xf32>
    %299 = vector.extract_strided_slice %92 {offsets = [0, 0, 48], sizes = [2, 8, 16], strides = [1, 1, 1]} : vector<2x8x64xf32> to vector<2x8x16xf32>
    "tpu.trace_start"() <{level = 10 : i32, message = "bqd,bkd->bqk"}> : () -> ()
    %cst_143 = arith.constant dense<0.000000e+00> : vector<2x8x12xf32>
    %300 = tpu.matmul %299, %297, %cst_143 {dimension_numbers = #tpu.dot_dimension_numbers<[2], [2], [1], [1], [0, 0, 0, 1, 1, 1], [0], [0]>} : vector<2x8x16xf32>, vector<2x12x16xf32>, vector<2x8x12xf32> -> vector<2x8x12xf32>
    "tpu.trace_stop"() : () -> ()
    %301 = vector.extract_strided_slice %95 {offsets = [0, 48], sizes = [16, 16], strides = [1, 1]} : vector<16x64xf32> to vector<16x16xf32>
    %302 = vector.extract_strided_slice %73 {offsets = [0, 48], sizes = [128, 16], strides = [1, 1]} : vector<128x64xf32> to vector<128x16xf32>
    %cst_144 = arith.constant dense<0.000000e+00> : vector<16x128xf32>
    %303 = tpu.matmul %301, %302, %cst_144 {dimension_numbers = #tpu.dot_dimension_numbers<[1], [1], [0], [0], [0, 0, 1, 0], [], []>} : vector<16x16xf32>, vector<128x16xf32>, vector<16x128xf32> -> vector<16x128xf32>
    %c127_i32_145 = arith.constant 127 : i32
    %304 = tpu.dynamic_rotate %303 by %c127_i32_145 dim 1 : vector<16x128xf32>, i32 -> vector<16x128xf32>
    %c1_i32_146 = arith.constant 1 : i32
    %305 = vector.broadcast %c1_i32_146 : i32 to vector<16x1xi32>
    %306 = arith.andi %119, %305 : vector<16x1xi32>
    %c0_i32_147 = arith.constant 0 : i32
    %307 = vector.broadcast %c0_i32_147 : i32 to vector<16x1xi32>
    %308 = arith.cmpi sgt, %306, %307 : vector<16x1xi32>
    %309 = vector.shape_cast %308 : vector<16x1xi1> to vector<16x1xi1>
    %310 = vector.broadcast %309 : vector<16x1xi1> to vector<16x128xi1>
    %311 = arith.select %310, %304, %303 : vector<16x128xi1>, vector<16x128xf32>
    %c126_i32_148 = arith.constant 126 : i32
    %312 = tpu.dynamic_rotate %311 by %c126_i32_148 dim 1 : vector<16x128xf32>, i32 -> vector<16x128xf32>
    %c2_i32_149 = arith.constant 2 : i32
    %313 = vector.broadcast %c2_i32_149 : i32 to vector<16x1xi32>
    %314 = arith.andi %119, %313 : vector<16x1xi32>
    %c0_i32_150 = arith.constant 0 : i32
    %315 = vector.broadcast %c0_i32_150 : i32 to vector<16x1xi32>
    %316 = arith.cmpi sgt, %314, %315 : vector<16x1xi32>
    %317 = vector.shape_cast %316 : vector<16x1xi1> to vector<16x1xi1>
    %318 = vector.broadcast %317 : vector<16x1xi1> to vector<16x128xi1>
    %319 = arith.select %318, %312, %311 : vector<16x128xi1>, vector<16x128xf32>
    %c124_i32_151 = arith.constant 124 : i32
    %320 = tpu.dynamic_rotate %319 by %c124_i32_151 dim 1 : vector<16x128xf32>, i32 -> vector<16x128xf32>
    %c4_i32_152 = arith.constant 4 : i32
    %321 = vector.broadcast %c4_i32_152 : i32 to vector<16x1xi32>
    %322 = arith.andi %119, %321 : vector<16x1xi32>
    %c0_i32_153 = arith.constant 0 : i32
    %323 = vector.broadcast %c0_i32_153 : i32 to vector<16x1xi32>
    %324 = arith.cmpi sgt, %322, %323 : vector<16x1xi32>
    %325 = vector.shape_cast %324 : vector<16x1xi1> to vector<16x1xi1>
    %326 = vector.broadcast %325 : vector<16x1xi1> to vector<16x128xi1>
    %327 = arith.select %326, %320, %319 : vector<16x128xi1>, vector<16x128xf32>
    %328 = vector.shape_cast %327 : vector<16x128xf32> to vector<2x8x128xf32>
    %329 = vector.extract_strided_slice %328 {offsets = [0, 0, 0], sizes = [2, 8, 12], strides = [1, 1, 1]} : vector<2x8x128xf32> to vector<2x8x12xf32>
    %cst_154 = arith.constant 0.000000e+00 : f32
    %330 = vector.shape_cast %100 : vector<8x12xi1> to vector<1x8x12xi1>
    %331 = vector.broadcast %330 : vector<1x8x12xi1> to vector<2x8x12xi1>
    %332 = vector.broadcast %cst_154 : f32 to vector<2x8x12xf32>
    %333 = arith.select %331, %329, %332 : vector<2x8x12xi1>, vector<2x8x12xf32>
    %334 = arith.addf %300, %333 : vector<2x8x12xf32>
    %cst_155 = arith.constant 1.250000e-01 : f32
    %335 = vector.broadcast %cst_155 : f32 to vector<2x8x12xf32>
    %336 = arith.mulf %334, %335 : vector<2x8x12xf32>
    %cst_156 = arith.constant dense<0xFF800000> : vector<2x8xf32>
    %337 = vector.multi_reduction <maximumf>, %336, %cst_156 [2] : vector<2x8x12xf32> to vector<2x8xf32>
    %338 = vector.shape_cast %337 : vector<2x8xf32> to vector<2x8x1xf32>
    %339 = vector.broadcast %338 : vector<2x8x1xf32> to vector<2x8x12xf32>
    %340 = arith.subf %336, %339 : vector<2x8x12xf32>
    %341 = math.exp %340 : vector<2x8x12xf32>
    %cst_157 = arith.constant dense<0.000000e+00> : vector<2x8xf32>
    %342 = vector.multi_reduction <add>, %341, %cst_157 [2] : vector<2x8x12xf32> to vector<2x8xf32>
    %343 = vector.shape_cast %342 : vector<2x8xf32> to vector<2x8x1xf32>
    %344 = tpu.reciprocal %343 {approx = true} : vector<2x8x1xf32> -> vector<2x8x1xf32>
    %345 = arith.mulf %343, %344 : vector<2x8x1xf32>
    %cst_158 = arith.constant 2.000000e+00 : f32
    %346 = vector.broadcast %cst_158 : f32 to vector<2x8x1xf32>
    %347 = arith.subf %346, %345 : vector<2x8x1xf32>
    %348 = arith.mulf %344, %347 : vector<2x8x1xf32>
    %349 = vector.broadcast %348 : vector<2x8x1xf32> to vector<2x8x12xf32>
    %350 = arith.mulf %341, %349 : vector<2x8x12xf32>
    %c0_159 = arith.constant 0 : index
    %c3_160 = arith.constant 3 : index
    %c0_161 = arith.constant 0 : index
    %c0_162 = arith.constant 0 : index
    %351 = vector.load %arg19[%c0_159, %c3_160, %c0_161, %c0_162] : memref<2x4x8x12xf32, #tpu.memory_space<vmem>>, vector<2x1x8x12xf32>
    %352 = vector.shape_cast %351 : vector<2x1x8x12xf32> to vector<2x8x12xf32>
    %353 = vector.shape_cast %350 : vector<2x8x12xf32> to vector<2x1x8x12xf32>
    tpu.vector_store %arg19[%c0_159, %c3_160, %c0_161, %c0_162], %353 {strides = array<i32>} : memref<2x4x8x12xf32, #tpu.memory_space<vmem>>, vector<2x1x8x12xf32>,
    "tpu.trace_start"() <{level = 10 : i32, message = "bqk,bkd->bqd"}> : () -> ()
    %cst_163 = arith.constant dense<0.000000e+00> : vector<2x8x16xf32>
    %354 = tpu.matmul %350, %298, %cst_163 {dimension_numbers = #tpu.dot_dimension_numbers<[2], [1], [1], [2], [0, 0, 0, 1, 1, 2], [0], [0]>} : vector<2x8x12xf32>, vector<2x12x16xf32>, vector<2x8x16xf32> -> vector<2x8x16xf32>
    "tpu.trace_stop"() : () -> ()
    %c0_164 = arith.constant 0 : index
    %c0_165 = arith.constant 0 : index
    %c48_166 = arith.constant 48 : index
    %355 = vector.load %arg21[%c0_164, %c0_165, %c48_166] : memref<2x8x64xf32, #tpu.memory_space<vmem>>, vector<2x8x16xf32>
    tpu.vector_store %arg21[%c0_164, %c0_165, %c48_166], %354 {strides = array<i32>} : memref<2x8x64xf32, #tpu.memory_space<vmem>>, vector<2x8x16xf32>,
    %c0_167 = arith.constant 0 : index
    %c0_168 = arith.constant 0 : index
    %c0_169 = arith.constant 0 : index
    %356 = vector.load %arg21[%c0_167, %c0_168, %c0_169] : memref<2x8x64xf32, #tpu.memory_space<vmem>>, vector<2x8x64xf32>
    %357 = vector.shape_cast %356 : vector<2x8x64xf32> to vector<16x64xf32>
    %c7 = arith.constant 7 : index
    %c0_170 = arith.constant 0 : index
    %358 = vector.load %arg15[%c7, %c0_170] : memref<19x64xf32, #tpu.memory_space<vmem>>, vector<1x64xf32>
    %c0_171 = arith.constant 0 : index
    %c0_172 = arith.constant 0 : index
    %359 = vector.load %arg9[%c0_171, %c0_172] : memref<64x64xf32, #tpu.memory_space<vmem>>, vector<64x64xf32>
    %cst_173 = arith.constant dense<0.000000e+00> : vector<16x64xf32>
    %360 = tpu.matmul %357, %359, %cst_173 {dimension_numbers = #tpu.dot_dimension_numbers<[1], [0], [0], [1], [0, 0, 1, 1], [], []>} : vector<16x64xf32>, vector<64x64xf32>, vector<16x64xf32> -> vector<16x64xf32>
    %361 = vector.broadcast %358 : vector<1x64xf32> to vector<16x64xf32>
    %362 = arith.addf %360, %361 : vector<16x64xf32>
    %363 = arith.addf %362, %44 : vector<16x64xf32>
    %c8 = arith.constant 8 : index
    %c0_174 = arith.constant 0 : index
    %364 = vector.load %arg15[%c8, %c0_174] : memref<19x64xf32, #tpu.memory_space<vmem>>, vector<1x64xf32>
    %c9 = arith.constant 9 : index
    %c0_175 = arith.constant 0 : index
    %365 = vector.load %arg15[%c9, %c0_175] : memref<19x64xf32, #tpu.memory_space<vmem>>, vector<1x64xf32>
    %cst_176 = arith.constant dense<0.000000e+00> : vector<16xf32>
    %366 = vector.multi_reduction <add>, %363, %cst_176 [1] : vector<16x64xf32> to vector<16xf32>
    %367 = vector.shape_cast %366 : vector<16xf32> to vector<16x1xf32>
    %cst_177 = arith.constant 6.400000e+01 : f32
    %368 = vector.broadcast %cst_177 : f32 to vector<16x1xf32>
    %369 = arith.divf %367, %368 : vector<16x1xf32>
    %370 = vector.broadcast %369 : vector<16x1xf32> to vector<16x64xf32>
    %371 = arith.subf %363, %370 : vector<16x64xf32>
    %372 = arith.mulf %371, %371 : vector<16x64xf32>
    %cst_178 = arith.constant dense<0.000000e+00> : vector<16xf32>
    %373 = vector.multi_reduction <add>, %372, %cst_178 [1] : vector<16x64xf32> to vector<16xf32>
    %374 = vector.shape_cast %373 : vector<16xf32> to vector<16x1xf32>
    %cst_179 = arith.constant 6.400000e+01 : f32
    %375 = vector.broadcast %cst_179 : f32 to vector<16x1xf32>
    %376 = arith.divf %374, %375 : vector<16x1xf32>
    %377 = vector.broadcast %369 : vector<16x1xf32> to vector<16x64xf32>
    %378 = arith.subf %363, %377 : vector<16x64xf32>
    %cst_180 = arith.constant 9.99999974E-6 : f32
    %379 = vector.broadcast %cst_180 : f32 to vector<16x1xf32>
    %380 = arith.addf %376, %379 : vector<16x1xf32>
    %381 = math.rsqrt %380 : vector<16x1xf32>
    %382 = vector.broadcast %381 : vector<16x1xf32> to vector<16x64xf32>
    %383 = arith.mulf %378, %382 : vector<16x64xf32>
    %384 = vector.broadcast %364 : vector<1x64xf32> to vector<16x64xf32>
    %385 = arith.mulf %383, %384 : vector<16x64xf32>
    %386 = vector.broadcast %365 : vector<1x64xf32> to vector<16x64xf32>
    %387 = arith.addf %385, %386 : vector<16x64xf32>
    %c0_181 = arith.constant 0 : index
    %c0_182 = arith.constant 0 : index
    %388 = vector.load %arg17[%c0_181, %c0_182] : memref<1x128xf32, #tpu.memory_space<vmem>>, vector<1x128xf32>
    %c0_183 = arith.constant 0 : index
    %c0_184 = arith.constant 0 : index
    %389 = vector.load %arg10[%c0_183, %c0_184] : memref<64x128xf32, #tpu.memory_space<vmem>>, vector<64x128xf32>
    %cst_185 = arith.constant dense<0.000000e+00> : vector<16x128xf32>
    %390 = tpu.matmul %387, %389, %cst_185 {dimension_numbers = #tpu.dot_dimension_numbers<[1], [0], [0], [1], [0, 0, 1, 1], [], []>} : vector<16x64xf32>, vector<64x128xf32>, vector<16x128xf32> -> vector<16x128xf32>
    %391 = vector.broadcast %388 : vector<1x128xf32> to vector<16x128xf32>
    %392 = arith.addf %390, %391 : vector<16x128xf32>
    %393 = vector.extract_strided_slice %392 {offsets = [0, 0], sizes = [16, 64], strides = [1, 1]} : vector<16x128xf32> to vector<16x64xf32>
    %394 = vector.extract_strided_slice %392 {offsets = [0, 64], sizes = [16, 64], strides = [1, 1]} : vector<16x128xf32> to vector<16x64xf32>
    %395 = arith.negf %394 : vector<16x64xf32>
    %396 = math.exp %395 : vector<16x64xf32>
    %cst_186 = arith.constant 1.000000e+00 : f32
    %397 = vector.broadcast %cst_186 : f32 to vector<16x64xf32>
    %398 = arith.addf %397, %396 : vector<16x64xf32>
    %399 = arith.divf %397, %398 : vector<16x64xf32>
    %400 = arith.mulf %393, %399 : vector<16x64xf32>
    %cst_187 = arith.constant 0.000000e+00 : f32
    %401 = vector.broadcast %cst_187 : f32 to vector<2x2x64xf32>
    %c0_188 = arith.constant 0 : index
    %c0_189 = arith.constant 0 : index
    %c0_190 = arith.constant 0 : index
    %402 = vector.load %arg22[%c0_188, %c0_189, %c0_190] : memref<2x10x64xf32, #tpu.memory_space<vmem>>, vector<2x2x64xf32>
    tpu.vector_store %arg22[%c0_188, %c0_189, %c0_190], %401 {strides = array<i32>} : memref<2x10x64xf32, #tpu.memory_space<vmem>>, vector<2x2x64xf32>,
    %403 = vector.shape_cast %400 : vector<16x64xf32> to vector<2x8x64xf32>
    %c0_191 = arith.constant 0 : index
    %c2_192 = arith.constant 2 : index
    %c0_193 = arith.constant 0 : index
    %404 = vector.load %arg22[%c0_191, %c2_192, %c0_193] : memref<2x10x64xf32, #tpu.memory_space<vmem>>, vector<2x8x64xf32>
    tpu.vector_store %arg22[%c0_191, %c2_192, %c0_193], %403 {strides = array<i32>} : memref<2x10x64xf32, #tpu.memory_space<vmem>>, vector<2x8x64xf32>,
    %cst_194 = arith.constant 0.000000e+00 : f32
    %405 = vector.broadcast %cst_194 : f32 to vector<2x8x64xf32>
    %c0_195 = arith.constant 0 : index
    %c0_196 = arith.constant 0 : index
    %c0_197 = arith.constant 0 : index
    %406 = vector.load %arg22[%c0_195, %c0_196, %c0_197] : memref<2x10x64xf32, #tpu.memory_space<vmem>>, vector<2x8x64xf32>
    %c0_198 = arith.constant 0 : index
    %c0_199 = arith.constant 0 : index
    %407 = vector.load %arg11[%c0_198, %c0_199] : memref<3x64xf32, #tpu.memory_space<vmem>>, vector<1x64xf32>
    %408 = vector.shape_cast %407 : vector<1x64xf32> to vector<1x1x64xf32>
    %409 = vector.broadcast %408 : vector<1x1x64xf32> to vector<2x8x64xf32>
    %410 = arith.mulf %406, %409 : vector<2x8x64xf32>
    %411 = arith.addf %405, %410 : vector<2x8x64xf32>
    %c0_200 = arith.constant 0 : index
    %c1_201 = arith.constant 1 : index
    %c0_202 = arith.constant 0 : index
    %412 = vector.load %arg22[%c0_200, %c1_201, %c0_202] : memref<2x10x64xf32, #tpu.memory_space<vmem>>, vector<2x8x64xf32>
    %c1_203 = arith.constant 1 : index
    %c0_204 = arith.constant 0 : index
    %413 = vector.load %arg11[%c1_203, %c0_204] : memref<3x64xf32, #tpu.memory_space<vmem>>, vector<1x64xf32>
    %414 = vector.shape_cast %413 : vector<1x64xf32> to vector<1x1x64xf32>
    %415 = vector.broadcast %414 : vector<1x1x64xf32> to vector<2x8x64xf32>
    %416 = arith.mulf %412, %415 : vector<2x8x64xf32>
    %417 = arith.addf %411, %416 : vector<2x8x64xf32>
    %c0_205 = arith.constant 0 : index
    %c2_206 = arith.constant 2 : index
    %c0_207 = arith.constant 0 : index
    %418 = vector.load %arg22[%c0_205, %c2_206, %c0_207] : memref<2x10x64xf32, #tpu.memory_space<vmem>>, vector<2x8x64xf32>
    %c2_208 = arith.constant 2 : index
    %c0_209 = arith.constant 0 : index
    %419 = vector.load %arg11[%c2_208, %c0_209] : memref<3x64xf32, #tpu.memory_space<vmem>>, vector<1x64xf32>
    %420 = vector.shape_cast %419 : vector<1x64xf32> to vector<1x1x64xf32>
    %421 = vector.broadcast %420 : vector<1x1x64xf32> to vector<2x8x64xf32>
    %422 = arith.mulf %418, %421 : vector<2x8x64xf32>
    %423 = arith.addf %417, %422 : vector<2x8x64xf32>
    %c10 = arith.constant 10 : index
    %c0_210 = arith.constant 0 : index
    %424 = vector.load %arg15[%c10, %c0_210] : memref<19x64xf32, #tpu.memory_space<vmem>>, vector<1x64xf32>
    %425 = vector.shape_cast %424 : vector<1x64xf32> to vector<1x1x64xf32>
    %426 = vector.broadcast %425 : vector<1x1x64xf32> to vector<2x8x64xf32>
    %427 = arith.addf %423, %426 : vector<2x8x64xf32>
    %c11 = arith.constant 11 : index
    %c0_211 = arith.constant 0 : index
    %428 = vector.load %arg15[%c11, %c0_211] : memref<19x64xf32, #tpu.memory_space<vmem>>, vector<1x64xf32>
    %c12 = arith.constant 12 : index
    %c0_212 = arith.constant 0 : index
    %429 = vector.load %arg15[%c12, %c0_212] : memref<19x64xf32, #tpu.memory_space<vmem>>, vector<1x64xf32>
    %cst_213 = arith.constant dense<0.000000e+00> : vector<2x8xf32>
    %430 = vector.multi_reduction <add>, %427, %cst_213 [2] : vector<2x8x64xf32> to vector<2x8xf32>
    %431 = vector.shape_cast %430 : vector<2x8xf32> to vector<2x8x1xf32>
    %cst_214 = arith.constant 6.400000e+01 : f32
    %432 = vector.broadcast %cst_214 : f32 to vector<2x8x1xf32>
    %433 = arith.divf %431, %432 : vector<2x8x1xf32>
    %434 = vector.broadcast %433 : vector<2x8x1xf32> to vector<2x8x64xf32>
    %435 = arith.subf %427, %434 : vector<2x8x64xf32>
    %436 = arith.mulf %435, %435 : vector<2x8x64xf32>
    %cst_215 = arith.constant dense<0.000000e+00> : vector<2x8xf32>
    %437 = vector.multi_reduction <add>, %436, %cst_215 [2] : vector<2x8x64xf32> to vector<2x8xf32>
    %438 = vector.shape_cast %437 : vector<2x8xf32> to vector<2x8x1xf32>
    %cst_216 = arith.constant 6.400000e+01 : f32
    %439 = vector.broadcast %cst_216 : f32 to vector<2x8x1xf32>
    %440 = arith.divf %438, %439 : vector<2x8x1xf32>
    %441 = vector.broadcast %433 : vector<2x8x1xf32> to vector<2x8x64xf32>
    %442 = arith.subf %427, %441 : vector<2x8x64xf32>
    %cst_217 = arith.constant 9.99999974E-6 : f32
    %443 = vector.broadcast %cst_217 : f32 to vector<2x8x1xf32>
    %444 = arith.addf %440, %443 : vector<2x8x1xf32>
    %445 = math.rsqrt %444 : vector<2x8x1xf32>
    %446 = vector.broadcast %445 : vector<2x8x1xf32> to vector<2x8x64xf32>
    %447 = arith.mulf %442, %446 : vector<2x8x64xf32>
    %448 = vector.shape_cast %428 : vector<1x64xf32> to vector<1x1x64xf32>
    %449 = vector.broadcast %448 : vector<1x1x64xf32> to vector<2x8x64xf32>
    %450 = arith.mulf %447, %449 : vector<2x8x64xf32>
    %451 = vector.shape_cast %429 : vector<1x64xf32> to vector<1x1x64xf32>
    %452 = vector.broadcast %451 : vector<1x1x64xf32> to vector<2x8x64xf32>
    %453 = arith.addf %450, %452 : vector<2x8x64xf32>
    %454 = arith.negf %453 : vector<2x8x64xf32>
    %455 = math.exp %454 : vector<2x8x64xf32>
    %cst_218 = arith.constant 1.000000e+00 : f32
    %456 = vector.broadcast %cst_218 : f32 to vector<2x8x64xf32>
    %457 = arith.addf %456, %455 : vector<2x8x64xf32>
    %458 = arith.divf %456, %457 : vector<2x8x64xf32>
    %459 = arith.mulf %453, %458 : vector<2x8x64xf32>
    %460 = vector.shape_cast %459 : vector<2x8x64xf32> to vector<16x64xf32>
    %c13 = arith.constant 13 : index
    %c0_219 = arith.constant 0 : index
    %461 = vector.load %arg15[%c13, %c0_219] : memref<19x64xf32, #tpu.memory_space<vmem>>, vector<1x64xf32>
    %c0_220 = arith.constant 0 : index
    %c0_221 = arith.constant 0 : index
    %462 = vector.load %arg12[%c0_220, %c0_221] : memref<64x64xf32, #tpu.memory_space<vmem>>, vector<64x64xf32>
    %cst_222 = arith.constant dense<0.000000e+00> : vector<16x64xf32>
    %463 = tpu.matmul %460, %462, %cst_222 {dimension_numbers = #tpu.dot_dimension_numbers<[1], [0], [0], [1], [0, 0, 1, 1], [], []>} : vector<16x64xf32>, vector<64x64xf32>, vector<16x64xf32> -> vector<16x64xf32>
    %464 = vector.broadcast %461 : vector<1x64xf32> to vector<16x64xf32>
    %465 = arith.addf %463, %464 : vector<16x64xf32>
    %466 = arith.addf %363, %465 : vector<16x64xf32>
    %c14 = arith.constant 14 : index
    %c0_223 = arith.constant 0 : index
    %467 = vector.load %arg15[%c14, %c0_223] : memref<19x64xf32, #tpu.memory_space<vmem>>, vector<1x64xf32>
    %c15 = arith.constant 15 : index
    %c0_224 = arith.constant 0 : index
    %468 = vector.load %arg15[%c15, %c0_224] : memref<19x64xf32, #tpu.memory_space<vmem>>, vector<1x64xf32>
    %cst_225 = arith.constant dense<0.000000e+00> : vector<16xf32>
    %469 = vector.multi_reduction <add>, %466, %cst_225 [1] : vector<16x64xf32> to vector<16xf32>
    %470 = vector.shape_cast %469 : vector<16xf32> to vector<16x1xf32>
    %cst_226 = arith.constant 6.400000e+01 : f32
    %471 = vector.broadcast %cst_226 : f32 to vector<16x1xf32>
    %472 = arith.divf %470, %471 : vector<16x1xf32>
    %473 = vector.broadcast %472 : vector<16x1xf32> to vector<16x64xf32>
    %474 = arith.subf %466, %473 : vector<16x64xf32>
    %475 = arith.mulf %474, %474 : vector<16x64xf32>
    %cst_227 = arith.constant dense<0.000000e+00> : vector<16xf32>
    %476 = vector.multi_reduction <add>, %475, %cst_227 [1] : vector<16x64xf32> to vector<16xf32>
    %477 = vector.shape_cast %476 : vector<16xf32> to vector<16x1xf32>
    %cst_228 = arith.constant 6.400000e+01 : f32
    %478 = vector.broadcast %cst_228 : f32 to vector<16x1xf32>
    %479 = arith.divf %477, %478 : vector<16x1xf32>
    %480 = vector.broadcast %472 : vector<16x1xf32> to vector<16x64xf32>
    %481 = arith.subf %466, %480 : vector<16x64xf32>
    %cst_229 = arith.constant 9.99999974E-6 : f32
    %482 = vector.broadcast %cst_229 : f32 to vector<16x1xf32>
    %483 = arith.addf %479, %482 : vector<16x1xf32>
    %484 = math.rsqrt %483 : vector<16x1xf32>
    %485 = vector.broadcast %484 : vector<16x1xf32> to vector<16x64xf32>
    %486 = arith.mulf %481, %485 : vector<16x64xf32>
    %487 = vector.broadcast %467 : vector<1x64xf32> to vector<16x64xf32>
    %488 = arith.mulf %486, %487 : vector<16x64xf32>
    %489 = vector.broadcast %468 : vector<1x64xf32> to vector<16x64xf32>
    %490 = arith.addf %488, %489 : vector<16x64xf32>
    %c1_230 = arith.constant 1 : index
    %c0_231 = arith.constant 0 : index
    %491 = vector.load %arg16[%c1_230, %c0_231] : memref<2x128xf32, #tpu.memory_space<vmem>>, vector<1x128xf32>
    %c0_232 = arith.constant 0 : index
    %c0_233 = arith.constant 0 : index
    %492 = vector.load %arg13[%c0_232, %c0_233] : memref<64x128xf32, #tpu.memory_space<vmem>>, vector<64x128xf32>
    %cst_234 = arith.constant dense<0.000000e+00> : vector<16x128xf32>
    %493 = tpu.matmul %490, %492, %cst_234 {dimension_numbers = #tpu.dot_dimension_numbers<[1], [0], [0], [1], [0, 0, 1, 1], [], []>} : vector<16x64xf32>, vector<64x128xf32>, vector<16x128xf32> -> vector<16x128xf32>
    %494 = vector.broadcast %491 : vector<1x128xf32> to vector<16x128xf32>
    %495 = arith.addf %493, %494 : vector<16x128xf32>
    %496 = arith.negf %495 : vector<16x128xf32>
    %497 = math.exp %496 : vector<16x128xf32>
    %cst_235 = arith.constant 1.000000e+00 : f32
    %498 = vector.broadcast %cst_235 : f32 to vector<16x128xf32>
    %499 = arith.addf %498, %497 : vector<16x128xf32>
    %500 = arith.divf %498, %499 : vector<16x128xf32>
    %501 = arith.mulf %495, %500 : vector<16x128xf32>
    %c16_236 = arith.constant 16 : index
    %c0_237 = arith.constant 0 : index
    %502 = vector.load %arg15[%c16_236, %c0_237] : memref<19x64xf32, #tpu.memory_space<vmem>>, vector<1x64xf32>
    %c0_238 = arith.constant 0 : index
    %c0_239 = arith.constant 0 : index
    %503 = vector.load %arg14[%c0_238, %c0_239] : memref<128x64xf32, #tpu.memory_space<vmem>>, vector<128x64xf32>
    %cst_240 = arith.constant dense<0.000000e+00> : vector<16x64xf32>
    %504 = tpu.matmul %501, %503, %cst_240 {dimension_numbers = #tpu.dot_dimension_numbers<[1], [0], [0], [1], [0, 0, 1, 1], [], []>} : vector<16x128xf32>, vector<128x64xf32>, vector<16x64xf32> -> vector<16x64xf32>
    %505 = vector.broadcast %502 : vector<1x64xf32> to vector<16x64xf32>
    %506 = arith.addf %504, %505 : vector<16x64xf32>
    %cst_241 = arith.constant 5.000000e-01 : f32
    %507 = vector.broadcast %cst_241 : f32 to vector<16x64xf32>
    %508 = arith.mulf %507, %506 : vector<16x64xf32>
    %509 = arith.addf %466, %508 : vector<16x64xf32>
    %c17 = arith.constant 17 : index
    %c0_242 = arith.constant 0 : index
    %510 = vector.load %arg15[%c17, %c0_242] : memref<19x64xf32, #tpu.memory_space<vmem>>, vector<1x64xf32>
    %c18 = arith.constant 18 : index
    %c0_243 = arith.constant 0 : index
    %511 = vector.load %arg15[%c18, %c0_243] : memref<19x64xf32, #tpu.memory_space<vmem>>, vector<1x64xf32>
    %cst_244 = arith.constant dense<0.000000e+00> : vector<16xf32>
    %512 = vector.multi_reduction <add>, %509, %cst_244 [1] : vector<16x64xf32> to vector<16xf32>
    %513 = vector.shape_cast %512 : vector<16xf32> to vector<16x1xf32>
    %cst_245 = arith.constant 6.400000e+01 : f32
    %514 = vector.broadcast %cst_245 : f32 to vector<16x1xf32>
    %515 = arith.divf %513, %514 : vector<16x1xf32>
    %516 = vector.broadcast %515 : vector<16x1xf32> to vector<16x64xf32>
    %517 = arith.subf %509, %516 : vector<16x64xf32>
    %518 = arith.mulf %517, %517 : vector<16x64xf32>
    %cst_246 = arith.constant dense<0.000000e+00> : vector<16xf32>
    %519 = vector.multi_reduction <add>, %518, %cst_246 [1] : vector<16x64xf32> to vector<16xf32>
    %520 = vector.shape_cast %519 : vector<16xf32> to vector<16x1xf32>
    %cst_247 = arith.constant 6.400000e+01 : f32
    %521 = vector.broadcast %cst_247 : f32 to vector<16x1xf32>
    %522 = arith.divf %520, %521 : vector<16x1xf32>
    %523 = vector.broadcast %515 : vector<16x1xf32> to vector<16x64xf32>
    %524 = arith.subf %509, %523 : vector<16x64xf32>
    %cst_248 = arith.constant 9.99999974E-6 : f32
    %525 = vector.broadcast %cst_248 : f32 to vector<16x1xf32>
    %526 = arith.addf %522, %525 : vector<16x1xf32>
    %527 = math.rsqrt %526 : vector<16x1xf32>
    %528 = vector.broadcast %527 : vector<16x1xf32> to vector<16x64xf32>
    %529 = arith.mulf %524, %528 : vector<16x64xf32>
    %530 = vector.broadcast %510 : vector<1x64xf32> to vector<16x64xf32>
    %531 = arith.mulf %529, %530 : vector<16x64xf32>
    %532 = vector.broadcast %511 : vector<1x64xf32> to vector<16x64xf32>
    %533 = arith.addf %531, %532 : vector<16x64xf32>
    %534 = vector.shape_cast %533 : vector<16x64xf32> to vector<2x8x64xf32>
    %c0_249 = arith.constant 0 : index
    %c0_250 = arith.constant 0 : index
    %c0_251 = arith.constant 0 : index
    %535 = vector.load %arg18[%c0_249, %c0_250, %c0_251] : memref<2x8x64xf32, #tpu.memory_space<vmem>>, vector<2x8x64xf32>
    tpu.vector_store %arg18[%c0_249, %c0_250, %c0_251], %534 {strides = array<i32>} : memref<2x8x64xf32, #tpu.memory_space<vmem>>, vector<2x8x64xf32>,
    return
  }
  func.func @transform_0(%arg0: i32) -> (i32, i32, i32) {
    %c0_i32 = arith.constant 0 : i32
    %c0_i32_0 = arith.constant 0 : i32
    %c0_i32_1 = arith.constant 0 : i32
    return %arg0, %c0_i32, %c0_i32_0 : i32, i32, i32
  }
  func.func @transform_1(%arg0: i32) -> (i32, i32, i32) {
    %c0_i32 = arith.constant 0 : i32
    %c0_i32_0 = arith.constant 0 : i32
    %c0_i32_1 = arith.constant 0 : i32
    return %arg0, %c0_i32, %c0_i32_0 : i32, i32, i32
  }
  func.func @transform_2(%arg0: i32) -> (i32, i32) {
    %c0_i32 = arith.constant 0 : i32
    %c0_i32_0 = arith.constant 0 : i32
    %c0_i32_1 = arith.constant 0 : i32
    return %c0_i32, %c0_i32_0 : i32, i32
  }
  func.func @transform_3(%arg0: i32) -> (i32, i32) {
    %c0_i32 = arith.constant 0 : i32
    %c0_i32_0 = arith.constant 0 : i32
    %c0_i32_1 = arith.constant 0 : i32
    return %c0_i32, %c0_i32_0 : i32, i32
  }
  func.func @transform_4(%arg0: i32) -> (i32, i32) {
    %c0_i32 = arith.constant 0 : i32
    %c0_i32_0 = arith.constant 0 : i32
    %c0_i32_1 = arith.constant 0 : i32
    return %c0_i32, %c0_i32_0 : i32, i32
  }
  func.func @transform_5(%arg0: i32) -> (i32, i32) {
    %c0_i32 = arith.constant 0 : i32
    %c0_i32_0 = arith.constant 0 : i32
    %c0_i32_1 = arith.constant 0 : i32
    return %c0_i32, %c0_i32_0 : i32, i32
  }
  func.func @transform_6(%arg0: i32) -> (i32, i32) {
    %c0_i32 = arith.constant 0 : i32
    %c0_i32_0 = arith.constant 0 : i32
    %c0_i32_1 = arith.constant 0 : i32
    return %c0_i32, %c0_i32_0 : i32, i32
  }
  func.func @transform_7(%arg0: i32) -> (i32, i32) {
    %c0_i32 = arith.constant 0 : i32
    %c0_i32_0 = arith.constant 0 : i32
    %c0_i32_1 = arith.constant 0 : i32
    return %c0_i32, %c0_i32_0 : i32, i32
  }
  func.func @transform_8(%arg0: i32) -> (i32, i32) {
    %c0_i32 = arith.constant 0 : i32
    %c0_i32_0 = arith.constant 0 : i32
    %c0_i32_1 = arith.constant 0 : i32
    return %c0_i32, %c0_i32_0 : i32, i32
  }
  func.func @transform_9(%arg0: i32) -> (i32, i32) {
    %c0_i32 = arith.constant 0 : i32
    %c0_i32_0 = arith.constant 0 : i32
    %c0_i32_1 = arith.constant 0 : i32
    return %c0_i32, %c0_i32_0 : i32, i32
  }
  func.func @transform_10(%arg0: i32) -> (i32, i32) {
    %c0_i32 = arith.constant 0 : i32
    %c0_i32_0 = arith.constant 0 : i32
    %c0_i32_1 = arith.constant 0 : i32
    return %c0_i32, %c0_i32_0 : i32, i32
  }
  func.func @transform_11(%arg0: i32) -> (i32, i32) {
    %c0_i32 = arith.constant 0 : i32
    %c0_i32_0 = arith.constant 0 : i32
    %c0_i32_1 = arith.constant 0 : i32
    return %c0_i32, %c0_i32_0 : i32, i32
  }
  func.func @transform_12(%arg0: i32) -> (i32, i32) {
    %c0_i32 = arith.constant 0 : i32
    %c0_i32_0 = arith.constant 0 : i32
    %c0_i32_1 = arith.constant 0 : i32
    return %c0_i32, %c0_i32_0 : i32, i32
  }
  func.func @transform_13(%arg0: i32) -> (i32, i32) {
    %c0_i32 = arith.constant 0 : i32
    %c0_i32_0 = arith.constant 0 : i32
    %c0_i32_1 = arith.constant 0 : i32
    return %c0_i32, %c0_i32_0 : i32, i32
  }
  func.func @transform_14(%arg0: i32) -> (i32, i32) {
    %c0_i32 = arith.constant 0 : i32
    %c0_i32_0 = arith.constant 0 : i32
    %c0_i32_1 = arith.constant 0 : i32
    return %c0_i32, %c0_i32_0 : i32, i32
  }
  func.func @transform_15(%arg0: i32) -> (i32, i32) {
    %c0_i32 = arith.constant 0 : i32
    %c0_i32_0 = arith.constant 0 : i32
    %c0_i32_1 = arith.constant 0 : i32
    return %c0_i32, %c0_i32_0 : i32, i32
  }
  func.func @transform_16(%arg0: i32) -> (i32, i32) {
    %c0_i32 = arith.constant 0 : i32
    %c0_i32_0 = arith.constant 0 : i32
    %c0_i32_1 = arith.constant 0 : i32
    return %c0_i32, %c0_i32_0 : i32, i32
  }
  func.func @transform_17(%arg0: i32) -> (i32, i32, i32) {
    %c0_i32 = arith.constant 0 : i32
    %c0_i32_0 = arith.constant 0 : i32
    %c0_i32_1 = arith.constant 0 : i32
    return %arg0, %c0_i32, %c0_i32_0 : i32, i32, i32
  }
  func.func @transform_18(%arg0: i32) -> (i32, i32, i32, i32) {
    %c0_i32 = arith.constant 0 : i32
    %c0_i32_0 = arith.constant 0 : i32
    %c0_i32_1 = arith.constant 0 : i32
    %c0_i32_2 = arith.constant 0 : i32
    return %arg0, %c0_i32, %c0_i32_0, %c0_i32_1 : i32, i32, i32, i32
  }
}

module attributes {stable_mosaic.version = 11 : i64} {
  func.func @kernel(%arg0: i32, %arg1: memref<2x8x64xf32, #tpu.memory_space<vmem>>, %arg2: memref<2x12x64xf32, #tpu.memory_space<vmem>>, %arg3: memref<128x64xf32, #tpu.memory_space<vmem>>, %arg4: memref<64x128xf32, #tpu.memory_space<vmem>>, %arg5: memref<128x64xf32, #tpu.memory_space<vmem>>, %arg6: memref<64x64xf32, #tpu.memory_space<vmem>>, %arg7: memref<64x128xf32, #tpu.memory_space<vmem>>, %arg8: memref<64x64xf32, #tpu.memory_space<vmem>>, %arg9: memref<64x64xf32, #tpu.memory_space<vmem>>, %arg10: memref<64x128xf32, #tpu.memory_space<vmem>>, %arg11: memref<3x64xf32, #tpu.memory_space<vmem>>, %arg12: memref<64x64xf32, #tpu.memory_space<vmem>>, %arg13: memref<64x128xf32, #tpu.memory_space<vmem>>, %arg14: memref<128x64xf32, #tpu.memory_space<vmem>>, %arg15: memref<19x64xf32, #tpu.memory_space<vmem>>, %arg16: memref<2x128xf32, #tpu.memory_space<vmem>>, %arg17: memref<1x128xf32, #tpu.memory_space<vmem>>, %arg18: memref<2x8x64xf32, #tpu.memory_space<vmem>>, %arg19: memref<2x4x8x12xf32, #tpu.memory_space<vmem>>, %arg20: memref<2x12x128xf32, #tpu.memory_space<vmem>>, %arg21: memref<2x8x64xf32, #tpu.memory_space<vmem>>, %arg22: memref<2x10x64xf32, #tpu.memory_space<vmem>>) attributes {dimension_semantics = [#tpu.dimension_semantics<parallel>], iteration_bounds = array<i64: 2>, scalar_prefetch = 0 : i64, scratch_operands = 3 : i64, tpu.core_type = #tpu.core_type<tc>, window_params = [{transform_indices = @transform_0, window_bounds = array<i64: 2, 8, 64>}, {transform_indices = @transform_1, window_bounds = array<i64: 2, 12, 64>}, {pipeline_mode = #tpu.pipeline_mode<synchronous>, transform_indices = @transform_2, window_bounds = array<i64: 128, 64>}, {pipeline_mode = #tpu.pipeline_mode<synchronous>, transform_indices = @transform_3, window_bounds = array<i64: 64, 128>}, {pipeline_mode = #tpu.pipeline_mode<synchronous>, transform_indices = @transform_4, window_bounds = array<i64: 128, 64>}, {pipeline_mode = #tpu.pipeline_mode<synchronous>, transform_indices = @transform_5, window_bounds = array<i64: 64, 64>}, {pipeline_mode = #tpu.pipeline_mode<synchronous>, transform_indices = @transform_6, window_bounds = array<i64: 64, 128>}, {pipeline_mode = #tpu.pipeline_mode<synchronous>, transform_indices = @transform_7, window_bounds = array<i64: 64, 64>}, {pipeline_mode = #tpu.pipeline_mode<synchronous>, transform_indices = @transform_8, window_bounds = array<i64: 64, 64>}, {pipeline_mode = #tpu.pipeline_mode<synchronous>, transform_indices = @transform_9, window_bounds = array<i64: 64, 128>}, {pipeline_mode = #tpu.pipeline_mode<synchronous>, transform_indices = @transform_10, window_bounds = array<i64: 3, 64>}, {pipeline_mode = #tpu.pipeline_mode<synchronous>, transform_indices = @transform_11, window_bounds = array<i64: 64, 64>}, {pipeline_mode = #tpu.pipeline_mode<synchronous>, transform_indices = @transform_12, window_bounds = array<i64: 64, 128>}, {pipeline_mode = #tpu.pipeline_mode<synchronous>, transform_indices = @transform_13, window_bounds = array<i64: 128, 64>}, {pipeline_mode = #tpu.pipeline_mode<synchronous>, transform_indices = @transform_14, window_bounds = array<i64: 19, 64>}, {pipeline_mode = #tpu.pipeline_mode<synchronous>, transform_indices = @transform_15, window_bounds = array<i64: 2, 128>}, {pipeline_mode = #tpu.pipeline_mode<synchronous>, transform_indices = @transform_16, window_bounds = array<i64: 1, 128>}, {transform_indices = @transform_17, window_bounds = array<i64: 2, 8, 64>}, {transform_indices = @transform_18, window_bounds = array<i64: 2, 4, 8, 12>}]} {
    %c0 = arith.constant 0 : index
    %c0_0 = arith.constant 0 : index
    %c0_1 = arith.constant 0 : index
    %0 = vector.load %arg1[%c0, %c0_0, %c0_1] : memref<2x8x64xf32, #tpu.memory_space<vmem>>, vector<2x8x64xf32>
    %1 = vector.shape_cast %0 : vector<2x8x64xf32> to vector<16x64xf32>
    %c0_2 = arith.constant 0 : index
    %c0_3 = arith.constant 0 : index
    %2 = vector.load %arg15[%c0_2, %c0_3] : memref<19x64xf32, #tpu.memory_space<vmem>>, vector<1x64xf32>
    %c1 = arith.constant 1 : index
    %c0_4 = arith.constant 0 : index
    %3 = vector.load %arg15[%c1, %c0_4] : memref<19x64xf32, #tpu.memory_space<vmem>>, vector<1x64xf32>
    %cst = arith.constant dense<0.000000e+00> : vector<16xf32>
    %4 = vector.multi_reduction <add>, %1, %cst [1] : vector<16x64xf32> to vector<16xf32>
    %5 = vector.shape_cast %4 : vector<16xf32> to vector<16x1xf32>
    %cst_5 = arith.constant 6.400000e+01 : f32
    %6 = vector.broadcast %cst_5 : f32 to vector<16x1xf32>
    %7 = arith.divf %5, %6 : vector<16x1xf32>
    %8 = vector.broadcast %7 : vector<16x1xf32> to vector<16x64xf32>
    %9 = arith.subf %1, %8 : vector<16x64xf32>
    %10 = arith.mulf %9, %9 : vector<16x64xf32>
    %cst_6 = arith.constant dense<0.000000e+00> : vector<16xf32>
    %11 = vector.multi_reduction <add>, %10, %cst_6 [1] : vector<16x64xf32> to vector<16xf32>
    %12 = vector.shape_cast %11 : vector<16xf32> to vector<16x1xf32>
    %cst_7 = arith.constant 6.400000e+01 : f32
    %13 = vector.broadcast %cst_7 : f32 to vector<16x1xf32>
    %14 = arith.divf %12, %13 : vector<16x1xf32>
    %15 = vector.broadcast %7 : vector<16x1xf32> to vector<16x64xf32>
    %16 = arith.subf %1, %15 : vector<16x64xf32>
    %cst_8 = arith.constant 9.99999974E-6 : f32
    %17 = vector.broadcast %cst_8 : f32 to vector<16x1xf32>
    %18 = arith.addf %14, %17 : vector<16x1xf32>
    %19 = math.rsqrt %18 : vector<16x1xf32>
    %20 = vector.broadcast %19 : vector<16x1xf32> to vector<16x64xf32>
    %21 = arith.mulf %16, %20 : vector<16x64xf32>
    %22 = vector.broadcast %2 : vector<1x64xf32> to vector<16x64xf32>
    %23 = arith.mulf %21, %22 : vector<16x64xf32>
    %24 = vector.broadcast %3 : vector<1x64xf32> to vector<16x64xf32>
    %25 = arith.addf %23, %24 : vector<16x64xf32>
    %c0_9 = arith.constant 0 : index
    %c0_10 = arith.constant 0 : index
    %26 = vector.load %arg16[%c0_9, %c0_10] : memref<2x128xf32, #tpu.memory_space<vmem>>, vector<1x128xf32>
    %c0_11 = arith.constant 0 : index
    %c0_12 = arith.constant 0 : index
    %27 = vector.load %arg4[%c0_11, %c0_12] : memref<64x128xf32, #tpu.memory_space<vmem>>, vector<64x128xf32>
    %cst_13 = arith.constant dense<0.000000e+00> : vector<16x128xf32>
    %28 = tpu.matmul %25, %27, %cst_13 {dimension_numbers = #tpu.dot_dimension_numbers<[1], [0], [0], [1], [0, 0, 1, 1], [], []>} : vector<16x64xf32>, vector<64x128xf32>, vector<16x128xf32> -> vector<16x128xf32>
    %29 = vector.broadcast %26 : vector<1x128xf32> to vector<16x128xf32>
    %30 = arith.addf %28, %29 : vector<16x128xf32>
    %31 = arith.negf %30 : vector<16x128xf32>
    %32 = math.exp %31 : vector<16x128xf32>
    %cst_14 = arith.constant 1.000000e+00 : f32
    %33 = vector.broadcast %cst_14 : f32 to vector<16x128xf32>
    %34 = arith.addf %33, %32 : vector<16x128xf32>
    %35 = arith.divf %33, %34 : vector<16x128xf32>
    %36 = arith.mulf %30, %35 : vector<16x128xf32>
    %c2 = arith.constant 2 : index
    %c0_15 = arith.constant 0 : index
    %37 = vector.load %arg15[%c2, %c0_15] : memref<19x64xf32, #tpu.memory_space<vmem>>, vector<1x64xf32>
    %c0_16 = arith.constant 0 : index
    %c0_17 = arith.constant 0 : index
    %38 = vector.load %arg5[%c0_16, %c0_17] : memref<128x64xf32, #tpu.memory_space<vmem>>, vector<128x64xf32>
    %cst_18 = arith.constant dense<0.000000e+00> : vector<16x64xf32>
    %39 = tpu.matmul %36, %38, %cst_18 {dimension_numbers = #tpu.dot_dimension_numbers<[1], [0], [0], [1], [0, 0, 1, 1], [], []>} : vector<16x128xf32>, vector<128x64xf32>, vector<16x64xf32> -> vector<16x64xf32>
    %40 = vector.broadcast %37 : vector<1x64xf32> to vector<16x64xf32>
    %41 = arith.addf %39, %40 : vector<16x64xf32>
    %cst_19 = arith.constant 5.000000e-01 : f32
    %42 = vector.broadcast %cst_19 : f32 to vector<16x64xf32>
    %43 = arith.mulf %42, %41 : vector<16x64xf32>
    %44 = arith.addf %1, %43 : vector<16x64xf32>
    %c3 = arith.constant 3 : index
    %c0_20 = arith.constant 0 : index
    %45 = vector.load %arg15[%c3, %c0_20] : memref<19x64xf32, #tpu.memory_space<vmem>>, vector<1x64xf32>
    %c4 = arith.constant 4 : index
    %c0_21 = arith.constant 0 : index
    %46 = vector.load %arg15[%c4, %c0_21] : memref<19x64xf32, #tpu.memory_space<vmem>>, vector<1x64xf32>
    %cst_22 = arith.constant dense<0.000000e+00> : vector<16xf32>
    %47 = vector.multi_reduction <add>, %44, %cst_22 [1] : vector<16x64xf32> to vector<16xf32>
    %48 = vector.shape_cast %47 : vector<16xf32> to vector<16x1xf32>
    %cst_23 = arith.constant 6.400000e+01 : f32
    %49 = vector.broadcast %cst_23 : f32 to vector<16x1xf32>
    %50 = arith.divf %48, %49 : vector<16x1xf32>
    %51 = vector.broadcast %50 : vector<16x1xf32> to vector<16x64xf32>
    %52 = arith.subf %44, %51 : vector<16x64xf32>
    %53 = arith.mulf %52, %52 : vector<16x64xf32>
    %cst_24 = arith.constant dense<0.000000e+00> : vector<16xf32>
    %54 = vector.multi_reduction <add>, %53, %cst_24 [1] : vector<16x64xf32> to vector<16xf32>
    %55 = vector.shape_cast %54 : vector<16xf32> to vector<16x1xf32>
    %cst_25 = arith.constant 6.400000e+01 : f32
    %56 = vector.broadcast %cst_25 : f32 to vector<16x1xf32>
    %57 = arith.divf %55, %56 : vector<16x1xf32>
    %58 = vector.broadcast %50 : vector<16x1xf32> to vector<16x64xf32>
    %59 = arith.subf %44, %58 : vector<16x64xf32>
    %cst_26 = arith.constant 9.99999974E-6 : f32
    %60 = vector.broadcast %cst_26 : f32 to vector<16x1xf32>
    %61 = arith.addf %57, %60 : vector<16x1xf32>
    %62 = math.rsqrt %61 : vector<16x1xf32>
    %63 = vector.broadcast %62 : vector<16x1xf32> to vector<16x64xf32>
    %64 = arith.mulf %59, %63 : vector<16x64xf32>
    %65 = vector.broadcast %45 : vector<1x64xf32> to vector<16x64xf32>
    %66 = arith.mulf %64, %65 : vector<16x64xf32>
    %67 = vector.broadcast %46 : vector<1x64xf32> to vector<16x64xf32>
    %68 = arith.addf %66, %67 : vector<16x64xf32>
    %c0_27 = arith.constant 0 : index
    %c0_28 = arith.constant 0 : index
    %69 = vector.load %arg6[%c0_27, %c0_28] : memref<64x64xf32, #tpu.memory_space<vmem>>, vector<64x64xf32>
    %cst_29 = arith.constant dense<0.000000e+00> : vector<16x64xf32>
    %70 = tpu.matmul %68, %69, %cst_29 {dimension_numbers = #tpu.dot_dimension_numbers<[1], [0], [0], [1], [0, 0, 1, 1], [], []>} : vector<16x64xf32>, vector<64x64xf32>, vector<16x64xf32> -> vector<16x64xf32>
    %c0_30 = arith.constant 0 : index
    %c0_31 = arith.constant 0 : index
    %71 = vector.load %arg3[%c0_30, %c0_31] : memref<128x64xf32, #tpu.memory_space<vmem>>, vector<128x64xf32>
    %c0_32 = arith.constant 0 : index
    %c0_33 = arith.constant 0 : index
    %72 = vector.load %arg8[%c0_32, %c0_33] : memref<64x64xf32, #tpu.memory_space<vmem>>, vector<64x64xf32>
    %cst_34 = arith.constant dense<0.000000e+00> : vector<128x64xf32>
    %73 = tpu.matmul %71, %72, %cst_34 {dimension_numbers = #tpu.dot_dimension_numbers<[1], [0], [0], [1], [0, 0, 1, 1], [], []>} : vector<128x64xf32>, vector<64x64xf32>, vector<128x64xf32> -> vector<128x64xf32>
    %c0_35 = arith.constant 0 : index
    %c0_36 = arith.constant 0 : index
    %c0_37 = arith.constant 0 : index
    %74 = vector.load %arg2[%c0_35, %c0_36, %c0_37] : memref<2x12x64xf32, #tpu.memory_space<vmem>>, vector<1x12x64xf32>
    %75 = vector.shape_cast %74 : vector<1x12x64xf32> to vector<12x64xf32>
    %c0_38 = arith.constant 0 : index
    %c0_39 = arith.constant 0 : index
    %76 = vector.load %arg7[%c0_38, %c0_39] : memref<64x128xf32, #tpu.memory_space<vmem>>, vector<64x128xf32>
    %cst_40 = arith.constant dense<0.000000e+00> : vector<12x128xf32>
    %77 = tpu.matmul %75, %76, %cst_40 {dimension_numbers = #tpu.dot_dimension_numbers<[1], [0], [0], [1], [0, 0, 1, 1], [], []>} : vector<12x64xf32>, vector<64x128xf32>, vector<12x128xf32> -> vector<12x128xf32>
    %c0_41 = arith.constant 0 : index
    %c0_42 = arith.constant 0 : index
    %c0_43 = arith.constant 0 : index
    %78 = vector.load %arg20[%c0_41, %c0_42, %c0_43] : memref<2x12x128xf32, #tpu.memory_space<vmem>>, vector<1x12x128xf32>
    %79 = vector.shape_cast %78 : vector<1x12x128xf32> to vector<12x128xf32>
    %80 = vector.shape_cast %77 : vector<12x128xf32> to vector<1x12x128xf32>
    tpu.vector_store %arg20[%c0_41, %c0_42, %c0_43], %80 {strides = array<i32>} : memref<2x12x128xf32, #tpu.memory_space<vmem>>, vector<1x12x128xf32>,
    %c1_44 = arith.constant 1 : index
    %c0_45 = arith.constant 0 : index
    %c0_46 = arith.constant 0 : index
    %81 = vector.load %arg2[%c1_44, %c0_45, %c0_46] : memref<2x12x64xf32, #tpu.memory_space<vmem>>, vector<1x12x64xf32>
    %82 = vector.shape_cast %81 : vector<1x12x64xf32> to vector<12x64xf32>
    %c0_47 = arith.constant 0 : index
    %c0_48 = arith.constant 0 : index
    %83 = vector.load %arg7[%c0_47, %c0_48] : memref<64x128xf32, #tpu.memory_space<vmem>>, vector<64x128xf32>
    %cst_49 = arith.constant dense<0.000000e+00> : vector<12x128xf32>
    %84 = tpu.matmul %82, %83, %cst_49 {dimension_numbers = #tpu.dot_dimension_numbers<[1], [0], [0], [1], [0, 0, 1, 1], [], []>} : vector<12x64xf32>, vector<64x128xf32>, vector<12x128xf32> -> vector<12x128xf32>
    %c1_50 = arith.constant 1 : index
    %c0_51 = arith.constant 0 : index
    %c0_52 = arith.constant 0 : index
    %85 = vector.load %arg20[%c1_50, %c0_51, %c0_52] : memref<2x12x128xf32, #tpu.memory_space<vmem>>, vector<1x12x128xf32>
    %86 = vector.shape_cast %85 : vector<1x12x128xf32> to vector<12x128xf32>
    %87 = vector.shape_cast %84 : vector<12x128xf32> to vector<1x12x128xf32>
    tpu.vector_store %arg20[%c1_50, %c0_51, %c0_52], %87 {strides = array<i32>} : memref<2x12x128xf32, #tpu.memory_space<vmem>>, vector<1x12x128xf32>,
    %88 = vector.shape_cast %70 : vector<16x64xf32> to vector<2x8x64xf32>
    %c5 = arith.constant 5 : index
    %c0_53 = arith.constant 0 : index
    %89 = vector.load %arg15[%c5, %c0_53] : memref<19x64xf32, #tpu.memory_space<vmem>>, vector<1x64xf32>
    %90 = vector.shape_cast %89 : vector<1x64xf32> to vector<1x1x64xf32>
    %91 = vector.broadcast %90 : vector<1x1x64xf32> to vector<2x8x64xf32>
    %92 = arith.addf %88, %91 : vector<2x8x64xf32>
    %c6 = arith.constant 6 : index
    %c0_54 = arith.constant 0 : index
    %93 = vector.load %arg15[%c6, %c0_54] : memref<19x64xf32, #tpu.memory_space<vmem>>, vector<1x64xf32>
    %94 = vector.broadcast %93 : vector<1x64xf32> to vector<16x64xf32>
    %95 = arith.addf %70, %94 : vector<16x64xf32>
    %96 = tpu.iota {dimensions = array<i32: 0>} : vector<8x12xi32>
    %97 = tpu.iota {dimensions = array<i32: 1>} : vector<8x12xi32>
    %98 = arith.subi %97, %96 : vector<8x12xi32>
    %c4_i32 = arith.constant 4 : i32
    %99 = vector.broadcast %c4_i32 : i32 to vector<8x12xi32>
    %100 = arith.cmpi sle, %98, %99 : vector<8x12xi32>
    %101 = tpu.iota {dimensions = array<i32: 0>} : vector<16x1xi32>
    %c8_i32 = arith.constant 8 : i32
    %c0_i32 = arith.constant 0 : i32
    %102 = arith.cmpi eq, %c8_i32, %c0_i32 : i32
    %c1_i32 = arith.constant 1 : i32
    %103 = arith.select %102, %c1_i32, %c8_i32 : i32
    %104 = vector.broadcast %103 : i32 to vector<16x1xi32>
    %105 = arith.remsi %101, %104 : vector<16x1xi32>
    %c0_i32_55 = arith.constant 0 : i32
    %106 = vector.broadcast %c0_i32_55 : i32 to vector<16x1xi32>
    %107 = arith.cmpi ne, %105, %106 : vector<16x1xi32>
    %c0_i32_56 = arith.constant 0 : i32
    %108 = vector.broadcast %c0_i32_56 : i32 to vector<16x1xi32>
    %109 = arith.cmpi slt, %105, %108 : vector<16x1xi32>
    %c0_i32_57 = arith.constant 0 : i32
    %110 = arith.cmpi slt, %103, %c0_i32_57 : i32
    %111 = vector.broadcast %110 : i1 to vector<16x1xi1>
    %112 = vector.broadcast %111 : vector<16x1xi1> to vector<16x1xi1>
    %113 = arith.xori %109, %112 : vector<16x1xi1>
    %114 = arith.andi %113, %107 : vector<16x1xi1>
    %115 = vector.broadcast %103 : i32 to vector<16x1xi32>
    %116 = arith.addi %105, %115 : vector<16x1xi32>
    %117 = arith.select %114, %116, %105 : vector<16x1xi1>, vector<16x1xi32>
    %c7_i32 = arith.constant 7 : i32
    %118 = vector.broadcast %c7_i32 : i32 to vector<16x1xi32>
    %119 = arith.subi %118, %117 : vector<16x1xi32>
    %c0_58 = arith.constant 0 : index
    %c0_59 = arith.constant 0 : index
    %c0_60 = arith.constant 0 : index
    %120 = vector.load %arg20[%c0_58, %c0_59, %c0_60] : memref<2x12x128xf32, #tpu.memory_space<vmem>>, vector<2x12x16xf32>
    %c0_61 = arith.constant 0 : index
    %c0_62 = arith.constant 0 : index
    %c64 = arith.constant 64 : index
    %121 = vector.load %arg20[%c0_61, %c0_62, %c64] : memref<2x12x128xf32, #tpu.memory_space<vmem>>, vector<2x12x16xf32>
    %122 = vector.extract_strided_slice %92 {offsets = [0, 0, 0], sizes = [2, 8, 16], strides = [1, 1, 1]} : vector<2x8x64xf32> to vector<2x8x16xf32>
    "tpu.trace_start"() <{level = 10 : i32, message = "bqd,bkd->bqk"}> : () -> ()
    %cst_63 = arith.constant dense<0.000000e+00> : vector<2x8x12xf32>
    %123 = tpu.matmul %122, %120, %cst_63 {dimension_numbers = #tpu.dot_dimension_numbers<[2], [2], [1], [1], [0, 0, 0, 1, 1, 1], [0], [0]>} : vector<2x8x16xf32>, vector<2x12x16xf32>, vector<2x8x12xf32> -> vector<2x8x12xf32>
    "tpu.trace_stop"() : () -> ()
    %124 = vector.extract_strided_slice %95 {offsets = [0, 0], sizes = [16, 16], strides = [1, 1]} : vector<16x64xf32> to vector<16x16xf32>
    %125 = vector.extract_strided_slice %73 {offsets = [0, 0], sizes = [128, 16], strides = [1, 1]} : vector<128x64xf32> to vector<128x16xf32>
    %cst_64 = arith.constant dense<0.000000e+00> : vector<16x128xf32>
    %126 = tpu.matmul %124, %125, %cst_64 {dimension_numbers = #tpu.dot_dimension_numbers<[1], [1], [0], [0], [0, 0, 1, 0], [], []>} : vector<16x16xf32>, vector<128x16xf32>, vector<16x128xf32> -> vector<16x128xf32>
    %c127_i32 = arith.constant 127 : i32
    %127 = tpu.dynamic_rotate %126 by %c127_i32 dim 1 : vector<16x128xf32>, i32 -> vector<16x128xf32>
    %c1_i32_65 = arith.constant 1 : i32
    %128 = vector.broadcast %c1_i32_65 : i32 to vector<16x1xi32>
    %129 = arith.andi %119, %128 : vector<16x1xi32>
    %c0_i32_66 = arith.constant 0 : i32
    %130 = vector.broadcast %c0_i32_66 : i32 to vector<16x1xi32>
    %131 = arith.cmpi sgt, %129, %130 : vector<16x1xi32>
    %132 = vector.shape_cast %131 : vector<16x1xi1> to vector<16x1xi1>
    %133 = vector.broadcast %132 : vector<16x1xi1> to vector<16x128xi1>
    %134 = arith.select %133, %127, %126 : vector<16x128xi1>, vector<16x128xf32>
    %c126_i32 = arith.constant 126 : i32
    %135 = tpu.dynamic_rotate %134 by %c126_i32 dim 1 : vector<16x128xf32>, i32 -> vector<16x128xf32>
    %c2_i32 = arith.constant 2 : i32
    %136 = vector.broadcast %c2_i32 : i32 to vector<16x1xi32>
    %137 = arith.andi %119, %136 : vector<16x1xi32>
    %c0_i32_67 = arith.constant 0 : i32
    %138 = vector.broadcast %c0_i32_67 : i32 to vector<16x1xi32>
    %139 = arith.cmpi sgt, %137, %138 : vector<16x1xi32>
    %140 = vector.shape_cast %139 : vector<16x1xi1> to vector<16x1xi1>
    %141 = vector.broadcast %140 : vector<16x1xi1> to vector<16x128xi1>
    %142 = arith.select %141, %135, %134 : vector<16x128xi1>, vector<16x128xf32>
    %c124_i32 = arith.constant 124 : i32
    %143 = tpu.dynamic_rotate %142 by %c124_i32 dim 1 : vector<16x128xf32>, i32 -> vector<16x128xf32>
    %c4_i32_68 = arith.constant 4 : i32
    %144 = vector.broadcast %c4_i32_68 : i32 to vector<16x1xi32>
    %145 = arith.andi %119, %144 : vector<16x1xi32>
    %c0_i32_69 = arith.constant 0 : i32
    %146 = vector.broadcast %c0_i32_69 : i32 to vector<16x1xi32>
    %147 = arith.cmpi sgt, %145, %146 : vector<16x1xi32>
    %148 = vector.shape_cast %147 : vector<16x1xi1> to vector<16x1xi1>
    %149 = vector.broadcast %148 : vector<16x1xi1> to vector<16x128xi1>
    %150 = arith.select %149, %143, %142 : vector<16x128xi1>, vector<16x128xf32>
    %151 = vector.shape_cast %150 : vector<16x128xf32> to vector<2x8x128xf32>
    %152 = vector.extract_strided_slice %151 {offsets = [0, 0, 0], sizes = [2, 8, 12], strides = [1, 1, 1]} : vector<2x8x128xf32> to vector<2x8x12xf32>
    %cst_70 = arith.constant 0.000000e+00 : f32
    %153 = vector.shape_cast %100 : vector<8x12xi1> to vector<1x8x12xi1>
    %154 = vector.broadcast %153 : vector<1x8x12xi1> to vector<2x8x12xi1>
    %155 = vector.broadcast %cst_70 : f32 to vector<2x8x12xf32>
    %156 = arith.select %154, %152, %155 : vector<2x8x12xi1>, vector<2x8x12xf32>
    %157 = arith.addf %123, %156 : vector<2x8x12xf32>
    %cst_71 = arith.constant 1.250000e-01 : f32
    %158 = vector.broadcast %cst_71 : f32 to vector<2x8x12xf32>
    %159 = arith.mulf %157, %158 : vector<2x8x12xf32>
    %cst_72 = arith.constant dense<0xFF800000> : vector<2x8xf32>
    %160 = vector.multi_reduction <maximumf>, %159, %cst_72 [2] : vector<2x8x12xf32> to vector<2x8xf32>
    %161 = vector.shape_cast %160 : vector<2x8xf32> to vector<2x8x1xf32>
    %162 = vector.broadcast %161 : vector<2x8x1xf32> to vector<2x8x12xf32>
    %163 = arith.subf %159, %162 : vector<2x8x12xf32>
    %164 = math.exp %163 : vector<2x8x12xf32>
    %cst_73 = arith.constant dense<0.000000e+00> : vector<2x8xf32>
    %165 = vector.multi_reduction <add>, %164, %cst_73 [2] : vector<2x8x12xf32> to vector<2x8xf32>
    %166 = vector.shape_cast %165 : vector<2x8xf32> to vector<2x8x1xf32>
    %167 = tpu.reciprocal %166 {approx = true} : vector<2x8x1xf32> -> vector<2x8x1xf32>
    %168 = arith.mulf %166, %167 : vector<2x8x1xf32>
    %cst_74 = arith.constant 2.000000e+00 : f32
    %169 = vector.broadcast %cst_74 : f32 to vector<2x8x1xf32>
    %170 = arith.subf %169, %168 : vector<2x8x1xf32>
    %171 = arith.mulf %167, %170 : vector<2x8x1xf32>
    %172 = vector.broadcast %171 : vector<2x8x1xf32> to vector<2x8x12xf32>
    %173 = arith.mulf %164, %172 : vector<2x8x12xf32>
    %c0_75 = arith.constant 0 : index
    %c0_76 = arith.constant 0 : index
    %c0_77 = arith.constant 0 : index
    %c0_78 = arith.constant 0 : index
    %174 = vector.load %arg19[%c0_75, %c0_76, %c0_77, %c0_78] : memref<2x4x8x12xf32, #tpu.memory_space<vmem>>, vector<2x1x8x12xf32>
    %175 = vector.shape_cast %174 : vector<2x1x8x12xf32> to vector<2x8x12xf32>
    %176 = vector.shape_cast %173 : vector<2x8x12xf32> to vector<2x1x8x12xf32>
    tpu.vector_store %arg19[%c0_75, %c0_76, %c0_77, %c0_78], %176 {strides = array<i32>} : memref<2x4x8x12xf32, #tpu.memory_space<vmem>>, vector<2x1x8x12xf32>,
    "tpu.trace_start"() <{level = 10 : i32, message = "bqk,bkd->bqd"}> : () -> ()
    %cst_79 = arith.constant dense<0.000000e+00> : vector<2x8x16xf32>
    %177 = tpu.matmul %173, %121, %cst_79 {dimension_numbers = #tpu.dot_dimension_numbers<[2], [1], [1], [2], [0, 0, 0, 1, 1, 2], [0], [0]>} : vector<2x8x12xf32>, vector<2x12x16xf32>, vector<2x8x16xf32> -> vector<2x8x16xf32>
    "tpu.trace_stop"() : () -> ()
    %c0_80 = arith.constant 0 : index
    %c0_81 = arith.constant 0 : index
    %c0_82 = arith.constant 0 : index
    %178 = vector.load %arg21[%c0_80, %c0_81, %c0_82] : memref<2x8x64xf32, #tpu.memory_space<vmem>>, vector<2x8x16xf32>
    tpu.vector_store %arg21[%c0_80, %c0_81, %c0_82], %177 {strides = array<i32>} : memref<2x8x64xf32, #tpu.memory_space<vmem>>, vector<2x8x16xf32>,
    %c0_83 = arith.constant 0 : index
    %c0_84 = arith.constant 0 : index
    %c16 = arith.constant 16 : index
    %179 = vector.load %arg20[%c0_83, %c0_84, %c16] : memref<2x12x128xf32, #tpu.memory_space<vmem>>, vector<2x12x16xf32>
    %c0_85 = arith.constant 0 : index
    %c0_86 = arith.constant 0 : index
    %c80 = arith.constant 80 : index
    %180 = vector.load %arg20[%c0_85, %c0_86, %c80] : memref<2x12x128xf32, #tpu.memory_space<vmem>>, vector<2x12x16xf32>
    %181 = vector.extract_strided_slice %92 {offsets = [0, 0, 16], sizes = [2, 8, 16], strides = [1, 1, 1]} : vector<2x8x64xf32> to vector<2x8x16xf32>
    "tpu.trace_start"() <{level = 10 : i32, message = "bqd,bkd->bqk"}> : () -> ()
    %cst_87 = arith.constant dense<0.000000e+00> : vector<2x8x12xf32>
    %182 = tpu.matmul %181, %179, %cst_87 {dimension_numbers = #tpu.dot_dimension_numbers<[2], [2], [1], [1], [0, 0, 0, 1, 1, 1], [0], [0]>} : vector<2x8x16xf32>, vector<2x12x16xf32>, vector<2x8x12xf32> -> vector<2x8x12xf32>
    "tpu.trace_stop"() : () -> ()
    %183 = vector.extract_strided_slice %95 {offsets = [0, 16], sizes = [16, 16], strides = [1, 1]} : vector<16x64xf32> to vector<16x16xf32>
    %184 = vector.extract_strided_slice %73 {offsets = [0, 16], sizes = [128, 16], strides = [1, 1]} : vector<128x64xf32> to vector<128x16xf32>
    %cst_88 = arith.constant dense<0.000000e+00> : vector<16x128xf32>
    %185 = tpu.matmul %183, %184, %cst_88 {dimension_numbers = #tpu.dot_dimension_numbers<[1], [1], [0], [0], [0, 0, 1, 0], [], []>} : vector<16x16xf32>, vector<128x16xf32>, vector<16x128xf32> -> vector<16x128xf32>
    %c127_i32_89 = arith.constant 127 : i32
    %186 = tpu.dynamic_rotate %185 by %c127_i32_89 dim 1 : vector<16x128xf32>, i32 -> vector<16x128xf32>
    %c1_i32_90 = arith.constant 1 : i32
    %187 = vector.broadcast %c1_i32_90 : i32 to vector<16x1xi32>
    %188 = arith.andi %119, %187 : vector<16x1xi32>
    %c0_i32_91 = arith.constant 0 : i32
    %189 = vector.broadcast %c0_i32_91 : i32 to vector<16x1xi32>
    %190 = arith.cmpi sgt, %188, %189 : vector<16x1xi32>
    %191 = vector.shape_cast %190 : vector<16x1xi1> to vector<16x1xi1>
    %192 = vector.broadcast %191 : vector<16x1xi1> to vector<16x128xi1>
    %193 = arith.select %192, %186, %185 : vector<16x128xi1>, vector<16x128xf32>
    %c126_i32_92 = arith.constant 126 : i32
    %194 = tpu.dynamic_rotate %193 by %c126_i32_92 dim 1 : vector<16x128xf32>, i32 -> vector<16x128xf32>
    %c2_i32_93 = arith.constant 2 : i32
    %195 = vector.broadcast %c2_i32_93 : i32 to vector<16x1xi32>
    %196 = arith.andi %119, %195 : vector<16x1xi32>
    %c0_i32_94 = arith.constant 0 : i32
    %197 = vector.broadcast %c0_i32_94 : i32 to vector<16x1xi32>
    %198 = arith.cmpi sgt, %196, %197 : vector<16x1xi32>
    %199 = vector.shape_cast %198 : vector<16x1xi1> to vector<16x1xi1>
    %200 = vector.broadcast %199 : vector<16x1xi1> to vector<16x128xi1>
    %201 = arith.select %200, %194, %193 : vector<16x128xi1>, vector<16x128xf32>
    %c124_i32_95 = arith.constant 124 : i32
    %202 = tpu.dynamic_rotate %201 by %c124_i32_95 dim 1 : vector<16x128xf32>, i32 -> vector<16x128xf32>
    %c4_i32_96 = arith.constant 4 : i32
    %203 = vector.broadcast %c4_i32_96 : i32 to vector<16x1xi32>
    %204 = arith.andi %119, %203 : vector<16x1xi32>
    %c0_i32_97 = arith.constant 0 : i32
    %205 = vector.broadcast %c0_i32_97 : i32 to vector<16x1xi32>
    %206 = arith.cmpi sgt, %204, %205 : vector<16x1xi32>
    %207 = vector.shape_cast %206 : vector<16x1xi1> to vector<16x1xi1>
    %208 = vector.broadcast %207 : vector<16x1xi1> to vector<16x128xi1>
    %209 = arith.select %208, %202, %201 : vector<16x128xi1>, vector<16x128xf32>
    %210 = vector.shape_cast %209 : vector<16x128xf32> to vector<2x8x128xf32>
    %211 = vector.extract_strided_slice %210 {offsets = [0, 0, 0], sizes = [2, 8, 12], strides = [1, 1, 1]} : vector<2x8x128xf32> to vector<2x8x12xf32>
    %cst_98 = arith.constant 0.000000e+00 : f32
    %212 = vector.shape_cast %100 : vector<8x12xi1> to vector<1x8x12xi1>
    %213 = vector.broadcast %212 : vector<1x8x12xi1> to vector<2x8x12xi1>
    %214 = vector.broadcast %cst_98 : f32 to vector<2x8x12xf32>
    %215 = arith.select %213, %211, %214 : vector<2x8x12xi1>, vector<2x8x12xf32>
    %216 = arith.addf %182, %215 : vector<2x8x12xf32>
    %cst_99 = arith.constant 1.250000e-01 : f32
    %217 = vector.broadcast %cst_99 : f32 to vector<2x8x12xf32>
    %218 = arith.mulf %216, %217 : vector<2x8x12xf32>
    %cst_100 = arith.constant dense<0xFF800000> : vector<2x8xf32>
    %219 = vector.multi_reduction <maximumf>, %218, %cst_100 [2] : vector<2x8x12xf32> to vector<2x8xf32>
    %220 = vector.shape_cast %219 : vector<2x8xf32> to vector<2x8x1xf32>
    %221 = vector.broadcast %220 : vector<2x8x1xf32> to vector<2x8x12xf32>
    %222 = arith.subf %218, %221 : vector<2x8x12xf32>
    %223 = math.exp %222 : vector<2x8x12xf32>
    %cst_101 = arith.constant dense<0.000000e+00> : vector<2x8xf32>
    %224 = vector.multi_reduction <add>, %223, %cst_101 [2] : vector<2x8x12xf32> to vector<2x8xf32>
    %225 = vector.shape_cast %224 : vector<2x8xf32> to vector<2x8x1xf32>
    %226 = tpu.reciprocal %225 {approx = true} : vector<2x8x1xf32> -> vector<2x8x1xf32>
    %227 = arith.mulf %225, %226 : vector<2x8x1xf32>
    %cst_102 = arith.constant 2.000000e+00 : f32
    %228 = vector.broadcast %cst_102 : f32 to vector<2x8x1xf32>
    %229 = arith.subf %228, %227 : vector<2x8x1xf32>
    %230 = arith.mulf %226, %229 : vector<2x8x1xf32>
    %231 = vector.broadcast %230 : vector<2x8x1xf32> to vector<2x8x12xf32>
    %232 = arith.mulf %223, %231 : vector<2x8x12xf32>
    %c0_103 = arith.constant 0 : index
    %c1_104 = arith.constant 1 : index
    %c0_105 = arith.constant 0 : index
    %c0_106 = arith.constant 0 : index
    %233 = vector.load %arg19[%c0_103, %c1_104, %c0_105, %c0_106] : memref<2x4x8x12xf32, #tpu.memory_space<vmem>>, vector<2x1x8x12xf32>
    %234 = vector.shape_cast %233 : vector<2x1x8x12xf32> to vector<2x8x12xf32>
    %235 = vector.shape_cast %232 : vector<2x8x12xf32> to vector<2x1x8x12xf32>
    tpu.vector_store %arg19[%c0_103, %c1_104, %c0_105, %c0_106], %235 {strides = array<i32>} : memref<2x4x8x12xf32, #tpu.memory_space<vmem>>, vector<2x1x8x12xf32>,
    "tpu.trace_start"() <{level = 10 : i32, message = "bqk,bkd->bqd"}> : () -> ()
    %cst_107 = arith.constant dense<0.000000e+00> : vector<2x8x16xf32>
    %236 = tpu.matmul %232, %180, %cst_107 {dimension_numbers = #tpu.dot_dimension_numbers<[2], [1], [1], [2], [0, 0, 0, 1, 1, 2], [0], [0]>} : vector<2x8x12xf32>, vector<2x12x16xf32>, vector<2x8x16xf32> -> vector<2x8x16xf32>
    "tpu.trace_stop"() : () -> ()
    %c0_108 = arith.constant 0 : index
    %c0_109 = arith.constant 0 : index
    %c16_110 = arith.constant 16 : index
    %237 = vector.load %arg21[%c0_108, %c0_109, %c16_110] : memref<2x8x64xf32, #tpu.memory_space<vmem>>, vector<2x8x16xf32>
    tpu.vector_store %arg21[%c0_108, %c0_109, %c16_110], %236 {strides = array<i32>} : memref<2x8x64xf32, #tpu.memory_space<vmem>>, vector<2x8x16xf32>,
    %c0_111 = arith.constant 0 : index
    %c0_112 = arith.constant 0 : index
    %c32 = arith.constant 32 : index
    %238 = vector.load %arg20[%c0_111, %c0_112, %c32] : memref<2x12x128xf32, #tpu.memory_space<vmem>>, vector<2x12x16xf32>
    %c0_113 = arith.constant 0 : index
    %c0_114 = arith.constant 0 : index
    %c96 = arith.constant 96 : index
    %239 = vector.load %arg20[%c0_113, %c0_114, %c96] : memref<2x12x128xf32, #tpu.memory_space<vmem>>, vector<2x12x16xf32>
    %240 = vector.extract_strided_slice %92 {offsets = [0, 0, 32], sizes = [2, 8, 16], strides = [1, 1, 1]} : vector<2x8x64xf32> to vector<2x8x16xf32>
    "tpu.trace_start"() <{level = 10 : i32, message = "bqd,bkd->bqk"}> : () -> ()
    %cst_115 = arith.constant dense<0.000000e+00> : vector<2x8x12xf32>
    %241 = tpu.matmul %240, %238, %cst_115 {dimension_numbers = #tpu.dot_dimension_numbers<[2], [2], [1], [1], [0, 0, 0, 1, 1, 1], [0], [0]>} : vector<2x8x16xf32>, vector<2x12x16xf32>, vector<2x8x12xf32> -> vector<2x8x12xf32>
    "tpu.trace_stop"() : () -> ()
    %242 = vector.extract_strided_slice %95 {offsets = [0, 32], sizes = [16, 16], strides = [1, 1]} : vector<16x64xf32> to vector<16x16xf32>
    %243 = vector.extract_strided_slice %73 {offsets = [0, 32], sizes = [128, 16], strides = [1, 1]} : vector<128x64xf32> to vector<128x16xf32>
    %cst_116 = arith.constant dense<0.000000e+00> : vector<16x128xf32>
    %244 = tpu.matmul %242, %243, %cst_116 {dimension_numbers = #tpu.dot_dimension_numbers<[1], [1], [0], [0], [0, 0, 1, 0], [], []>} : vector<16x16xf32>, vector<128x16xf32>, vector<16x128xf32> -> vector<16x128xf32>
    %c127_i32_117 = arith.constant 127 : i32
    %245 = tpu.dynamic_rotate %244 by %c127_i32_117 dim 1 : vector<16x128xf32>, i32 -> vector<16x128xf32>
    %c1_i32_118 = arith.constant 1 : i32
    %246 = vector.broadcast %c1_i32_118 : i32 to vector<16x1xi32>
    %247 = arith.andi %119, %246 : vector<16x1xi32>
    %c0_i32_119 = arith.constant 0 : i32
    %248 = vector.broadcast %c0_i32_119 : i32 to vector<16x1xi32>
    %249 = arith.cmpi sgt, %247, %248 : vector<16x1xi32>
    %250 = vector.shape_cast %249 : vector<16x1xi1> to vector<16x1xi1>
    %251 = vector.broadcast %250 : vector<16x1xi1> to vector<16x128xi1>
    %252 = arith.select %251, %245, %244 : vector<16x128xi1>, vector<16x128xf32>
    %c126_i32_120 = arith.constant 126 : i32
    %253 = tpu.dynamic_rotate %252 by %c126_i32_120 dim 1 : vector<16x128xf32>, i32 -> vector<16x128xf32>
    %c2_i32_121 = arith.constant 2 : i32
    %254 = vector.broadcast %c2_i32_121 : i32 to vector<16x1xi32>
    %255 = arith.andi %119, %254 : vector<16x1xi32>
    %c0_i32_122 = arith.constant 0 : i32
    %256 = vector.broadcast %c0_i32_122 : i32 to vector<16x1xi32>
    %257 = arith.cmpi sgt, %255, %256 : vector<16x1xi32>
    %258 = vector.shape_cast %257 : vector<16x1xi1> to vector<16x1xi1>
    %259 = vector.broadcast %258 : vector<16x1xi1> to vector<16x128xi1>
    %260 = arith.select %259, %253, %252 : vector<16x128xi1>, vector<16x128xf32>
    %c124_i32_123 = arith.constant 124 : i32
    %261 = tpu.dynamic_rotate %260 by %c124_i32_123 dim 1 : vector<16x128xf32>, i32 -> vector<16x128xf32>
    %c4_i32_124 = arith.constant 4 : i32
    %262 = vector.broadcast %c4_i32_124 : i32 to vector<16x1xi32>
    %263 = arith.andi %119, %262 : vector<16x1xi32>
    %c0_i32_125 = arith.constant 0 : i32
    %264 = vector.broadcast %c0_i32_125 : i32 to vector<16x1xi32>
    %265 = arith.cmpi sgt, %263, %264 : vector<16x1xi32>
    %266 = vector.shape_cast %265 : vector<16x1xi1> to vector<16x1xi1>
    %267 = vector.broadcast %266 : vector<16x1xi1> to vector<16x128xi1>
    %268 = arith.select %267, %261, %260 : vector<16x128xi1>, vector<16x128xf32>
    %269 = vector.shape_cast %268 : vector<16x128xf32> to vector<2x8x128xf32>
    %270 = vector.extract_strided_slice %269 {offsets = [0, 0, 0], sizes = [2, 8, 12], strides = [1, 1, 1]} : vector<2x8x128xf32> to vector<2x8x12xf32>
    %cst_126 = arith.constant 0.000000e+00 : f32
    %271 = vector.shape_cast %100 : vector<8x12xi1> to vector<1x8x12xi1>
    %272 = vector.broadcast %271 : vector<1x8x12xi1> to vector<2x8x12xi1>
    %273 = vector.broadcast %cst_126 : f32 to vector<2x8x12xf32>
    %274 = arith.select %272, %270, %273 : vector<2x8x12xi1>, vector<2x8x12xf32>
    %275 = arith.addf %241, %274 : vector<2x8x12xf32>
    %cst_127 = arith.constant 1.250000e-01 : f32
    %276 = vector.broadcast %cst_127 : f32 to vector<2x8x12xf32>
    %277 = arith.mulf %275, %276 : vector<2x8x12xf32>
    %cst_128 = arith.constant dense<0xFF800000> : vector<2x8xf32>
    %278 = vector.multi_reduction <maximumf>, %277, %cst_128 [2] : vector<2x8x12xf32> to vector<2x8xf32>
    %279 = vector.shape_cast %278 : vector<2x8xf32> to vector<2x8x1xf32>
    %280 = vector.broadcast %279 : vector<2x8x1xf32> to vector<2x8x12xf32>
    %281 = arith.subf %277, %280 : vector<2x8x12xf32>
    %282 = math.exp %281 : vector<2x8x12xf32>
    %cst_129 = arith.constant dense<0.000000e+00> : vector<2x8xf32>
    %283 = vector.multi_reduction <add>, %282, %cst_129 [2] : vector<2x8x12xf32> to vector<2x8xf32>
    %284 = vector.shape_cast %283 : vector<2x8xf32> to vector<2x8x1xf32>
    %285 = tpu.reciprocal %284 {approx = true} : vector<2x8x1xf32> -> vector<2x8x1xf32>
    %286 = arith.mulf %284, %285 : vector<2x8x1xf32>
    %cst_130 = arith.constant 2.000000e+00 : f32
    %287 = vector.broadcast %cst_130 : f32 to vector<2x8x1xf32>
    %288 = arith.subf %287, %286 : vector<2x8x1xf32>
    %289 = arith.mulf %285, %288 : vector<2x8x1xf32>
    %290 = vector.broadcast %289 : vector<2x8x1xf32> to vector<2x8x12xf32>
    %291 = arith.mulf %282, %290 : vector<2x8x12xf32>
    %c0_131 = arith.constant 0 : index
    %c2_132 = arith.constant 2 : index
    %c0_133 = arith.constant 0 : index
    %c0_134 = arith.constant 0 : index
    %292 = vector.load %arg19[%c0_131, %c2_132, %c0_133, %c0_134] : memref<2x4x8x12xf32, #tpu.memory_space<vmem>>, vector<2x1x8x12xf32>
    %293 = vector.shape_cast %292 : vector<2x1x8x12xf32> to vector<2x8x12xf32>
    %294 = vector.shape_cast %291 : vector<2x8x12xf32> to vector<2x1x8x12xf32>
    tpu.vector_store %arg19[%c0_131, %c2_132, %c0_133, %c0_134], %294 {strides = array<i32>} : memref<2x4x8x12xf32, #tpu.memory_space<vmem>>, vector<2x1x8x12xf32>,
    "tpu.trace_start"() <{level = 10 : i32, message = "bqk,bkd->bqd"}> : () -> ()
    %cst_135 = arith.constant dense<0.000000e+00> : vector<2x8x16xf32>
    %295 = tpu.matmul %291, %239, %cst_135 {dimension_numbers = #tpu.dot_dimension_numbers<[2], [1], [1], [2], [0, 0, 0, 1, 1, 2], [0], [0]>} : vector<2x8x12xf32>, vector<2x12x16xf32>, vector<2x8x16xf32> -> vector<2x8x16xf32>
    "tpu.trace_stop"() : () -> ()
    %c0_136 = arith.constant 0 : index
    %c0_137 = arith.constant 0 : index
    %c32_138 = arith.constant 32 : index
    %296 = vector.load %arg21[%c0_136, %c0_137, %c32_138] : memref<2x8x64xf32, #tpu.memory_space<vmem>>, vector<2x8x16xf32>
    tpu.vector_store %arg21[%c0_136, %c0_137, %c32_138], %295 {strides = array<i32>} : memref<2x8x64xf32, #tpu.memory_space<vmem>>, vector<2x8x16xf32>,
    %c0_139 = arith.constant 0 : index
    %c0_140 = arith.constant 0 : index
    %c48 = arith.constant 48 : index
    %297 = vector.load %arg20[%c0_139, %c0_140, %c48] : memref<2x12x128xf32, #tpu.memory_space<vmem>>, vector<2x12x16xf32>
    %c0_141 = arith.constant 0 : index
    %c0_142 = arith.constant 0 : index
    %c112 = arith.constant 112 : index
    %298 = vector.load %arg20[%c0_141, %c0_142, %c112] : memref<2x12x128xf32, #tpu.memory_space<vmem>>, vector<2x12x16xf32>
    %299 = vector.extract_strided_slice %92 {offsets = [0, 0, 48], sizes = [2, 8, 16], strides = [1, 1, 1]} : vector<2x8x64xf32> to vector<2x8x16xf32>
    "tpu.trace_start"() <{level = 10 : i32, message = "bqd,bkd->bqk"}> : () -> ()
    %cst_143 = arith.constant dense<0.000000e+00> : vector<2x8x12xf32>
    %300 = tpu.matmul %299, %297, %cst_143 {dimension_numbers = #tpu.dot_dimension_numbers<[2], [2], [1], [1], [0, 0, 0, 1, 1, 1], [0], [0]>} : vector<2x8x16xf32>, vector<2x12x16xf32>, vector<2x8x12xf32> -> vector<2x8x12xf32>
    "tpu.trace_stop"() : () -> ()
    %301 = vector.extract_strided_slice %95 {offsets = [0, 48], sizes = [16, 16], strides = [1, 1]} : vector<16x64xf32> to vector<16x16xf32>
    %302 = vector.extract_strided_slice %73 {offsets = [0, 48], sizes = [128, 16], strides = [1, 1]} : vector<128x64xf32> to vector<128x16xf32>
    %cst_144 = arith.constant dense<0.000000e+00> : vector<16x128xf32>
    %303 = tpu.matmul %301, %302, %cst_144 {dimension_numbers = #tpu.dot_dimension_numbers<[1], [1], [0], [0], [0, 0, 1, 0], [], []>} : vector<16x16xf32>, vector<128x16xf32>, vector<16x128xf32> -> vector<16x128xf32>
    %c127_i32_145 = arith.constant 127 : i32
    %304 = tpu.dynamic_rotate %303 by %c127_i32_145 dim 1 : vector<16x128xf32>, i32 -> vector<16x128xf32>
    %c1_i32_146 = arith.constant 1 : i32
    %305 = vector.broadcast %c1_i32_146 : i32 to vector<16x1xi32>
    %306 = arith.andi %119, %305 : vector<16x1xi32>
    %c0_i32_147 = arith.constant 0 : i32
    %307 = vector.broadcast %c0_i32_147 : i32 to vector<16x1xi32>
    %308 = arith.cmpi sgt, %306, %307 : vector<16x1xi32>
    %309 = vector.shape_cast %308 : vector<16x1xi1> to vector<16x1xi1>
    %310 = vector.broadcast %309 : vector<16x1xi1> to vector<16x128xi1>
    %311 = arith.select %310, %304, %303 : vector<16x128xi1>, vector<16x128xf32>
    %c126_i32_148 = arith.constant 126 : i32
    %312 = tpu.dynamic_rotate %311 by %c126_i32_148 dim 1 : vector<16x128xf32>, i32 -> vector<16x128xf32>
    %c2_i32_149 = arith.constant 2 : i32
    %313 = vector.broadcast %c2_i32_149 : i32 to vector<16x1xi32>
    %314 = arith.andi %119, %313 : vector<16x1xi32>
    %c0_i32_150 = arith.constant 0 : i32
    %315 = vector.broadcast %c0_i32_150 : i32 to vector<16x1xi32>
    %316 = arith.cmpi sgt, %314, %315 : vector<16x1xi32>
    %317 = vector.shape_cast %316 : vector<16x1xi1> to vector<16x1xi1>
    %318 = vector.broadcast %317 : vector<16x1xi1> to vector<16x128xi1>
    %319 = arith.select %318, %312, %311 : vector<16x128xi1>, vector<16x128xf32>
    %c124_i32_151 = arith.constant 124 : i32
    %320 = tpu.dynamic_rotate %319 by %c124_i32_151 dim 1 : vector<16x128xf32>, i32 -> vector<16x128xf32>
    %c4_i32_152 = arith.constant 4 : i32
    %321 = vector.broadcast %c4_i32_152 : i32 to vector<16x1xi32>
    %322 = arith.andi %119, %321 : vector<16x1xi32>
    %c0_i32_153 = arith.constant 0 : i32
    %323 = vector.broadcast %c0_i32_153 : i32 to vector<16x1xi32>
    %324 = arith.cmpi sgt, %322, %323 : vector<16x1xi32>
    %325 = vector.shape_cast %324 : vector<16x1xi1> to vector<16x1xi1>
    %326 = vector.broadcast %325 : vector<16x1xi1> to vector<16x128xi1>
    %327 = arith.select %326, %320, %319 : vector<16x128xi1>, vector<16x128xf32>
    %328 = vector.shape_cast %327 : vector<16x128xf32> to vector<2x8x128xf32>
    %329 = vector.extract_strided_slice %328 {offsets = [0, 0, 0], sizes = [2, 8, 12], strides = [1, 1, 1]} : vector<2x8x128xf32> to vector<2x8x12xf32>
    %cst_154 = arith.constant 0.000000e+00 : f32
    %330 = vector.shape_cast %100 : vector<8x12xi1> to vector<1x8x12xi1>
    %331 = vector.broadcast %330 : vector<1x8x12xi1> to vector<2x8x12xi1>
    %332 = vector.broadcast %cst_154 : f32 to vector<2x8x12xf32>
    %333 = arith.select %331, %329, %332 : vector<2x8x12xi1>, vector<2x8x12xf32>
    %334 = arith.addf %300, %333 : vector<2x8x12xf32>
    %cst_155 = arith.constant 1.250000e-01 : f32
    %335 = vector.broadcast %cst_155 : f32 to vector<2x8x12xf32>
    %336 = arith.mulf %334, %335 : vector<2x8x12xf32>
    %cst_156 = arith.constant dense<0xFF800000> : vector<2x8xf32>
    %337 = vector.multi_reduction <maximumf>, %336, %cst_156 [2] : vector<2x8x12xf32> to vector<2x8xf32>
    %338 = vector.shape_cast %337 : vector<2x8xf32> to vector<2x8x1xf32>
    %339 = vector.broadcast %338 : vector<2x8x1xf32> to vector<2x8x12xf32>
    %340 = arith.subf %336, %339 : vector<2x8x12xf32>
    %341 = math.exp %340 : vector<2x8x12xf32>
    %cst_157 = arith.constant dense<0.000000e+00> : vector<2x8xf32>
    %342 = vector.multi_reduction <add>, %341, %cst_157 [2] : vector<2x8x12xf32> to vector<2x8xf32>
    %343 = vector.shape_cast %342 : vector<2x8xf32> to vector<2x8x1xf32>
    %344 = tpu.reciprocal %343 {approx = true} : vector<2x8x1xf32> -> vector<2x8x1xf32>
    %345 = arith.mulf %343, %344 : vector<2x8x1xf32>
    %cst_158 = arith.constant 2.000000e+00 : f32
    %346 = vector.broadcast %cst_158 : f32 to vector<2x8x1xf32>
    %347 = arith.subf %346, %345 : vector<2x8x1xf32>
    %348 = arith.mulf %344, %347 : vector<2x8x1xf32>
    %349 = vector.broadcast %348 : vector<2x8x1xf32> to vector<2x8x12xf32>
    %350 = arith.mulf %341, %349 : vector<2x8x12xf32>
    %c0_159 = arith.constant 0 : index
    %c3_160 = arith.constant 3 : index
    %c0_161 = arith.constant 0 : index
    %c0_162 = arith.constant 0 : index
    %351 = vector.load %arg19[%c0_159, %c3_160, %c0_161, %c0_162] : memref<2x4x8x12xf32, #tpu.memory_space<vmem>>, vector<2x1x8x12xf32>
    %352 = vector.shape_cast %351 : vector<2x1x8x12xf32> to vector<2x8x12xf32>
    %353 = vector.shape_cast %350 : vector<2x8x12xf32> to vector<2x1x8x12xf32>
    tpu.vector_store %arg19[%c0_159, %c3_160, %c0_161, %c0_162], %353 {strides = array<i32>} : memref<2x4x8x12xf32, #tpu.memory_space<vmem>>, vector<2x1x8x12xf32>,
    "tpu.trace_start"() <{level = 10 : i32, message = "bqk,bkd->bqd"}> : () -> ()
    %cst_163 = arith.constant dense<0.000000e+00> : vector<2x8x16xf32>
    %354 = tpu.matmul %350, %298, %cst_163 {dimension_numbers = #tpu.dot_dimension_numbers<[2], [1], [1], [2], [0, 0, 0, 1, 1, 2], [0], [0]>} : vector<2x8x12xf32>, vector<2x12x16xf32>, vector<2x8x16xf32> -> vector<2x8x16xf32>
    "tpu.trace_stop"() : () -> ()
    %c0_164 = arith.constant 0 : index
    %c0_165 = arith.constant 0 : index
    %c48_166 = arith.constant 48 : index
    %355 = vector.load %arg21[%c0_164, %c0_165, %c48_166] : memref<2x8x64xf32, #tpu.memory_space<vmem>>, vector<2x8x16xf32>
    tpu.vector_store %arg21[%c0_164, %c0_165, %c48_166], %354 {strides = array<i32>} : memref<2x8x64xf32, #tpu.memory_space<vmem>>, vector<2x8x16xf32>,
    %c0_167 = arith.constant 0 : index
    %c0_168 = arith.constant 0 : index
    %c0_169 = arith.constant 0 : index
    %356 = vector.load %arg21[%c0_167, %c0_168, %c0_169] : memref<2x8x64xf32, #tpu.memory_space<vmem>>, vector<2x8x64xf32>
    %357 = vector.shape_cast %356 : vector<2x8x64xf32> to vector<16x64xf32>
    %c7 = arith.constant 7 : index
    %c0_170 = arith.constant 0 : index
    %358 = vector.load %arg15[%c7, %c0_170] : memref<19x64xf32, #tpu.memory_space<vmem>>, vector<1x64xf32>
    %c0_171 = arith.constant 0 : index
    %c0_172 = arith.constant 0 : index
    %359 = vector.load %arg9[%c0_171, %c0_172] : memref<64x64xf32, #tpu.memory_space<vmem>>, vector<64x64xf32>
    %cst_173 = arith.constant dense<0.000000e+00> : vector<16x64xf32>
    %360 = tpu.matmul %357, %359, %cst_173 {dimension_numbers = #tpu.dot_dimension_numbers<[1], [0], [0], [1], [0, 0, 1, 1], [], []>} : vector<16x64xf32>, vector<64x64xf32>, vector<16x64xf32> -> vector<16x64xf32>
    %361 = vector.broadcast %358 : vector<1x64xf32> to vector<16x64xf32>
    %362 = arith.addf %360, %361 : vector<16x64xf32>
    %363 = arith.addf %362, %44 : vector<16x64xf32>
    %c8 = arith.constant 8 : index
    %c0_174 = arith.constant 0 : index
    %364 = vector.load %arg15[%c8, %c0_174] : memref<19x64xf32, #tpu.memory_space<vmem>>, vector<1x64xf32>
    %c9 = arith.constant 9 : index
    %c0_175 = arith.constant 0 : index
    %365 = vector.load %arg15[%c9, %c0_175] : memref<19x64xf32, #tpu.memory_space<vmem>>, vector<1x64xf32>
    %cst_176 = arith.constant dense<0.000000e+00> : vector<16xf32>
    %366 = vector.multi_reduction <add>, %363, %cst_176 [1] : vector<16x64xf32> to vector<16xf32>
    %367 = vector.shape_cast %366 : vector<16xf32> to vector<16x1xf32>
    %cst_177 = arith.constant 6.400000e+01 : f32
    %368 = vector.broadcast %cst_177 : f32 to vector<16x1xf32>
    %369 = arith.divf %367, %368 : vector<16x1xf32>
    %370 = vector.broadcast %369 : vector<16x1xf32> to vector<16x64xf32>
    %371 = arith.subf %363, %370 : vector<16x64xf32>
    %372 = arith.mulf %371, %371 : vector<16x64xf32>
    %cst_178 = arith.constant dense<0.000000e+00> : vector<16xf32>
    %373 = vector.multi_reduction <add>, %372, %cst_178 [1] : vector<16x64xf32> to vector<16xf32>
    %374 = vector.shape_cast %373 : vector<16xf32> to vector<16x1xf32>
    %cst_179 = arith.constant 6.400000e+01 : f32
    %375 = vector.broadcast %cst_179 : f32 to vector<16x1xf32>
    %376 = arith.divf %374, %375 : vector<16x1xf32>
    %377 = vector.broadcast %369 : vector<16x1xf32> to vector<16x64xf32>
    %378 = arith.subf %363, %377 : vector<16x64xf32>
    %cst_180 = arith.constant 9.99999974E-6 : f32
    %379 = vector.broadcast %cst_180 : f32 to vector<16x1xf32>
    %380 = arith.addf %376, %379 : vector<16x1xf32>
    %381 = math.rsqrt %380 : vector<16x1xf32>
    %382 = vector.broadcast %381 : vector<16x1xf32> to vector<16x64xf32>
    %383 = arith.mulf %378, %382 : vector<16x64xf32>
    %384 = vector.broadcast %364 : vector<1x64xf32> to vector<16x64xf32>
    %385 = arith.mulf %383, %384 : vector<16x64xf32>
    %386 = vector.broadcast %365 : vector<1x64xf32> to vector<16x64xf32>
    %387 = arith.addf %385, %386 : vector<16x64xf32>
    %c0_181 = arith.constant 0 : index
    %c0_182 = arith.constant 0 : index
    %388 = vector.load %arg17[%c0_181, %c0_182] : memref<1x128xf32, #tpu.memory_space<vmem>>, vector<1x128xf32>
    %c0_183 = arith.constant 0 : index
    %c0_184 = arith.constant 0 : index
    %389 = vector.load %arg10[%c0_183, %c0_184] : memref<64x128xf32, #tpu.memory_space<vmem>>, vector<64x128xf32>
    %cst_185 = arith.constant dense<0.000000e+00> : vector<16x128xf32>
    %390 = tpu.matmul %387, %389, %cst_185 {dimension_numbers = #tpu.dot_dimension_numbers<[1], [0], [0], [1], [0, 0, 1, 1], [], []>} : vector<16x64xf32>, vector<64x128xf32>, vector<16x128xf32> -> vector<16x128xf32>
    %391 = vector.broadcast %388 : vector<1x128xf32> to vector<16x128xf32>
    %392 = arith.addf %390, %391 : vector<16x128xf32>
    %393 = vector.extract_strided_slice %392 {offsets = [0, 0], sizes = [16, 64], strides = [1, 1]} : vector<16x128xf32> to vector<16x64xf32>
    %394 = vector.extract_strided_slice %392 {offsets = [0, 64], sizes = [16, 64], strides = [1, 1]} : vector<16x128xf32> to vector<16x64xf32>
    %395 = arith.negf %394 : vector<16x64xf32>
    %396 = math.exp %395 : vector<16x64xf32>
    %cst_186 = arith.constant 1.000000e+00 : f32
    %397 = vector.broadcast %cst_186 : f32 to vector<16x64xf32>
    %398 = arith.addf %397, %396 : vector<16x64xf32>
    %399 = arith.divf %397, %398 : vector<16x64xf32>
    %400 = arith.mulf %393, %399 : vector<16x64xf32>
    %cst_187 = arith.constant 0.000000e+00 : f32
    %401 = vector.broadcast %cst_187 : f32 to vector<2x2x64xf32>
    %c0_188 = arith.constant 0 : index
    %c0_189 = arith.constant 0 : index
    %c0_190 = arith.constant 0 : index
    %402 = vector.load %arg22[%c0_188, %c0_189, %c0_190] : memref<2x10x64xf32, #tpu.memory_space<vmem>>, vector<2x2x64xf32>
    tpu.vector_store %arg22[%c0_188, %c0_189, %c0_190], %401 {strides = array<i32>} : memref<2x10x64xf32, #tpu.memory_space<vmem>>, vector<2x2x64xf32>,
    %403 = vector.shape_cast %400 : vector<16x64xf32> to vector<2x8x64xf32>
    %c0_191 = arith.constant 0 : index
    %c2_192 = arith.constant 2 : index
    %c0_193 = arith.constant 0 : index
    %404 = vector.load %arg22[%c0_191, %c2_192, %c0_193] : memref<2x10x64xf32, #tpu.memory_space<vmem>>, vector<2x8x64xf32>
    tpu.vector_store %arg22[%c0_191, %c2_192, %c0_193], %403 {strides = array<i32>} : memref<2x10x64xf32, #tpu.memory_space<vmem>>, vector<2x8x64xf32>,
    %cst_194 = arith.constant 0.000000e+00 : f32
    %405 = vector.broadcast %cst_194 : f32 to vector<2x8x64xf32>
    %c0_195 = arith.constant 0 : index
    %c0_196 = arith.constant 0 : index
    %c0_197 = arith.constant 0 : index
    %406 = vector.load %arg22[%c0_195, %c0_196, %c0_197] : memref<2x10x64xf32, #tpu.memory_space<vmem>>, vector<2x8x64xf32>
    %c0_198 = arith.constant 0 : index
    %c0_199 = arith.constant 0 : index
    %407 = vector.load %arg11[%c0_198, %c0_199] : memref<3x64xf32, #tpu.memory_space<vmem>>, vector<1x64xf32>
    %408 = vector.shape_cast %407 : vector<1x64xf32> to vector<1x1x64xf32>
    %409 = vector.broadcast %408 : vector<1x1x64xf32> to vector<2x8x64xf32>
    %410 = arith.mulf %406, %409 : vector<2x8x64xf32>
    %411 = arith.addf %405, %410 : vector<2x8x64xf32>
    %c0_200 = arith.constant 0 : index
    %c1_201 = arith.constant 1 : index
    %c0_202 = arith.constant 0 : index
    %412 = vector.load %arg22[%c0_200, %c1_201, %c0_202] : memref<2x10x64xf32, #tpu.memory_space<vmem>>, vector<2x8x64xf32>
    %c1_203 = arith.constant 1 : index
    %c0_204 = arith.constant 0 : index
    %413 = vector.load %arg11[%c1_203, %c0_204] : memref<3x64xf32, #tpu.memory_space<vmem>>, vector<1x64xf32>
    %414 = vector.shape_cast %413 : vector<1x64xf32> to vector<1x1x64xf32>
    %415 = vector.broadcast %414 : vector<1x1x64xf32> to vector<2x8x64xf32>
    %416 = arith.mulf %412, %415 : vector<2x8x64xf32>
    %417 = arith.addf %411, %416 : vector<2x8x64xf32>
    %c0_205 = arith.constant 0 : index
    %c2_206 = arith.constant 2 : index
    %c0_207 = arith.constant 0 : index
    %418 = vector.load %arg22[%c0_205, %c2_206, %c0_207] : memref<2x10x64xf32, #tpu.memory_space<vmem>>, vector<2x8x64xf32>
    %c2_208 = arith.constant 2 : index
    %c0_209 = arith.constant 0 : index
    %419 = vector.load %arg11[%c2_208, %c0_209] : memref<3x64xf32, #tpu.memory_space<vmem>>, vector<1x64xf32>
    %420 = vector.shape_cast %419 : vector<1x64xf32> to vector<1x1x64xf32>
    %421 = vector.broadcast %420 : vector<1x1x64xf32> to vector<2x8x64xf32>
    %422 = arith.mulf %418, %421 : vector<2x8x64xf32>
    %423 = arith.addf %417, %422 : vector<2x8x64xf32>
    %c10 = arith.constant 10 : index
    %c0_210 = arith.constant 0 : index
    %424 = vector.load %arg15[%c10, %c0_210] : memref<19x64xf32, #tpu.memory_space<vmem>>, vector<1x64xf32>
    %425 = vector.shape_cast %424 : vector<1x64xf32> to vector<1x1x64xf32>
    %426 = vector.broadcast %425 : vector<1x1x64xf32> to vector<2x8x64xf32>
    %427 = arith.addf %423, %426 : vector<2x8x64xf32>
    %c11 = arith.constant 11 : index
    %c0_211 = arith.constant 0 : index
    %428 = vector.load %arg15[%c11, %c0_211] : memref<19x64xf32, #tpu.memory_space<vmem>>, vector<1x64xf32>
    %c12 = arith.constant 12 : index
    %c0_212 = arith.constant 0 : index
    %429 = vector.load %arg15[%c12, %c0_212] : memref<19x64xf32, #tpu.memory_space<vmem>>, vector<1x64xf32>
    %cst_213 = arith.constant dense<0.000000e+00> : vector<2x8xf32>
    %430 = vector.multi_reduction <add>, %427, %cst_213 [2] : vector<2x8x64xf32> to vector<2x8xf32>
    %431 = vector.shape_cast %430 : vector<2x8xf32> to vector<2x8x1xf32>
    %cst_214 = arith.constant 6.400000e+01 : f32
    %432 = vector.broadcast %cst_214 : f32 to vector<2x8x1xf32>
    %433 = arith.divf %431, %432 : vector<2x8x1xf32>
    %434 = vector.broadcast %433 : vector<2x8x1xf32> to vector<2x8x64xf32>
    %435 = arith.subf %427, %434 : vector<2x8x64xf32>
    %436 = arith.mulf %435, %435 : vector<2x8x64xf32>
    %cst_215 = arith.constant dense<0.000000e+00> : vector<2x8xf32>
    %437 = vector.multi_reduction <add>, %436, %cst_215 [2] : vector<2x8x64xf32> to vector<2x8xf32>
    %438 = vector.shape_cast %437 : vector<2x8xf32> to vector<2x8x1xf32>
    %cst_216 = arith.constant 6.400000e+01 : f32
    %439 = vector.broadcast %cst_216 : f32 to vector<2x8x1xf32>
    %440 = arith.divf %438, %439 : vector<2x8x1xf32>
    %441 = vector.broadcast %433 : vector<2x8x1xf32> to vector<2x8x64xf32>
    %442 = arith.subf %427, %441 : vector<2x8x64xf32>
    %cst_217 = arith.constant 9.99999974E-6 : f32
    %443 = vector.broadcast %cst_217 : f32 to vector<2x8x1xf32>
    %444 = arith.addf %440, %443 : vector<2x8x1xf32>
    %445 = math.rsqrt %444 : vector<2x8x1xf32>
    %446 = vector.broadcast %445 : vector<2x8x1xf32> to vector<2x8x64xf32>
    %447 = arith.mulf %442, %446 : vector<2x8x64xf32>
    %448 = vector.shape_cast %428 : vector<1x64xf32> to vector<1x1x64xf32>
    %449 = vector.broadcast %448 : vector<1x1x64xf32> to vector<2x8x64xf32>
    %450 = arith.mulf %447, %449 : vector<2x8x64xf32>
    %451 = vector.shape_cast %429 : vector<1x64xf32> to vector<1x1x64xf32>
    %452 = vector.broadcast %451 : vector<1x1x64xf32> to vector<2x8x64xf32>
    %453 = arith.addf %450, %452 : vector<2x8x64xf32>
    %454 = arith.negf %453 : vector<2x8x64xf32>
    %455 = math.exp %454 : vector<2x8x64xf32>
    %cst_218 = arith.constant 1.000000e+00 : f32
    %456 = vector.broadcast %cst_218 : f32 to vector<2x8x64xf32>
    %457 = arith.addf %456, %455 : vector<2x8x64xf32>
    %458 = arith.divf %456, %457 : vector<2x8x64xf32>
    %459 = arith.mulf %453, %458 : vector<2x8x64xf32>
    %460 = vector.shape_cast %459 : vector<2x8x64xf32> to vector<16x64xf32>
    %c13 = arith.constant 13 : index
    %c0_219 = arith.constant 0 : index
    %461 = vector.load %arg15[%c13, %c0_219] : memref<19x64xf32, #tpu.memory_space<vmem>>, vector<1x64xf32>
    %c0_220 = arith.constant 0 : index
    %c0_221 = arith.constant 0 : index
    %462 = vector.load %arg12[%c0_220, %c0_221] : memref<64x64xf32, #tpu.memory_space<vmem>>, vector<64x64xf32>
    %cst_222 = arith.constant dense<0.000000e+00> : vector<16x64xf32>
    %463 = tpu.matmul %460, %462, %cst_222 {dimension_numbers = #tpu.dot_dimension_numbers<[1], [0], [0], [1], [0, 0, 1, 1], [], []>} : vector<16x64xf32>, vector<64x64xf32>, vector<16x64xf32> -> vector<16x64xf32>
    %464 = vector.broadcast %461 : vector<1x64xf32> to vector<16x64xf32>
    %465 = arith.addf %463, %464 : vector<16x64xf32>
    %466 = arith.addf %363, %465 : vector<16x64xf32>
    %c14 = arith.constant 14 : index
    %c0_223 = arith.constant 0 : index
    %467 = vector.load %arg15[%c14, %c0_223] : memref<19x64xf32, #tpu.memory_space<vmem>>, vector<1x64xf32>
    %c15 = arith.constant 15 : index
    %c0_224 = arith.constant 0 : index
    %468 = vector.load %arg15[%c15, %c0_224] : memref<19x64xf32, #tpu.memory_space<vmem>>, vector<1x64xf32>
    %cst_225 = arith.constant dense<0.000000e+00> : vector<16xf32>
    %469 = vector.multi_reduction <add>, %466, %cst_225 [1] : vector<16x64xf32> to vector<16xf32>
    %470 = vector.shape_cast %469 : vector<16xf32> to vector<16x1xf32>
    %cst_226 = arith.constant 6.400000e+01 : f32
    %471 = vector.broadcast %cst_226 : f32 to vector<16x1xf32>
    %472 = arith.divf %470, %471 : vector<16x1xf32>
    %473 = vector.broadcast %472 : vector<16x1xf32> to vector<16x64xf32>
    %474 = arith.subf %466, %473 : vector<16x64xf32>
    %475 = arith.mulf %474, %474 : vector<16x64xf32>
    %cst_227 = arith.constant dense<0.000000e+00> : vector<16xf32>
    %476 = vector.multi_reduction <add>, %475, %cst_227 [1] : vector<16x64xf32> to vector<16xf32>
    %477 = vector.shape_cast %476 : vector<16xf32> to vector<16x1xf32>
    %cst_228 = arith.constant 6.400000e+01 : f32
    %478 = vector.broadcast %cst_228 : f32 to vector<16x1xf32>
    %479 = arith.divf %477, %478 : vector<16x1xf32>
    %480 = vector.broadcast %472 : vector<16x1xf32> to vector<16x64xf32>
    %481 = arith.subf %466, %480 : vector<16x64xf32>
    %cst_229 = arith.constant 9.99999974E-6 : f32
    %482 = vector.broadcast %cst_229 : f32 to vector<16x1xf32>
    %483 = arith.addf %479, %482 : vector<16x1xf32>
    %484 = math.rsqrt %483 : vector<16x1xf32>
    %485 = vector.broadcast %484 : vector<16x1xf32> to vector<16x64xf32>
    %486 = arith.mulf %481, %485 : vector<16x64xf32>
    %487 = vector.broadcast %467 : vector<1x64xf32> to vector<16x64xf32>
    %488 = arith.mulf %486, %487 : vector<16x64xf32>
    %489 = vector.broadcast %468 : vector<1x64xf32> to vector<16x64xf32>
    %490 = arith.addf %488, %489 : vector<16x64xf32>
    %c1_230 = arith.constant 1 : index
    %c0_231 = arith.constant 0 : index
    %491 = vector.load %arg16[%c1_230, %c0_231] : memref<2x128xf32, #tpu.memory_space<vmem>>, vector<1x128xf32>
    %c0_232 = arith.constant 0 : index
    %c0_233 = arith.constant 0 : index
    %492 = vector.load %arg13[%c0_232, %c0_233] : memref<64x128xf32, #tpu.memory_space<vmem>>, vector<64x128xf32>
    %cst_234 = arith.constant dense<0.000000e+00> : vector<16x128xf32>
    %493 = tpu.matmul %490, %492, %cst_234 {dimension_numbers = #tpu.dot_dimension_numbers<[1], [0], [0], [1], [0, 0, 1, 1], [], []>} : vector<16x64xf32>, vector<64x128xf32>, vector<16x128xf32> -> vector<16x128xf32>
    %494 = vector.broadcast %491 : vector<1x128xf32> to vector<16x128xf32>
    %495 = arith.addf %493, %494 : vector<16x128xf32>
    %496 = arith.negf %495 : vector<16x128xf32>
    %497 = math.exp %496 : vector<16x128xf32>
    %cst_235 = arith.constant 1.000000e+00 : f32
    %498 = vector.broadcast %cst_235 : f32 to vector<16x128xf32>
    %499 = arith.addf %498, %497 : vector<16x128xf32>
    %500 = arith.divf %498, %499 : vector<16x128xf32>
    %501 = arith.mulf %495, %500 : vector<16x128xf32>
    %c16_236 = arith.constant 16 : index
    %c0_237 = arith.constant 0 : index
    %502 = vector.load %arg15[%c16_236, %c0_237] : memref<19x64xf32, #tpu.memory_space<vmem>>, vector<1x64xf32>
    %c0_238 = arith.constant 0 : index
    %c0_239 = arith.constant 0 : index
    %503 = vector.load %arg14[%c0_238, %c0_239] : memref<128x64xf32, #tpu.memory_space<vmem>>, vector<128x64xf32>
    %cst_240 = arith.constant dense<0.000000e+00> : vector<16x64xf32>
    %504 = tpu.matmul %501, %503, %cst_240 {dimension_numbers = #tpu.dot_dimension_numbers<[1], [0], [0], [1], [0, 0, 1, 1], [], []>} : vector<16x128xf32>, vector<128x64xf32>, vector<16x64xf32> -> vector<16x64xf32>
    %505 = vector.broadcast %502 : vector<1x64xf32> to vector<16x64xf32>
    %506 = arith.addf %504, %505 : vector<16x64xf32>
    %cst_241 = arith.constant 5.000000e-01 : f32
    %507 = vector.broadcast %cst_241 : f32 to vector<16x64xf32>
    %508 = arith.mulf %507, %506 : vector<16x64xf32>
    %509 = arith.addf %466, %508 : vector<16x64xf32>
    %c17 = arith.constant 17 : index
    %c0_242 = arith.constant 0 : index
    %510 = vector.load %arg15[%c17, %c0_242] : memref<19x64xf32, #tpu.memory_space<vmem>>, vector<1x64xf32>
    %c18 = arith.constant 18 : index
    %c0_243 = arith.constant 0 : index
    %511 = vector.load %arg15[%c18, %c0_243] : memref<19x64xf32, #tpu.memory_space<vmem>>, vector<1x64xf32>
    %cst_244 = arith.constant dense<0.000000e+00> : vector<16xf32>
    %512 = vector.multi_reduction <add>, %509, %cst_244 [1] : vector<16x64xf32> to vector<16xf32>
    %513 = vector.shape_cast %512 : vector<16xf32> to vector<16x1xf32>
    %cst_245 = arith.constant 6.400000e+01 : f32
    %514 = vector.broadcast %cst_245 : f32 to vector<16x1xf32>
    %515 = arith.divf %513, %514 : vector<16x1xf32>
    %516 = vector.broadcast %515 : vector<16x1xf32> to vector<16x64xf32>
    %517 = arith.subf %509, %516 : vector<16x64xf32>
    %518 = arith.mulf %517, %517 : vector<16x64xf32>
    %cst_246 = arith.constant dense<0.000000e+00> : vector<16xf32>
    %519 = vector.multi_reduction <add>, %518, %cst_246 [1] : vector<16x64xf32> to vector<16xf32>
    %520 = vector.shape_cast %519 : vector<16xf32> to vector<16x1xf32>
    %cst_247 = arith.constant 6.400000e+01 : f32
    %521 = vector.broadcast %cst_247 : f32 to vector<16x1xf32>
    %522 = arith.divf %520, %521 : vector<16x1xf32>
    %523 = vector.broadcast %515 : vector<16x1xf32> to vector<16x64xf32>
    %524 = arith.subf %509, %523 : vector<16x64xf32>
    %cst_248 = arith.constant 9.99999974E-6 : f32
    %525 = vector.broadcast %cst_248 : f32 to vector<16x1xf32>
    %526 = arith.addf %522, %525 : vector<16x1xf32>
    %527 = math.rsqrt %526 : vector<16x1xf32>
    %528 = vector.broadcast %527 : vector<16x1xf32> to vector<16x64xf32>
    %529 = arith.mulf %524, %528 : vector<16x64xf32>
    %530 = vector.broadcast %510 : vector<1x64xf32> to vector<16x64xf32>
    %531 = arith.mulf %529, %530 : vector<16x64xf32>
    %532 = vector.broadcast %511 : vector<1x64xf32> to vector<16x64xf32>
    %533 = arith.addf %531, %532 : vector<16x64xf32>
    %534 = vector.shape_cast %533 : vector<16x64xf32> to vector<2x8x64xf32>
    %c0_249 = arith.constant 0 : index
    %c0_250 = arith.constant 0 : index
    %c0_251 = arith.constant 0 : index
    %535 = vector.load %arg18[%c0_249, %c0_250, %c0_251] : memref<2x8x64xf32, #tpu.memory_space<vmem>>, vector<2x8x64xf32>
    tpu.vector_store %arg18[%c0_249, %c0_250, %c0_251], %534 {strides = array<i32>} : memref<2x8x64xf32, #tpu.memory_space<vmem>>, vector<2x8x64xf32>,
    return
  }
  func.func @transform_0(%arg0: i32) -> (i32, i32, i32) {
    %c0_i32 = arith.constant 0 : i32
    %c0_i32_0 = arith.constant 0 : i32
    %c0_i32_1 = arith.constant 0 : i32
    return %arg0, %c0_i32, %c0_i32_0 : i32, i32, i32
  }
  func.func @transform_1(%arg0: i32) -> (i32, i32, i32) {
    %c0_i32 = arith.constant 0 : i32
    %c0_i32_0 = arith.constant 0 : i32
    %c0_i32_1 = arith.constant 0 : i32
    return %arg0, %c0_i32, %c0_i32_0 : i32, i32, i32
  }
  func.func @transform_2(%arg0: i32) -> (i32, i32) {
    %c0_i32 = arith.constant 0 : i32
    %c0_i32_0 = arith.constant 0 : i32
    %c0_i32_1 = arith.constant 0 : i32
    return %c0_i32, %c0_i32_0 : i32, i32
  }
  func.func @transform_3(%arg0: i32) -> (i32, i32) {
    %c0_i32 = arith.constant 0 : i32
    %c0_i32_0 = arith.constant 0 : i32
    %c0_i32_1 = arith.constant 0 : i32
    return %c0_i32, %c0_i32_0 : i32, i32
  }
  func.func @transform_4(%arg0: i32) -> (i32, i32) {
    %c0_i32 = arith.constant 0 : i32
    %c0_i32_0 = arith.constant 0 : i32
    %c0_i32_1 = arith.constant 0 : i32
    return %c0_i32, %c0_i32_0 : i32, i32
  }
  func.func @transform_5(%arg0: i32) -> (i32, i32) {
    %c0_i32 = arith.constant 0 : i32
    %c0_i32_0 = arith.constant 0 : i32
    %c0_i32_1 = arith.constant 0 : i32
    return %c0_i32, %c0_i32_0 : i32, i32
  }
  func.func @transform_6(%arg0: i32) -> (i32, i32) {
    %c0_i32 = arith.constant 0 : i32
    %c0_i32_0 = arith.constant 0 : i32
    %c0_i32_1 = arith.constant 0 : i32
    return %c0_i32, %c0_i32_0 : i32, i32
  }
  func.func @transform_7(%arg0: i32) -> (i32, i32) {
    %c0_i32 = arith.constant 0 : i32
    %c0_i32_0 = arith.constant 0 : i32
    %c0_i32_1 = arith.constant 0 : i32
    return %c0_i32, %c0_i32_0 : i32, i32
  }
  func.func @transform_8(%arg0: i32) -> (i32, i32) {
    %c0_i32 = arith.constant 0 : i32
    %c0_i32_0 = arith.constant 0 : i32
    %c0_i32_1 = arith.constant 0 : i32
    return %c0_i32, %c0_i32_0 : i32, i32
  }
  func.func @transform_9(%arg0: i32) -> (i32, i32) {
    %c0_i32 = arith.constant 0 : i32
    %c0_i32_0 = arith.constant 0 : i32
    %c0_i32_1 = arith.constant 0 : i32
    return %c0_i32, %c0_i32_0 : i32, i32
  }
  func.func @transform_10(%arg0: i32) -> (i32, i32) {
    %c0_i32 = arith.constant 0 : i32
    %c0_i32_0 = arith.constant 0 : i32
    %c0_i32_1 = arith.constant 0 : i32
    return %c0_i32, %c0_i32_0 : i32, i32
  }
  func.func @transform_11(%arg0: i32) -> (i32, i32) {
    %c0_i32 = arith.constant 0 : i32
    %c0_i32_0 = arith.constant 0 : i32
    %c0_i32_1 = arith.constant 0 : i32
    return %c0_i32, %c0_i32_0 : i32, i32
  }
  func.func @transform_12(%arg0: i32) -> (i32, i32) {
    %c0_i32 = arith.constant 0 : i32
    %c0_i32_0 = arith.constant 0 : i32
    %c0_i32_1 = arith.constant 0 : i32
    return %c0_i32, %c0_i32_0 : i32, i32
  }
  func.func @transform_13(%arg0: i32) -> (i32, i32) {
    %c0_i32 = arith.constant 0 : i32
    %c0_i32_0 = arith.constant 0 : i32
    %c0_i32_1 = arith.constant 0 : i32
    return %c0_i32, %c0_i32_0 : i32, i32
  }
  func.func @transform_14(%arg0: i32) -> (i32, i32) {
    %c0_i32 = arith.constant 0 : i32
    %c0_i32_0 = arith.constant 0 : i32
    %c0_i32_1 = arith.constant 0 : i32
    return %c0_i32, %c0_i32_0 : i32, i32
  }
  func.func @transform_15(%arg0: i32) -> (i32, i32) {
    %c0_i32 = arith.constant 0 : i32
    %c0_i32_0 = arith.constant 0 : i32
    %c0_i32_1 = arith.constant 0 : i32
    return %c0_i32, %c0_i32_0 : i32, i32
  }
  func.func @transform_16(%arg0: i32) -> (i32, i32) {
    %c0_i32 = arith.constant 0 : i32
    %c0_i32_0 = arith.constant 0 : i32
    %c0_i32_1 = arith.constant 0 : i32
    return %c0_i32, %c0_i32_0 : i32, i32
  }
  func.func @transform_17(%arg0: i32) -> (i32, i32, i32) {
    %c0_i32 = arith.constant 0 : i32
    %c0_i32_0 = arith.constant 0 : i32
    %c0_i32_1 = arith.constant 0 : i32
    return %arg0, %c0_i32, %c0_i32_0 : i32, i32, i32
  }
  func.func @transform_18(%arg0: i32) -> (i32, i32, i32, i32) {
    %c0_i32 = arith.constant 0 : i32
    %c0_i32_0 = arith.constant 0 : i32
    %c0_i32_1 = arith.constant 0 : i32
    %c0_i32_2 = arith.constant 0 : i32
    return %arg0, %c0_i32, %c0_i32_0, %c0_i32_1 : i32, i32, i32, i32
  }
}

</mosaic_0001>

<llo_original>
// kernel: tpu_custom_call.1
$region0: #{tpu_custom_call.1}
  #allocation0 [shape = 'u32[]', space=smem, size = 0x4, offset = 0x4, fixed_abs, tag = 'smem constant byte address 0x4 - core index']
  #allocation1 [shape = 'u32[72,128]{1,0:T(1,128)}', space=vmem, size = 0x9000, scoped, tag = 'internal scratch']
  #allocation2 [shape = 'f32[2,12,128]{2,1,0:T(8,128)}', space=vmem, size = 0x4000, scoped, tag = 'scratch operand']
  #allocation3 [shape = 'f32[2,8,64]{2,1,0:T(8,128)}', space=vmem, size = 0x2000, scoped, tag = 'scratch operand']
  #allocation4 [shape = 'f32[2,10,64]{2,1,0:T(8,128)}', space=vmem, size = 0x4000, scoped, tag = 'scratch operand']
  %s0 = inlined_call_operand.vmem [shape: f32[4,8,64], index: 0, kind: input, shape index: {}]
  %s1 = inlined_call_operand.vmem [shape: f32[4,12,64], index: 1, kind: input, shape index: {}]
  %s2 = inlined_call_operand.vmem [shape: f32[128,64], index: 2, kind: input, shape index: {}]
  %s3 = inlined_call_operand.vmem [shape: f32[64,128], index: 3, kind: input, shape index: {}]
  %s4 = inlined_call_operand.vmem [shape: f32[128,64], index: 4, kind: input, shape index: {}]
  %s5 = inlined_call_operand.vmem [shape: f32[64,64], index: 5, kind: input, shape index: {}]
  %s6 = inlined_call_operand.vmem [shape: f32[64,128], index: 6, kind: input, shape index: {}]
  %s7 = inlined_call_operand.vmem [shape: f32[64,64], index: 7, kind: input, shape index: {}]
  %s8 = inlined_call_operand.vmem [shape: f32[64,64], index: 8, kind: input, shape index: {}]
  %s9 = inlined_call_operand.vmem [shape: f32[64,128], index: 9, kind: input, shape index: {}]
  %s10 = inlined_call_operand.vmem [shape: f32[3,64], index: 10, kind: input, shape index: {}]
  %s11 = inlined_call_operand.vmem [shape: f32[64,64], index: 11, kind: input, shape index: {}]
  %s12 = inlined_call_operand.hbm [shape: f32[64,128], index: 12, kind: input, shape index: {}]
  %s13 = inlined_call_operand.vmem [shape: f32[128,64], index: 13, kind: input, shape index: {}]
  %s14 = inlined_call_operand.hbm [shape: f32[19,64], index: 14, kind: input, shape index: {}]
  %s15 = inlined_call_operand.vmem [shape: f32[2,128], index: 15, kind: input, shape index: {}]
  %s16 = inlined_call_operand.vmem [shape: f32[1,128], index: 16, kind: input, shape index: {}]
  %s17 = inlined_call_operand.hbm [shape: f32[4,8,64], index: 17, kind: output, shape index: {0}]
  %s18 = inlined_call_operand.hbm [shape: f32[4,4,8,12], index: 18, kind: output, shape index: {1}]
  %19 = xla_tuple %s17, %s18
  %s20 = sld [smem:[#allocation0]]
  $region117: #{tpu_custom_call.1} parent=0
    _
  %s22 = ssub.s32 1, %s20
  %s23 = scalar_select 0, %s22, %s20
  $region1: #{tpu_custom_call.1} parent=0
    #allocation5 [shape = 'u8[32768]{0}', space=vmem, size = 0x8000, scoped, tag = 'input window, operand 12, single buffered']
    #allocation6 [shape = 's32[2]{0}', space=sflag, size = 0x8, scoped, tag = 'scoped memory for tpu_custom_call.1']
    #allocation7 [shape = 's32[2]{0}', space=sflag, size = 0x8, scoped, tag = 'scoped memory for tpu_custom_call.1']
    #allocation8 [shape = 'u8[12288]{0}', space=vmem, size = 0x3000, scoped, tag = 'input window, operand 14, single buffered']
    #allocation9 [shape = 's32[1]{0}', space=sflag, size = 0x4, scoped, tag = 'scoped memory for tpu_custom_call.1']
    #allocation10 [shape = 'u8[16384]{0}', space=vmem, size = 0x4000, scoped, tag = 'output window, operand 0']
    #allocation11 [shape = 'u8[65536]{0}', space=vmem, size = 0x10000, scoped, tag = 'output window, operand 1']
    #allocation12 [shape = 's32[2]{0}', space=sflag, size = 0x8, scoped, tag = 'scoped memory for tpu_custom_call.1']
    %24 = vsyncpa [#allocation6], 0
    %25 = vsyncpa [#allocation9], 0
    %26 = vsyncpa [#allocation7], 0
    %s27 = scalar_lea.sflag [#allocation7], 1
    %28 = vsyncpa %s27, 0
    %29 = vsyncpa [#allocation12], 0
    %s30 = scalar_lea.sflag [#allocation12], 1
    %31 = vsyncpa %s30, 0
    loop: start=0, step=1, limit=4
    $region2: #{tpu_custom_call.1} parent=1 // loop_pre_header
      _
    $region3: #{tpu_custom_call.1} parent=1 // loop_header
      %s33 = sphi 0, %s37
      %p34 = scmp.ge.s32.totalorder %s33, 4
      %s43 = sphi 0, %s45
      %s46 = sphi 0, %s43
      %s47 = sphi 0, %s46
      %s63 = sphi 0, %s47
      %s69 = sphi 0, %s71
      %s72 = sphi 0, %s69
      %s73 = sphi 0, %s72
      %s89 = sphi 0, %s73
      %s93 = sphi 0, %s93
      %s95 = sphi 0, %s93
      %s96 = sphi 0, %s95
      %s110 = sphi 0, %s96
      %s114 = sphi 0, %s114
      %s116 = sphi 0, %s114
      %s117 = sphi 0, %s116
      %s131 = sphi 0, %s117
      %s135 = sphi 0, %s135
      %s137 = sphi 0, %s135
      %s138 = sphi 0, %s137
      %s152 = sphi 0, %s138
      %s156 = sphi 0, %s156
      %s158 = sphi 0, %s156
      %s159 = sphi 0, %s158
      %s173 = sphi 0, %s159
      %s177 = sphi 0, %s177
      %s179 = sphi 0, %s177
      %s180 = sphi 0, %s179
      %s194 = sphi 0, %s180
      %s198 = sphi 0, %s198
      %s200 = sphi 0, %s198
      %s201 = sphi 0, %s200
      %s215 = sphi 0, %s201
      %s219 = sphi 0, %s219
      %s221 = sphi 0, %s219
      %s222 = sphi 0, %s221
      %s236 = sphi 0, %s222
      %s240 = sphi 0, %s240
      %s242 = sphi 0, %s240
      %s243 = sphi 0, %s242
      %s257 = sphi 0, %s243
      %s261 = sphi 0, %s261
      %s263 = sphi 0, %s261
      %s264 = sphi 0, %s263
      %s278 = sphi 0, %s264
      %s282 = sphi 0, %s282
      %s284 = sphi 0, %s282
      %s285 = sphi 0, %s284
      %s299 = sphi 0, %s285
      %s303 = sphi 0, %s303
      %s305 = sphi 0, %s303
      %s306 = sphi 0, %s305
      %s320 = sphi 0, %s306
      %s324 = sphi 0, %s324
      %s326 = sphi 0, %s324
      %s327 = sphi 0, %s326
      %s341 = sphi 0, %s327
      %s345 = sphi 0, %s345
      %s347 = sphi 0, %s345
      %s348 = sphi 0, %s347
      %s362 = sphi 0, %s348
      %s366 = sphi 0, %s366
      %s368 = sphi 0, %s366
      %s369 = sphi 0, %s368
      %s383 = sphi 0, %s369
      %s387 = sphi 0, %s387
      %s389 = sphi 0, %s387
      %s390 = sphi 0, %s389
      %s404 = sphi 0, %s390
      %s410 = sphi 0, %s412
      %s413 = sphi 0, %s410
      %s414 = sphi 0, %s413
      %s430 = sphi 0, %s414
      %s436 = sphi 0, %s438
      %s439 = sphi 0, %s436
      %s440 = sphi 0, %s439
      %s456 = sphi 0, %s440
    $region4: #{tpu_custom_call.1} parent=1 // loop_header_branch
      %36 = sbr.rel (%p34) target = $region8
    $region5: #{tpu_custom_call.1} parent=1 // loop_body
      %s38 = ssub.s32 %s33, 1
      %s39 = ssub.s32 %s33, 2
      %s40 = sadd.s32 %s33, 1
      %s41 = ssub.s32 %s33, %s40
      %p42 = scmp.eq.s32.totalorder %s41, 0
      %s44 = sadd.s32 %s43, 1
      %s45 = scalar_select %p42, %s43, %s44
      %p48 = pneg %p42
      %p49 = scmp.eq.s32.totalorder %s33, 1
      %p50 = por %p48, %p49
      %p51 = scmp.ne.s32.totalorder %s43, %s46
      %p52 = scmp.eq.s32.totalorder %s33, 0
      %p53 = por %p51, %p52
      %p54 = scmp.ne.s32.totalorder %s43, %s46
      %p55 = scmp.eq.s32.totalorder %s38, 1
      %p56 = por %p54, %p55
      %p57 = scmp.ne.s32.totalorder %s46, %s47
      %p58 = scmp.eq.s32.totalorder %s38, 0
      %p59 = por %p57, %p58
      %p60 = scmp.ne.s32.totalorder %s46, %s47
      %p61 = scmp.eq.s32.totalorder %s39, 1
      %p62 = por %p60, %p61
      %p64 = scmp.ne.s32.totalorder %s47, %s63
      %p65 = scmp.eq.s32.totalorder %s39, 0
      %p66 = por %p64, %p65
      %s67 = ssub.s32 %s33, %s40
      %p68 = scmp.eq.s32.totalorder %s67, 0
      %s70 = sadd.s32 %s69, 1
      %s71 = scalar_select %p68, %s69, %s70
      %p74 = pneg %p68
      %p75 = scmp.eq.s32.totalorder %s33, 1
      %p76 = por %p74, %p75
      %p77 = scmp.ne.s32.totalorder %s69, %s72
      %p78 = scmp.eq.s32.totalorder %s33, 0
      %p79 = por %p77, %p78
      %p80 = scmp.ne.s32.totalorder %s69, %s72
      %p81 = scmp.eq.s32.totalorder %s38, 1
      %p82 = por %p80, %p81
      %p83 = scmp.ne.s32.totalorder %s72, %s73
      %p84 = scmp.eq.s32.totalorder %s38, 0
      %p85 = por %p83, %p84
      %p86 = scmp.ne.s32.totalorder %s72, %s73
      %p87 = scmp.eq.s32.totalorder %s39, 1
      %p88 = por %p86, %p87
      %p90 = scmp.ne.s32.totalorder %s73, %s89
      %p91 = scmp.eq.s32.totalorder %s39, 0
      %p92 = por %p90, %p91
      %s94 = sadd.s32 %s93, 1
      %p97 = scmp.eq.s32.totalorder %s33, 1
      %p98 = scmp.ne.s32.totalorder %s93, %s95
      %p99 = scmp.eq.s32.totalorder %s33, 0
      %p100 = por %p98, %p99
      %p101 = scmp.ne.s32.totalorder %s93, %s95
      %p102 = scmp.eq.s32.totalorder %s38, 1
      %p103 = por %p101, %p102
      %p104 = scmp.ne.s32.totalorder %s95, %s96
      %p105 = scmp.eq.s32.totalorder %s38, 0
      %p106 = por %p104, %p105
      %p107 = scmp.ne.s32.totalorder %s95, %s96
      %p108 = scmp.eq.s32.totalorder %s39, 1
      %p109 = por %p107, %p108
      %p111 = scmp.ne.s32.totalorder %s96, %s110
      %p112 = scmp.eq.s32.totalorder %s39, 0
      %p113 = por %p111, %p112
      %s115 = sadd.s32 %s114, 1
      %p118 = scmp.eq.s32.totalorder %s33, 1
      %p119 = scmp.ne.s32.totalorder %s114, %s116
      %p120 = scmp.eq.s32.totalorder %s33, 0
      %p121 = por %p119, %p120
      %p122 = scmp.ne.s32.totalorder %s114, %s116
      %p123 = scmp.eq.s32.totalorder %s38, 1
      %p124 = por %p122, %p123
      %p125 = scmp.ne.s32.totalorder %s116, %s117
      %p126 = scmp.eq.s32.totalorder %s38, 0
      %p127 = por %p125, %p126
      %p128 = scmp.ne.s32.totalorder %s116, %s117
      %p129 = scmp.eq.s32.totalorder %s39, 1
      %p130 = por %p128, %p129
      %p132 = scmp.ne.s32.totalorder %s117, %s131
      %p133 = scmp.eq.s32.totalorder %s39, 0
      %p134 = por %p132, %p133
      %s136 = sadd.s32 %s135, 1
      %p139 = scmp.eq.s32.totalorder %s33, 1
      %p140 = scmp.ne.s32.totalorder %s135, %s137
      %p141 = scmp.eq.s32.totalorder %s33, 0
      %p142 = por %p140, %p141
      %p143 = scmp.ne.s32.totalorder %s135, %s137
      %p144 = scmp.eq.s32.totalorder %s38, 1
      %p145 = por %p143, %p144
      %p146 = scmp.ne.s32.totalorder %s137, %s138
      %p147 = scmp.eq.s32.totalorder %s38, 0
      %p148 = por %p146, %p147
      %p149 = scmp.ne.s32.totalorder %s137, %s138
      %p150 = scmp.eq.s32.totalorder %s39, 1
      %p151 = por %p149, %p150
      %p153 = scmp.ne.s32.totalorder %s138, %s152
      %p154 = scmp.eq.s32.totalorder %s39, 0
      %p155 = por %p153, %p154
      %s157 = sadd.s32 %s156, 1
      %p160 = scmp.eq.s32.totalorder %s33, 1
      %p161 = scmp.ne.s32.totalorder %s156, %s158
      %p162 = scmp.eq.s32.totalorder %s33, 0
      %p163 = por %p161, %p162
      %p164 = scmp.ne.s32.totalorder %s156, %s158
      %p165 = scmp.eq.s32.totalorder %s38, 1
      %p166 = por %p164, %p165
      %p167 = scmp.ne.s32.totalorder %s158, %s159
      %p168 = scmp.eq.s32.totalorder %s38, 0
      %p169 = por %p167, %p168
      %p170 = scmp.ne.s32.totalorder %s158, %s159
      %p171 = scmp.eq.s32.totalorder %s39, 1
      %p172 = por %p170, %p171
      %p174 = scmp.ne.s32.totalorder %s159, %s173
      %p175 = scmp.eq.s32.totalorder %s39, 0
      %p176 = por %p174, %p175
      %s178 = sadd.s32 %s177, 1
      %p181 = scmp.eq.s32.totalorder %s33, 1
      %p182 = scmp.ne.s32.totalorder %s177, %s179
      %p183 = scmp.eq.s32.totalorder %s33, 0
      %p184 = por %p182, %p183
      %p185 = scmp.ne.s32.totalorder %s177, %s179
      %p186 = scmp.eq.s32.totalorder %s38, 1
      %p187 = por %p185, %p186
      %p188 = scmp.ne.s32.totalorder %s179, %s180
      %p189 = scmp.eq.s32.totalorder %s38, 0
      %p190 = por %p188, %p189
      %p191 = scmp.ne.s32.totalorder %s179, %s180
      %p192 = scmp.eq.s32.totalorder %s39, 1
      %p193 = por %p191, %p192
      %p195 = scmp.ne.s32.totalorder %s180, %s194
      %p196 = scmp.eq.s32.totalorder %s39, 0
      %p197 = por %p195, %p196
      %s199 = sadd.s32 %s198, 1
      %p202 = scmp.eq.s32.totalorder %s33, 1
      %p203 = scmp.ne.s32.totalorder %s198, %s200
      %p204 = scmp.eq.s32.totalorder %s33, 0
      %p205 = por %p203, %p204
      %p206 = scmp.ne.s32.totalorder %s198, %s200
      %p207 = scmp.eq.s32.totalorder %s38, 1
      %p208 = por %p206, %p207
      %p209 = scmp.ne.s32.totalorder %s200, %s201
      %p210 = scmp.eq.s32.totalorder %s38, 0
      %p211 = por %p209, %p210
      %p212 = scmp.ne.s32.totalorder %s200, %s201
      %p213 = scmp.eq.s32.totalorder %s39, 1
      %p214 = por %p212, %p213
      %p216 = scmp.ne.s32.totalorder %s201, %s215
      %p217 = scmp.eq.s32.totalorder %s39, 0
      %p218 = por %p216, %p217
      %s220 = sadd.s32 %s219, 1
      %p223 = scmp.eq.s32.totalorder %s33, 1
      %p224 = scmp.ne.s32.totalorder %s219, %s221
      %p225 = scmp.eq.s32.totalorder %s33, 0
      %p226 = por %p224, %p225
      %p227 = scmp.ne.s32.totalorder %s219, %s221
      %p228 = scmp.eq.s32.totalorder %s38, 1
      %p229 = por %p227, %p228
      %p230 = scmp.ne.s32.totalorder %s221, %s222
      %p231 = scmp.eq.s32.totalorder %s38, 0
      %p232 = por %p230, %p231
      %p233 = scmp.ne.s32.totalorder %s221, %s222
      %p234 = scmp.eq.s32.totalorder %s39, 1
      %p235 = por %p233, %p234
      %p237 = scmp.ne.s32.totalorder %s222, %s236
      %p238 = scmp.eq.s32.totalorder %s39, 0
      %p239 = por %p237, %p238
      %s241 = sadd.s32 %s240, 1
      %p244 = scmp.eq.s32.totalorder %s33, 1
      %p245 = scmp.ne.s32.totalorder %s240, %s242
      %p246 = scmp.eq.s32.totalorder %s33, 0
      %p247 = por %p245, %p246
      %p248 = scmp.ne.s32.totalorder %s240, %s242
      %p249 = scmp.eq.s32.totalorder %s38, 1
      %p250 = por %p248, %p249
      %p251 = scmp.ne.s32.totalorder %s242, %s243
      %p252 = scmp.eq.s32.totalorder %s38, 0
      %p253 = por %p251, %p252
      %p254 = scmp.ne.s32.totalorder %s242, %s243
      %p255 = scmp.eq.s32.totalorder %s39, 1
      %p256 = por %p254, %p255
      %p258 = scmp.ne.s32.totalorder %s243, %s257
      %p259 = scmp.eq.s32.totalorder %s39, 0
      %p260 = por %p258, %p259
      %s262 = sadd.s32 %s261, 1
      %p265 = scmp.eq.s32.totalorder %s33, 1
      %p266 = scmp.ne.s32.totalorder %s261, %s263
      %p267 = scmp.eq.s32.totalorder %s33, 0
      %p268 = por %p266, %p267
      %p269 = scmp.ne.s32.totalorder %s261, %s263
      %p270 = scmp.eq.s32.totalorder %s38, 1
      %p271 = por %p269, %p270
      %p272 = scmp.ne.s32.totalorder %s263, %s264
      %p273 = scmp.eq.s32.totalorder %s38, 0
      %p274 = por %p272, %p273
      %p275 = scmp.ne.s32.totalorder %s263, %s264
      %p276 = scmp.eq.s32.totalorder %s39, 1
      %p277 = por %p275, %p276
      %p279 = scmp.ne.s32.totalorder %s264, %s278
      %p280 = scmp.eq.s32.totalorder %s39, 0
      %p281 = por %p279, %p280
      %s283 = sadd.s32 %s282, 1
      %p286 = scmp.eq.s32.totalorder %s33, 1
      %p287 = scmp.ne.s32.totalorder %s282, %s284
      %p288 = scmp.eq.s32.totalorder %s33, 0
      %p289 = por %p287, %p288
      %p290 = scmp.ne.s32.totalorder %s282, %s284
      %p291 = scmp.eq.s32.totalorder %s38, 1
      %p292 = por %p290, %p291
      %p293 = scmp.ne.s32.totalorder %s284, %s285
      %p294 = scmp.eq.s32.totalorder %s38, 0
      %p295 = por %p293, %p294
      %p296 = scmp.ne.s32.totalorder %s284, %s285
      %p297 = scmp.eq.s32.totalorder %s39, 1
      %p298 = por %p296, %p297
      %p300 = scmp.ne.s32.totalorder %s285, %s299
      %p301 = scmp.eq.s32.totalorder %s39, 0
      %p302 = por %p300, %p301
      %s304 = sadd.s32 %s303, 1
      %p307 = scmp.eq.s32.totalorder %s33, 1
      %p308 = scmp.ne.s32.totalorder %s303, %s305
      %p309 = scmp.eq.s32.totalorder %s33, 0
      %p310 = por %p308, %p309
      %p311 = scmp.ne.s32.totalorder %s303, %s305
      %p312 = scmp.eq.s32.totalorder %s38, 1
      %p313 = por %p311, %p312
      %p314 = scmp.ne.s32.totalorder %s305, %s306
      %p315 = scmp.eq.s32.totalorder %s38, 0
      %p316 = por %p314, %p315
      %p317 = scmp.ne.s32.totalorder %s305, %s306
      %p318 = scmp.eq.s32.totalorder %s39, 1
      %p319 = por %p317, %p318
      %p321 = scmp.ne.s32.totalorder %s306, %s320
      %p322 = scmp.eq.s32.totalorder %s39, 0
      %p323 = por %p321, %p322
      %s325 = sadd.s32 %s324, 1
      %p328 = scmp.eq.s32.totalorder %s33, 1
      %p329 = scmp.ne.s32.totalorder %s324, %s326
      %p330 = scmp.eq.s32.totalorder %s33, 0
      %p331 = por %p329, %p330
      %p332 = scmp.ne.s32.totalorder %s324, %s326
      %p333 = scmp.eq.s32.totalorder %s38, 1
      %p334 = por %p332, %p333
      %p335 = scmp.ne.s32.totalorder %s326, %s327
      %p336 = scmp.eq.s32.totalorder %s38, 0
      %p337 = por %p335, %p336
      %p338 = scmp.ne.s32.totalorder %s326, %s327
      %p339 = scmp.eq.s32.totalorder %s39, 1
      %p340 = por %p338, %p339
      %p342 = scmp.ne.s32.totalorder %s327, %s341
      %p343 = scmp.eq.s32.totalorder %s39, 0
      %p344 = por %p342, %p343
      %s346 = sadd.s32 %s345, 1
      %p349 = scmp.eq.s32.totalorder %s33, 1
      %p350 = scmp.ne.s32.totalorder %s345, %s347
      %p351 = scmp.eq.s32.totalorder %s33, 0
      %p352 = por %p350, %p351
      %p353 = scmp.ne.s32.totalorder %s345, %s347
      %p354 = scmp.eq.s32.totalorder %s38, 1
      %p355 = por %p353, %p354
      %p356 = scmp.ne.s32.totalorder %s347, %s348
      %p357 = scmp.eq.s32.totalorder %s38, 0
      %p358 = por %p356, %p357
      %p359 = scmp.ne.s32.totalorder %s347, %s348
      %p360 = scmp.eq.s32.totalorder %s39, 1
      %p361 = por %p359, %p360
      %p363 = scmp.ne.s32.totalorder %s348, %s362
      %p364 = scmp.eq.s32.totalorder %s39, 0
      %p365 = por %p363, %p364
      %s367 = sadd.s32 %s366, 1
      %p370 = scmp.eq.s32.totalorder %s33, 1
      %p371 = scmp.ne.s32.totalorder %s366, %s368
      %p372 = scmp.eq.s32.totalorder %s33, 0
      %p373 = por %p371, %p372
      %p374 = scmp.ne.s32.totalorder %s366, %s368
      %p375 = scmp.eq.s32.totalorder %s38, 1
      %p376 = por %p374, %p375
      %p377 = scmp.ne.s32.totalorder %s368, %s369
      %p378 = scmp.eq.s32.totalorder %s38, 0
      %p379 = por %p377, %p378
      %p380 = scmp.ne.s32.totalorder %s368, %s369
      %p381 = scmp.eq.s32.totalorder %s39, 1
      %p382 = por %p380, %p381
      %p384 = scmp.ne.s32.totalorder %s369, %s383
      %p385 = scmp.eq.s32.totalorder %s39, 0
      %p386 = por %p384, %p385
      %s388 = sadd.s32 %s387, 1
      %p391 = scmp.eq.s32.totalorder %s33, 1
      %p392 = scmp.ne.s32.totalorder %s387, %s389
      %p393 = scmp.eq.s32.totalorder %s33, 0
      %p394 = por %p392, %p393
      %p395 = scmp.ne.s32.totalorder %s387, %s389
      %p396 = scmp.eq.s32.totalorder %s38, 1
      %p397 = por %p395, %p396
      %p398 = scmp.ne.s32.totalorder %s389, %s390
      %p399 = scmp.eq.s32.totalorder %s38, 0
      %p400 = por %p398, %p399
      %p401 = scmp.ne.s32.totalorder %s389, %s390
      %p402 = scmp.eq.s32.totalorder %s39, 1
      %p403 = por %p401, %p402
      %p405 = scmp.ne.s32.totalorder %s390, %s404
      %p406 = scmp.eq.s32.totalorder %s39, 0
      %p407 = por %p405, %p406
      %s408 = ssub.s32 %s33, %s40
      %p409 = scmp.eq.s32.totalorder %s408, 0
      %s411 = sadd.s32 %s410, 1
      %s412 = scalar_select %p409, %s410, %s411
      %p415 = pneg %p409
      %p416 = scmp.eq.s32.totalorder %s33, 1
      %p417 = por %p415, %p416
      %p418 = scmp.ne.s32.totalorder %s410, %s413
      %p419 = scmp.eq.s32.totalorder %s33, 0
      %p420 = por %p418, %p419
      %p421 = scmp.ne.s32.totalorder %s410, %s413
      %p422 = scmp.eq.s32.totalorder %s38, 1
      %p423 = por %p421, %p422
      %p424 = scmp.ne.s32.totalorder %s413, %s414
      %p425 = scmp.eq.s32.totalorder %s38, 0
      %p426 = por %p424, %p425
      %p427 = scmp.ne.s32.totalorder %s413, %s414
      %p428 = scmp.eq.s32.totalorder %s39, 1
      %p429 = por %p427, %p428
      %p431 = scmp.ne.s32.totalorder %s414, %s430
      %p432 = scmp.eq.s32.totalorder %s39, 0
      %p433 = por %p431, %p432
      %s434 = ssub.s32 %s33, %s40
      %p435 = scmp.eq.s32.totalorder %s434, 0
      %s437 = sadd.s32 %s436, 1
      %s438 = scalar_select %p435, %s436, %s437
      %p441 = pneg %p435
      %p442 = scmp.eq.s32.totalorder %s33, 1
      %p443 = por %p441, %p442
      %p444 = scmp.ne.s32.totalorder %s436, %s439
      %p445 = scmp.eq.s32.totalorder %s33, 0
      %p446 = por %p444, %p445
      %p447 = scmp.ne.s32.totalorder %s436, %s439
      %p448 = scmp.eq.s32.totalorder %s38, 1
      %p449 = por %p447, %p448
      %p450 = scmp.ne.s32.totalorder %s439, %s440
      %p451 = scmp.eq.s32.totalorder %s38, 0
      %p452 = por %p450, %p451
      %p453 = scmp.ne.s32.totalorder %s439, %s440
      %p454 = scmp.eq.s32.totalorder %s39, 1
      %p455 = por %p453, %p454
      %p457 = scmp.ne.s32.totalorder %s440, %s456
      %p458 = scmp.eq.s32.totalorder %s39, 0
      %p459 = por %p457, %p458
      %p460 = scmp.le.s32.totalorder 1, %s33
      %p461 = scmp.lt.s32.totalorder %s33, 3
      %p462 = pnand %p460, %p461
      %p463 = pneg %p462
      // Predicated region
      $region9: #{tpu_custom_call.1} parent=5 // pred_check
        _
      $region10: #{tpu_custom_call.1} parent=5 // pred_check_branch
        %465 = sbr.rel (%p462) target = $region12
      $region11: #{tpu_custom_call.1} parent=5 // pred_region
        %s466 = ssub.s32 %s33, 1
        // Predicated region
        $region13: #{tpu_custom_call.1} parent=11 // pred_check
          %p467 = pneg %p106
        $region14: #{tpu_custom_call.1} parent=11 // pred_check_branch
          %469 = sbr.rel (%p467) target = $region16
        $region15: #{tpu_custom_call.1} parent=11 // pred_region
          _
        $region16: #{tpu_custom_call.1} parent=11 // pred_fallthru
          _
        // Predicated region
        $region17: #{tpu_custom_call.1} parent=11 // pred_check
          %p470 = pneg %p127
        $region18: #{tpu_custom_call.1} parent=11 // pred_check_branch
          %472 = sbr.rel (%p470) target = $region20
        $region19: #{tpu_custom_call.1} parent=11 // pred_region
          _
        $region20: #{tpu_custom_call.1} parent=11 // pred_fallthru
          _
        // Predicated region
        $region21: #{tpu_custom_call.1} parent=11 // pred_check
          %p473 = pneg %p148
        $region22: #{tpu_custom_call.1} parent=11 // pred_check_branch
          %475 = sbr.rel (%p473) target = $region24
        $region23: #{tpu_custom_call.1} parent=11 // pred_region
          _
        $region24: #{tpu_custom_call.1} parent=11 // pred_fallthru
          _
        // Predicated region
        $region25: #{tpu_custom_call.1} parent=11 // pred_check
          %p476 = pneg %p169
        $region26: #{tpu_custom_call.1} parent=11 // pred_check_branch
          %478 = sbr.rel (%p476) target = $region28
        $region27: #{tpu_custom_call.1} parent=11 // pred_region
          _
        $region28: #{tpu_custom_call.1} parent=11 // pred_fallthru
          _
        // Predicated region
        $region29: #{tpu_custom_call.1} parent=11 // pred_check
          %p479 = pneg %p190
        $region30: #{tpu_custom_call.1} parent=11 // pred_check_branch
          %481 = sbr.rel (%p479) target = $region32
        $region31: #{tpu_custom_call.1} parent=11 // pred_region
          _
        $region32: #{tpu_custom_call.1} parent=11 // pred_fallthru
          _
        // Predicated region
        $region33: #{tpu_custom_call.1} parent=11 // pred_check
          %p482 = pneg %p211
        $region34: #{tpu_custom_call.1} parent=11 // pred_check_branch
          %484 = sbr.rel (%p482) target = $region36
        $region35: #{tpu_custom_call.1} parent=11 // pred_region
          _
        $region36: #{tpu_custom_call.1} parent=11 // pred_fallthru
          _
        // Predicated region
        $region37: #{tpu_custom_call.1} parent=11 // pred_check
          %p485 = pneg %p232
        $region38: #{tpu_custom_call.1} parent=11 // pred_check_branch
          %487 = sbr.rel (%p485) target = $region40
        $region39: #{tpu_custom_call.1} parent=11 // pred_region
          _
        $region40: #{tpu_custom_call.1} parent=11 // pred_fallthru
          _
        // Predicated region
        $region41: #{tpu_custom_call.1} parent=11 // pred_check
          %p488 = pneg %p253
        $region42: #{tpu_custom_call.1} parent=11 // pred_check_branch
          %490 = sbr.rel (%p488) target = $region44
        $region43: #{tpu_custom_call.1} parent=11 // pred_region
          _
        $region44: #{tpu_custom_call.1} parent=11 // pred_fallthru
          _
        // Predicated region
        $region45: #{tpu_custom_call.1} parent=11 // pred_check
          %p491 = pneg %p274
        $region46: #{tpu_custom_call.1} parent=11 // pred_check_branch
          %493 = sbr.rel (%p491) target = $region48
        $region47: #{tpu_custom_call.1} parent=11 // pred_region
          _
        $region48: #{tpu_custom_call.1} parent=11 // pred_fallthru
          _
        // Predicated region
        $region49: #{tpu_custom_call.1} parent=11 // pred_check
          %p494 = pneg %p295
        $region50: #{tpu_custom_call.1} parent=11 // pred_check_branch
          %496 = sbr.rel (%p494) target = $region52
        $region51: #{tpu_custom_call.1} parent=11 // pred_region
          _
        $region52: #{tpu_custom_call.1} parent=11 // pred_fallthru
          _
        // Predicated region
        $region53: #{tpu_custom_call.1} parent=11 // pred_check
          %p497 = pneg %p316
        $region54: #{tpu_custom_call.1} parent=11 // pred_check_branch
          %499 = sbr.rel (%p497) target = $region56
        $region55: #{tpu_custom_call.1} parent=11 // pred_region
          %501 = vsyncadd [#allocation6], 0
          %s502 = sshll.u32 %s12, 4
          %s503 = int_to_ptr.hbm [resolvable:$true] %s502
          %s504 = sshll.u32 [#allocation5], 4
          %s505 = int_to_ptr.vmem [resolvable:$true] %s504
          %510 = dma.hbm_to_vmem [thread:$0]  %s503, 1024, %s505, [#allocation6], 128, 128, 8
        $region56: #{tpu_custom_call.1} parent=11 // pred_fallthru
          _
        // Predicated region
        $region57: #{tpu_custom_call.1} parent=11 // pred_check
          %p511 = pneg %p337
        $region58: #{tpu_custom_call.1} parent=11 // pred_check_branch
          %513 = sbr.rel (%p511) target = $region60
        $region59: #{tpu_custom_call.1} parent=11 // pred_region
          _
        $region60: #{tpu_custom_call.1} parent=11 // pred_fallthru
          _
        // Predicated region
        $region61: #{tpu_custom_call.1} parent=11 // pred_check
          %p514 = pneg %p358
        $region62: #{tpu_custom_call.1} parent=11 // pred_check_branch
          %516 = sbr.rel (%p514) target = $region64
        $region63: #{tpu_custom_call.1} parent=11 // pred_region
          %518 = vsyncadd [#allocation9], 0
          %s519 = sshll.u32 %s14, 4
          %s520 = int_to_ptr.hbm [resolvable:$true] %s519
          %s521 = sshll.u32 [#allocation8], 4
          %s522 = int_to_ptr.vmem [resolvable:$true] %s521
          %527 = dma.hbm_to_vmem [thread:$0]  %s520, 384, %s522, [#allocation9], 128, 128, 8
        $region64: #{tpu_custom_call.1} parent=11 // pred_fallthru
          _
        // Predicated region
        $region65: #{tpu_custom_call.1} parent=11 // pred_check
          %p528 = pneg %p379
        $region66: #{tpu_custom_call.1} parent=11 // pred_check_branch
          %530 = sbr.rel (%p528) target = $region68
        $region67: #{tpu_custom_call.1} parent=11 // pred_region
          _
        $region68: #{tpu_custom_call.1} parent=11 // pred_fallthru
          _
        // Predicated region
        $region69: #{tpu_custom_call.1} parent=11 // pred_check
          %p531 = pneg %p400
        $region70: #{tpu_custom_call.1} parent=11 // pred_check_branch
          %533 = sbr.rel (%p531) target = $region72
        $region71: #{tpu_custom_call.1} parent=11 // pred_region
          _
        $region72: #{tpu_custom_call.1} parent=11 // pred_fallthru
          _
      $region12: #{tpu_custom_call.1} parent=5 // pred_fallthru
        _
      %p534 = scmp.lt.s32.totalorder %s33, 2
      // Predicated region
      $region73: #{tpu_custom_call.1} parent=5 // pred_check
        %p535 = pneg %p534
      $region74: #{tpu_custom_call.1} parent=5 // pred_check_branch
        %537 = sbr.rel (%p535) target = $region76
      $region75: #{tpu_custom_call.1} parent=5 // pred_region
        // Predicated region
        $region77: #{tpu_custom_call.1} parent=75 // pred_check
          %p538 = pneg %p53
        $region78: #{tpu_custom_call.1} parent=75 // pred_check_branch
          %540 = sbr.rel (%p538) target = $region80
        $region79: #{tpu_custom_call.1} parent=75 // pred_region
          %s541 = smul.u32 2, %s33
          %p542 = scmp.lt.s32.totalorder %s541, 3
          %s543 = scalar_select %p542, %s541, 3
          %s544 = smul.addr %s543, 8
          %s545 = scalar_lea.vmem %s0, %s544
          %s546 = smul.u32 2, %s33
        $region80: #{tpu_custom_call.1} parent=75 // pred_fallthru
          _
        // Predicated region
        $region81: #{tpu_custom_call.1} parent=75 // pred_check
          %p547 = pneg %p79
        $region82: #{tpu_custom_call.1} parent=75 // pred_check_branch
          %549 = sbr.rel (%p547) target = $region84
        $region83: #{tpu_custom_call.1} parent=75 // pred_region
          %s550 = smul.u32 2, %s33
          %p551 = scmp.lt.s32.totalorder %s550, 3
          %s552 = scalar_select %p551, %s550, 3
          %s553 = smul.addr %s552, 2
          %s554 = smul.addr %s553, 8
          %s555 = scalar_lea.vmem %s1, %s554
          %s556 = smul.u32 2, %s33
        $region84: #{tpu_custom_call.1} parent=75 // pred_fallthru
          _
      $region76: #{tpu_custom_call.1} parent=5 // pred_fallthru
        _
      %p557 = scmp.le.s32.totalorder 1, %s33
      %p558 = scmp.lt.s32.totalorder %s33, 3
      %p559 = pnand %p557, %p558
      %p560 = pneg %p559
      // Predicated region
      $region85: #{tpu_custom_call.1} parent=5 // pred_check
        _
      $region86: #{tpu_custom_call.1} parent=5 // pred_check_branch
        %562 = sbr.rel (%p559) target = $region88
      $region87: #{tpu_custom_call.1} parent=5 // pred_region
        %s563 = ssub.s32 %s33, 1
        // Predicated region
        $region89: #{tpu_custom_call.1} parent=87 // pred_check
          %p564 = pneg %p316
        $region90: #{tpu_custom_call.1} parent=87 // pred_check_branch
          %566 = sbr.rel (%p564) target = $region92
        $region91: #{tpu_custom_call.1} parent=87 // pred_region
          %568 = dma.done [#allocation6], 1024
        $region92: #{tpu_custom_call.1} parent=87 // pred_fallthru
          _
        // Predicated region
        $region93: #{tpu_custom_call.1} parent=87 // pred_check
          %p569 = pneg %p358
        $region94: #{tpu_custom_call.1} parent=87 // pred_check_branch
          %571 = sbr.rel (%p569) target = $region96
        $region95: #{tpu_custom_call.1} parent=87 // pred_region
          %573 = dma.done [#allocation9], 384
        $region96: #{tpu_custom_call.1} parent=87 // pred_fallthru
          _
        %s574 = smul.u32 2, %s38
        %p575 = scmp.lt.s32.totalorder %s574, 3
        %s576 = scalar_select %p575, %s574, 3
        %s577 = smul.addr %s576, 8
        %s578 = scalar_lea.vmem %s0, %s577
        %p579 = pneg %p59
        %p580 = pneg %p56
        %s581 = smul.u32 2, %s38
        %p582 = scmp.lt.s32.totalorder %s581, 3
        %s583 = scalar_select %p582, %s581, 3
        %s584 = smul.addr %s583, 2
        %s585 = smul.addr %s584, 8
        %s586 = scalar_lea.vmem %s1, %s585
        %p587 = pneg %p85
        %p588 = pneg %p82
        %p589 = pneg %p106
        %p590 = pneg %p103
        %p591 = pneg %p127
        %p592 = pneg %p124
        %p593 = pneg %p148
        %p594 = pneg %p145
        %p595 = pneg %p169
        %p596 = pneg %p166
        %p597 = pneg %p190
        %p598 = pneg %p187
        %p599 = pneg %p211
        %p600 = pneg %p208
        %p601 = pneg %p232
        %p602 = pneg %p229
        %p603 = pneg %p253
        %p604 = pneg %p250
        %p605 = pneg %p274
        %p606 = pneg %p271
        %p607 = pneg %p295
        %p608 = pneg %p292
        %p609 = pneg %p316
        %p610 = pneg %p313
        %p611 = pneg %p337
        %p612 = pneg %p334
        %p613 = pneg %p358
        %p614 = pneg %p355
        %p615 = pneg %p379
        %p616 = pneg %p376
        %p617 = pneg %p400
        %p618 = pneg %p397
        %p619 = pneg %p426
        %p620 = pneg %p423
        %s621 = sand.u32 %s413, 1
        %s622 = scalar_lea.sflag [#allocation7], %s621
        %s623 = sand.u32 %s413, 1
        %s624 = smul.addr %s623, 16
        %s625 = scalar_lea.vmem [#allocation10], %s624
        %p626 = pneg %p452
        %p627 = pneg %p449
        %s628 = sand.u32 %s439, 1
        %s629 = scalar_lea.sflag [#allocation12], %s628
        %s630 = sand.u32 %s439, 1
        %s631 = smul.addr %s630, 64
        %s632 = scalar_lea.vmem [#allocation11], %s631
        %s633 = smul.u32 2, %s38
        %p634 = scmp.lt.s32.totalorder %s633, 3
        %s635 = scalar_select %p634, %s633, 3
        %s636 = smul.addr %s635, 8
        %s637 = scalar_lea.vmem %s0, %s636
        %s638 = smul.u32 2, %s38
        %s639 = smul.u32 2, %s38
        %p640 = scmp.lt.s32.totalorder %s639, 3
        %s641 = scalar_select %p640, %s639, 3
        %s642 = smul.addr %s641, 2
        %s643 = smul.addr %s642, 8
        %s644 = scalar_lea.vmem %s1, %s643
        %s645 = smul.u32 2, %s38
        %s646 = smul.u32 2, %s38
        %s647 = smul.u32 2, %s38
        %v648 = vld [vmem:[%s637] sm:$0xff]
        %v649 = vld [vmem:[%s637 + $0x8] sm:$0xff]
        %v650 = vld [vmem:[#allocation8] sm:$0x1]
        %v651 = vld [vmem:[#allocation8 + $0x1] sm:$0x1]
        %vm652 = vcmask 523264
        %v653 = vsel %vm652, %v648, 0.0
        %654 = vadd.xlane.f32.xlu0 %v653
        %v655 = vpop.xlane.xlu0 %654
        %v656 = vsel %vm652, %v649, 0.0
        %657 = vadd.xlane.f32.xlu0 %v656
        %v658 = vpop.xlane.xlu0 %657
        %v659 = vrcp.pop 64.0
        %v660 = vmul.f32 64.0, %v659
        %v661 = vsub.f32 1.0, %v660
        %v662 = vmul.f32 %v659, %v661
        %v663 = vadd.f32 %v659, %v662
        %vm664 = vweird.f32 %v659
        %v665 = vsel %vm664, %v659, %v663
        %v666 = vmul.f32 %v655, %v665
        %v667 = vmul.f32 %v658, %v665
        %v668 = vsub.f32 %v648, %v666
        %v669 = vsub.f32 %v649, %v667
        %v670 = vmul.f32 %v668, %v668
        %v671 = vmul.f32 %v669, %v669
        %v672 = vsel %vm652, %v670, 0.0
        %673 = vadd.xlane.f32.xlu0 %v672
        %v674 = vpop.xlane.xlu0 %673
        %v675 = vsel %vm652, %v671, 0.0
        %676 = vadd.xlane.f32.xlu0 %v675
        %v677 = vpop.xlane.xlu0 %676
        %v678 = vmul.f32 %v674, %v665
        %v679 = vmul.f32 %v677, %v665
        %v680 = vadd.f32 %v678, 1e-05
        %v681 = vadd.f32 %v679, 1e-05
        %v682 = vrsqrt.pop %v680
        %v683 = vmul.f32 %v682, %v680
        %v684 = vmul.f32 %v683, %v682
        %v685 = vmul.f32 0.5, %v684
        %v686 = vsub.f32 1.5, %v685
        %v687 = vmul.f32 %v682, %v686
        %vm688 = vweird.f32 %v680
        %vm689 = vweird.f32 %v682
        %vm690 = vmor %vm688, %vm689
        %v691 = vsel %vm690, %v682, %v687
        %v692 = vrsqrt.pop %v681
        %v693 = vmul.f32 %v692, %v681
        %v694 = vmul.f32 %v693, %v692
        %v695 = vmul.f32 0.5, %v694
        %v696 = vsub.f32 1.5, %v695
        %v697 = vmul.f32 %v692, %v696
        %vm698 = vweird.f32 %v681
        %vm699 = vweird.f32 %v692
        %vm700 = vmor %vm698, %vm699
        %v701 = vsel %vm700, %v692, %v697
        %v702 = vmul.f32 %v668, %v691
        %v703 = vmul.f32 %v669, %v701
        %v704 = vperm.slane %v650, 0
        %v705 = vmul.f32 %v702, %v704
        %v706 = vmul.f32 %v703, %v704
        %v707 = vperm.slane %v651, 0
        %v708 = vadd.f32 %v705, %v707
        %v709 = vadd.f32 %v706, %v707
        %v710 = vld [vmem:[%s15] sm:$0x1]
        %v711 = vld [vmem:[%s3] sm:$0xff]
        %v712 = vld [vmem:[%s3 + $0x8] sm:$0xff]
        %v713 = vld [vmem:[%s3 + $0x10] sm:$0xff]
        %v714 = vld [vmem:[%s3 + $0x18] sm:$0xff]
        %v715 = vld [vmem:[%s3 + $0x20] sm:$0xff]
        %v716 = vld [vmem:[%s3 + $0x28] sm:$0xff]
        %v717 = vld [vmem:[%s3 + $0x30] sm:$0xff]
        %v718 = vld [vmem:[%s3 + $0x38] sm:$0xff]
        %v719 = vperm.slane %v710, 0
        %v721 = vsel %vm652, %v708, 0
        %v724 = vsel %vm652, %v709, 0
        %726 = vmatpush.msra.mxu0 0.0
        %727 = vmatpush.msra.mxu0 0.0
        %728 = vmatpush.msra.mxu0 0.0
        %729 = vmatpush.msra.mxu0 0.0
        %730 = vmatpush.msra.mxu0 0.0
        %731 = vmatpush.msra.mxu0 0.0
        %732 = vmatpush.msra.mxu0 0.0
        %733 = vmatpush.msra.mxu0 0.0
        %734 = vmatpush.msra.mxu0 %v718
        %735 = vmatpush.msra.mxu0 %v717
        %736 = vmatpush.msra.mxu0 %v716
        %737 = vmatpush.msra.mxu0 %v715
        %738 = vmatpush.msra.mxu0 %v714
        %739 = vmatpush.msra.mxu0 %v713
        %740 = vmatpush.msra.mxu0 %v712
        %741 = vmatpush.msra.mxu0 %v711
        %742 = vmatmul.f32.gmra.mxu0 %v721
        %v743 = vpop.f32.mrf.mxu0
        %v744 = vadd.f32 %v719, %v743
        %745 = vmatmul.f32.gmra.mxu0 %v724
        %v746 = vpop.f32.mrf.mxu0
        %v747 = vadd.f32 %v719, %v746
        %748 = vdwg.mxu0
        %v749 = vxor.u32 %v744, 2147483648
        %v750 = vxor.u32 %v747, 2147483648
        %v751 = vmul.f32 %v749, 1.442695
        %v752 = vpow.pop %v751
        %v753 = vmul.f32 %v750, 1.442695
        %v754 = vpow.pop %v753
        %v755 = vadd.f32 %v752, 1.0
        %v756 = vadd.f32 %v754, 1.0
        %v757 = vrcp.pop %v755
        %v758 = vmul.f32 %v755, %v757
        %v759 = vsub.f32 1.0, %v758
        %v760 = vmul.f32 %v757, %v759
        %v761 = vadd.f32 %v757, %v760
        %vm762 = vweird.f32 %v755
        %vm763 = vweird.f32 %v757
        %vm764 = vmor %vm762, %vm763
        %v765 = vsel %vm764, %v757, %v761
        %v766 = vand.u32 2147483647, %v755
        %vm767 = vcmp.eq.f32.partialorder %v766, 8.507059e+37
        %v768 = vand.u32 %v755, 2147483648
        %v769 = vor.u32 1.1754944e-38, %v768
        %v770 = vsel %vm767, %v769, %v765
        %v771 = vmul.f32 1.0, %v770
        %v772 = vrcp.pop %v756
        %v773 = vmul.f32 %v756, %v772
        %v774 = vsub.f32 1.0, %v773
        %v775 = vmul.f32 %v772, %v774
        %v776 = vadd.f32 %v772, %v775
        %vm777 = vweird.f32 %v756
        %vm778 = vweird.f32 %v772
        %vm779 = vmor %vm777, %vm778
        %v780 = vsel %vm779, %v772, %v776
        %v781 = vand.u32 2147483647, %v756
        %vm782 = vcmp.eq.f32.partialorder %v781, 8.507059e+37
        %v783 = vand.u32 %v756, 2147483648
        %v784 = vor.u32 1.1754944e-38, %v783
        %v785 = vsel %vm782, %v784, %v780
        %v786 = vmul.f32 1.0, %v785
        %v787 = vmul.f32 %v744, %v771
        %v788 = vmul.f32 %v747, %v786
        %v789 = vld [vmem:[#allocation8 + $0x2] sm:$0x1]
        %v790 = vld [vmem:[%s4] sm:$0xff]
        %v791 = vld [vmem:[%s4 + $0x8] sm:$0xff]
        %v792 = vld [vmem:[%s4 + $0x10] sm:$0xff]
        %v793 = vld [vmem:[%s4 + $0x18] sm:$0xff]
        %v794 = vld [vmem:[%s4 + $0x20] sm:$0xff]
        %v795 = vld [vmem:[%s4 + $0x28] sm:$0xff]
        %v796 = vld [vmem:[%s4 + $0x30] sm:$0xff]
        %v797 = vld [vmem:[%s4 + $0x38] sm:$0xff]
        %v798 = vld [vmem:[%s4 + $0x40] sm:$0xff]
        %v799 = vld [vmem:[%s4 + $0x48] sm:$0xff]
        %v800 = vld [vmem:[%s4 + $0x50] sm:$0xff]
        %v801 = vld [vmem:[%s4 + $0x58] sm:$0xff]
        %v802 = vld [vmem:[%s4 + $0x60] sm:$0xff]
        %v803 = vld [vmem:[%s4 + $0x68] sm:$0xff]
        %v804 = vld [vmem:[%s4 + $0x70] sm:$0xff]
        %v805 = vld [vmem:[%s4 + $0x78] sm:$0xff]
        %v806 = vperm.slane %v789, 0
        %807 = vmatpush.msra.mxu0 %v805
        %808 = vmatpush.msra.mxu0 %v804
        %809 = vmatpush.msra.mxu0 %v803
        %810 = vmatpush.msra.mxu0 %v802
        %811 = vmatpush.msra.mxu0 %v801
        %812 = vmatpush.msra.mxu0 %v800
        %813 = vmatpush.msra.mxu0 %v799
        %814 = vmatpush.msra.mxu0 %v798
        %815 = vmatpush.msra.mxu0 %v797
        %816 = vmatpush.msra.mxu0 %v796
        %817 = vmatpush.msra.mxu0 %v795
        %818 = vmatpush.msra.mxu0 %v794
        %819 = vmatpush.msra.mxu0 %v793
        %820 = vmatpush.msra.mxu0 %v792
        %821 = vmatpush.msra.mxu0 %v791
        %822 = vmatpush.msra.mxu0 %v790
        %823 = vmatmul.f32.gmra.mxu0 %v787
        %v824 = vpop.f32.mrf.mxu0
        %v825 = vadd.f32 %v806, %v824
        %826 = vmatmul.f32.gmra.mxu0 %v788
        %v827 = vpop.f32.mrf.mxu0
        %v828 = vadd.f32 %v806, %v827
        %829 = vdwg.mxu0
        %v830 = vmul.f32 %v825, 0.5
        %v831 = vmul.f32 %v828, 0.5
        %v832 = vadd.f32 %v648, %v830
        %v833 = vadd.f32 %v649, %v831
        %v834 = vld [vmem:[#allocation8 + $0x3] sm:$0x1]
        %v835 = vld [vmem:[#allocation8 + $0x4] sm:$0x1]
        %v836 = vsel %vm652, %v832, 0.0
        %837 = vadd.xlane.f32.xlu0 %v836
        %v838 = vpop.xlane.xlu0 %837
        %v839 = vsel %vm652, %v833, 0.0
        %840 = vadd.xlane.f32.xlu0 %v839
        %v841 = vpop.xlane.xlu0 %840
        %v842 = vmul.f32 %v838, %v665
        %v843 = vmul.f32 %v841, %v665
        %v844 = vsub.f32 %v832, %v842
        %v845 = vsub.f32 %v833, %v843
        %v846 = vmul.f32 %v844, %v844
        %v847 = vmul.f32 %v845, %v845
        %v848 = vsel %vm652, %v846, 0.0
        %849 = vadd.xlane.f32.xlu0 %v848
        %v850 = vpop.xlane.xlu0 %849
        %v851 = vsel %vm652, %v847, 0.0
        %852 = vadd.xlane.f32.xlu0 %v851
        %v853 = vpop.xlane.xlu0 %852
        %v854 = vmul.f32 %v850, %v665
        %v855 = vmul.f32 %v853, %v665
        %v856 = vadd.f32 %v854, 1e-05
        %v857 = vadd.f32 %v855, 1e-05
        %v858 = vrsqrt.pop %v856
        %v859 = vmul.f32 %v858, %v856
        %v860 = vmul.f32 %v859, %v858
        %v861 = vmul.f32 0.5, %v860
        %v862 = vsub.f32 1.5, %v861
        %v863 = vmul.f32 %v858, %v862
        %vm864 = vweird.f32 %v856
        %vm865 = vweird.f32 %v858
        %vm866 = vmor %vm864, %vm865
        %v867 = vsel %vm866, %v858, %v863
        %v868 = vrsqrt.pop %v857
        %v869 = vmul.f32 %v868, %v857
        %v870 = vmul.f32 %v869, %v868
        %v871 = vmul.f32 0.5, %v870
        %v872 = vsub.f32 1.5, %v871
        %v873 = vmul.f32 %v868, %v872
        %vm874 = vweird.f32 %v857
        %vm875 = vweird.f32 %v868
        %vm876 = vmor %vm874, %vm875
        %v877 = vsel %vm876, %v868, %v873
        %v878 = vmul.f32 %v844, %v867
        %v879 = vmul.f32 %v845, %v877
        %v880 = vperm.slane %v834, 0
        %v881 = vmul.f32 %v878, %v880
        %v882 = vmul.f32 %v879, %v880
        %v883 = vperm.slane %v835, 0
        %v884 = vadd.f32 %v881, %v883
        %v885 = vadd.f32 %v882, %v883
        %v886 = vld [vmem:[%s5] sm:$0xff]
        %v887 = vld [vmem:[%s5 + $0x8] sm:$0xff]
        %v888 = vld [vmem:[%s5 + $0x10] sm:$0xff]
        %v889 = vld [vmem:[%s5 + $0x18] sm:$0xff]
        %v890 = vld [vmem:[%s5 + $0x20] sm:$0xff]
        %v891 = vld [vmem:[%s5 + $0x28] sm:$0xff]
        %v892 = vld [vmem:[%s5 + $0x30] sm:$0xff]
        %v893 = vld [vmem:[%s5 + $0x38] sm:$0xff]
        %v895 = vsel %vm652, %v884, 0
        %v898 = vsel %vm652, %v885, 0
        %900 = vmatpush.msra.mxu0 0.0
        %901 = vmatpush.msra.mxu0 0.0
        %902 = vmatpush.msra.mxu0 0.0
        %903 = vmatpush.msra.mxu0 0.0
        %904 = vmatpush.msra.mxu0 0.0
        %905 = vmatpush.msra.mxu0 0.0
        %906 = vmatpush.msra.mxu0 0.0
        %907 = vmatpush.msra.mxu0 0.0
        %908 = vmatpush.msra.mxu0 %v893
        %909 = vmatpush.msra.mxu0 %v892
        %910 = vmatpush.msra.mxu0 %v891
        %911 = vmatpush.msra.mxu0 %v890
        %912 = vmatpush.msra.mxu0 %v889
        %913 = vmatpush.msra.mxu0 %v888
        %914 = vmatpush.msra.mxu0 %v887
        %915 = vmatpush.msra.mxu0 %v886
        %916 = vmatmul.f32.gmra.mxu0 %v895
        %v917 = vpop.f32.mrf.mxu0
        %v918 = vadd.f32 0.0, %v917
        %919 = vmatmul.f32.gmra.mxu0 %v898
        %v920 = vpop.f32.mrf.mxu0
        %v921 = vadd.f32 0.0, %v920
        %922 = vdwg.mxu0
        %v923 = vld [vmem:[%s2] sm:$0xff]
        %v924 = vld [vmem:[%s2 + $0x8] sm:$0xff]
        %v925 = vld [vmem:[%s2 + $0x10] sm:$0xff]
        %v926 = vld [vmem:[%s2 + $0x18] sm:$0xff]
        %v927 = vld [vmem:[%s2 + $0x20] sm:$0xff]
        %v928 = vld [vmem:[%s2 + $0x28] sm:$0xff]
        %v929 = vld [vmem:[%s2 + $0x30] sm:$0xff]
        %v930 = vld [vmem:[%s2 + $0x38] sm:$0xff]
        %v931 = vld [vmem:[%s2 + $0x40] sm:$0xff]
        %v932 = vld [vmem:[%s2 + $0x48] sm:$0xff]
        %v933 = vld [vmem:[%s2 + $0x50] sm:$0xff]
        %v934 = vld [vmem:[%s2 + $0x58] sm:$0xff]
        %v935 = vld [vmem:[%s2 + $0x60] sm:$0xff]
        %v936 = vld [vmem:[%s2 + $0x68] sm:$0xff]
        %v937 = vld [vmem:[%s2 + $0x70] sm:$0xff]
        %v938 = vld [vmem:[%s2 + $0x78] sm:$0xff]
        %v939 = vld [vmem:[%s7] sm:$0xff]
        %v940 = vld [vmem:[%s7 + $0x8] sm:$0xff]
        %v941 = vld [vmem:[%s7 + $0x10] sm:$0xff]
        %v942 = vld [vmem:[%s7 + $0x18] sm:$0xff]
        %v943 = vld [vmem:[%s7 + $0x20] sm:$0xff]
        %v944 = vld [vmem:[%s7 + $0x28] sm:$0xff]
        %v945 = vld [vmem:[%s7 + $0x30] sm:$0xff]
        %v946 = vld [vmem:[%s7 + $0x38] sm:$0xff]
        %v948 = vsel %vm652, %v923, 0
        %v951 = vsel %vm652, %v924, 0
        %v954 = vsel %vm652, %v925, 0
        %v957 = vsel %vm652, %v926, 0
        %v960 = vsel %vm652, %v927, 0
        %v963 = vsel %vm652, %v928, 0
        %v966 = vsel %vm652, %v929, 0
        %v969 = vsel %vm652, %v930, 0
        %v972 = vsel %vm652, %v931, 0
        %v975 = vsel %vm652, %v932, 0
        %v978 = vsel %vm652, %v933, 0
        %v981 = vsel %vm652, %v934, 0
        %v984 = vsel %vm652, %v935, 0
        %v987 = vsel %vm652, %v936, 0
        %v990 = vsel %vm652, %v937, 0
        %v993 = vsel %vm652, %v938, 0
        %995 = vmatpush.msra.mxu0 0.0
        %996 = vmatpush.msra.mxu0 0.0
        %997 = vmatpush.msra.mxu0 0.0
        %998 = vmatpush.msra.mxu0 0.0
        %999 = vmatpush.msra.mxu0 0.0
        %1000 = vmatpush.msra.mxu0 0.0
        %1001 = vmatpush.msra.mxu0 0.0
        %1002 = vmatpush.msra.mxu0 0.0
        %1003 = vmatpush.msra.mxu0 %v946
        %1004 = vmatpush.msra.mxu0 %v945
        %1005 = vmatpush.msra.mxu0 %v944
        %1006 = vmatpush.msra.mxu0 %v943
        %1007 = vmatpush.msra.mxu0 %v942
        %1008 = vmatpush.msra.mxu0 %v941
        %1009 = vmatpush.msra.mxu0 %v940
        %1010 = vmatpush.msra.mxu0 %v939
        %1011 = vmatmul.f32.gmra.mxu0 %v948
        %v1012 = vpop.f32.mrf.mxu0
        %v1013 = vadd.f32 0.0, %v1012
        %1014 = vmatmul.f32.gmra.mxu0 %v951
        %v1015 = vpop.f32.mrf.mxu0
        %v1016 = vadd.f32 0.0, %v1015
        %1017 = vmatmul.f32.gmra.mxu0 %v954
        %v1018 = vpop.f32.mrf.mxu0
        %v1019 = vadd.f32 0.0, %v1018
        %1020 = vmatmul.f32.gmra.mxu0 %v957
        %v1021 = vpop.f32.mrf.mxu0
        %v1022 = vadd.f32 0.0, %v1021
        %1023 = vmatmul.f32.gmra.mxu0 %v960
        %v1024 = vpop.f32.mrf.mxu0
        %v1025 = vadd.f32 0.0, %v1024
        %1026 = vmatmul.f32.gmra.mxu0 %v963
        %v1027 = vpop.f32.mrf.mxu0
        %v1028 = vadd.f32 0.0, %v1027
        %1029 = vmatmul.f32.gmra.mxu0 %v966
        %v1030 = vpop.f32.mrf.mxu0
        %v1031 = vadd.f32 0.0, %v1030
        %1032 = vmatmul.f32.gmra.mxu0 %v969
        %v1033 = vpop.f32.mrf.mxu0
        %v1034 = vadd.f32 0.0, %v1033
        %1035 = vmatmul.f32.gmra.mxu0 %v972
        %v1036 = vpop.f32.mrf.mxu0
        %v1037 = vadd.f32 0.0, %v1036
        %1038 = vmatmul.f32.gmra.mxu0 %v975
        %v1039 = vpop.f32.mrf.mxu0
        %v1040 = vadd.f32 0.0, %v1039
        %1041 = vmatmul.f32.gmra.mxu0 %v978
        %v1042 = vpop.f32.mrf.mxu0
        %v1043 = vadd.f32 0.0, %v1042
        %1044 = vmatmul.f32.gmra.mxu0 %v981
        %v1045 = vpop.f32.mrf.mxu0
        %v1046 = vadd.f32 0.0, %v1045
        %1047 = vmatmul.f32.gmra.mxu0 %v984
        %v1048 = vpop.f32.mrf.mxu0
        %v1049 = vadd.f32 0.0, %v1048
        %1050 = vmatmul.f32.gmra.mxu0 %v987
        %v1051 = vpop.f32.mrf.mxu0
        %v1052 = vadd.f32 0.0, %v1051
        %1053 = vmatmul.f32.gmra.mxu0 %v990
        %v1054 = vpop.f32.mrf.mxu0
        %v1055 = vadd.f32 0.0, %v1054
        %1056 = vmatmul.f32.gmra.mxu0 %v993
        %v1057 = vpop.f32.mrf.mxu0
        %v1058 = vadd.f32 0.0, %v1057
        %1059 = vdwg.mxu0
        %v1060 = vld [vmem:[%s644] sm:$0xff]
        %v1061 = vld [vmem:[%s644 + $0x8] sm:$0xf]
        %v1062 = vld [vmem:[%s6] sm:$0xff]
        %v1063 = vld [vmem:[%s6 + $0x8] sm:$0xff]
        %v1064 = vld [vmem:[%s6 + $0x10] sm:$0xff]
        %v1065 = vld [vmem:[%s6 + $0x18] sm:$0xff]
        %v1066 = vld [vmem:[%s6 + $0x20] sm:$0xff]
        %v1067 = vld [vmem:[%s6 + $0x28] sm:$0xff]
        %v1068 = vld [vmem:[%s6 + $0x30] sm:$0xff]
        %v1069 = vld [vmem:[%s6 + $0x38] sm:$0xff]
        %v1071 = vsel %vm652, %v1060, 0
        %v1074 = vsel %vm652, %v1061, 0
        %1076 = vmatpush.msra.mxu0 0.0
        %1077 = vmatpush.msra.mxu0 0.0
        %1078 = vmatpush.msra.mxu0 0.0
        %1079 = vmatpush.msra.mxu0 0.0
        %1080 = vmatpush.msra.mxu0 0.0
        %1081 = vmatpush.msra.mxu0 0.0
        %1082 = vmatpush.msra.mxu0 0.0
        %1083 = vmatpush.msra.mxu0 0.0
        %1084 = vmatpush.msra.mxu0 %v1069
        %1085 = vmatpush.msra.mxu0 %v1068
        %1086 = vmatpush.msra.mxu0 %v1067
        %1087 = vmatpush.msra.mxu0 %v1066
        %1088 = vmatpush.msra.mxu0 %v1065
        %1089 = vmatpush.msra.mxu0 %v1064
        %1090 = vmatpush.msra.mxu0 %v1063
        %1091 = vmatpush.msra.mxu0 %v1062
        %1092 = vmatmul.f32.gmra.mxu0 %v1071
        %v1093 = vpop.f32.mrf.mxu0
        %v1094 = vadd.f32 0.0, %v1093
        %1095 = vmatmul.f32.gmra.mxu0 %v1074
        %v1096 = vpop.f32.mrf.mxu0
        %v1097 = vadd.f32 0.0, %v1096
        %1098 = vdwg.mxu0
        %1099 = vst [vmem:[#allocation2] sm:$0xff] %v1094
        %1100 = vst [vmem:[#allocation2 + $0x8] sm:$0xf] %v1097
        %s1101 = scalar_lea.vmem %s644, 16
        %v1102 = vld [vmem:[%s1101] sm:$0xff]
        %v1103 = vld [vmem:[%s1101 + $0x8] sm:$0xf]
        %v1104 = vld [vmem:[%s6] sm:$0xff]
        %v1105 = vld [vmem:[%s6 + $0x8] sm:$0xff]
        %v1106 = vld [vmem:[%s6 + $0x10] sm:$0xff]
        %v1107 = vld [vmem:[%s6 + $0x18] sm:$0xff]
        %v1108 = vld [vmem:[%s6 + $0x20] sm:$0xff]
        %v1109 = vld [vmem:[%s6 + $0x28] sm:$0xff]
        %v1110 = vld [vmem:[%s6 + $0x30] sm:$0xff]
        %v1111 = vld [vmem:[%s6 + $0x38] sm:$0xff]
        %v1113 = vsel %vm652, %v1102, 0
        %v1116 = vsel %vm652, %v1103, 0
        %1118 = vmatpush.msra.mxu0 0.0
        %1119 = vmatpush.msra.mxu0 0.0
        %1120 = vmatpush.msra.mxu0 0.0
        %1121 = vmatpush.msra.mxu0 0.0
        %1122 = vmatpush.msra.mxu0 0.0
        %1123 = vmatpush.msra.mxu0 0.0
        %1124 = vmatpush.msra.mxu0 0.0
        %1125 = vmatpush.msra.mxu0 0.0
        %1126 = vmatpush.msra.mxu0 %v1111
        %1127 = vmatpush.msra.mxu0 %v1110
        %1128 = vmatpush.msra.mxu0 %v1109
        %1129 = vmatpush.msra.mxu0 %v1108
        %1130 = vmatpush.msra.mxu0 %v1107
        %1131 = vmatpush.msra.mxu0 %v1106
        %1132 = vmatpush.msra.mxu0 %v1105
        %1133 = vmatpush.msra.mxu0 %v1104
        %1134 = vmatmul.f32.gmra.mxu0 %v1113
        %v1135 = vpop.f32.mrf.mxu0
        %v1136 = vadd.f32 0.0, %v1135
        %1137 = vmatmul.f32.gmra.mxu0 %v1116
        %v1138 = vpop.f32.mrf.mxu0
        %v1139 = vadd.f32 0.0, %v1138
        %1140 = vdwg.mxu0
        %s1141 = scalar_lea.vmem [#allocation2], 16
        %1142 = vst [vmem:[%s1141] sm:$0xff] %v1136
        %1143 = vst [vmem:[%s1141 + $0x8] sm:$0xf] %v1139
        %v1144 = vld [vmem:[#allocation8 + $0x5] sm:$0x1]
        %v1145 = vperm.slane %v1144, 0
        %v1146 = vadd.f32 %v918, %v1145
        %v1147 = vadd.f32 %v921, %v1145
        %v1148 = vld [vmem:[#allocation8 + $0x6] sm:$0x1]
        %v1149 = vperm.slane %v1148, 0
        %v1150 = vadd.f32 %v918, %v1149
        %v1151 = vadd.f32 %v921, %v1149
        %v1152 = vlaneseq
        %v1153 = vshrl.u32 %v1152, 7
        %v1154 = vlaneseq
        %v1155 = vand.u32 %v1154, 127
        %v1156 = vsub.s32 %v1155, %v1153
        %vm1157 = vcmp.le.s32.totalorder %v1156, 4
        %v1158 = vadd.s32 %v1153, 8
        %vm1159 = vcmp.lt.s32.totalorder %v1153, 0
        %v1160 = vsub.s32 0, %v1153
        %v1161 = vsel %vm1159, %v1160, %v1153
        %v1162 = vshrl.u32 %v1161, 3
        %v1163 = vand.u32 %v1161, 7
        %v1164 = vsub.s32 0, %v1163
        %v1165 = vsel %vm1159, %v1164, %v1163
        %vm1166 = vcmp.lt.s32.totalorder %v1158, 0
        %v1167 = vsub.s32 0, %v1158
        %v1168 = vsel %vm1166, %v1167, %v1158
        %v1169 = vshrl.u32 %v1168, 3
        %v1170 = vand.u32 %v1168, 7
        %v1171 = vsub.s32 0, %v1170
        %v1172 = vsel %vm1166, %v1171, %v1170
        %vm1173 = vcmp.ne.s32.totalorder %v1165, 0
        %vm1174 = vcmp.ne.s32.totalorder %v1172, 0
        %vm1175 = vcmp.lt.s32.totalorder %v1165, 0
        %vm1176 = vcmp.lt.s32.totalorder %v1172, 0
        %vm1177 = vmand %vm1175, %vm1173
        %vm1178 = vmand %vm1176, %vm1174
        %v1179 = vadd.s32 %v1165, 8
        %v1180 = vadd.s32 %v1172, 8
        %v1181 = vsel %vm1177, %v1179, %v1165
        %v1182 = vsel %vm1178, %v1180, %v1172
        %v1183 = vsub.s32 7, %v1181
        %v1184 = vsub.s32 7, %v1182
        %v1185 = vld [vmem:[#allocation2] sm:$0xff]
        %v1186 = vld [vmem:[#allocation2 + $0x8] sm:$0xf]
        %v1187 = vld [vmem:[#allocation2 + $0x10] sm:$0xff]
        %v1188 = vld [vmem:[#allocation2 + $0x18] sm:$0xf]
        %vm1189 = vcmask 130048
        %v1191 = vsel %vm1189, %v1150, 0
        %v1194 = vsel %vm1189, %v1151, 0
        %v1197 = vsel %vm1189, %v1013, 0
        %v1200 = vsel %vm1189, %v1016, 0
        %v1203 = vsel %vm1189, %v1019, 0
        %v1206 = vsel %vm1189, %v1022, 0
        %v1209 = vsel %vm1189, %v1025, 0
        %v1212 = vsel %vm1189, %v1028, 0
        %v1215 = vsel %vm1189, %v1031, 0
        %v1218 = vsel %vm1189, %v1034, 0
        %v1221 = vsel %vm1189, %v1037, 0
        %v1224 = vsel %vm1189, %v1040, 0
        %v1227 = vsel %vm1189, %v1043, 0
        %v1230 = vsel %vm1189, %v1046, 0
        %v1233 = vsel %vm1189, %v1049, 0
        %v1236 = vsel %vm1189, %v1052, 0
        %v1239 = vsel %vm1189, %v1055, 0
        %v1242 = vsel %vm1189, %v1058, 0
        %1244 = vmatpush.xpose.msra.mxu0 %v1242
        %1245 = vmatpush.xpose.msra.mxu0 %v1239
        %1246 = vmatpush.xpose.msra.mxu0 %v1236
        %1247 = vmatpush.xpose.msra.mxu0 %v1233
        %1248 = vmatpush.xpose.msra.mxu0 %v1230
        %1249 = vmatpush.xpose.msra.mxu0 %v1227
        %1250 = vmatpush.xpose.msra.mxu0 %v1224
        %1251 = vmatpush.xpose.msra.mxu0 %v1221
        %1252 = vmatpush.xpose.msra.mxu0 %v1218
        %1253 = vmatpush.xpose.msra.mxu0 %v1215
        %1254 = vmatpush.xpose.msra.mxu0 %v1212
        %1255 = vmatpush.xpose.msra.mxu0 %v1209
        %1256 = vmatpush.xpose.msra.mxu0 %v1206
        %1257 = vmatpush.xpose.msra.mxu0 %v1203
        %1258 = vmatpush.xpose.msra.mxu0 %v1200
        %1259 = vmatpush.xpose.msra.mxu0 %v1197
        %1260 = vmatmul.f32.gmra.mxu0 %v1191
        %v1261 = vpop.f32.mrf.mxu0
        %v1262 = vadd.f32 0.0, %v1261
        %1263 = vmatmul.f32.gmra.mxu0 %v1194
        %v1264 = vpop.f32.mrf.mxu0
        %v1265 = vadd.f32 0.0, %v1264
        %1266 = vdwg.mxu0
        %1267 = vrot.lane.b32.xlu0 %v1262, 127
        %v1268 = vpop.permute.xlu0 %1267
        %1269 = vrot.lane.b32.xlu0 %v1265, 127
        %v1270 = vpop.permute.xlu0 %1269
        %v1271 = vand.u32 %v1183, 1
        %v1272 = vand.u32 %v1184, 1
        %vm1273 = vcmp.gt.s32.totalorder %v1271, 0
        %vm1274 = vcmp.gt.s32.totalorder %v1272, 0
        %v1275 = vsel %vm1273, 1, 0
        %v1276 = vsel %vm1274, 1, 0
        %vm1277 = vcmp.eq.s32.totalorder %v1275, 1
        %vm1278 = vcmp.eq.s32.totalorder %v1276, 1
        %v1279 = vsel %vm1277, %v1268, %v1262
        %v1280 = vsel %vm1278, %v1270, %v1265
        %1281 = vrot.lane.b32.xlu0 %v1279, 126
        %v1282 = vpop.permute.xlu0 %1281
        %1283 = vrot.lane.b32.xlu0 %v1280, 126
        %v1284 = vpop.permute.xlu0 %1283
        %v1285 = vand.u32 %v1183, 2
        %v1286 = vand.u32 %v1184, 2
        %vm1287 = vcmp.gt.s32.totalorder %v1285, 0
        %vm1288 = vcmp.gt.s32.totalorder %v1286, 0
        %v1289 = vsel %vm1287, 1, 0
        %v1290 = vsel %vm1288, 1, 0
        %vm1291 = vcmp.eq.s32.totalorder %v1289, 1
        %vm1292 = vcmp.eq.s32.totalorder %v1290, 1
        %v1293 = vsel %vm1291, %v1282, %v1279
        %v1294 = vsel %vm1292, %v1284, %v1280
        %1295 = vrot.lane.b32.xlu0 %v1293, 124
        %v1296 = vpop.permute.xlu0 %1295
        %1297 = vrot.lane.b32.xlu0 %v1294, 124
        %v1298 = vpop.permute.xlu0 %1297
        %v1299 = vand.u32 %v1183, 4
        %v1300 = vand.u32 %v1184, 4
        %vm1301 = vcmp.gt.s32.totalorder %v1299, 0
        %vm1302 = vcmp.gt.s32.totalorder %v1300, 0
        %v1303 = vsel %vm1301, 1, 0
        %v1304 = vsel %vm1302, 1, 0
        %vm1305 = vcmp.eq.s32.totalorder %v1303, 1
        %vm1306 = vcmp.eq.s32.totalorder %v1304, 1
        %v1307 = vsel %vm1305, %v1296, %v1293
        %v1308 = vsel %vm1306, %v1298, %v1294
        %v1309 = vsel %vm1157, 1, 0
        %vm1310 = vcmp.eq.s32.totalorder %v1309, 1
        %v1311 = vsel %vm1310, %v1307, 0.0
        %v1312 = vsel %vm1310, %v1308, 0.0
        %v1314 = vsel %vm1189, %v1146, 0
        %v1317 = vsel %vm1189, %v1185, 0
        %v1320 = vsel %vm1189, %v1186, 0
        %1322 = vmatpush.xpose.msra.mxu0 0.0
        %1323 = vmatpush.xpose.msra.mxu0 0.0
        %1324 = vmatpush.xpose.msra.mxu0 0.0
        %1325 = vmatpush.xpose.msra.mxu0 0.0
        %1326 = vmatpush.xpose.msra.mxu0 0.0
        %1327 = vmatpush.xpose.msra.mxu0 0.0
        %1328 = vmatpush.xpose.msra.mxu0 0.0
        %1329 = vmatpush.xpose.msra.mxu0 0.0
        %1330 = vmatpush.xpose.msra.mxu0 0.0
        %1331 = vmatpush.xpose.msra.mxu0 0.0
        %1332 = vmatpush.xpose.msra.mxu0 0.0
        %1333 = vmatpush.xpose.msra.mxu0 0.0
        %1334 = vmatpush.xpose.msra.mxu0 0.0
        %1335 = vmatpush.xpose.msra.mxu0 0.0
        %1336 = vmatpush.xpose.msra.mxu0 %v1320
        %1337 = vmatpush.xpose.msra.mxu0 %v1317
        %1338 = vmatmul.f32.gmra.mxu0 %v1314
        %v1339 = vpop.f32.mrf.mxu0
        %v1340 = vadd.f32 %v1311, %v1339
        %1341 = vdwg.mxu0
        %v1343 = vsel %vm1189, %v1147, 0
        %v1346 = vsel %vm1189, %v1187, 0
        %v1349 = vsel %vm1189, %v1188, 0
        %1351 = vmatpush.xpose.msra.mxu0 0.0
        %1352 = vmatpush.xpose.msra.mxu0 0.0
        %1353 = vmatpush.xpose.msra.mxu0 0.0
        %1354 = vmatpush.xpose.msra.mxu0 0.0
        %1355 = vmatpush.xpose.msra.mxu0 0.0
        %1356 = vmatpush.xpose.msra.mxu0 0.0
        %1357 = vmatpush.xpose.msra.mxu0 0.0
        %1358 = vmatpush.xpose.msra.mxu0 0.0
        %1359 = vmatpush.xpose.msra.mxu0 0.0
        %1360 = vmatpush.xpose.msra.mxu0 0.0
        %1361 = vmatpush.xpose.msra.mxu0 0.0
        %1362 = vmatpush.xpose.msra.mxu0 0.0
        %1363 = vmatpush.xpose.msra.mxu0 0.0
        %1364 = vmatpush.xpose.msra.mxu0 0.0
        %1365 = vmatpush.xpose.msra.mxu0 %v1349
        %1366 = vmatpush.xpose.msra.mxu0 %v1346
        %1367 = vmatmul.f32.gmra.mxu0 %v1343
        %v1368 = vpop.f32.mrf.mxu0
        %v1369 = vadd.f32 %v1312, %v1368
        %1370 = vdwg.mxu0
        %v1371 = vmul.f32 %v1340, 0.125
        %v1372 = vmul.f32 %v1369, 0.125
        %vm1373 = vcmask 97280
        %v1374 = vsel %vm1373, %v1371, -inf
        %1375 = vmax.xlane.f32.xlu0 %v1374
        %v1376 = vpop.xlane.xlu0 %1375
        %v1377 = vsel %vm1373, %v1372, -inf
        %1378 = vmax.xlane.f32.xlu0 %v1377
        %v1379 = vpop.xlane.xlu0 %1378
        %v1380 = vsub.f32 %v1371, %v1376
        %v1381 = vsub.f32 %v1372, %v1379
        %v1382 = vmul.f32 %v1380, 1.442695
        %v1383 = vpow.pop %v1382
        %v1384 = vmul.f32 %v1381, 1.442695
        %v1385 = vpow.pop %v1384
        %v1386 = vsel %vm1373, %v1383, 0.0
        %1387 = vadd.xlane.f32.xlu0 %v1386
        %v1388 = vpop.xlane.xlu0 %1387
        %v1389 = vsel %vm1373, %v1385, 0.0
        %1390 = vadd.xlane.f32.xlu0 %v1389
        %v1391 = vpop.xlane.xlu0 %1390
        %v1392 = vrcp.pop %v1388
        %v1393 = vrcp.pop %v1391
        %v1394 = vmul.f32 %v1388, %v1392
        %v1395 = vmul.f32 %v1391, %v1393
        %v1396 = vsub.f32 2.0, %v1394
        %v1397 = vsub.f32 2.0, %v1395
        %v1398 = vmul.f32 %v1392, %v1396
        %v1399 = vmul.f32 %v1393, %v1397
        %v1400 = vmul.f32 %v1383, %v1398
        %v1401 = vmul.f32 %v1385, %v1399
        %1402 = vst.msk [vmem:[%s632] sm:$0xff] %vm1373, %v1400
        %1403 = vst.msk [vmem:[%s632 + $0x20] sm:$0xff] %vm1373, %v1401
        %1404 = vrot.lane.b32.xlu0 %v1185, 64
        %v1405 = vpop.permute.xlu0 %1404
        %1406 = vrot.lane.b32.xlu0 %v1186, 64
        %v1407 = vpop.permute.xlu0 %1406
        %v1410 = vsel %vm1373, %v1400, 0
        %vm1412 = vcmask 1043456
        %v1413 = vsel %vm1412, %v1407, 0
        %1415 = vmatpush.msra.mxu0 0.0
        %1416 = vmatpush.msra.mxu0 0.0
        %1417 = vmatpush.msra.mxu0 0.0
        %1418 = vmatpush.msra.mxu0 0.0
        %1419 = vmatpush.msra.mxu0 0.0
        %1420 = vmatpush.msra.mxu0 0.0
        %1421 = vmatpush.msra.mxu0 0.0
        %1422 = vmatpush.msra.mxu0 0.0
        %1423 = vmatpush.msra.mxu0 0.0
        %1424 = vmatpush.msra.mxu0 0.0
        %1425 = vmatpush.msra.mxu0 0.0
        %1426 = vmatpush.msra.mxu0 0.0
        %1427 = vmatpush.msra.mxu0 0.0
        %1428 = vmatpush.msra.mxu0 0.0
        %1429 = vmatpush.msra.mxu0 %v1413
        %1430 = vmatpush.msra.mxu0 %v1405
        %1431 = vmatmul.f32.gmra.mxu0 %v1410
        %v1432 = vpop.f32.mrf.mxu0
        %v1433 = vadd.f32 0.0, %v1432
        %1434 = vdwg.mxu0
        %1435 = vrot.lane.b32.xlu0 %v1187, 64
        %v1436 = vpop.permute.xlu0 %1435
        %1437 = vrot.lane.b32.xlu0 %v1188, 64
        %v1438 = vpop.permute.xlu0 %1437
        %v1441 = vsel %vm1373, %v1401, 0
        %v1443 = vsel %vm1412, %v1438, 0
        %1445 = vmatpush.msra.mxu0 0.0
        %1446 = vmatpush.msra.mxu0 0.0
        %1447 = vmatpush.msra.mxu0 0.0
        %1448 = vmatpush.msra.mxu0 0.0
        %1449 = vmatpush.msra.mxu0 0.0
        %1450 = vmatpush.msra.mxu0 0.0
        %1451 = vmatpush.msra.mxu0 0.0
        %1452 = vmatpush.msra.mxu0 0.0
        %1453 = vmatpush.msra.mxu0 0.0
        %1454 = vmatpush.msra.mxu0 0.0
        %1455 = vmatpush.msra.mxu0 0.0
        %1456 = vmatpush.msra.mxu0 0.0
        %1457 = vmatpush.msra.mxu0 0.0
        %1458 = vmatpush.msra.mxu0 0.0
        %1459 = vmatpush.msra.mxu0 %v1443
        %1460 = vmatpush.msra.mxu0 %v1436
        %1461 = vmatmul.f32.gmra.mxu0 %v1441
        %v1462 = vpop.f32.mrf.mxu0
        %v1463 = vadd.f32 0.0, %v1462
        %1464 = vdwg.mxu0
        %1465 = vst.msk [vmem:[#allocation3] sm:$0xff] %vm1189, %v1433
        %1466 = vst.msk [vmem:[#allocation3 + $0x8] sm:$0xff] %vm1189, %v1463
        %v1467 = vld [vmem:[#allocation2] sm:$0xff]
        %v1468 = vld [vmem:[#allocation2 + $0x8] sm:$0xf]
        %v1469 = vld [vmem:[#allocation2 + $0x10] sm:$0xff]
        %v1470 = vld [vmem:[#allocation2 + $0x18] sm:$0xf]
        %1471 = vrot.lane.b32.xlu0 %v1150, 112
        %v1472 = vpop.permute.xlu0 %1471
        %1473 = vrot.lane.b32.xlu0 %v1151, 112
        %v1474 = vpop.permute.xlu0 %1473
        %1475 = vrot.lane.b32.xlu0 %v1013, 112
        %v1476 = vpop.permute.xlu0 %1475
        %1477 = vrot.lane.b32.xlu0 %v1016, 112
        %v1478 = vpop.permute.xlu0 %1477
        %1479 = vrot.lane.b32.xlu0 %v1019, 112
        %v1480 = vpop.permute.xlu0 %1479
        %1481 = vrot.lane.b32.xlu0 %v1022, 112
        %v1482 = vpop.permute.xlu0 %1481
        %1483 = vrot.lane.b32.xlu0 %v1025, 112
        %v1484 = vpop.permute.xlu0 %1483
        %1485 = vrot.lane.b32.xlu0 %v1028, 112
        %v1486 = vpop.permute.xlu0 %1485
        %1487 = vrot.lane.b32.xlu0 %v1031, 112
        %v1488 = vpop.permute.xlu0 %1487
        %1489 = vrot.lane.b32.xlu0 %v1034, 112
        %v1490 = vpop.permute.xlu0 %1489
        %1491 = vrot.lane.b32.xlu0 %v1037, 112
        %v1492 = vpop.permute.xlu0 %1491
        %1493 = vrot.lane.b32.xlu0 %v1040, 112
        %v1494 = vpop.permute.xlu0 %1493
        %1495 = vrot.lane.b32.xlu0 %v1043, 112
        %v1496 = vpop.permute.xlu0 %1495
        %1497 = vrot.lane.b32.xlu0 %v1046, 112
        %v1498 = vpop.permute.xlu0 %1497
        %1499 = vrot.lane.b32.xlu0 %v1049, 112
        %v1500 = vpop.permute.xlu0 %1499
        %1501 = vrot.lane.b32.xlu0 %v1052, 112
        %v1502 = vpop.permute.xlu0 %1501
        %1503 = vrot.lane.b32.xlu0 %v1055, 112
        %v1504 = vpop.permute.xlu0 %1503
        %1505 = vrot.lane.b32.xlu0 %v1058, 112
        %v1506 = vpop.permute.xlu0 %1505
        %v1507 = vsel %vm1189, %v1472, 0
        %v1509 = vsel %vm1189, %v1474, 0
        %v1511 = vsel %vm1189, %v1476, 0
        %v1513 = vsel %vm1189, %v1478, 0
        %v1515 = vsel %vm1189, %v1480, 0
        %v1517 = vsel %vm1189, %v1482, 0
        %v1519 = vsel %vm1189, %v1484, 0
        %v1521 = vsel %vm1189, %v1486, 0
        %v1523 = vsel %vm1189, %v1488, 0
        %v1525 = vsel %vm1189, %v1490, 0
        %v1527 = vsel %vm1189, %v1492, 0
        %v1529 = vsel %vm1189, %v1494, 0
        %v1531 = vsel %vm1189, %v1496, 0
        %v1533 = vsel %vm1189, %v1498, 0
        %v1535 = vsel %vm1189, %v1500, 0
        %v1537 = vsel %vm1189, %v1502, 0
        %v1539 = vsel %vm1189, %v1504, 0
        %v1541 = vsel %vm1189, %v1506, 0
        %1543 = vmatpush.xpose.msra.mxu0 %v1541
        %1544 = vmatpush.xpose.msra.mxu0 %v1539
        %1545 = vmatpush.xpose.msra.mxu0 %v1537
        %1546 = vmatpush.xpose.msra.mxu0 %v1535
        %1547 = vmatpush.xpose.msra.mxu0 %v1533
        %1548 = vmatpush.xpose.msra.mxu0 %v1531
        %1549 = vmatpush.xpose.msra.mxu0 %v1529
        %1550 = vmatpush.xpose.msra.mxu0 %v1527
        %1551 = vmatpush.xpose.msra.mxu0 %v1525
        %1552 = vmatpush.xpose.msra.mxu0 %v1523
        %1553 = vmatpush.xpose.msra.mxu0 %v1521
        %1554 = vmatpush.xpose.msra.mxu0 %v1519
        %1555 = vmatpush.xpose.msra.mxu0 %v1517
        %1556 = vmatpush.xpose.msra.mxu0 %v1515
        %1557 = vmatpush.xpose.msra.mxu0 %v1513
        %1558 = vmatpush.xpose.msra.mxu0 %v1511
        %1559 = vmatmul.f32.gmra.mxu0 %v1507
        %v1560 = vpop.f32.mrf.mxu0
        %v1561 = vadd.f32 0.0, %v1560
        %1562 = vmatmul.f32.gmra.mxu0 %v1509
        %v1563 = vpop.f32.mrf.mxu0
        %v1564 = vadd.f32 0.0, %v1563
        %1565 = vdwg.mxu0
        %1566 = vrot.lane.b32.xlu0 %v1561, 127
        %v1567 = vpop.permute.xlu0 %1566
        %1568 = vrot.lane.b32.xlu0 %v1564, 127
        %v1569 = vpop.permute.xlu0 %1568
        %v1570 = vsel %vm1277, %v1567, %v1561
        %v1571 = vsel %vm1278, %v1569, %v1564
        %1572 = vrot.lane.b32.xlu0 %v1570, 126
        %v1573 = vpop.permute.xlu0 %1572
        %1574 = vrot.lane.b32.xlu0 %v1571, 126
        %v1575 = vpop.permute.xlu0 %1574
        %v1576 = vsel %vm1291, %v1573, %v1570
        %v1577 = vsel %vm1292, %v1575, %v1571
        %1578 = vrot.lane.b32.xlu0 %v1576, 124
        %v1579 = vpop.permute.xlu0 %1578
        %1580 = vrot.lane.b32.xlu0 %v1577, 124
        %v1581 = vpop.permute.xlu0 %1580
        %v1582 = vsel %vm1305, %v1579, %v1576
        %v1583 = vsel %vm1306, %v1581, %v1577
        %v1584 = vsel %vm1310, %v1582, 0.0
        %v1585 = vsel %vm1310, %v1583, 0.0
        %1586 = vrot.lane.b32.xlu0 %v1146, 112
        %v1587 = vpop.permute.xlu0 %1586
        %1590 = vrot.lane.b32.xlu0 %v1467, 112
        %v1591 = vpop.permute.xlu0 %1590
        %1592 = vrot.lane.b32.xlu0 %v1468, 112
        %v1593 = vpop.permute.xlu0 %1592
        %v1594 = vsel %vm1189, %v1587, 0
        %v1596 = vsel %vm1189, %v1591, 0
        %v1598 = vsel %vm1189, %v1593, 0
        %1600 = vmatpush.xpose.msra.mxu0 0.0
        %1601 = vmatpush.xpose.msra.mxu0 0.0
        %1602 = vmatpush.xpose.msra.mxu0 0.0
        %1603 = vmatpush.xpose.msra.mxu0 0.0
        %1604 = vmatpush.xpose.msra.mxu0 0.0
        %1605 = vmatpush.xpose.msra.mxu0 0.0
        %1606 = vmatpush.xpose.msra.mxu0 0.0
        %1607 = vmatpush.xpose.msra.mxu0 0.0
        %1608 = vmatpush.xpose.msra.mxu0 0.0
        %1609 = vmatpush.xpose.msra.mxu0 0.0
        %1610 = vmatpush.xpose.msra.mxu0 0.0
        %1611 = vmatpush.xpose.msra.mxu0 0.0
        %1612 = vmatpush.xpose.msra.mxu0 0.0
        %1613 = vmatpush.xpose.msra.mxu0 0.0
        %1614 = vmatpush.xpose.msra.mxu0 %v1598
        %1615 = vmatpush.xpose.msra.mxu0 %v1596
        %1616 = vmatmul.f32.gmra.mxu0 %v1594
        %v1617 = vpop.f32.mrf.mxu0
        %v1618 = vadd.f32 %v1584, %v1617
        %1619 = vdwg.mxu0
        %1620 = vrot.lane.b32.xlu0 %v1147, 112
        %v1621 = vpop.permute.xlu0 %1620
        %1624 = vrot.lane.b32.xlu0 %v1469, 112
        %v1625 = vpop.permute.xlu0 %1624
        %1626 = vrot.lane.b32.xlu0 %v1470, 112
        %v1627 = vpop.permute.xlu0 %1626
        %v1628 = vsel %vm1189, %v1621, 0
        %v1630 = vsel %vm1189, %v1625, 0
        %v1632 = vsel %vm1189, %v1627, 0
        %1634 = vmatpush.xpose.msra.mxu0 0.0
        %1635 = vmatpush.xpose.msra.mxu0 0.0
        %1636 = vmatpush.xpose.msra.mxu0 0.0
        %1637 = vmatpush.xpose.msra.mxu0 0.0
        %1638 = vmatpush.xpose.msra.mxu0 0.0
        %1639 = vmatpush.xpose.msra.mxu0 0.0
        %1640 = vmatpush.xpose.msra.mxu0 0.0
        %1641 = vmatpush.xpose.msra.mxu0 0.0
        %1642 = vmatpush.xpose.msra.mxu0 0.0
        %1643 = vmatpush.xpose.msra.mxu0 0.0
        %1644 = vmatpush.xpose.msra.mxu0 0.0
        %1645 = vmatpush.xpose.msra.mxu0 0.0
        %1646 = vmatpush.xpose.msra.mxu0 0.0
        %1647 = vmatpush.xpose.msra.mxu0 0.0
        %1648 = vmatpush.xpose.msra.mxu0 %v1632
        %1649 = vmatpush.xpose.msra.mxu0 %v1630
        %1650 = vmatmul.f32.gmra.mxu0 %v1628
        %v1651 = vpop.f32.mrf.mxu0
        %v1652 = vadd.f32 %v1585, %v1651
        %1653 = vdwg.mxu0
        %v1654 = vmul.f32 %v1618, 0.125
        %v1655 = vmul.f32 %v1652, 0.125
        %v1656 = vsel %vm1373, %v1654, -inf
        %1657 = vmax.xlane.f32.xlu0 %v1656
        %v1658 = vpop.xlane.xlu0 %1657
        %v1659 = vsel %vm1373, %v1655, -inf
        %1660 = vmax.xlane.f32.xlu0 %v1659
        %v1661 = vpop.xlane.xlu0 %1660
        %v1662 = vsub.f32 %v1654, %v1658
        %v1663 = vsub.f32 %v1655, %v1661
        %v1664 = vmul.f32 %v1662, 1.442695
        %v1665 = vpow.pop %v1664
        %v1666 = vmul.f32 %v1663, 1.442695
        %v1667 = vpow.pop %v1666
        %v1668 = vsel %vm1373, %v1665, 0.0
        %1669 = vadd.xlane.f32.xlu0 %v1668
        %v1670 = vpop.xlane.xlu0 %1669
        %v1671 = vsel %vm1373, %v1667, 0.0
        %1672 = vadd.xlane.f32.xlu0 %v1671
        %v1673 = vpop.xlane.xlu0 %1672
        %v1674 = vrcp.pop %v1670
        %v1675 = vrcp.pop %v1673
        %v1676 = vmul.f32 %v1670, %v1674
        %v1677 = vmul.f32 %v1673, %v1675
        %v1678 = vsub.f32 2.0, %v1676
        %v1679 = vsub.f32 2.0, %v1677
        %v1680 = vmul.f32 %v1674, %v1678
        %v1681 = vmul.f32 %v1675, %v1679
        %v1682 = vmul.f32 %v1665, %v1680
        %v1683 = vmul.f32 %v1667, %v1681
        %s1684 = scalar_lea.vmem %s632, 8 [#allocation11]
        %1685 = vst.msk [vmem:[%s1684] sm:$0xff] %vm1373, %v1682
        %1686 = vst.msk [vmem:[%s1684 + $0x20] sm:$0xff] %vm1373, %v1683
        %1687 = vrot.lane.b32.xlu0 %v1467, 48
        %v1688 = vpop.permute.xlu0 %1687
        %1689 = vrot.lane.b32.xlu0 %v1468, 48
        %v1690 = vpop.permute.xlu0 %1689
        %v1693 = vsel %vm1373, %v1682, 0
        %v1695 = vsel %vm1412, %v1690, 0
        %1697 = vmatpush.msra.mxu0 0.0
        %1698 = vmatpush.msra.mxu0 0.0
        %1699 = vmatpush.msra.mxu0 0.0
        %1700 = vmatpush.msra.mxu0 0.0
        %1701 = vmatpush.msra.mxu0 0.0
        %1702 = vmatpush.msra.mxu0 0.0
        %1703 = vmatpush.msra.mxu0 0.0
        %1704 = vmatpush.msra.mxu0 0.0
        %1705 = vmatpush.msra.mxu0 0.0
        %1706 = vmatpush.msra.mxu0 0.0
        %1707 = vmatpush.msra.mxu0 0.0
        %1708 = vmatpush.msra.mxu0 0.0
        %1709 = vmatpush.msra.mxu0 0.0
        %1710 = vmatpush.msra.mxu0 0.0
        %1711 = vmatpush.msra.mxu0 %v1695
        %1712 = vmatpush.msra.mxu0 %v1688
        %1713 = vmatmul.f32.gmra.mxu0 %v1693
        %v1714 = vpop.f32.mrf.mxu0
        %v1715 = vadd.f32 0.0, %v1714
        %1716 = vdwg.mxu0
        %1717 = vrot.lane.b32.xlu0 %v1469, 48
        %v1718 = vpop.permute.xlu0 %1717
        %1719 = vrot.lane.b32.xlu0 %v1470, 48
        %v1720 = vpop.permute.xlu0 %1719
        %v1723 = vsel %vm1373, %v1683, 0
        %v1725 = vsel %vm1412, %v1720, 0
        %1727 = vmatpush.msra.mxu0 0.0
        %1728 = vmatpush.msra.mxu0 0.0
        %1729 = vmatpush.msra.mxu0 0.0
        %1730 = vmatpush.msra.mxu0 0.0
        %1731 = vmatpush.msra.mxu0 0.0
        %1732 = vmatpush.msra.mxu0 0.0
        %1733 = vmatpush.msra.mxu0 0.0
        %1734 = vmatpush.msra.mxu0 0.0
        %1735 = vmatpush.msra.mxu0 0.0
        %1736 = vmatpush.msra.mxu0 0.0
        %1737 = vmatpush.msra.mxu0 0.0
        %1738 = vmatpush.msra.mxu0 0.0
        %1739 = vmatpush.msra.mxu0 0.0
        %1740 = vmatpush.msra.mxu0 0.0
        %1741 = vmatpush.msra.mxu0 %v1725
        %1742 = vmatpush.msra.mxu0 %v1718
        %1743 = vmatmul.f32.gmra.mxu0 %v1723
        %v1744 = vpop.f32.mrf.mxu0
        %v1745 = vadd.f32 0.0, %v1744
        %1746 = vdwg.mxu0
        %1749 = vrot.lane.b32.xlu0 %v1715, 16
        %v1750 = vpop.permute.xlu0 %1749
        %1751 = vrot.lane.b32.xlu0 %v1745, 16
        %v1752 = vpop.permute.xlu0 %1751
        %vm1755 = vcmask 261248
        %1756 = vst.msk [vmem:[#allocation3] sm:$0xff] %vm1755, %v1750
        %1757 = vst.msk [vmem:[#allocation3 + $0x8] sm:$0xff] %vm1755, %v1752
        %v1758 = vld [vmem:[#allocation2] sm:$0xff]
        %v1759 = vld [vmem:[#allocation2 + $0x8] sm:$0xf]
        %v1760 = vld [vmem:[#allocation2 + $0x10] sm:$0xff]
        %v1761 = vld [vmem:[#allocation2 + $0x18] sm:$0xf]
        %1762 = vrot.lane.b32.xlu0 %v1150, 96
        %v1763 = vpop.permute.xlu0 %1762
        %1764 = vrot.lane.b32.xlu0 %v1151, 96
        %v1765 = vpop.permute.xlu0 %1764
        %1766 = vrot.lane.b32.xlu0 %v1013, 96
        %v1767 = vpop.permute.xlu0 %1766
        %1768 = vrot.lane.b32.xlu0 %v1016, 96
        %v1769 = vpop.permute.xlu0 %1768
        %1770 = vrot.lane.b32.xlu0 %v1019, 96
        %v1771 = vpop.permute.xlu0 %1770
        %1772 = vrot.lane.b32.xlu0 %v1022, 96
        %v1773 = vpop.permute.xlu0 %1772
        %1774 = vrot.lane.b32.xlu0 %v1025, 96
        %v1775 = vpop.permute.xlu0 %1774
        %1776 = vrot.lane.b32.xlu0 %v1028, 96
        %v1777 = vpop.permute.xlu0 %1776
        %1778 = vrot.lane.b32.xlu0 %v1031, 96
        %v1779 = vpop.permute.xlu0 %1778
        %1780 = vrot.lane.b32.xlu0 %v1034, 96
        %v1781 = vpop.permute.xlu0 %1780
        %1782 = vrot.lane.b32.xlu0 %v1037, 96
        %v1783 = vpop.permute.xlu0 %1782
        %1784 = vrot.lane.b32.xlu0 %v1040, 96
        %v1785 = vpop.permute.xlu0 %1784
        %1786 = vrot.lane.b32.xlu0 %v1043, 96
        %v1787 = vpop.permute.xlu0 %1786
        %1788 = vrot.lane.b32.xlu0 %v1046, 96
        %v1789 = vpop.permute.xlu0 %1788
        %1790 = vrot.lane.b32.xlu0 %v1049, 96
        %v1791 = vpop.permute.xlu0 %1790
        %1792 = vrot.lane.b32.xlu0 %v1052, 96
        %v1793 = vpop.permute.xlu0 %1792
        %1794 = vrot.lane.b32.xlu0 %v1055, 96
        %v1795 = vpop.permute.xlu0 %1794
        %1796 = vrot.lane.b32.xlu0 %v1058, 96
        %v1797 = vpop.permute.xlu0 %1796
        %v1798 = vsel %vm1189, %v1763, 0
        %v1800 = vsel %vm1189, %v1765, 0
        %v1802 = vsel %vm1189, %v1767, 0
        %v1804 = vsel %vm1189, %v1769, 0
        %v1806 = vsel %vm1189, %v1771, 0
        %v1808 = vsel %vm1189, %v1773, 0
        %v1810 = vsel %vm1189, %v1775, 0
        %v1812 = vsel %vm1189, %v1777, 0
        %v1814 = vsel %vm1189, %v1779, 0
        %v1816 = vsel %vm1189, %v1781, 0
        %v1818 = vsel %vm1189, %v1783, 0
        %v1820 = vsel %vm1189, %v1785, 0
        %v1822 = vsel %vm1189, %v1787, 0
        %v1824 = vsel %vm1189, %v1789, 0
        %v1826 = vsel %vm1189, %v1791, 0
        %v1828 = vsel %vm1189, %v1793, 0
        %v1830 = vsel %vm1189, %v1795, 0
        %v1832 = vsel %vm1189, %v1797, 0
        %1834 = vmatpush.xpose.msra.mxu0 %v1832
        %1835 = vmatpush.xpose.msra.mxu0 %v1830
        %1836 = vmatpush.xpose.msra.mxu0 %v1828
        %1837 = vmatpush.xpose.msra.mxu0 %v1826
        %1838 = vmatpush.xpose.msra.mxu0 %v1824
        %1839 = vmatpush.xpose.msra.mxu0 %v1822
        %1840 = vmatpush.xpose.msra.mxu0 %v1820
        %1841 = vmatpush.xpose.msra.mxu0 %v1818
        %1842 = vmatpush.xpose.msra.mxu0 %v1816
        %1843 = vmatpush.xpose.msra.mxu0 %v1814
        %1844 = vmatpush.xpose.msra.mxu0 %v1812
        %1845 = vmatpush.xpose.msra.mxu0 %v1810
        %1846 = vmatpush.xpose.msra.mxu0 %v1808
        %1847 = vmatpush.xpose.msra.mxu0 %v1806
        %1848 = vmatpush.xpose.msra.mxu0 %v1804
        %1849 = vmatpush.xpose.msra.mxu0 %v1802
        %1850 = vmatmul.f32.gmra.mxu0 %v1798
        %v1851 = vpop.f32.mrf.mxu0
        %v1852 = vadd.f32 0.0, %v1851
        %1853 = vmatmul.f32.gmra.mxu0 %v1800
        %v1854 = vpop.f32.mrf.mxu0
        %v1855 = vadd.f32 0.0, %v1854
        %1856 = vdwg.mxu0
        %1857 = vrot.lane.b32.xlu0 %v1852, 127
        %v1858 = vpop.permute.xlu0 %1857
        %1859 = vrot.lane.b32.xlu0 %v1855, 127
        %v1860 = vpop.permute.xlu0 %1859
        %v1861 = vsel %vm1277, %v1858, %v1852
        %v1862 = vsel %vm1278, %v1860, %v1855
        %1863 = vrot.lane.b32.xlu0 %v1861, 126
        %v1864 = vpop.permute.xlu0 %1863
        %1865 = vrot.lane.b32.xlu0 %v1862, 126
        %v1866 = vpop.permute.xlu0 %1865
        %v1867 = vsel %vm1291, %v1864, %v1861
        %v1868 = vsel %vm1292, %v1866, %v1862
        %1869 = vrot.lane.b32.xlu0 %v1867, 124
        %v1870 = vpop.permute.xlu0 %1869
        %1871 = vrot.lane.b32.xlu0 %v1868, 124
        %v1872 = vpop.permute.xlu0 %1871
        %v1873 = vsel %vm1305, %v1870, %v1867
        %v1874 = vsel %vm1306, %v1872, %v1868
        %v1875 = vsel %vm1310, %v1873, 0.0
        %v1876 = vsel %vm1310, %v1874, 0.0
        %1877 = vrot.lane.b32.xlu0 %v1146, 96
        %v1878 = vpop.permute.xlu0 %1877
        %1881 = vrot.lane.b32.xlu0 %v1758, 96
        %v1882 = vpop.permute.xlu0 %1881
        %1883 = vrot.lane.b32.xlu0 %v1759, 96
        %v1884 = vpop.permute.xlu0 %1883
        %v1885 = vsel %vm1189, %v1878, 0
        %v1887 = vsel %vm1189, %v1882, 0
        %v1889 = vsel %vm1189, %v1884, 0
        %1891 = vmatpush.xpose.msra.mxu0 0.0
        %1892 = vmatpush.xpose.msra.mxu0 0.0
        %1893 = vmatpush.xpose.msra.mxu0 0.0
        %1894 = vmatpush.xpose.msra.mxu0 0.0
        %1895 = vmatpush.xpose.msra.mxu0 0.0
        %1896 = vmatpush.xpose.msra.mxu0 0.0
        %1897 = vmatpush.xpose.msra.mxu0 0.0
        %1898 = vmatpush.xpose.msra.mxu0 0.0
        %1899 = vmatpush.xpose.msra.mxu0 0.0
        %1900 = vmatpush.xpose.msra.mxu0 0.0
        %1901 = vmatpush.xpose.msra.mxu0 0.0
        %1902 = vmatpush.xpose.msra.mxu0 0.0
        %1903 = vmatpush.xpose.msra.mxu0 0.0
        %1904 = vmatpush.xpose.msra.mxu0 0.0
        %1905 = vmatpush.xpose.msra.mxu0 %v1889
        %1906 = vmatpush.xpose.msra.mxu0 %v1887
        %1907 = vmatmul.f32.gmra.mxu0 %v1885
        %v1908 = vpop.f32.mrf.mxu0
        %v1909 = vadd.f32 %v1875, %v1908
        %1910 = vdwg.mxu0
        %1911 = vrot.lane.b32.xlu0 %v1147, 96
        %v1912 = vpop.permute.xlu0 %1911
        %1915 = vrot.lane.b32.xlu0 %v1760, 96
        %v1916 = vpop.permute.xlu0 %1915
        %1917 = vrot.lane.b32.xlu0 %v1761, 96
        %v1918 = vpop.permute.xlu0 %1917
        %v1919 = vsel %vm1189, %v1912, 0
        %v1921 = vsel %vm1189, %v1916, 0
        %v1923 = vsel %vm1189, %v1918, 0
        %1925 = vmatpush.xpose.msra.mxu0 0.0
        %1926 = vmatpush.xpose.msra.mxu0 0.0
        %1927 = vmatpush.xpose.msra.mxu0 0.0
        %1928 = vmatpush.xpose.msra.mxu0 0.0
        %1929 = vmatpush.xpose.msra.mxu0 0.0
        %1930 = vmatpush.xpose.msra.mxu0 0.0
        %1931 = vmatpush.xpose.msra.mxu0 0.0
        %1932 = vmatpush.xpose.msra.mxu0 0.0
        %1933 = vmatpush.xpose.msra.mxu0 0.0
        %1934 = vmatpush.xpose.msra.mxu0 0.0
        %1935 = vmatpush.xpose.msra.mxu0 0.0
        %1936 = vmatpush.xpose.msra.mxu0 0.0
        %1937 = vmatpush.xpose.msra.mxu0 0.0
        %1938 = vmatpush.xpose.msra.mxu0 0.0
        %1939 = vmatpush.xpose.msra.mxu0 %v1923
        %1940 = vmatpush.xpose.msra.mxu0 %v1921
        %1941 = vmatmul.f32.gmra.mxu0 %v1919
        %v1942 = vpop.f32.mrf.mxu0
        %v1943 = vadd.f32 %v1876, %v1942
        %1944 = vdwg.mxu0
        %v1945 = vmul.f32 %v1909, 0.125
        %v1946 = vmul.f32 %v1943, 0.125
        %v1947 = vsel %vm1373, %v1945, -inf
        %1948 = vmax.xlane.f32.xlu0 %v1947
        %v1949 = vpop.xlane.xlu0 %1948
        %v1950 = vsel %vm1373, %v1946, -inf
        %1951 = vmax.xlane.f32.xlu0 %v1950
        %v1952 = vpop.xlane.xlu0 %1951
        %v1953 = vsub.f32 %v1945, %v1949
        %v1954 = vsub.f32 %v1946, %v1952
        %v1955 = vmul.f32 %v1953, 1.442695
        %v1956 = vpow.pop %v1955
        %v1957 = vmul.f32 %v1954, 1.442695
        %v1958 = vpow.pop %v1957
        %v1959 = vsel %vm1373, %v1956, 0.0
        %1960 = vadd.xlane.f32.xlu0 %v1959
        %v1961 = vpop.xlane.xlu0 %1960
        %v1962 = vsel %vm1373, %v1958, 0.0
        %1963 = vadd.xlane.f32.xlu0 %v1962
        %v1964 = vpop.xlane.xlu0 %1963
        %v1965 = vrcp.pop %v1961
        %v1966 = vrcp.pop %v1964
        %v1967 = vmul.f32 %v1961, %v1965
        %v1968 = vmul.f32 %v1964, %v1966
        %v1969 = vsub.f32 2.0, %v1967
        %v1970 = vsub.f32 2.0, %v1968
        %v1971 = vmul.f32 %v1965, %v1969
        %v1972 = vmul.f32 %v1966, %v1970
        %v1973 = vmul.f32 %v1956, %v1971
        %v1974 = vmul.f32 %v1958, %v1972
        %s1975 = scalar_lea.vmem %s632, 16 [#allocation11]
        %1976 = vst.msk [vmem:[%s1975] sm:$0xff] %vm1373, %v1973
        %1977 = vst.msk [vmem:[%s1975 + $0x20] sm:$0xff] %vm1373, %v1974
        %1978 = vrot.lane.b32.xlu0 %v1758, 32
        %v1979 = vpop.permute.xlu0 %1978
        %1980 = vrot.lane.b32.xlu0 %v1759, 32
        %v1981 = vpop.permute.xlu0 %1980
        %v1984 = vsel %vm1373, %v1973, 0
        %v1986 = vsel %vm1412, %v1981, 0
        %1988 = vmatpush.msra.mxu0 0.0
        %1989 = vmatpush.msra.mxu0 0.0
        %1990 = vmatpush.msra.mxu0 0.0
        %1991 = vmatpush.msra.mxu0 0.0
        %1992 = vmatpush.msra.mxu0 0.0
        %1993 = vmatpush.msra.mxu0 0.0
        %1994 = vmatpush.msra.mxu0 0.0
        %1995 = vmatpush.msra.mxu0 0.0
        %1996 = vmatpush.msra.mxu0 0.0
        %1997 = vmatpush.msra.mxu0 0.0
        %1998 = vmatpush.msra.mxu0 0.0
        %1999 = vmatpush.msra.mxu0 0.0
        %2000 = vmatpush.msra.mxu0 0.0
        %2001 = vmatpush.msra.mxu0 0.0
        %2002 = vmatpush.msra.mxu0 %v1986
        %2003 = vmatpush.msra.mxu0 %v1979
        %2004 = vmatmul.f32.gmra.mxu0 %v1984
        %v2005 = vpop.f32.mrf.mxu0
        %v2006 = vadd.f32 0.0, %v2005
        %2007 = vdwg.mxu0
        %2008 = vrot.lane.b32.xlu0 %v1760, 32
        %v2009 = vpop.permute.xlu0 %2008
        %2010 = vrot.lane.b32.xlu0 %v1761, 32
        %v2011 = vpop.permute.xlu0 %2010
        %v2014 = vsel %vm1373, %v1974, 0
        %v2016 = vsel %vm1412, %v2011, 0
        %2018 = vmatpush.msra.mxu0 0.0
        %2019 = vmatpush.msra.mxu0 0.0
        %2020 = vmatpush.msra.mxu0 0.0
        %2021 = vmatpush.msra.mxu0 0.0
        %2022 = vmatpush.msra.mxu0 0.0
        %2023 = vmatpush.msra.mxu0 0.0
        %2024 = vmatpush.msra.mxu0 0.0
        %2025 = vmatpush.msra.mxu0 0.0
        %2026 = vmatpush.msra.mxu0 0.0
        %2027 = vmatpush.msra.mxu0 0.0
        %2028 = vmatpush.msra.mxu0 0.0
        %2029 = vmatpush.msra.mxu0 0.0
        %2030 = vmatpush.msra.mxu0 0.0
        %2031 = vmatpush.msra.mxu0 0.0
        %2032 = vmatpush.msra.mxu0 %v2016
        %2033 = vmatpush.msra.mxu0 %v2009
        %2034 = vmatmul.f32.gmra.mxu0 %v2014
        %v2035 = vpop.f32.mrf.mxu0
        %v2036 = vadd.f32 0.0, %v2035
        %2037 = vdwg.mxu0
        %2040 = vrot.lane.b32.xlu0 %v2006, 32
        %v2041 = vpop.permute.xlu0 %2040
        %2042 = vrot.lane.b32.xlu0 %v2036, 32
        %v2043 = vpop.permute.xlu0 %2042
        %vm2046 = vcmask 392448
        %2047 = vst.msk [vmem:[#allocation3] sm:$0xff] %vm2046, %v2041
        %2048 = vst.msk [vmem:[#allocation3 + $0x8] sm:$0xff] %vm2046, %v2043
        %v2049 = vld [vmem:[#allocation2] sm:$0xff]
        %v2050 = vld [vmem:[#allocation2 + $0x8] sm:$0xf]
        %v2051 = vld [vmem:[#allocation2 + $0x10] sm:$0xff]
        %v2052 = vld [vmem:[#allocation2 + $0x18] sm:$0xf]
        %2053 = vrot.lane.b32.xlu0 %v1150, 80
        %v2054 = vpop.permute.xlu0 %2053
        %2055 = vrot.lane.b32.xlu0 %v1151, 80
        %v2056 = vpop.permute.xlu0 %2055
        %2057 = vrot.lane.b32.xlu0 %v1013, 80
        %v2058 = vpop.permute.xlu0 %2057
        %2059 = vrot.lane.b32.xlu0 %v1016, 80
        %v2060 = vpop.permute.xlu0 %2059
        %2061 = vrot.lane.b32.xlu0 %v1019, 80
        %v2062 = vpop.permute.xlu0 %2061
        %2063 = vrot.lane.b32.xlu0 %v1022, 80
        %v2064 = vpop.permute.xlu0 %2063
        %2065 = vrot.lane.b32.xlu0 %v1025, 80
        %v2066 = vpop.permute.xlu0 %2065
        %2067 = vrot.lane.b32.xlu0 %v1028, 80
        %v2068 = vpop.permute.xlu0 %2067
        %2069 = vrot.lane.b32.xlu0 %v1031, 80
        %v2070 = vpop.permute.xlu0 %2069
        %2071 = vrot.lane.b32.xlu0 %v1034, 80
        %v2072 = vpop.permute.xlu0 %2071
        %2073 = vrot.lane.b32.xlu0 %v1037, 80
        %v2074 = vpop.permute.xlu0 %2073
        %2075 = vrot.lane.b32.xlu0 %v1040, 80
        %v2076 = vpop.permute.xlu0 %2075
        %2077 = vrot.lane.b32.xlu0 %v1043, 80
        %v2078 = vpop.permute.xlu0 %2077
        %2079 = vrot.lane.b32.xlu0 %v1046, 80
        %v2080 = vpop.permute.xlu0 %2079
        %2081 = vrot.lane.b32.xlu0 %v1049, 80
        %v2082 = vpop.permute.xlu0 %2081
        %2083 = vrot.lane.b32.xlu0 %v1052, 80
        %v2084 = vpop.permute.xlu0 %2083
        %2085 = vrot.lane.b32.xlu0 %v1055, 80
        %v2086 = vpop.permute.xlu0 %2085
        %2087 = vrot.lane.b32.xlu0 %v1058, 80
        %v2088 = vpop.permute.xlu0 %2087
        %v2089 = vsel %vm1189, %v2054, 0
        %v2091 = vsel %vm1189, %v2056, 0
        %v2093 = vsel %vm1189, %v2058, 0
        %v2095 = vsel %vm1189, %v2060, 0
        %v2097 = vsel %vm1189, %v2062, 0
        %v2099 = vsel %vm1189, %v2064, 0
        %v2101 = vsel %vm1189, %v2066, 0
        %v2103 = vsel %vm1189, %v2068, 0
        %v2105 = vsel %vm1189, %v2070, 0
        %v2107 = vsel %vm1189, %v2072, 0
        %v2109 = vsel %vm1189, %v2074, 0
        %v2111 = vsel %vm1189, %v2076, 0
        %v2113 = vsel %vm1189, %v2078, 0
        %v2115 = vsel %vm1189, %v2080, 0
        %v2117 = vsel %vm1189, %v2082, 0
        %v2119 = vsel %vm1189, %v2084, 0
        %v2121 = vsel %vm1189, %v2086, 0
        %v2123 = vsel %vm1189, %v2088, 0
        %2125 = vmatpush.xpose.msra.mxu0 %v2123
        %2126 = vmatpush.xpose.msra.mxu0 %v2121
        %2127 = vmatpush.xpose.msra.mxu0 %v2119
        %2128 = vmatpush.xpose.msra.mxu0 %v2117
        %2129 = vmatpush.xpose.msra.mxu0 %v2115
        %2130 = vmatpush.xpose.msra.mxu0 %v2113
        %2131 = vmatpush.xpose.msra.mxu0 %v2111
        %2132 = vmatpush.xpose.msra.mxu0 %v2109
        %2133 = vmatpush.xpose.msra.mxu0 %v2107
        %2134 = vmatpush.xpose.msra.mxu0 %v2105
        %2135 = vmatpush.xpose.msra.mxu0 %v2103
        %2136 = vmatpush.xpose.msra.mxu0 %v2101
        %2137 = vmatpush.xpose.msra.mxu0 %v2099
        %2138 = vmatpush.xpose.msra.mxu0 %v2097
        %2139 = vmatpush.xpose.msra.mxu0 %v2095
        %2140 = vmatpush.xpose.msra.mxu0 %v2093
        %2141 = vmatmul.f32.gmra.mxu0 %v2089
        %v2142 = vpop.f32.mrf.mxu0
        %v2143 = vadd.f32 0.0, %v2142
        %2144 = vmatmul.f32.gmra.mxu0 %v2091
        %v2145 = vpop.f32.mrf.mxu0
        %v2146 = vadd.f32 0.0, %v2145
        %2147 = vdwg.mxu0
        %2148 = vrot.lane.b32.xlu0 %v2143, 127
        %v2149 = vpop.permute.xlu0 %2148
        %2150 = vrot.lane.b32.xlu0 %v2146, 127
        %v2151 = vpop.permute.xlu0 %2150
        %v2152 = vsel %vm1277, %v2149, %v2143
        %v2153 = vsel %vm1278, %v2151, %v2146
        %2154 = vrot.lane.b32.xlu0 %v2152, 126
        %v2155 = vpop.permute.xlu0 %2154
        %2156 = vrot.lane.b32.xlu0 %v2153, 126
        %v2157 = vpop.permute.xlu0 %2156
        %v2158 = vsel %vm1291, %v2155, %v2152
        %v2159 = vsel %vm1292, %v2157, %v2153
        %2160 = vrot.lane.b32.xlu0 %v2158, 124
        %v2161 = vpop.permute.xlu0 %2160
        %2162 = vrot.lane.b32.xlu0 %v2159, 124
        %v2163 = vpop.permute.xlu0 %2162
        %v2164 = vsel %vm1305, %v2161, %v2158
        %v2165 = vsel %vm1306, %v2163, %v2159
        %v2166 = vsel %vm1310, %v2164, 0.0
        %v2167 = vsel %vm1310, %v2165, 0.0
        %2168 = vrot.lane.b32.xlu0 %v1146, 80
        %v2169 = vpop.permute.xlu0 %2168
        %2172 = vrot.lane.b32.xlu0 %v2049, 80
        %v2173 = vpop.permute.xlu0 %2172
        %2174 = vrot.lane.b32.xlu0 %v2050, 80
        %v2175 = vpop.permute.xlu0 %2174
        %v2176 = vsel %vm1189, %v2169, 0
        %v2178 = vsel %vm1189, %v2173, 0
        %v2180 = vsel %vm1189, %v2175, 0
        %2182 = vmatpush.xpose.msra.mxu0 0.0
        %2183 = vmatpush.xpose.msra.mxu0 0.0
        %2184 = vmatpush.xpose.msra.mxu0 0.0
        %2185 = vmatpush.xpose.msra.mxu0 0.0
        %2186 = vmatpush.xpose.msra.mxu0 0.0
        %2187 = vmatpush.xpose.msra.mxu0 0.0
        %2188 = vmatpush.xpose.msra.mxu0 0.0
        %2189 = vmatpush.xpose.msra.mxu0 0.0
        %2190 = vmatpush.xpose.msra.mxu0 0.0
        %2191 = vmatpush.xpose.msra.mxu0 0.0
        %2192 = vmatpush.xpose.msra.mxu0 0.0
        %2193 = vmatpush.xpose.msra.mxu0 0.0
        %2194 = vmatpush.xpose.msra.mxu0 0.0
        %2195 = vmatpush.xpose.msra.mxu0 0.0
        %2196 = vmatpush.xpose.msra.mxu0 %v2180
        %2197 = vmatpush.xpose.msra.mxu0 %v2178
        %2198 = vmatmul.f32.gmra.mxu0 %v2176
        %v2199 = vpop.f32.mrf.mxu0
        %v2200 = vadd.f32 %v2166, %v2199
        %2201 = vdwg.mxu0
        %2202 = vrot.lane.b32.xlu0 %v1147, 80
        %v2203 = vpop.permute.xlu0 %2202
        %2206 = vrot.lane.b32.xlu0 %v2051, 80
        %v2207 = vpop.permute.xlu0 %2206
        %2208 = vrot.lane.b32.xlu0 %v2052, 80
        %v2209 = vpop.permute.xlu0 %2208
        %v2210 = vsel %vm1189, %v2203, 0
        %v2212 = vsel %vm1189, %v2207, 0
        %v2214 = vsel %vm1189, %v2209, 0
        %2216 = vmatpush.xpose.msra.mxu0 0.0
        %2217 = vmatpush.xpose.msra.mxu0 0.0
        %2218 = vmatpush.xpose.msra.mxu0 0.0
        %2219 = vmatpush.xpose.msra.mxu0 0.0
        %2220 = vmatpush.xpose.msra.mxu0 0.0
        %2221 = vmatpush.xpose.msra.mxu0 0.0
        %2222 = vmatpush.xpose.msra.mxu0 0.0
        %2223 = vmatpush.xpose.msra.mxu0 0.0
        %2224 = vmatpush.xpose.msra.mxu0 0.0
        %2225 = vmatpush.xpose.msra.mxu0 0.0
        %2226 = vmatpush.xpose.msra.mxu0 0.0
        %2227 = vmatpush.xpose.msra.mxu0 0.0
        %2228 = vmatpush.xpose.msra.mxu0 0.0
        %2229 = vmatpush.xpose.msra.mxu0 0.0
        %2230 = vmatpush.xpose.msra.mxu0 %v2214
        %2231 = vmatpush.xpose.msra.mxu0 %v2212
        %2232 = vmatmul.f32.gmra.mxu0 %v2210
        %v2233 = vpop.f32.mrf.mxu0
        %v2234 = vadd.f32 %v2167, %v2233
        %2235 = vdwg.mxu0
        %v2236 = vmul.f32 %v2200, 0.125
        %v2237 = vmul.f32 %v2234, 0.125
        %v2238 = vsel %vm1373, %v2236, -inf
        %2239 = vmax.xlane.f32.xlu0 %v2238
        %v2240 = vpop.xlane.xlu0 %2239
        %v2241 = vsel %vm1373, %v2237, -inf
        %2242 = vmax.xlane.f32.xlu0 %v2241
        %v2243 = vpop.xlane.xlu0 %2242
        %v2244 = vsub.f32 %v2236, %v2240
        %v2245 = vsub.f32 %v2237, %v2243
        %v2246 = vmul.f32 %v2244, 1.442695
        %v2247 = vpow.pop %v2246
        %v2248 = vmul.f32 %v2245, 1.442695
        %v2249 = vpow.pop %v2248
        %v2250 = vsel %vm1373, %v2247, 0.0
        %2251 = vadd.xlane.f32.xlu0 %v2250
        %v2252 = vpop.xlane.xlu0 %2251
        %v2253 = vsel %vm1373, %v2249, 0.0
        %2254 = vadd.xlane.f32.xlu0 %v2253
        %v2255 = vpop.xlane.xlu0 %2254
        %v2256 = vrcp.pop %v2252
        %v2257 = vrcp.pop %v2255
        %v2258 = vmul.f32 %v2252, %v2256
        %v2259 = vmul.f32 %v2255, %v2257
        %v2260 = vsub.f32 2.0, %v2258
        %v2261 = vsub.f32 2.0, %v2259
        %v2262 = vmul.f32 %v2256, %v2260
        %v2263 = vmul.f32 %v2257, %v2261
        %v2264 = vmul.f32 %v2247, %v2262
        %v2265 = vmul.f32 %v2249, %v2263
        %s2266 = scalar_lea.vmem %s632, 24 [#allocation11]
        %2267 = vst.msk [vmem:[%s2266] sm:$0xff] %vm1373, %v2264
        %2268 = vst.msk [vmem:[%s2266 + $0x20] sm:$0xff] %vm1373, %v2265
        %2269 = vrot.lane.b32.xlu0 %v2049, 16
        %v2270 = vpop.permute.xlu0 %2269
        %2271 = vrot.lane.b32.xlu0 %v2050, 16
        %v2272 = vpop.permute.xlu0 %2271
        %v2275 = vsel %vm1373, %v2264, 0
        %v2277 = vsel %vm1412, %v2272, 0
        %2279 = vmatpush.msra.mxu0 0.0
        %2280 = vmatpush.msra.mxu0 0.0
        %2281 = vmatpush.msra.mxu0 0.0
        %2282 = vmatpush.msra.mxu0 0.0
        %2283 = vmatpush.msra.mxu0 0.0
        %2284 = vmatpush.msra.mxu0 0.0
        %2285 = vmatpush.msra.mxu0 0.0
        %2286 = vmatpush.msra.mxu0 0.0
        %2287 = vmatpush.msra.mxu0 0.0
        %2288 = vmatpush.msra.mxu0 0.0
        %2289 = vmatpush.msra.mxu0 0.0
        %2290 = vmatpush.msra.mxu0 0.0
        %2291 = vmatpush.msra.mxu0 0.0
        %2292 = vmatpush.msra.mxu0 0.0
        %2293 = vmatpush.msra.mxu0 %v2277
        %2294 = vmatpush.msra.mxu0 %v2270
        %2295 = vmatmul.f32.gmra.mxu0 %v2275
        %v2296 = vpop.f32.mrf.mxu0
        %v2297 = vadd.f32 0.0, %v2296
        %2298 = vdwg.mxu0
        %2299 = vrot.lane.b32.xlu0 %v2051, 16
        %v2300 = vpop.permute.xlu0 %2299
        %2301 = vrot.lane.b32.xlu0 %v2052, 16
        %v2302 = vpop.permute.xlu0 %2301
        %v2305 = vsel %vm1373, %v2265, 0
        %v2307 = vsel %vm1412, %v2302, 0
        %2309 = vmatpush.msra.mxu0 0.0
        %2310 = vmatpush.msra.mxu0 0.0
        %2311 = vmatpush.msra.mxu0 0.0
        %2312 = vmatpush.msra.mxu0 0.0
        %2313 = vmatpush.msra.mxu0 0.0
        %2314 = vmatpush.msra.mxu0 0.0
        %2315 = vmatpush.msra.mxu0 0.0
        %2316 = vmatpush.msra.mxu0 0.0
        %2317 = vmatpush.msra.mxu0 0.0
        %2318 = vmatpush.msra.mxu0 0.0
        %2319 = vmatpush.msra.mxu0 0.0
        %2320 = vmatpush.msra.mxu0 0.0
        %2321 = vmatpush.msra.mxu0 0.0
        %2322 = vmatpush.msra.mxu0 0.0
        %2323 = vmatpush.msra.mxu0 %v2307
        %2324 = vmatpush.msra.mxu0 %v2300
        %2325 = vmatmul.f32.gmra.mxu0 %v2305
        %v2326 = vpop.f32.mrf.mxu0
        %v2327 = vadd.f32 0.0, %v2326
        %2328 = vdwg.mxu0
        %2331 = vrot.lane.b32.xlu0 %v2297, 48
        %v2332 = vpop.permute.xlu0 %2331
        %2333 = vrot.lane.b32.xlu0 %v2327, 48
        %v2334 = vpop.permute.xlu0 %2333
        %vm2337 = vcmask 523648
        %2338 = vst.msk [vmem:[#allocation3] sm:$0xff] %vm2337, %v2332
        %2339 = vst.msk [vmem:[#allocation3 + $0x8] sm:$0xff] %vm2337, %v2334
        %v2340 = vld [vmem:[#allocation3] sm:$0xff]
        %v2341 = vld [vmem:[#allocation3 + $0x8] sm:$0xff]
        %v2342 = vld [vmem:[#allocation8 + $0x7] sm:$0x1]
        %v2343 = vld [vmem:[%s8] sm:$0xff]
        %v2344 = vld [vmem:[%s8 + $0x8] sm:$0xff]
        %v2345 = vld [vmem:[%s8 + $0x10] sm:$0xff]
        %v2346 = vld [vmem:[%s8 + $0x18] sm:$0xff]
        %v2347 = vld [vmem:[%s8 + $0x20] sm:$0xff]
        %v2348 = vld [vmem:[%s8 + $0x28] sm:$0xff]
        %v2349 = vld [vmem:[%s8 + $0x30] sm:$0xff]
        %v2350 = vld [vmem:[%s8 + $0x38] sm:$0xff]
        %v2351 = vperm.slane %v2342, 0
        %v2353 = vsel %vm652, %v2340, 0
        %v2356 = vsel %vm652, %v2341, 0
        %2358 = vmatpush.msra.mxu0 0.0
        %2359 = vmatpush.msra.mxu0 0.0
        %2360 = vmatpush.msra.mxu0 0.0
        %2361 = vmatpush.msra.mxu0 0.0
        %2362 = vmatpush.msra.mxu0 0.0
        %2363 = vmatpush.msra.mxu0 0.0
        %2364 = vmatpush.msra.mxu0 0.0
        %2365 = vmatpush.msra.mxu0 0.0
        %2366 = vmatpush.msra.mxu0 %v2350
        %2367 = vmatpush.msra.mxu0 %v2349
        %2368 = vmatpush.msra.mxu0 %v2348
        %2369 = vmatpush.msra.mxu0 %v2347
        %2370 = vmatpush.msra.mxu0 %v2346
        %2371 = vmatpush.msra.mxu0 %v2345
        %2372 = vmatpush.msra.mxu0 %v2344
        %2373 = vmatpush.msra.mxu0 %v2343
        %2374 = vmatmul.f32.gmra.mxu0 %v2353
        %v2375 = vpop.f32.mrf.mxu0
        %v2376 = vadd.f32 %v2351, %v2375
        %2377 = vmatmul.f32.gmra.mxu0 %v2356
        %v2378 = vpop.f32.mrf.mxu0
        %v2379 = vadd.f32 %v2351, %v2378
        %2380 = vdwg.mxu0
        %v2381 = vadd.f32 %v2376, %v832
        %v2382 = vadd.f32 %v2379, %v833
        %v2383 = vld [vmem:[#allocation8 + $0x8] sm:$0x1]
        %v2384 = vld [vmem:[#allocation8 + $0x9] sm:$0x1]
        %v2385 = vsel %vm652, %v2381, 0.0
        %2386 = vadd.xlane.f32.xlu0 %v2385
        %v2387 = vpop.xlane.xlu0 %2386
        %v2388 = vsel %vm652, %v2382, 0.0
        %2389 = vadd.xlane.f32.xlu0 %v2388
        %v2390 = vpop.xlane.xlu0 %2389
        %v2391 = vmul.f32 %v2387, %v665
        %v2392 = vmul.f32 %v2390, %v665
        %v2393 = vsub.f32 %v2381, %v2391
        %v2394 = vsub.f32 %v2382, %v2392
        %v2395 = vmul.f32 %v2393, %v2393
        %v2396 = vmul.f32 %v2394, %v2394
        %v2397 = vsel %vm652, %v2395, 0.0
        %2398 = vadd.xlane.f32.xlu0 %v2397
        %v2399 = vpop.xlane.xlu0 %2398
        %v2400 = vsel %vm652, %v2396, 0.0
        %2401 = vadd.xlane.f32.xlu0 %v2400
        %v2402 = vpop.xlane.xlu0 %2401
        %v2403 = vmul.f32 %v2399, %v665
        %v2404 = vmul.f32 %v2402, %v665
        %v2405 = vadd.f32 %v2403, 1e-05
        %v2406 = vadd.f32 %v2404, 1e-05
        %v2407 = vrsqrt.pop %v2405
        %v2408 = vmul.f32 %v2407, %v2405
        %v2409 = vmul.f32 %v2408, %v2407
        %v2410 = vmul.f32 0.5, %v2409
        %v2411 = vsub.f32 1.5, %v2410
        %v2412 = vmul.f32 %v2407, %v2411
        %vm2413 = vweird.f32 %v2405
        %vm2414 = vweird.f32 %v2407
        %vm2415 = vmor %vm2413, %vm2414
        %v2416 = vsel %vm2415, %v2407, %v2412
        %v2417 = vrsqrt.pop %v2406
        %v2418 = vmul.f32 %v2417, %v2406
        %v2419 = vmul.f32 %v2418, %v2417
        %v2420 = vmul.f32 0.5, %v2419
        %v2421 = vsub.f32 1.5, %v2420
        %v2422 = vmul.f32 %v2417, %v2421
        %vm2423 = vweird.f32 %v2406
        %vm2424 = vweird.f32 %v2417
        %vm2425 = vmor %vm2423, %vm2424
        %v2426 = vsel %vm2425, %v2417, %v2422
        %v2427 = vmul.f32 %v2393, %v2416
        %v2428 = vmul.f32 %v2394, %v2426
        %v2429 = vperm.slane %v2383, 0
        %v2430 = vmul.f32 %v2427, %v2429
        %v2431 = vmul.f32 %v2428, %v2429
        %v2432 = vperm.slane %v2384, 0
        %v2433 = vadd.f32 %v2430, %v2432
        %v2434 = vadd.f32 %v2431, %v2432
        %v2435 = vld [vmem:[%s16] sm:$0x1]
        %v2436 = vld [vmem:[%s9] sm:$0xff]
        %v2437 = vld [vmem:[%s9 + $0x8] sm:$0xff]
        %v2438 = vld [vmem:[%s9 + $0x10] sm:$0xff]
        %v2439 = vld [vmem:[%s9 + $0x18] sm:$0xff]
        %v2440 = vld [vmem:[%s9 + $0x20] sm:$0xff]
        %v2441 = vld [vmem:[%s9 + $0x28] sm:$0xff]
        %v2442 = vld [vmem:[%s9 + $0x30] sm:$0xff]
        %v2443 = vld [vmem:[%s9 + $0x38] sm:$0xff]
        %v2445 = vperm.slane %v2435, 0
        %v2448 = vsel %vm652, %v2433, 0
        %v2451 = vsel %vm652, %v2434, 0
        %2453 = vmatpush.msra.mxu0 0.0
        %2454 = vmatpush.msra.mxu0 0.0
        %2455 = vmatpush.msra.mxu0 0.0
        %2456 = vmatpush.msra.mxu0 0.0
        %2457 = vmatpush.msra.mxu0 0.0
        %2458 = vmatpush.msra.mxu0 0.0
        %2459 = vmatpush.msra.mxu0 0.0
        %2460 = vmatpush.msra.mxu0 0.0
        %2461 = vmatpush.msra.mxu0 %v2443
        %2462 = vmatpush.msra.mxu0 %v2442
        %2463 = vmatpush.msra.mxu0 %v2441
        %2464 = vmatpush.msra.mxu0 %v2440
        %2465 = vmatpush.msra.mxu0 %v2439
        %2466 = vmatpush.msra.mxu0 %v2438
        %2467 = vmatpush.msra.mxu0 %v2437
        %2468 = vmatpush.msra.mxu0 %v2436
        %2469 = vmatmul.f32.gmra.mxu0 %v2448
        %v2470 = vpop.f32.mrf.mxu0
        %v2471 = vadd.f32 %v2445, %v2470
        %2472 = vmatmul.f32.gmra.mxu0 %v2451
        %v2473 = vpop.f32.mrf.mxu0
        %v2474 = vadd.f32 %v2445, %v2473
        %2475 = vdwg.mxu0
        %v2476 = vxor.u32 %v2471, 2147483648
        %v2477 = vxor.u32 %v2474, 2147483648
        %v2478 = vmul.f32 %v2476, 1.442695
        %v2479 = vpow.pop %v2478
        %v2480 = vmul.f32 %v2477, 1.442695
        %v2481 = vpow.pop %v2480
        %v2482 = vadd.f32 %v2479, 1.0
        %v2483 = vadd.f32 %v2481, 1.0
        %v2484 = vrcp.pop %v2482
        %v2485 = vmul.f32 %v2482, %v2484
        %v2486 = vsub.f32 1.0, %v2485
        %v2487 = vmul.f32 %v2484, %v2486
        %v2488 = vadd.f32 %v2484, %v2487
        %vm2489 = vweird.f32 %v2482
        %vm2490 = vweird.f32 %v2484
        %vm2491 = vmor %vm2489, %vm2490
        %v2492 = vsel %vm2491, %v2484, %v2488
        %v2493 = vand.u32 2147483647, %v2482
        %vm2494 = vcmp.eq.f32.partialorder %v2493, 8.507059e+37
        %v2495 = vand.u32 %v2482, 2147483648
        %v2496 = vor.u32 1.1754944e-38, %v2495
        %v2497 = vsel %vm2494, %v2496, %v2492
        %v2498 = vmul.f32 1.0, %v2497
        %v2499 = vrcp.pop %v2483
        %v2500 = vmul.f32 %v2483, %v2499
        %v2501 = vsub.f32 1.0, %v2500
        %v2502 = vmul.f32 %v2499, %v2501
        %v2503 = vadd.f32 %v2499, %v2502
        %vm2504 = vweird.f32 %v2483
        %vm2505 = vweird.f32 %v2499
        %vm2506 = vmor %vm2504, %vm2505
        %v2507 = vsel %vm2506, %v2499, %v2503
        %v2508 = vand.u32 2147483647, %v2483
        %vm2509 = vcmp.eq.f32.partialorder %v2508, 8.507059e+37
        %v2510 = vand.u32 %v2483, 2147483648
        %v2511 = vor.u32 1.1754944e-38, %v2510
        %v2512 = vsel %vm2509, %v2511, %v2507
        %v2513 = vmul.f32 1.0, %v2512
        %2516 = vrot.lane.b32.xlu0 %v2498, 64
        %v2517 = vpop.permute.xlu0 %2516
        %2518 = vrot.lane.b32.xlu0 %v2513, 64
        %v2519 = vpop.permute.xlu0 %2518
        %v2522 = vmul.f32 %v2471, %v2517
        %v2523 = vmul.f32 %v2474, %v2519
        %vm2524 = vcmask 517120
        %2525 = vst.msk [vmem:[#allocation4] sm:$0x3] %vm2524, 0.0
        %2526 = vst.msk [vmem:[#allocation4 + $0x10] sm:$0x3] %vm2524, 0.0
        %2527 = vst.msk [vmem:[#allocation4 + $0x2] sm:$0xff] %vm652, %v2522
        %2528 = vst.msk [vmem:[#allocation4 + $0x12] sm:$0xff] %vm652, %v2523
        %v2529 = vld [vmem:[#allocation4] sm:$0xff]
        %v2530 = vld [vmem:[#allocation4 + $0x10] sm:$0xff]
        %v2531 = vld [vmem:[%s10] sm:$0x1]
        %v2532 = vperm.slane %v2531, 0
        %v2533 = vmul.f32 %v2529, %v2532
        %v2534 = vmul.f32 %v2530, %v2532
        %v2535 = vadd.f32 %v2533, 0.0
        %v2536 = vadd.f32 %v2534, 0.0
        %v2537 = vld [vmem:[#allocation4 + $0x1] sm:$0xff]
        %v2538 = vld [vmem:[#allocation4 + $0x11] sm:$0xff]
        %v2539 = vld [vmem:[%s10 + $0x1] sm:$0x1]
        %v2540 = vperm.slane %v2539, 0
        %v2541 = vmul.f32 %v2537, %v2540
        %v2542 = vmul.f32 %v2538, %v2540
        %v2543 = vadd.f32 %v2535, %v2541
        %v2544 = vadd.f32 %v2536, %v2542
        %v2545 = vld [vmem:[#allocation4 + $0x2] sm:$0xff]
        %v2546 = vld [vmem:[#allocation4 + $0x12] sm:$0xff]
        %v2547 = vld [vmem:[%s10 + $0x2] sm:$0x1]
        %v2548 = vperm.slane %v2547, 0
        %v2549 = vmul.f32 %v2545, %v2548
        %v2550 = vmul.f32 %v2546, %v2548
        %v2551 = vadd.f32 %v2543, %v2549
        %v2552 = vadd.f32 %v2544, %v2550
        %v2553 = vld [vmem:[#allocation8 + $0xa] sm:$0x1]
        %v2554 = vperm.slane %v2553, 0
        %v2555 = vadd.f32 %v2551, %v2554
        %v2556 = vadd.f32 %v2552, %v2554
        %v2557 = vld [vmem:[#allocation8 + $0xb] sm:$0x1]
        %v2558 = vld [vmem:[#allocation8 + $0xc] sm:$0x1]
        %v2559 = vsel %vm652, %v2555, 0.0
        %2560 = vadd.xlane.f32.xlu0 %v2559
        %v2561 = vpop.xlane.xlu0 %2560
        %v2562 = vsel %vm652, %v2556, 0.0
        %2563 = vadd.xlane.f32.xlu0 %v2562
        %v2564 = vpop.xlane.xlu0 %2563
        %v2565 = vmul.f32 %v2561, %v665
        %v2566 = vmul.f32 %v2564, %v665
        %v2567 = vsub.f32 %v2555, %v2565
        %v2568 = vsub.f32 %v2556, %v2566
        %v2569 = vmul.f32 %v2567, %v2567
        %v2570 = vmul.f32 %v2568, %v2568
        %v2571 = vsel %vm652, %v2569, 0.0
        %2572 = vadd.xlane.f32.xlu0 %v2571
        %v2573 = vpop.xlane.xlu0 %2572
        %v2574 = vsel %vm652, %v2570, 0.0
        %2575 = vadd.xlane.f32.xlu0 %v2574
        %v2576 = vpop.xlane.xlu0 %2575
        %v2577 = vmul.f32 %v2573, %v665
        %v2578 = vmul.f32 %v2576, %v665
        %v2579 = vadd.f32 %v2577, 1e-05
        %v2580 = vadd.f32 %v2578, 1e-05
        %v2581 = vrsqrt.pop %v2579
        %v2582 = vmul.f32 %v2581, %v2579
        %v2583 = vmul.f32 %v2582, %v2581
        %v2584 = vmul.f32 0.5, %v2583
        %v2585 = vsub.f32 1.5, %v2584
        %v2586 = vmul.f32 %v2581, %v2585
        %vm2587 = vweird.f32 %v2579
        %vm2588 = vweird.f32 %v2581
        %vm2589 = vmor %vm2587, %vm2588
        %v2590 = vsel %vm2589, %v2581, %v2586
        %v2591 = vrsqrt.pop %v2580
        %v2592 = vmul.f32 %v2591, %v2580
        %v2593 = vmul.f32 %v2592, %v2591
        %v2594 = vmul.f32 0.5, %v2593
        %v2595 = vsub.f32 1.5, %v2594
        %v2596 = vmul.f32 %v2591, %v2595
        %vm2597 = vweird.f32 %v2580
        %vm2598 = vweird.f32 %v2591
        %vm2599 = vmor %vm2597, %vm2598
        %v2600 = vsel %vm2599, %v2591, %v2596
        %v2601 = vmul.f32 %v2567, %v2590
        %v2602 = vmul.f32 %v2568, %v2600
        %v2603 = vperm.slane %v2557, 0
        %v2604 = vmul.f32 %v2601, %v2603
        %v2605 = vmul.f32 %v2602, %v2603
        %v2606 = vperm.slane %v2558, 0
        %v2607 = vadd.f32 %v2604, %v2606
        %v2608 = vadd.f32 %v2605, %v2606
        %v2609 = vxor.u32 %v2607, 2147483648
        %v2610 = vxor.u32 %v2608, 2147483648
        %v2611 = vmul.f32 %v2609, 1.442695
        %v2612 = vpow.pop %v2611
        %v2613 = vmul.f32 %v2610, 1.442695
        %v2614 = vpow.pop %v2613
        %v2615 = vadd.f32 %v2612, 1.0
        %v2616 = vadd.f32 %v2614, 1.0
        %v2617 = vrcp.pop %v2615
        %v2618 = vmul.f32 %v2615, %v2617
        %v2619 = vsub.f32 1.0, %v2618
        %v2620 = vmul.f32 %v2617, %v2619
        %v2621 = vadd.f32 %v2617, %v2620
        %vm2622 = vweird.f32 %v2615
        %vm2623 = vweird.f32 %v2617
        %vm2624 = vmor %vm2622, %vm2623
        %v2625 = vsel %vm2624, %v2617, %v2621
        %v2626 = vand.u32 2147483647, %v2615
        %vm2627 = vcmp.eq.f32.partialorder %v2626, 8.507059e+37
        %v2628 = vand.u32 %v2615, 2147483648
        %v2629 = vor.u32 1.1754944e-38, %v2628
        %v2630 = vsel %vm2627, %v2629, %v2625
        %v2631 = vmul.f32 1.0, %v2630
        %v2632 = vrcp.pop %v2616
        %v2633 = vmul.f32 %v2616, %v2632
        %v2634 = vsub.f32 1.0, %v2633
        %v2635 = vmul.f32 %v2632, %v2634
        %v2636 = vadd.f32 %v2632, %v2635
        %vm2637 = vweird.f32 %v2616
        %vm2638 = vweird.f32 %v2632
        %vm2639 = vmor %vm2637, %vm2638
        %v2640 = vsel %vm2639, %v2632, %v2636
        %v2641 = vand.u32 2147483647, %v2616
        %vm2642 = vcmp.eq.f32.partialorder %v2641, 8.507059e+37
        %v2643 = vand.u32 %v2616, 2147483648
        %v2644 = vor.u32 1.1754944e-38, %v2643
        %v2645 = vsel %vm2642, %v2644, %v2640
        %v2646 = vmul.f32 1.0, %v2645
        %v2647 = vmul.f32 %v2607, %v2631
        %v2648 = vmul.f32 %v2608, %v2646
        %v2649 = vld [vmem:[#allocation8 + $0xd] sm:$0x1]
        %v2650 = vld [vmem:[%s11] sm:$0xff]
        %v2651 = vld [vmem:[%s11 + $0x8] sm:$0xff]
        %v2652 = vld [vmem:[%s11 + $0x10] sm:$0xff]
        %v2653 = vld [vmem:[%s11 + $0x18] sm:$0xff]
        %v2654 = vld [vmem:[%s11 + $0x20] sm:$0xff]
        %v2655 = vld [vmem:[%s11 + $0x28] sm:$0xff]
        %v2656 = vld [vmem:[%s11 + $0x30] sm:$0xff]
        %v2657 = vld [vmem:[%s11 + $0x38] sm:$0xff]
        %v2658 = vperm.slane %v2649, 0
        %v2660 = vsel %vm652, %v2647, 0
        %v2663 = vsel %vm652, %v2648, 0
        %2665 = vmatpush.msra.mxu0 0.0
        %2666 = vmatpush.msra.mxu0 0.0
        %2667 = vmatpush.msra.mxu0 0.0
        %2668 = vmatpush.msra.mxu0 0.0
        %2669 = vmatpush.msra.mxu0 0.0
        %2670 = vmatpush.msra.mxu0 0.0
        %2671 = vmatpush.msra.mxu0 0.0
        %2672 = vmatpush.msra.mxu0 0.0
        %2673 = vmatpush.msra.mxu0 %v2657
        %2674 = vmatpush.msra.mxu0 %v2656
        %2675 = vmatpush.msra.mxu0 %v2655
        %2676 = vmatpush.msra.mxu0 %v2654
        %2677 = vmatpush.msra.mxu0 %v2653
        %2678 = vmatpush.msra.mxu0 %v2652
        %2679 = vmatpush.msra.mxu0 %v2651
        %2680 = vmatpush.msra.mxu0 %v2650
        %2681 = vmatmul.f32.gmra.mxu0 %v2660
        %v2682 = vpop.f32.mrf.mxu0
        %v2683 = vadd.f32 %v2658, %v2682
        %2684 = vmatmul.f32.gmra.mxu0 %v2663
        %v2685 = vpop.f32.mrf.mxu0
        %v2686 = vadd.f32 %v2658, %v2685
        %2687 = vdwg.mxu0
        %v2688 = vadd.f32 %v2381, %v2683
        %v2689 = vadd.f32 %v2382, %v2686
        %v2690 = vld [vmem:[#allocation8 + $0xe] sm:$0x1]
        %v2691 = vld [vmem:[#allocation8 + $0xf] sm:$0x1]
        %v2692 = vsel %vm652, %v2688, 0.0
        %2693 = vadd.xlane.f32.xlu0 %v2692
        %v2694 = vpop.xlane.xlu0 %2693
        %v2695 = vsel %vm652, %v2689, 0.0
        %2696 = vadd.xlane.f32.xlu0 %v2695
        %v2697 = vpop.xlane.xlu0 %2696
        %v2698 = vmul.f32 %v2694, %v665
        %v2699 = vmul.f32 %v2697, %v665
        %v2700 = vsub.f32 %v2688, %v2698
        %v2701 = vsub.f32 %v2689, %v2699
        %v2702 = vmul.f32 %v2700, %v2700
        %v2703 = vmul.f32 %v2701, %v2701
        %v2704 = vsel %vm652, %v2702, 0.0
        %2705 = vadd.xlane.f32.xlu0 %v2704
        %v2706 = vpop.xlane.xlu0 %2705
        %v2707 = vsel %vm652, %v2703, 0.0
        %2708 = vadd.xlane.f32.xlu0 %v2707
        %v2709 = vpop.xlane.xlu0 %2708
        %v2710 = vmul.f32 %v2706, %v665
        %v2711 = vmul.f32 %v2709, %v665
        %v2712 = vadd.f32 %v2710, 1e-05
        %v2713 = vadd.f32 %v2711, 1e-05
        %v2714 = vrsqrt.pop %v2712
        %v2715 = vmul.f32 %v2714, %v2712
        %v2716 = vmul.f32 %v2715, %v2714
        %v2717 = vmul.f32 0.5, %v2716
        %v2718 = vsub.f32 1.5, %v2717
        %v2719 = vmul.f32 %v2714, %v2718
        %vm2720 = vweird.f32 %v2712
        %vm2721 = vweird.f32 %v2714
        %vm2722 = vmor %vm2720, %vm2721
        %v2723 = vsel %vm2722, %v2714, %v2719
        %v2724 = vrsqrt.pop %v2713
        %v2725 = vmul.f32 %v2724, %v2713
        %v2726 = vmul.f32 %v2725, %v2724
        %v2727 = vmul.f32 0.5, %v2726
        %v2728 = vsub.f32 1.5, %v2727
        %v2729 = vmul.f32 %v2724, %v2728
        %vm2730 = vweird.f32 %v2713
        %vm2731 = vweird.f32 %v2724
        %vm2732 = vmor %vm2730, %vm2731
        %v2733 = vsel %vm2732, %v2724, %v2729
        %v2734 = vmul.f32 %v2700, %v2723
        %v2735 = vmul.f32 %v2701, %v2733
        %v2736 = vperm.slane %v2690, 0
        %v2737 = vmul.f32 %v2734, %v2736
        %v2738 = vmul.f32 %v2735, %v2736
        %v2739 = vperm.slane %v2691, 0
        %v2740 = vadd.f32 %v2737, %v2739
        %v2741 = vadd.f32 %v2738, %v2739
        %v2742 = vld [vmem:[%s15 + $0x1] sm:$0x1]
        %v2743 = vld [vmem:[#allocation5] sm:$0xff]
        %v2744 = vld [vmem:[#allocation5 + $0x8] sm:$0xff]
        %v2745 = vld [vmem:[#allocation5 + $0x10] sm:$0xff]
        %v2746 = vld [vmem:[#allocation5 + $0x18] sm:$0xff]
        %v2747 = vld [vmem:[#allocation5 + $0x20] sm:$0xff]
        %v2748 = vld [vmem:[#allocation5 + $0x28] sm:$0xff]
        %v2749 = vld [vmem:[#allocation5 + $0x30] sm:$0xff]
        %v2750 = vld [vmem:[#allocation5 + $0x38] sm:$0xff]
        %v2751 = vperm.slane %v2742, 0
        %v2753 = vsel %vm652, %v2740, 0
        %v2756 = vsel %vm652, %v2741, 0
        %2758 = vmatpush.msra.mxu0 0.0
        %2759 = vmatpush.msra.mxu0 0.0
        %2760 = vmatpush.msra.mxu0 0.0
        %2761 = vmatpush.msra.mxu0 0.0
        %2762 = vmatpush.msra.mxu0 0.0
        %2763 = vmatpush.msra.mxu0 0.0
        %2764 = vmatpush.msra.mxu0 0.0
        %2765 = vmatpush.msra.mxu0 0.0
        %2766 = vmatpush.msra.mxu0 %v2750
        %2767 = vmatpush.msra.mxu0 %v2749
        %2768 = vmatpush.msra.mxu0 %v2748
        %2769 = vmatpush.msra.mxu0 %v2747
        %2770 = vmatpush.msra.mxu0 %v2746
        %2771 = vmatpush.msra.mxu0 %v2745
        %2772 = vmatpush.msra.mxu0 %v2744
        %2773 = vmatpush.msra.mxu0 %v2743
        %2774 = vmatmul.f32.gmra.mxu0 %v2753
        %v2775 = vpop.f32.mrf.mxu0
        %v2776 = vadd.f32 %v2751, %v2775
        %2777 = vmatmul.f32.gmra.mxu0 %v2756
        %v2778 = vpop.f32.mrf.mxu0
        %v2779 = vadd.f32 %v2751, %v2778
        %2780 = vdwg.mxu0
        %v2781 = vxor.u32 %v2776, 2147483648
        %v2782 = vxor.u32 %v2779, 2147483648
        %v2783 = vmul.f32 %v2781, 1.442695
        %v2784 = vpow.pop %v2783
        %v2785 = vmul.f32 %v2782, 1.442695
        %v2786 = vpow.pop %v2785
        %v2787 = vadd.f32 %v2784, 1.0
        %v2788 = vadd.f32 %v2786, 1.0
        %v2789 = vrcp.pop %v2787
        %v2790 = vmul.f32 %v2787, %v2789
        %v2791 = vsub.f32 1.0, %v2790
        %v2792 = vmul.f32 %v2789, %v2791
        %v2793 = vadd.f32 %v2789, %v2792
        %vm2794 = vweird.f32 %v2787
        %vm2795 = vweird.f32 %v2789
        %vm2796 = vmor %vm2794, %vm2795
        %v2797 = vsel %vm2796, %v2789, %v2793
        %v2798 = vand.u32 2147483647, %v2787
        %vm2799 = vcmp.eq.f32.partialorder %v2798, 8.507059e+37
        %v2800 = vand.u32 %v2787, 2147483648
        %v2801 = vor.u32 1.1754944e-38, %v2800
        %v2802 = vsel %vm2799, %v2801, %v2797
        %v2803 = vmul.f32 1.0, %v2802
        %v2804 = vrcp.pop %v2788
        %v2805 = vmul.f32 %v2788, %v2804
        %v2806 = vsub.f32 1.0, %v2805
        %v2807 = vmul.f32 %v2804, %v2806
        %v2808 = vadd.f32 %v2804, %v2807
        %vm2809 = vweird.f32 %v2788
        %vm2810 = vweird.f32 %v2804
        %vm2811 = vmor %vm2809, %vm2810
        %v2812 = vsel %vm2811, %v2804, %v2808
        %v2813 = vand.u32 2147483647, %v2788
        %vm2814 = vcmp.eq.f32.partialorder %v2813, 8.507059e+37
        %v2815 = vand.u32 %v2788, 2147483648
        %v2816 = vor.u32 1.1754944e-38, %v2815
        %v2817 = vsel %vm2814, %v2816, %v2812
        %v2818 = vmul.f32 1.0, %v2817
        %v2819 = vmul.f32 %v2776, %v2803
        %v2820 = vmul.f32 %v2779, %v2818
        %v2821 = vld [vmem:[#allocation8 + $0x10] sm:$0x1]
        %v2822 = vld [vmem:[%s13] sm:$0xff]
        %v2823 = vld [vmem:[%s13 + $0x8] sm:$0xff]
        %v2824 = vld [vmem:[%s13 + $0x10] sm:$0xff]
        %v2825 = vld [vmem:[%s13 + $0x18] sm:$0xff]
        %v2826 = vld [vmem:[%s13 + $0x20] sm:$0xff]
        %v2827 = vld [vmem:[%s13 + $0x28] sm:$0xff]
        %v2828 = vld [vmem:[%s13 + $0x30] sm:$0xff]
        %v2829 = vld [vmem:[%s13 + $0x38] sm:$0xff]
        %v2830 = vld [vmem:[%s13 + $0x40] sm:$0xff]
        %v2831 = vld [vmem:[%s13 + $0x48] sm:$0xff]
        %v2832 = vld [vmem:[%s13 + $0x50] sm:$0xff]
        %v2833 = vld [vmem:[%s13 + $0x58] sm:$0xff]
        %v2834 = vld [vmem:[%s13 + $0x60] sm:$0xff]
        %v2835 = vld [vmem:[%s13 + $0x68] sm:$0xff]
        %v2836 = vld [vmem:[%s13 + $0x70] sm:$0xff]
        %v2837 = vld [vmem:[%s13 + $0x78] sm:$0xff]
        %v2838 = vperm.slane %v2821, 0
        %2839 = vmatpush.msra.mxu0 %v2837
        %2840 = vmatpush.msra.mxu0 %v2836
        %2841 = vmatpush.msra.mxu0 %v2835
        %2842 = vmatpush.msra.mxu0 %v2834
        %2843 = vmatpush.msra.mxu0 %v2833
        %2844 = vmatpush.msra.mxu0 %v2832
        %2845 = vmatpush.msra.mxu0 %v2831
        %2846 = vmatpush.msra.mxu0 %v2830
        %2847 = vmatpush.msra.mxu0 %v2829
        %2848 = vmatpush.msra.mxu0 %v2828
        %2849 = vmatpush.msra.mxu0 %v2827
        %2850 = vmatpush.msra.mxu0 %v2826
        %2851 = vmatpush.msra.mxu0 %v2825
        %2852 = vmatpush.msra.mxu0 %v2824
        %2853 = vmatpush.msra.mxu0 %v2823
        %2854 = vmatpush.msra.mxu0 %v2822
        %2855 = vmatmul.f32.gmra.mxu0 %v2819
        %v2856 = vpop.f32.mrf.mxu0
        %v2857 = vadd.f32 %v2838, %v2856
        %2858 = vmatmul.f32.gmra.mxu0 %v2820
        %v2859 = vpop.f32.mrf.mxu0
        %v2860 = vadd.f32 %v2838, %v2859
        %2861 = vdwg.mxu0
        %v2862 = vmul.f32 %v2857, 0.5
        %v2863 = vmul.f32 %v2860, 0.5
        %v2864 = vadd.f32 %v2688, %v2862
        %v2865 = vadd.f32 %v2689, %v2863
        %v2866 = vld [vmem:[#allocation8 + $0x11] sm:$0x1]
        %v2867 = vld [vmem:[#allocation8 + $0x12] sm:$0x1]
        %v2868 = vsel %vm652, %v2864, 0.0
        %2869 = vadd.xlane.f32.xlu0 %v2868
        %v2870 = vpop.xlane.xlu0 %2869
        %v2871 = vsel %vm652, %v2865, 0.0
        %2872 = vadd.xlane.f32.xlu0 %v2871
        %v2873 = vpop.xlane.xlu0 %2872
        %v2874 = vmul.f32 %v2870, %v665
        %v2875 = vmul.f32 %v2873, %v665
        %v2876 = vsub.f32 %v2864, %v2874
        %v2877 = vsub.f32 %v2865, %v2875
        %v2878 = vmul.f32 %v2876, %v2876
        %v2879 = vmul.f32 %v2877, %v2877
        %v2880 = vsel %vm652, %v2878, 0.0
        %2881 = vadd.xlane.f32.xlu0 %v2880
        %v2882 = vpop.xlane.xlu0 %2881
        %v2883 = vsel %vm652, %v2879, 0.0
        %2884 = vadd.xlane.f32.xlu0 %v2883
        %v2885 = vpop.xlane.xlu0 %2884
        %v2886 = vmul.f32 %v2882, %v665
        %v2887 = vmul.f32 %v2885, %v665
        %v2888 = vadd.f32 %v2886, 1e-05
        %v2889 = vadd.f32 %v2887, 1e-05
        %v2890 = vrsqrt.pop %v2888
        %v2891 = vmul.f32 %v2890, %v2888
        %v2892 = vmul.f32 %v2891, %v2890
        %v2893 = vmul.f32 0.5, %v2892
        %v2894 = vsub.f32 1.5, %v2893
        %v2895 = vmul.f32 %v2890, %v2894
        %vm2896 = vweird.f32 %v2888
        %vm2897 = vweird.f32 %v2890
        %vm2898 = vmor %vm2896, %vm2897
        %v2899 = vsel %vm2898, %v2890, %v2895
        %v2900 = vrsqrt.pop %v2889
        %v2901 = vmul.f32 %v2900, %v2889
        %v2902 = vmul.f32 %v2901, %v2900
        %v2903 = vmul.f32 0.5, %v2902
        %v2904 = vsub.f32 1.5, %v2903
        %v2905 = vmul.f32 %v2900, %v2904
        %vm2906 = vweird.f32 %v2889
        %vm2907 = vweird.f32 %v2900
        %vm2908 = vmor %vm2906, %vm2907
        %v2909 = vsel %vm2908, %v2900, %v2905
        %v2910 = vmul.f32 %v2876, %v2899
        %v2911 = vmul.f32 %v2877, %v2909
        %v2912 = vperm.slane %v2866, 0
        %v2913 = vmul.f32 %v2910, %v2912
        %v2914 = vmul.f32 %v2911, %v2912
        %v2915 = vperm.slane %v2867, 0
        %v2916 = vadd.f32 %v2913, %v2915
        %v2917 = vadd.f32 %v2914, %v2915
        %2918 = vst.msk [vmem:[%s625] sm:$0xff] %vm652, %v2916
        %2919 = vst.msk [vmem:[%s625 + $0x8] sm:$0xff] %vm652, %v2917
        %s2920 = sand.u32 %s413, 1
        %s2921 = scalar_lea.sflag [#allocation7], %s2920
        %s2922 = sand.u32 %s413, 1
        %s2923 = smul.addr %s2922, 16
        %s2924 = scalar_lea.vmem [#allocation10], %s2923
        %s2925 = sand.u32 %s439, 1
        %s2926 = scalar_lea.sflag [#allocation12], %s2925
        %s2927 = sand.u32 %s439, 1
        %s2928 = smul.addr %s2927, 64
        %s2929 = scalar_lea.vmem [#allocation11], %s2928
        // Predicated region
        $region97: #{tpu_custom_call.1} parent=87 // pred_check
          %p2930 = pneg %p423
        $region98: #{tpu_custom_call.1} parent=87 // pred_check_branch
          %2932 = sbr.rel (%p2930) target = $region100
        $region99: #{tpu_custom_call.1} parent=87 // pred_region
          %s2933 = smul.u32 2, %s38
          %2935 = vsyncadd %s2921, 0
          %s2936 = smul.addr %s2933, 8
          %s2937 = scalar_lea.hbm %s17, %s2936
          %s2938 = sshll.u32 %s2924, 4
          %s2939 = int_to_ptr.vmem [resolvable:$true] %s2938
          %s2940 = sshll.u32 %s2937, 4
          %s2941 = int_to_ptr.hbm [resolvable:$true] %s2940
          %2946 = dma.vmem_to_hbm [thread:$0]  %s2939, 256, %s2941, %s2921, 128, 128, 8
        $region100: #{tpu_custom_call.1} parent=87 // pred_fallthru
          _
        // Predicated region
        $region101: #{tpu_custom_call.1} parent=87 // pred_check
          %p2947 = pneg %p449
        $region102: #{tpu_custom_call.1} parent=87 // pred_check_branch
          %2949 = sbr.rel (%p2947) target = $region104
        $region103: #{tpu_custom_call.1} parent=87 // pred_region
          %s2950 = smul.u32 2, %s38
          %2952 = vsyncadd %s2926, 0
          %s2953 = smul.addr %s2950, 4
          %s2954 = smul.addr %s2953, 8
          %s2955 = scalar_lea.hbm %s18, %s2954
          %s2956 = sshll.u32 %s2929, 4
          %s2957 = int_to_ptr.vmem [resolvable:$true] %s2956
          %s2958 = sshll.u32 %s2955, 4
          %s2959 = int_to_ptr.hbm [resolvable:$true] %s2958
          %2964 = dma.vmem_to_hbm [thread:$0]  %s2957, 1024, %s2959, %s2926, 128, 128, 8
        $region104: #{tpu_custom_call.1} parent=87 // pred_fallthru
          _
      $region88: #{tpu_custom_call.1} parent=5 // pred_fallthru
        _
      %p2965 = scmp.le.s32.totalorder 2, %s33
      // Predicated region
      $region105: #{tpu_custom_call.1} parent=5 // pred_check
        %p2966 = pneg %p2965
      $region106: #{tpu_custom_call.1} parent=5 // pred_check_branch
        %2968 = sbr.rel (%p2966) target = $region108
      $region107: #{tpu_custom_call.1} parent=5 // pred_region
        %s2969 = ssub.s32 %s33, 2
        // Predicated region
        $region109: #{tpu_custom_call.1} parent=107 // pred_check
          %p2970 = pneg %p429
        $region110: #{tpu_custom_call.1} parent=107 // pred_check_branch
          %2972 = sbr.rel (%p2970) target = $region112
        $region111: #{tpu_custom_call.1} parent=107 // pred_region
          %s2973 = sand.u32 %s414, 1
          %s2974 = scalar_lea.sflag [#allocation7], %s2973
          %s2975 = sand.u32 %s414, 1
          %s2976 = smul.addr %s2975, 16
          %s2977 = scalar_lea.vmem [#allocation10], %s2976
          %2979 = dma.done %s2974, 256
        $region112: #{tpu_custom_call.1} parent=107 // pred_fallthru
          _
        // Predicated region
        $region113: #{tpu_custom_call.1} parent=107 // pred_check
          %p2980 = pneg %p455
        $region114: #{tpu_custom_call.1} parent=107 // pred_check_branch
          %2982 = sbr.rel (%p2980) target = $region116
        $region115: #{tpu_custom_call.1} parent=107 // pred_region
          %s2983 = sand.u32 %s440, 1
          %s2984 = scalar_lea.sflag [#allocation12], %s2983
          %s2985 = sand.u32 %s440, 1
          %s2986 = smul.addr %s2985, 64
          %s2987 = scalar_lea.vmem [#allocation11], %s2986
          %2989 = dma.done %s2984, 1024
        $region116: #{tpu_custom_call.1} parent=107 // pred_fallthru
          _
      $region108: #{tpu_custom_call.1} parent=5 // pred_fallthru
        _
    $region6: #{tpu_custom_call.1} parent=1 // loop_footer
      %s37 = sadd.s32 1, %s33
    $region7: #{tpu_custom_call.1} parent=1 // loop_footer_branch
      %32 = sbr.rel target = $region3
    $region8: #{tpu_custom_call.1} parent=1 // loop_exit
      _
    %2990 = vsyncpa [#allocation6], 1
    %s2991 = scalar_lea.sflag [#allocation6], 1
    %2992 = vsyncpa %s2991, 1
    %2993 = vsyncpa [#allocation9], 1
    %2994 = vsyncpa [#allocation7], 1
    %s2995 = scalar_lea.sflag [#allocation7], 1
    %2996 = vsyncpa %s2995, 1
    %2997 = vsyncpa [#allocation12], 1
    %s2998 = scalar_lea.sflag [#allocation12], 1
    %2999 = vsyncpa %s2998, 1

// kernel: tpu_custom_call.1
$region0: #{tpu_custom_call.1}
  #allocation0 [shape = 'u32[]', space=smem, size = 0x4, offset = 0x4, fixed_abs, tag = 'smem constant byte address 0x4 - core index']
  #allocation1 [shape = 'u32[72,128]{1,0:T(1,128)}', space=vmem, size = 0x9000, scoped, tag = 'internal scratch']
  #allocation2 [shape = 'f32[2,12,128]{2,1,0:T(8,128)}', space=vmem, size = 0x4000, scoped, tag = 'scratch operand']
  #allocation3 [shape = 'f32[2,8,64]{2,1,0:T(8,128)}', space=vmem, size = 0x2000, scoped, tag = 'scratch operand']
  #allocation4 [shape = 'f32[2,10,64]{2,1,0:T(8,128)}', space=vmem, size = 0x4000, scoped, tag = 'scratch operand']
  %s0 = inlined_call_operand.vmem [shape: f32[4,8,64], index: 0, kind: input, shape index: {}]
  %s1 = inlined_call_operand.vmem [shape: f32[4,12,64], index: 1, kind: input, shape index: {}]
  %s2 = inlined_call_operand.vmem [shape: f32[128,64], index: 2, kind: input, shape index: {}]
  %s3 = inlined_call_operand.vmem [shape: f32[64,128], index: 3, kind: input, shape index: {}]
  %s4 = inlined_call_operand.vmem [shape: f32[128,64], index: 4, kind: input, shape index: {}]
  %s5 = inlined_call_operand.vmem [shape: f32[64,64], index: 5, kind: input, shape index: {}]
  %s6 = inlined_call_operand.vmem [shape: f32[64,128], index: 6, kind: input, shape index: {}]
  %s7 = inlined_call_operand.vmem [shape: f32[64,64], index: 7, kind: input, shape index: {}]
  %s8 = inlined_call_operand.vmem [shape: f32[64,64], index: 8, kind: input, shape index: {}]
  %s9 = inlined_call_operand.vmem [shape: f32[64,128], index: 9, kind: input, shape index: {}]
  %s10 = inlined_call_operand.vmem [shape: f32[3,64], index: 10, kind: input, shape index: {}]
  %s11 = inlined_call_operand.vmem [shape: f32[64,64], index: 11, kind: input, shape index: {}]
  %s12 = inlined_call_operand.hbm [shape: f32[64,128], index: 12, kind: input, shape index: {}]
  %s13 = inlined_call_operand.vmem [shape: f32[128,64], index: 13, kind: input, shape index: {}]
  %s14 = inlined_call_operand.hbm [shape: f32[19,64], index: 14, kind: input, shape index: {}]
  %s15 = inlined_call_operand.vmem [shape: f32[2,128], index: 15, kind: input, shape index: {}]
  %s16 = inlined_call_operand.vmem [shape: f32[1,128], index: 16, kind: input, shape index: {}]
  %s17 = inlined_call_operand.hbm [shape: f32[4,8,64], index: 17, kind: output, shape index: {0}]
  %s18 = inlined_call_operand.hbm [shape: f32[4,4,8,12], index: 18, kind: output, shape index: {1}]
  %19 = xla_tuple %s17, %s18
  %s20 = sld [smem:[#allocation0]]
  $region117: #{tpu_custom_call.1} parent=0
    _
  %s22 = ssub.s32 1, %s20
  %s23 = scalar_select 0, %s22, %s20
  $region1: #{tpu_custom_call.1} parent=0
    #allocation5 [shape = 'u8[32768]{0}', space=vmem, size = 0x8000, scoped, tag = 'input window, operand 12, single buffered']
    #allocation6 [shape = 's32[2]{0}', space=sflag, size = 0x8, scoped, tag = 'scoped memory for tpu_custom_call.1']
    #allocation7 [shape = 's32[2]{0}', space=sflag, size = 0x8, scoped, tag = 'scoped memory for tpu_custom_call.1']
    #allocation8 [shape = 'u8[12288]{0}', space=vmem, size = 0x3000, scoped, tag = 'input window, operand 14, single buffered']
    #allocation9 [shape = 's32[1]{0}', space=sflag, size = 0x4, scoped, tag = 'scoped memory for tpu_custom_call.1']
    #allocation10 [shape = 'u8[16384]{0}', space=vmem, size = 0x4000, scoped, tag = 'output window, operand 0']
    #allocation11 [shape = 'u8[65536]{0}', space=vmem, size = 0x10000, scoped, tag = 'output window, operand 1']
    #allocation12 [shape = 's32[2]{0}', space=sflag, size = 0x8, scoped, tag = 'scoped memory for tpu_custom_call.1']
    %24 = vsyncpa [#allocation6], 0
    %25 = vsyncpa [#allocation9], 0
    %26 = vsyncpa [#allocation7], 0
    %s27 = scalar_lea.sflag [#allocation7], 1
    %28 = vsyncpa %s27, 0
    %29 = vsyncpa [#allocation12], 0
    %s30 = scalar_lea.sflag [#allocation12], 1
    %31 = vsyncpa %s30, 0
    loop: start=0, step=1, limit=4
    $region2: #{tpu_custom_call.1} parent=1 // loop_pre_header
      _
    $region3: #{tpu_custom_call.1} parent=1 // loop_header
      %s33 = sphi 0, %s37
      %p34 = scmp.ge.s32.totalorder %s33, 4
      %s43 = sphi 0, %s45
      %s46 = sphi 0, %s43
      %s47 = sphi 0, %s46
      %s63 = sphi 0, %s47
      %s69 = sphi 0, %s71
      %s72 = sphi 0, %s69
      %s73 = sphi 0, %s72
      %s89 = sphi 0, %s73
      %s93 = sphi 0, %s93
      %s95 = sphi 0, %s93
      %s96 = sphi 0, %s95
      %s110 = sphi 0, %s96
      %s114 = sphi 0, %s114
      %s116 = sphi 0, %s114
      %s117 = sphi 0, %s116
      %s131 = sphi 0, %s117
      %s135 = sphi 0, %s135
      %s137 = sphi 0, %s135
      %s138 = sphi 0, %s137
      %s152 = sphi 0, %s138
      %s156 = sphi 0, %s156
      %s158 = sphi 0, %s156
      %s159 = sphi 0, %s158
      %s173 = sphi 0, %s159
      %s177 = sphi 0, %s177
      %s179 = sphi 0, %s177
      %s180 = sphi 0, %s179
      %s194 = sphi 0, %s180
      %s198 = sphi 0, %s198
      %s200 = sphi 0, %s198
      %s201 = sphi 0, %s200
      %s215 = sphi 0, %s201
      %s219 = sphi 0, %s219
      %s221 = sphi 0, %s219
      %s222 = sphi 0, %s221
      %s236 = sphi 0, %s222
      %s240 = sphi 0, %s240
      %s242 = sphi 0, %s240
      %s243 = sphi 0, %s242
      %s257 = sphi 0, %s243
      %s261 = sphi 0, %s261
      %s263 = sphi 0, %s261
      %s264 = sphi 0, %s263
      %s278 = sphi 0, %s264
      %s282 = sphi 0, %s282
      %s284 = sphi 0, %s282
      %s285 = sphi 0, %s284
      %s299 = sphi 0, %s285
      %s303 = sphi 0, %s303
      %s305 = sphi 0, %s303
      %s306 = sphi 0, %s305
      %s320 = sphi 0, %s306
      %s324 = sphi 0, %s324
      %s326 = sphi 0, %s324
      %s327 = sphi 0, %s326
      %s341 = sphi 0, %s327
      %s345 = sphi 0, %s345
      %s347 = sphi 0, %s345
      %s348 = sphi 0, %s347
      %s362 = sphi 0, %s348
      %s366 = sphi 0, %s366
      %s368 = sphi 0, %s366
      %s369 = sphi 0, %s368
      %s383 = sphi 0, %s369
      %s387 = sphi 0, %s387
      %s389 = sphi 0, %s387
      %s390 = sphi 0, %s389
      %s404 = sphi 0, %s390
      %s410 = sphi 0, %s412
      %s413 = sphi 0, %s410
      %s414 = sphi 0, %s413
      %s430 = sphi 0, %s414
      %s436 = sphi 0, %s438
      %s439 = sphi 0, %s436
      %s440 = sphi 0, %s439
      %s456 = sphi 0, %s440
    $region4: #{tpu_custom_call.1} parent=1 // loop_header_branch
      %36 = sbr.rel (%p34) target = $region8
    $region5: #{tpu_custom_call.1} parent=1 // loop_body
      %s38 = ssub.s32 %s33, 1
      %s39 = ssub.s32 %s33, 2
      %s40 = sadd.s32 %s33, 1
      %s41 = ssub.s32 %s33, %s40
      %p42 = scmp.eq.s32.totalorder %s41, 0
      %s44 = sadd.s32 %s43, 1
      %s45 = scalar_select %p42, %s43, %s44
      %p48 = pneg %p42
      %p49 = scmp.eq.s32.totalorder %s33, 1
      %p50 = por %p48, %p49
      %p51 = scmp.ne.s32.totalorder %s43, %s46
      %p52 = scmp.eq.s32.totalorder %s33, 0
      %p53 = por %p51, %p52
      %p54 = scmp.ne.s32.totalorder %s43, %s46
      %p55 = scmp.eq.s32.totalorder %s38, 1
      %p56 = por %p54, %p55
      %p57 = scmp.ne.s32.totalorder %s46, %s47
      %p58 = scmp.eq.s32.totalorder %s38, 0
      %p59 = por %p57, %p58
      %p60 = scmp.ne.s32.totalorder %s46, %s47
      %p61 = scmp.eq.s32.totalorder %s39, 1
      %p62 = por %p60, %p61
      %p64 = scmp.ne.s32.totalorder %s47, %s63
      %p65 = scmp.eq.s32.totalorder %s39, 0
      %p66 = por %p64, %p65
      %s67 = ssub.s32 %s33, %s40
      %p68 = scmp.eq.s32.totalorder %s67, 0
      %s70 = sadd.s32 %s69, 1
      %s71 = scalar_select %p68, %s69, %s70
      %p74 = pneg %p68
      %p75 = scmp.eq.s32.totalorder %s33, 1
      %p76 = por %p74, %p75
      %p77 = scmp.ne.s32.totalorder %s69, %s72
      %p78 = scmp.eq.s32.totalorder %s33, 0
      %p79 = por %p77, %p78
      %p80 = scmp.ne.s32.totalorder %s69, %s72
      %p81 = scmp.eq.s32.totalorder %s38, 1
      %p82 = por %p80, %p81
      %p83 = scmp.ne.s32.totalorder %s72, %s73
      %p84 = scmp.eq.s32.totalorder %s38, 0
      %p85 = por %p83, %p84
      %p86 = scmp.ne.s32.totalorder %s72, %s73
      %p87 = scmp.eq.s32.totalorder %s39, 1
      %p88 = por %p86, %p87
      %p90 = scmp.ne.s32.totalorder %s73, %s89
      %p91 = scmp.eq.s32.totalorder %s39, 0
      %p92 = por %p90, %p91
      %s94 = sadd.s32 %s93, 1
      %p97 = scmp.eq.s32.totalorder %s33, 1
      %p98 = scmp.ne.s32.totalorder %s93, %s95
      %p99 = scmp.eq.s32.totalorder %s33, 0
      %p100 = por %p98, %p99
      %p101 = scmp.ne.s32.totalorder %s93, %s95
      %p102 = scmp.eq.s32.totalorder %s38, 1
      %p103 = por %p101, %p102
      %p104 = scmp.ne.s32.totalorder %s95, %s96
      %p105 = scmp.eq.s32.totalorder %s38, 0
      %p106 = por %p104, %p105
      %p107 = scmp.ne.s32.totalorder %s95, %s96
      %p108 = scmp.eq.s32.totalorder %s39, 1
      %p109 = por %p107, %p108
      %p111 = scmp.ne.s32.totalorder %s96, %s110
      %p112 = scmp.eq.s32.totalorder %s39, 0
      %p113 = por %p111, %p112
      %s115 = sadd.s32 %s114, 1
      %p118 = scmp.eq.s32.totalorder %s33, 1
      %p119 = scmp.ne.s32.totalorder %s114, %s116
      %p120 = scmp.eq.s32.totalorder %s33, 0
      %p121 = por %p119, %p120
      %p122 = scmp.ne.s32.totalorder %s114, %s116
      %p123 = scmp.eq.s32.totalorder %s38, 1
      %p124 = por %p122, %p123
      %p125 = scmp.ne.s32.totalorder %s116, %s117
      %p126 = scmp.eq.s32.totalorder %s38, 0
      %p127 = por %p125, %p126
      %p128 = scmp.ne.s32.totalorder %s116, %s117
      %p129 = scmp.eq.s32.totalorder %s39, 1
      %p130 = por %p128, %p129
      %p132 = scmp.ne.s32.totalorder %s117, %s131
      %p133 = scmp.eq.s32.totalorder %s39, 0
      %p134 = por %p132, %p133
      %s136 = sadd.s32 %s135, 1
      %p139 = scmp.eq.s32.totalorder %s33, 1
      %p140 = scmp.ne.s32.totalorder %s135, %s137
      %p141 = scmp.eq.s32.totalorder %s33, 0
      %p142 = por %p140, %p141
      %p143 = scmp.ne.s32.totalorder %s135, %s137
      %p144 = scmp.eq.s32.totalorder %s38, 1
      %p145 = por %p143, %p144
      %p146 = scmp.ne.s32.totalorder %s137, %s138
      %p147 = scmp.eq.s32.totalorder %s38, 0
      %p148 = por %p146, %p147
      %p149 = scmp.ne.s32.totalorder %s137, %s138
      %p150 = scmp.eq.s32.totalorder %s39, 1
      %p151 = por %p149, %p150
      %p153 = scmp.ne.s32.totalorder %s138, %s152
      %p154 = scmp.eq.s32.totalorder %s39, 0
      %p155 = por %p153, %p154
      %s157 = sadd.s32 %s156, 1
      %p160 = scmp.eq.s32.totalorder %s33, 1
      %p161 = scmp.ne.s32.totalorder %s156, %s158
      %p162 = scmp.eq.s32.totalorder %s33, 0
      %p163 = por %p161, %p162
      %p164 = scmp.ne.s32.totalorder %s156, %s158
      %p165 = scmp.eq.s32.totalorder %s38, 1
      %p166 = por %p164, %p165
      %p167 = scmp.ne.s32.totalorder %s158, %s159
      %p168 = scmp.eq.s32.totalorder %s38, 0
      %p169 = por %p167, %p168
      %p170 = scmp.ne.s32.totalorder %s158, %s159
      %p171 = scmp.eq.s32.totalorder %s39, 1
      %p172 = por %p170, %p171
      %p174 = scmp.ne.s32.totalorder %s159, %s173
      %p175 = scmp.eq.s32.totalorder %s39, 0
      %p176 = por %p174, %p175
      %s178 = sadd.s32 %s177, 1
      %p181 = scmp.eq.s32.totalorder %s33, 1
      %p182 = scmp.ne.s32.totalorder %s177, %s179
      %p183 = scmp.eq.s32.totalorder %s33, 0
      %p184 = por %p182, %p183
      %p185 = scmp.ne.s32.totalorder %s177, %s179
      %p186 = scmp.eq.s32.totalorder %s38, 1
      %p187 = por %p185, %p186
      %p188 = scmp.ne.s32.totalorder %s179, %s180
      %p189 = scmp.eq.s32.totalorder %s38, 0
      %p190 = por %p188, %p189
      %p191 = scmp.ne.s32.totalorder %s179, %s180
      %p192 = scmp.eq.s32.totalorder %s39, 1
      %p193 = por %p191, %p192
      %p195 = scmp.ne.s32.totalorder %s180, %s194
      %p196 = scmp.eq.s32.totalorder %s39, 0
      %p197 = por %p195, %p196
      %s199 = sadd.s32 %s198, 1
      %p202 = scmp.eq.s32.totalorder %s33, 1
      %p203 = scmp.ne.s32.totalorder %s198, %s200
      %p204 = scmp.eq.s32.totalorder %s33, 0
      %p205 = por %p203, %p204
      %p206 = scmp.ne.s32.totalorder %s198, %s200
      %p207 = scmp.eq.s32.totalorder %s38, 1
      %p208 = por %p206, %p207
      %p209 = scmp.ne.s32.totalorder %s200, %s201
      %p210 = scmp.eq.s32.totalorder %s38, 0
      %p211 = por %p209, %p210
      %p212 = scmp.ne.s32.totalorder %s200, %s201
      %p213 = scmp.eq.s32.totalorder %s39, 1
      %p214 = por %p212, %p213
      %p216 = scmp.ne.s32.totalorder %s201, %s215
      %p217 = scmp.eq.s32.totalorder %s39, 0
      %p218 = por %p216, %p217
      %s220 = sadd.s32 %s219, 1
      %p223 = scmp.eq.s32.totalorder %s33, 1
      %p224 = scmp.ne.s32.totalorder %s219, %s221
      %p225 = scmp.eq.s32.totalorder %s33, 0
      %p226 = por %p224, %p225
      %p227 = scmp.ne.s32.totalorder %s219, %s221
      %p228 = scmp.eq.s32.totalorder %s38, 1
      %p229 = por %p227, %p228
      %p230 = scmp.ne.s32.totalorder %s221, %s222
      %p231 = scmp.eq.s32.totalorder %s38, 0
      %p232 = por %p230, %p231
      %p233 = scmp.ne.s32.totalorder %s221, %s222
      %p234 = scmp.eq.s32.totalorder %s39, 1
      %p235 = por %p233, %p234
      %p237 = scmp.ne.s32.totalorder %s222, %s236
      %p238 = scmp.eq.s32.totalorder %s39, 0
      %p239 = por %p237, %p238
      %s241 = sadd.s32 %s240, 1
      %p244 = scmp.eq.s32.totalorder %s33, 1
      %p245 = scmp.ne.s32.totalorder %s240, %s242
      %p246 = scmp.eq.s32.totalorder %s33, 0
      %p247 = por %p245, %p246
      %p248 = scmp.ne.s32.totalorder %s240, %s242
      %p249 = scmp.eq.s32.totalorder %s38, 1
      %p250 = por %p248, %p249
      %p251 = scmp.ne.s32.totalorder %s242, %s243
      %p252 = scmp.eq.s32.totalorder %s38, 0
      %p253 = por %p251, %p252
      %p254 = scmp.ne.s32.totalorder %s242, %s243
      %p255 = scmp.eq.s32.totalorder %s39, 1
      %p256 = por %p254, %p255
      %p258 = scmp.ne.s32.totalorder %s243, %s257
      %p259 = scmp.eq.s32.totalorder %s39, 0
      %p260 = por %p258, %p259
      %s262 = sadd.s32 %s261, 1
      %p265 = scmp.eq.s32.totalorder %s33, 1
      %p266 = scmp.ne.s32.totalorder %s261, %s263
      %p267 = scmp.eq.s32.totalorder %s33, 0
      %p268 = por %p266, %p267
      %p269 = scmp.ne.s32.totalorder %s261, %s263
      %p270 = scmp.eq.s32.totalorder %s38, 1
      %p271 = por %p269, %p270
      %p272 = scmp.ne.s32.totalorder %s263, %s264
      %p273 = scmp.eq.s32.totalorder %s38, 0
      %p274 = por %p272, %p273
      %p275 = scmp.ne.s32.totalorder %s263, %s264
      %p276 = scmp.eq.s32.totalorder %s39, 1
      %p277 = por %p275, %p276
      %p279 = scmp.ne.s32.totalorder %s264, %s278
      %p280 = scmp.eq.s32.totalorder %s39, 0
      %p281 = por %p279, %p280
      %s283 = sadd.s32 %s282, 1
      %p286 = scmp.eq.s32.totalorder %s33, 1
      %p287 = scmp.ne.s32.totalorder %s282, %s284
      %p288 = scmp.eq.s32.totalorder %s33, 0
      %p289 = por %p287, %p288
      %p290 = scmp.ne.s32.totalorder %s282, %s284
      %p291 = scmp.eq.s32.totalorder %s38, 1
      %p292 = por %p290, %p291
      %p293 = scmp.ne.s32.totalorder %s284, %s285
      %p294 = scmp.eq.s32.totalorder %s38, 0
      %p295 = por %p293, %p294
      %p296 = scmp.ne.s32.totalorder %s284, %s285
      %p297 = scmp.eq.s32.totalorder %s39, 1
      %p298 = por %p296, %p297
      %p300 = scmp.ne.s32.totalorder %s285, %s299
      %p301 = scmp.eq.s32.totalorder %s39, 0
      %p302 = por %p300, %p301
      %s304 = sadd.s32 %s303, 1
      %p307 = scmp.eq.s32.totalorder %s33, 1
      %p308 = scmp.ne.s32.totalorder %s303, %s305
      %p309 = scmp.eq.s32.totalorder %s33, 0
      %p310 = por %p308, %p309
      %p311 = scmp.ne.s32.totalorder %s303, %s305
      %p312 = scmp.eq.s32.totalorder %s38, 1
      %p313 = por %p311, %p312
      %p314 = scmp.ne.s32.totalorder %s305, %s306
      %p315 = scmp.eq.s32.totalorder %s38, 0
      %p316 = por %p314, %p315
      %p317 = scmp.ne.s32.totalorder %s305, %s306
      %p318 = scmp.eq.s32.totalorder %s39, 1
      %p319 = por %p317, %p318
      %p321 = scmp.ne.s32.totalorder %s306, %s320
      %p322 = scmp.eq.s32.totalorder %s39, 0
      %p323 = por %p321, %p322
      %s325 = sadd.s32 %s324, 1
      %p328 = scmp.eq.s32.totalorder %s33, 1
      %p329 = scmp.ne.s32.totalorder %s324, %s326
      %p330 = scmp.eq.s32.totalorder %s33, 0
      %p331 = por %p329, %p330
      %p332 = scmp.ne.s32.totalorder %s324, %s326
      %p333 = scmp.eq.s32.totalorder %s38, 1
      %p334 = por %p332, %p333
      %p335 = scmp.ne.s32.totalorder %s326, %s327
      %p336 = scmp.eq.s32.totalorder %s38, 0
      %p337 = por %p335, %p336
      %p338 = scmp.ne.s32.totalorder %s326, %s327
      %p339 = scmp.eq.s32.totalorder %s39, 1
      %p340 = por %p338, %p339
      %p342 = scmp.ne.s32.totalorder %s327, %s341
      %p343 = scmp.eq.s32.totalorder %s39, 0
      %p344 = por %p342, %p343
      %s346 = sadd.s32 %s345, 1
      %p349 = scmp.eq.s32.totalorder %s33, 1
      %p350 = scmp.ne.s32.totalorder %s345, %s347
      %p351 = scmp.eq.s32.totalorder %s33, 0
      %p352 = por %p350, %p351
      %p353 = scmp.ne.s32.totalorder %s345, %s347
      %p354 = scmp.eq.s32.totalorder %s38, 1
      %p355 = por %p353, %p354
      %p356 = scmp.ne.s32.totalorder %s347, %s348
      %p357 = scmp.eq.s32.totalorder %s38, 0
      %p358 = por %p356, %p357
      %p359 = scmp.ne.s32.totalorder %s347, %s348
      %p360 = scmp.eq.s32.totalorder %s39, 1
      %p361 = por %p359, %p360
      %p363 = scmp.ne.s32.totalorder %s348, %s362
      %p364 = scmp.eq.s32.totalorder %s39, 0
      %p365 = por %p363, %p364
      %s367 = sadd.s32 %s366, 1
      %p370 = scmp.eq.s32.totalorder %s33, 1
      %p371 = scmp.ne.s32.totalorder %s366, %s368
      %p372 = scmp.eq.s32.totalorder %s33, 0
      %p373 = por %p371, %p372
      %p374 = scmp.ne.s32.totalorder %s366, %s368
      %p375 = scmp.eq.s32.totalorder %s38, 1
      %p376 = por %p374, %p375
      %p377 = scmp.ne.s32.totalorder %s368, %s369
      %p378 = scmp.eq.s32.totalorder %s38, 0
      %p379 = por %p377, %p378
      %p380 = scmp.ne.s32.totalorder %s368, %s369
      %p381 = scmp.eq.s32.totalorder %s39, 1
      %p382 = por %p380, %p381
      %p384 = scmp.ne.s32.totalorder %s369, %s383
      %p385 = scmp.eq.s32.totalorder %s39, 0
      %p386 = por %p384, %p385
      %s388 = sadd.s32 %s387, 1
      %p391 = scmp.eq.s32.totalorder %s33, 1
      %p392 = scmp.ne.s32.totalorder %s387, %s389
      %p393 = scmp.eq.s32.totalorder %s33, 0
      %p394 = por %p392, %p393
      %p395 = scmp.ne.s32.totalorder %s387, %s389
      %p396 = scmp.eq.s32.totalorder %s38, 1
      %p397 = por %p395, %p396
      %p398 = scmp.ne.s32.totalorder %s389, %s390
      %p399 = scmp.eq.s32.totalorder %s38, 0
      %p400 = por %p398, %p399
      %p401 = scmp.ne.s32.totalorder %s389, %s390
      %p402 = scmp.eq.s32.totalorder %s39, 1
      %p403 = por %p401, %p402
      %p405 = scmp.ne.s32.totalorder %s390, %s404
      %p406 = scmp.eq.s32.totalorder %s39, 0
      %p407 = por %p405, %p406
      %s408 = ssub.s32 %s33, %s40
      %p409 = scmp.eq.s32.totalorder %s408, 0
      %s411 = sadd.s32 %s410, 1
      %s412 = scalar_select %p409, %s410, %s411
      %p415 = pneg %p409
      %p416 = scmp.eq.s32.totalorder %s33, 1
      %p417 = por %p415, %p416
      %p418 = scmp.ne.s32.totalorder %s410, %s413
      %p419 = scmp.eq.s32.totalorder %s33, 0
      %p420 = por %p418, %p419
      %p421 = scmp.ne.s32.totalorder %s410, %s413
      %p422 = scmp.eq.s32.totalorder %s38, 1
      %p423 = por %p421, %p422
      %p424 = scmp.ne.s32.totalorder %s413, %s414
      %p425 = scmp.eq.s32.totalorder %s38, 0
      %p426 = por %p424, %p425
      %p427 = scmp.ne.s32.totalorder %s413, %s414
      %p428 = scmp.eq.s32.totalorder %s39, 1
      %p429 = por %p427, %p428
      %p431 = scmp.ne.s32.totalorder %s414, %s430
      %p432 = scmp.eq.s32.totalorder %s39, 0
      %p433 = por %p431, %p432
      %s434 = ssub.s32 %s33, %s40
      %p435 = scmp.eq.s32.totalorder %s434, 0
      %s437 = sadd.s32 %s436, 1
      %s438 = scalar_select %p435, %s436, %s437
      %p441 = pneg %p435
      %p442 = scmp.eq.s32.totalorder %s33, 1
      %p443 = por %p441, %p442
      %p444 = scmp.ne.s32.totalorder %s436, %s439
      %p445 = scmp.eq.s32.totalorder %s33, 0
      %p446 = por %p444, %p445
      %p447 = scmp.ne.s32.totalorder %s436, %s439
      %p448 = scmp.eq.s32.totalorder %s38, 1
      %p449 = por %p447, %p448
      %p450 = scmp.ne.s32.totalorder %s439, %s440
      %p451 = scmp.eq.s32.totalorder %s38, 0
      %p452 = por %p450, %p451
      %p453 = scmp.ne.s32.totalorder %s439, %s440
      %p454 = scmp.eq.s32.totalorder %s39, 1
      %p455 = por %p453, %p454
      %p457 = scmp.ne.s32.totalorder %s440, %s456
      %p458 = scmp.eq.s32.totalorder %s39, 0
      %p459 = por %p457, %p458
      %p460 = scmp.le.s32.totalorder 1, %s33
      %p461 = scmp.lt.s32.totalorder %s33, 3
      %p462 = pnand %p460, %p461
      %p463 = pneg %p462
      // Predicated region
      $region9: #{tpu_custom_call.1} parent=5 // pred_check
        _
      $region10: #{tpu_custom_call.1} parent=5 // pred_check_branch
        %465 = sbr.rel (%p462) target = $region12
      $region11: #{tpu_custom_call.1} parent=5 // pred_region
        %s466 = ssub.s32 %s33, 1
        // Predicated region
        $region13: #{tpu_custom_call.1} parent=11 // pred_check
          %p467 = pneg %p106
        $region14: #{tpu_custom_call.1} parent=11 // pred_check_branch
          %469 = sbr.rel (%p467) target = $region16
        $region15: #{tpu_custom_call.1} parent=11 // pred_region
          _
        $region16: #{tpu_custom_call.1} parent=11 // pred_fallthru
          _
        // Predicated region
        $region17: #{tpu_custom_call.1} parent=11 // pred_check
          %p470 = pneg %p127
        $region18: #{tpu_custom_call.1} parent=11 // pred_check_branch
          %472 = sbr.rel (%p470) target = $region20
        $region19: #{tpu_custom_call.1} parent=11 // pred_region
          _
        $region20: #{tpu_custom_call.1} parent=11 // pred_fallthru
          _
        // Predicated region
        $region21: #{tpu_custom_call.1} parent=11 // pred_check
          %p473 = pneg %p148
        $region22: #{tpu_custom_call.1} parent=11 // pred_check_branch
          %475 = sbr.rel (%p473) target = $region24
        $region23: #{tpu_custom_call.1} parent=11 // pred_region
          _
        $region24: #{tpu_custom_call.1} parent=11 // pred_fallthru
          _
        // Predicated region
        $region25: #{tpu_custom_call.1} parent=11 // pred_check
          %p476 = pneg %p169
        $region26: #{tpu_custom_call.1} parent=11 // pred_check_branch
          %478 = sbr.rel (%p476) target = $region28
        $region27: #{tpu_custom_call.1} parent=11 // pred_region
          _
        $region28: #{tpu_custom_call.1} parent=11 // pred_fallthru
          _
        // Predicated region
        $region29: #{tpu_custom_call.1} parent=11 // pred_check
          %p479 = pneg %p190
        $region30: #{tpu_custom_call.1} parent=11 // pred_check_branch
          %481 = sbr.rel (%p479) target = $region32
        $region31: #{tpu_custom_call.1} parent=11 // pred_region
          _
        $region32: #{tpu_custom_call.1} parent=11 // pred_fallthru
          _
        // Predicated region
        $region33: #{tpu_custom_call.1} parent=11 // pred_check
          %p482 = pneg %p211
        $region34: #{tpu_custom_call.1} parent=11 // pred_check_branch
          %484 = sbr.rel (%p482) target = $region36
        $region35: #{tpu_custom_call.1} parent=11 // pred_region
          _
        $region36: #{tpu_custom_call.1} parent=11 // pred_fallthru
          _
        // Predicated region
        $region37: #{tpu_custom_call.1} parent=11 // pred_check
          %p485 = pneg %p232
        $region38: #{tpu_custom_call.1} parent=11 // pred_check_branch
          %487 = sbr.rel (%p485) target = $region40
        $region39: #{tpu_custom_call.1} parent=11 // pred_region
          _
        $region40: #{tpu_custom_call.1} parent=11 // pred_fallthru
          _
        // Predicated region
        $region41: #{tpu_custom_call.1} parent=11 // pred_check
          %p488 = pneg %p253
        $region42: #{tpu_custom_call.1} parent=11 // pred_check_branch
          %490 = sbr.rel (%p488) target = $region44
        $region43: #{tpu_custom_call.1} parent=11 // pred_region
          _
        $region44: #{tpu_custom_call.1} parent=11 // pred_fallthru
          _
        // Predicated region
        $region45: #{tpu_custom_call.1} parent=11 // pred_check
          %p491 = pneg %p274
        $region46: #{tpu_custom_call.1} parent=11 // pred_check_branch
          %493 = sbr.rel (%p491) target = $region48
        $region47: #{tpu_custom_call.1} parent=11 // pred_region
          _
        $region48: #{tpu_custom_call.1} parent=11 // pred_fallthru
          _
        // Predicated region
        $region49: #{tpu_custom_call.1} parent=11 // pred_check
          %p494 = pneg %p295
        $region50: #{tpu_custom_call.1} parent=11 // pred_check_branch
          %496 = sbr.rel (%p494) target = $region52
        $region51: #{tpu_custom_call.1} parent=11 // pred_region
          _
        $region52: #{tpu_custom_call.1} parent=11 // pred_fallthru
          _
        // Predicated region
        $region53: #{tpu_custom_call.1} parent=11 // pred_check
          %p497 = pneg %p316
        $region54: #{tpu_custom_call.1} parent=11 // pred_check_branch
          %499 = sbr.rel (%p497) target = $region56
        $region55: #{tpu_custom_call.1} parent=11 // pred_region
          %501 = vsyncadd [#allocation6], 0
          %s502 = sshll.u32 %s12, 4
          %s503 = int_to_ptr.hbm [resolvable:$true] %s502
          %s504 = sshll.u32 [#allocation5], 4
          %s505 = int_to_ptr.vmem [resolvable:$true] %s504
          %510 = dma.hbm_to_vmem [thread:$0]  %s503, 1024, %s505, [#allocation6], 128, 128, 8
        $region56: #{tpu_custom_call.1} parent=11 // pred_fallthru
          _
        // Predicated region
        $region57: #{tpu_custom_call.1} parent=11 // pred_check
          %p511 = pneg %p337
        $region58: #{tpu_custom_call.1} parent=11 // pred_check_branch
          %513 = sbr.rel (%p511) target = $region60
        $region59: #{tpu_custom_call.1} parent=11 // pred_region
          _
        $region60: #{tpu_custom_call.1} parent=11 // pred_fallthru
          _
        // Predicated region
        $region61: #{tpu_custom_call.1} parent=11 // pred_check
          %p514 = pneg %p358
        $region62: #{tpu_custom_call.1} parent=11 // pred_check_branch
          %516 = sbr.rel (%p514) target = $region64
        $region63: #{tpu_custom_call.1} parent=11 // pred_region
          %518 = vsyncadd [#allocation9], 0
          %s519 = sshll.u32 %s14, 4
          %s520 = int_to_ptr.hbm [resolvable:$true] %s519
          %s521 = sshll.u32 [#allocation8], 4
          %s522 = int_to_ptr.vmem [resolvable:$true] %s521
          %527 = dma.hbm_to_vmem [thread:$0]  %s520, 384, %s522, [#allocation9], 128, 128, 8
        $region64: #{tpu_custom_call.1} parent=11 // pred_fallthru
          _
        // Predicated region
        $region65: #{tpu_custom_call.1} parent=11 // pred_check
          %p528 = pneg %p379
        $region66: #{tpu_custom_call.1} parent=11 // pred_check_branch
          %530 = sbr.rel (%p528) target = $region68
        $region67: #{tpu_custom_call.1} parent=11 // pred_region
          _
        $region68: #{tpu_custom_call.1} parent=11 // pred_fallthru
          _
        // Predicated region
        $region69: #{tpu_custom_call.1} parent=11 // pred_check
          %p531 = pneg %p400
        $region70: #{tpu_custom_call.1} parent=11 // pred_check_branch
          %533 = sbr.rel (%p531) target = $region72
        $region71: #{tpu_custom_call.1} parent=11 // pred_region
          _
        $region72: #{tpu_custom_call.1} parent=11 // pred_fallthru
          _
      $region12: #{tpu_custom_call.1} parent=5 // pred_fallthru
        _
      %p534 = scmp.lt.s32.totalorder %s33, 2
      // Predicated region
      $region73: #{tpu_custom_call.1} parent=5 // pred_check
        %p535 = pneg %p534
      $region74: #{tpu_custom_call.1} parent=5 // pred_check_branch
        %537 = sbr.rel (%p535) target = $region76
      $region75: #{tpu_custom_call.1} parent=5 // pred_region
        // Predicated region
        $region77: #{tpu_custom_call.1} parent=75 // pred_check
          %p538 = pneg %p53
        $region78: #{tpu_custom_call.1} parent=75 // pred_check_branch
          %540 = sbr.rel (%p538) target = $region80
        $region79: #{tpu_custom_call.1} parent=75 // pred_region
          %s541 = smul.u32 2, %s33
          %p542 = scmp.lt.s32.totalorder %s541, 3
          %s543 = scalar_select %p542, %s541, 3
          %s544 = smul.addr %s543, 8
          %s545 = scalar_lea.vmem %s0, %s544
          %s546 = smul.u32 2, %s33
        $region80: #{tpu_custom_call.1} parent=75 // pred_fallthru
          _
        // Predicated region
        $region81: #{tpu_custom_call.1} parent=75 // pred_check
          %p547 = pneg %p79
        $region82: #{tpu_custom_call.1} parent=75 // pred_check_branch
          %549 = sbr.rel (%p547) target = $region84
        $region83: #{tpu_custom_call.1} parent=75 // pred_region
          %s550 = smul.u32 2, %s33
          %p551 = scmp.lt.s32.totalorder %s550, 3
          %s552 = scalar_select %p551, %s550, 3
          %s553 = smul.addr %s552, 2
          %s554 = smul.addr %s553, 8
          %s555 = scalar_lea.vmem %s1, %s554
          %s556 = smul.u32 2, %s33
        $region84: #{tpu_custom_call.1} parent=75 // pred_fallthru
          _
      $region76: #{tpu_custom_call.1} parent=5 // pred_fallthru
        _
      %p557 = scmp.le.s32.totalorder 1, %s33
      %p558 = scmp.lt.s32.totalorder %s33, 3
      %p559 = pnand %p557, %p558
      %p560 = pneg %p559
      // Predicated region
      $region85: #{tpu_custom_call.1} parent=5 // pred_check
        _
      $region86: #{tpu_custom_call.1} parent=5 // pred_check_branch
        %562 = sbr.rel (%p559) target = $region88
      $region87: #{tpu_custom_call.1} parent=5 // pred_region
        %s563 = ssub.s32 %s33, 1
        // Predicated region
        $region89: #{tpu_custom_call.1} parent=87 // pred_check
          %p564 = pneg %p316
        $region90: #{tpu_custom_call.1} parent=87 // pred_check_branch
          %566 = sbr.rel (%p564) target = $region92
        $region91: #{tpu_custom_call.1} parent=87 // pred_region
          %568 = dma.done [#allocation6], 1024
        $region92: #{tpu_custom_call.1} parent=87 // pred_fallthru
          _
        // Predicated region
        $region93: #{tpu_custom_call.1} parent=87 // pred_check
          %p569 = pneg %p358
        $region94: #{tpu_custom_call.1} parent=87 // pred_check_branch
          %571 = sbr.rel (%p569) target = $region96
        $region95: #{tpu_custom_call.1} parent=87 // pred_region
          %573 = dma.done [#allocation9], 384
        $region96: #{tpu_custom_call.1} parent=87 // pred_fallthru
          _
        %s574 = smul.u32 2, %s38
        %p575 = scmp.lt.s32.totalorder %s574, 3
        %s576 = scalar_select %p575, %s574, 3
        %s577 = smul.addr %s576, 8
        %s578 = scalar_lea.vmem %s0, %s577
        %p579 = pneg %p59
        %p580 = pneg %p56
        %s581 = smul.u32 2, %s38
        %p582 = scmp.lt.s32.totalorder %s581, 3
        %s583 = scalar_select %p582, %s581, 3
        %s584 = smul.addr %s583, 2
        %s585 = smul.addr %s584, 8
        %s586 = scalar_lea.vmem %s1, %s585
        %p587 = pneg %p85
        %p588 = pneg %p82
        %p589 = pneg %p106
        %p590 = pneg %p103
        %p591 = pneg %p127
        %p592 = pneg %p124
        %p593 = pneg %p148
        %p594 = pneg %p145
        %p595 = pneg %p169
        %p596 = pneg %p166
        %p597 = pneg %p190
        %p598 = pneg %p187
        %p599 = pneg %p211
        %p600 = pneg %p208
        %p601 = pneg %p232
        %p602 = pneg %p229
        %p603 = pneg %p253
        %p604 = pneg %p250
        %p605 = pneg %p274
        %p606 = pneg %p271
        %p607 = pneg %p295
        %p608 = pneg %p292
        %p609 = pneg %p316
        %p610 = pneg %p313
        %p611 = pneg %p337
        %p612 = pneg %p334
        %p613 = pneg %p358
        %p614 = pneg %p355
        %p615 = pneg %p379
        %p616 = pneg %p376
        %p617 = pneg %p400
        %p618 = pneg %p397
        %p619 = pneg %p426
        %p620 = pneg %p423
        %s621 = sand.u32 %s413, 1
        %s622 = scalar_lea.sflag [#allocation7], %s621
        %s623 = sand.u32 %s413, 1
        %s624 = smul.addr %s623, 16
        %s625 = scalar_lea.vmem [#allocation10], %s624
        %p626 = pneg %p452
        %p627 = pneg %p449
        %s628 = sand.u32 %s439, 1
        %s629 = scalar_lea.sflag [#allocation12], %s628
        %s630 = sand.u32 %s439, 1
        %s631 = smul.addr %s630, 64
        %s632 = scalar_lea.vmem [#allocation11], %s631
        %s633 = smul.u32 2, %s38
        %p634 = scmp.lt.s32.totalorder %s633, 3
        %s635 = scalar_select %p634, %s633, 3
        %s636 = smul.addr %s635, 8
        %s637 = scalar_lea.vmem %s0, %s636
        %s638 = smul.u32 2, %s38
        %s639 = smul.u32 2, %s38
        %p640 = scmp.lt.s32.totalorder %s639, 3
        %s641 = scalar_select %p640, %s639, 3
        %s642 = smul.addr %s641, 2
        %s643 = smul.addr %s642, 8
        %s644 = scalar_lea.vmem %s1, %s643
        %s645 = smul.u32 2, %s38
        %s646 = smul.u32 2, %s38
        %s647 = smul.u32 2, %s38
        %v648 = vld [vmem:[%s637] sm:$0xff]
        %v649 = vld [vmem:[%s637 + $0x8] sm:$0xff]
        %v650 = vld [vmem:[#allocation8] sm:$0x1]
        %v651 = vld [vmem:[#allocation8 + $0x1] sm:$0x1]
        %vm652 = vcmask 523264
        %v653 = vsel %vm652, %v648, 0.0
        %654 = vadd.xlane.f32.xlu0 %v653
        %v655 = vpop.xlane.xlu0 %654
        %v656 = vsel %vm652, %v649, 0.0
        %657 = vadd.xlane.f32.xlu0 %v656
        %v658 = vpop.xlane.xlu0 %657
        %v659 = vrcp.pop 64.0
        %v660 = vmul.f32 64.0, %v659
        %v661 = vsub.f32 1.0, %v660
        %v662 = vmul.f32 %v659, %v661
        %v663 = vadd.f32 %v659, %v662
        %vm664 = vweird.f32 %v659
        %v665 = vsel %vm664, %v659, %v663
        %v666 = vmul.f32 %v655, %v665
        %v667 = vmul.f32 %v658, %v665
        %v668 = vsub.f32 %v648, %v666
        %v669 = vsub.f32 %v649, %v667
        %v670 = vmul.f32 %v668, %v668
        %v671 = vmul.f32 %v669, %v669
        %v672 = vsel %vm652, %v670, 0.0
        %673 = vadd.xlane.f32.xlu0 %v672
        %v674 = vpop.xlane.xlu0 %673
        %v675 = vsel %vm652, %v671, 0.0
        %676 = vadd.xlane.f32.xlu0 %v675
        %v677 = vpop.xlane.xlu0 %676
        %v678 = vmul.f32 %v674, %v665
        %v679 = vmul.f32 %v677, %v665
        %v680 = vadd.f32 %v678, 1e-05
        %v681 = vadd.f32 %v679, 1e-05
        %v682 = vrsqrt.pop %v680
        %v683 = vmul.f32 %v682, %v680
        %v684 = vmul.f32 %v683, %v682
        %v685 = vmul.f32 0.5, %v684
        %v686 = vsub.f32 1.5, %v685
        %v687 = vmul.f32 %v682, %v686
        %vm688 = vweird.f32 %v680
        %vm689 = vweird.f32 %v682
        %vm690 = vmor %vm688, %vm689
        %v691 = vsel %vm690, %v682, %v687
        %v692 = vrsqrt.pop %v681
        %v693 = vmul.f32 %v692, %v681
        %v694 = vmul.f32 %v693, %v692
        %v695 = vmul.f32 0.5, %v694
        %v696 = vsub.f32 1.5, %v695
        %v697 = vmul.f32 %v692, %v696
        %vm698 = vweird.f32 %v681
        %vm699 = vweird.f32 %v692
        %vm700 = vmor %vm698, %vm699
        %v701 = vsel %vm700, %v692, %v697
        %v702 = vmul.f32 %v668, %v691
        %v703 = vmul.f32 %v669, %v701
        %v704 = vperm.slane %v650, 0
        %v705 = vmul.f32 %v702, %v704
        %v706 = vmul.f32 %v703, %v704
        %v707 = vperm.slane %v651, 0
        %v708 = vadd.f32 %v705, %v707
        %v709 = vadd.f32 %v706, %v707
        %v710 = vld [vmem:[%s15] sm:$0x1]
        %v711 = vld [vmem:[%s3] sm:$0xff]
        %v712 = vld [vmem:[%s3 + $0x8] sm:$0xff]
        %v713 = vld [vmem:[%s3 + $0x10] sm:$0xff]
        %v714 = vld [vmem:[%s3 + $0x18] sm:$0xff]
        %v715 = vld [vmem:[%s3 + $0x20] sm:$0xff]
        %v716 = vld [vmem:[%s3 + $0x28] sm:$0xff]
        %v717 = vld [vmem:[%s3 + $0x30] sm:$0xff]
        %v718 = vld [vmem:[%s3 + $0x38] sm:$0xff]
        %v719 = vperm.slane %v710, 0
        %v721 = vsel %vm652, %v708, 0
        %v724 = vsel %vm652, %v709, 0
        %726 = vmatpush.msra.mxu0 0.0
        %727 = vmatpush.msra.mxu0 0.0
        %728 = vmatpush.msra.mxu0 0.0
        %729 = vmatpush.msra.mxu0 0.0
        %730 = vmatpush.msra.mxu0 0.0
        %731 = vmatpush.msra.mxu0 0.0
        %732 = vmatpush.msra.mxu0 0.0
        %733 = vmatpush.msra.mxu0 0.0
        %734 = vmatpush.msra.mxu0 %v718
        %735 = vmatpush.msra.mxu0 %v717
        %736 = vmatpush.msra.mxu0 %v716
        %737 = vmatpush.msra.mxu0 %v715
        %738 = vmatpush.msra.mxu0 %v714
        %739 = vmatpush.msra.mxu0 %v713
        %740 = vmatpush.msra.mxu0 %v712
        %741 = vmatpush.msra.mxu0 %v711
        %742 = vmatmul.f32.gmra.mxu0 %v721
        %v743 = vpop.f32.mrf.mxu0
        %v744 = vadd.f32 %v719, %v743
        %745 = vmatmul.f32.gmra.mxu0 %v724
        %v746 = vpop.f32.mrf.mxu0
        %v747 = vadd.f32 %v719, %v746
        %748 = vdwg.mxu0
        %v749 = vxor.u32 %v744, 2147483648
        %v750 = vxor.u32 %v747, 2147483648
        %v751 = vmul.f32 %v749, 1.442695
        %v752 = vpow.pop %v751
        %v753 = vmul.f32 %v750, 1.442695
        %v754 = vpow.pop %v753
        %v755 = vadd.f32 %v752, 1.0
        %v756 = vadd.f32 %v754, 1.0
        %v757 = vrcp.pop %v755
        %v758 = vmul.f32 %v755, %v757
        %v759 = vsub.f32 1.0, %v758
        %v760 = vmul.f32 %v757, %v759
        %v761 = vadd.f32 %v757, %v760
        %vm762 = vweird.f32 %v755
        %vm763 = vweird.f32 %v757
        %vm764 = vmor %vm762, %vm763
        %v765 = vsel %vm764, %v757, %v761
        %v766 = vand.u32 2147483647, %v755
        %vm767 = vcmp.eq.f32.partialorder %v766, 8.507059e+37
        %v768 = vand.u32 %v755, 2147483648
        %v769 = vor.u32 1.1754944e-38, %v768
        %v770 = vsel %vm767, %v769, %v765
        %v771 = vmul.f32 1.0, %v770
        %v772 = vrcp.pop %v756
        %v773 = vmul.f32 %v756, %v772
        %v774 = vsub.f32 1.0, %v773
        %v775 = vmul.f32 %v772, %v774
        %v776 = vadd.f32 %v772, %v775
        %vm777 = vweird.f32 %v756
        %vm778 = vweird.f32 %v772
        %vm779 = vmor %vm777, %vm778
        %v780 = vsel %vm779, %v772, %v776
        %v781 = vand.u32 2147483647, %v756
        %vm782 = vcmp.eq.f32.partialorder %v781, 8.507059e+37
        %v783 = vand.u32 %v756, 2147483648
        %v784 = vor.u32 1.1754944e-38, %v783
        %v785 = vsel %vm782, %v784, %v780
        %v786 = vmul.f32 1.0, %v785
        %v787 = vmul.f32 %v744, %v771
        %v788 = vmul.f32 %v747, %v786
        %v789 = vld [vmem:[#allocation8 + $0x2] sm:$0x1]
        %v790 = vld [vmem:[%s4] sm:$0xff]
        %v791 = vld [vmem:[%s4 + $0x8] sm:$0xff]
        %v792 = vld [vmem:[%s4 + $0x10] sm:$0xff]
        %v793 = vld [vmem:[%s4 + $0x18] sm:$0xff]
        %v794 = vld [vmem:[%s4 + $0x20] sm:$0xff]
        %v795 = vld [vmem:[%s4 + $0x28] sm:$0xff]
        %v796 = vld [vmem:[%s4 + $0x30] sm:$0xff]
        %v797 = vld [vmem:[%s4 + $0x38] sm:$0xff]
        %v798 = vld [vmem:[%s4 + $0x40] sm:$0xff]
        %v799 = vld [vmem:[%s4 + $0x48] sm:$0xff]
        %v800 = vld [vmem:[%s4 + $0x50] sm:$0xff]
        %v801 = vld [vmem:[%s4 + $0x58] sm:$0xff]
        %v802 = vld [vmem:[%s4 + $0x60] sm:$0xff]
        %v803 = vld [vmem:[%s4 + $0x68] sm:$0xff]
        %v804 = vld [vmem:[%s4 + $0x70] sm:$0xff]
        %v805 = vld [vmem:[%s4 + $0x78] sm:$0xff]
        %v806 = vperm.slane %v789, 0
        %807 = vmatpush.msra.mxu0 %v805
        %808 = vmatpush.msra.mxu0 %v804
        %809 = vmatpush.msra.mxu0 %v803
        %810 = vmatpush.msra.mxu0 %v802
        %811 = vmatpush.msra.mxu0 %v801
        %812 = vmatpush.msra.mxu0 %v800
        %813 = vmatpush.msra.mxu0 %v799
        %814 = vmatpush.msra.mxu0 %v798
        %815 = vmatpush.msra.mxu0 %v797
        %816 = vmatpush.msra.mxu0 %v796
        %817 = vmatpush.msra.mxu0 %v795
        %818 = vmatpush.msra.mxu0 %v794
        %819 = vmatpush.msra.mxu0 %v793
        %820 = vmatpush.msra.mxu0 %v792
        %821 = vmatpush.msra.mxu0 %v791
        %822 = vmatpush.msra.mxu0 %v790
        %823 = vmatmul.f32.gmra.mxu0 %v787
        %v824 = vpop.f32.mrf.mxu0
        %v825 = vadd.f32 %v806, %v824
        %826 = vmatmul.f32.gmra.mxu0 %v788
        %v827 = vpop.f32.mrf.mxu0
        %v828 = vadd.f32 %v806, %v827
        %829 = vdwg.mxu0
        %v830 = vmul.f32 %v825, 0.5
        %v831 = vmul.f32 %v828, 0.5
        %v832 = vadd.f32 %v648, %v830
        %v833 = vadd.f32 %v649, %v831
        %v834 = vld [vmem:[#allocation8 + $0x3] sm:$0x1]
        %v835 = vld [vmem:[#allocation8 + $0x4] sm:$0x1]
        %v836 = vsel %vm652, %v832, 0.0
        %837 = vadd.xlane.f32.xlu0 %v836
        %v838 = vpop.xlane.xlu0 %837
        %v839 = vsel %vm652, %v833, 0.0
        %840 = vadd.xlane.f32.xlu0 %v839
        %v841 = vpop.xlane.xlu0 %840
        %v842 = vmul.f32 %v838, %v665
        %v843 = vmul.f32 %v841, %v665
        %v844 = vsub.f32 %v832, %v842
        %v845 = vsub.f32 %v833, %v843
        %v846 = vmul.f32 %v844, %v844
        %v847 = vmul.f32 %v845, %v845
        %v848 = vsel %vm652, %v846, 0.0
        %849 = vadd.xlane.f32.xlu0 %v848
        %v850 = vpop.xlane.xlu0 %849
        %v851 = vsel %vm652, %v847, 0.0
        %852 = vadd.xlane.f32.xlu0 %v851
        %v853 = vpop.xlane.xlu0 %852
        %v854 = vmul.f32 %v850, %v665
        %v855 = vmul.f32 %v853, %v665
        %v856 = vadd.f32 %v854, 1e-05
        %v857 = vadd.f32 %v855, 1e-05
        %v858 = vrsqrt.pop %v856
        %v859 = vmul.f32 %v858, %v856
        %v860 = vmul.f32 %v859, %v858
        %v861 = vmul.f32 0.5, %v860
        %v862 = vsub.f32 1.5, %v861
        %v863 = vmul.f32 %v858, %v862
        %vm864 = vweird.f32 %v856
        %vm865 = vweird.f32 %v858
        %vm866 = vmor %vm864, %vm865
        %v867 = vsel %vm866, %v858, %v863
        %v868 = vrsqrt.pop %v857
        %v869 = vmul.f32 %v868, %v857
        %v870 = vmul.f32 %v869, %v868
        %v871 = vmul.f32 0.5, %v870
        %v872 = vsub.f32 1.5, %v871
        %v873 = vmul.f32 %v868, %v872
        %vm874 = vweird.f32 %v857
        %vm875 = vweird.f32 %v868
        %vm876 = vmor %vm874, %vm875
        %v877 = vsel %vm876, %v868, %v873
        %v878 = vmul.f32 %v844, %v867
        %v879 = vmul.f32 %v845, %v877
        %v880 = vperm.slane %v834, 0
        %v881 = vmul.f32 %v878, %v880
        %v882 = vmul.f32 %v879, %v880
        %v883 = vperm.slane %v835, 0
        %v884 = vadd.f32 %v881, %v883
        %v885 = vadd.f32 %v882, %v883
        %v886 = vld [vmem:[%s5] sm:$0xff]
        %v887 = vld [vmem:[%s5 + $0x8] sm:$0xff]
        %v888 = vld [vmem:[%s5 + $0x10] sm:$0xff]
        %v889 = vld [vmem:[%s5 + $0x18] sm:$0xff]
        %v890 = vld [vmem:[%s5 + $0x20] sm:$0xff]
        %v891 = vld [vmem:[%s5 + $0x28] sm:$0xff]
        %v892 = vld [vmem:[%s5 + $0x30] sm:$0xff]
        %v893 = vld [vmem:[%s5 + $0x38] sm:$0xff]
        %v895 = vsel %vm652, %v884, 0
        %v898 = vsel %vm652, %v885, 0
        %900 = vmatpush.msra.mxu0 0.0
        %901 = vmatpush.msra.mxu0 0.0
        %902 = vmatpush.msra.mxu0 0.0
        %903 = vmatpush.msra.mxu0 0.0
        %904 = vmatpush.msra.mxu0 0.0
        %905 = vmatpush.msra.mxu0 0.0
        %906 = vmatpush.msra.mxu0 0.0
        %907 = vmatpush.msra.mxu0 0.0
        %908 = vmatpush.msra.mxu0 %v893
        %909 = vmatpush.msra.mxu0 %v892
        %910 = vmatpush.msra.mxu0 %v891
        %911 = vmatpush.msra.mxu0 %v890
        %912 = vmatpush.msra.mxu0 %v889
        %913 = vmatpush.msra.mxu0 %v888
        %914 = vmatpush.msra.mxu0 %v887
        %915 = vmatpush.msra.mxu0 %v886
        %916 = vmatmul.f32.gmra.mxu0 %v895
        %v917 = vpop.f32.mrf.mxu0
        %v918 = vadd.f32 0.0, %v917
        %919 = vmatmul.f32.gmra.mxu0 %v898
        %v920 = vpop.f32.mrf.mxu0
        %v921 = vadd.f32 0.0, %v920
        %922 = vdwg.mxu0
        %v923 = vld [vmem:[%s2] sm:$0xff]
        %v924 = vld [vmem:[%s2 + $0x8] sm:$0xff]
        %v925 = vld [vmem:[%s2 + $0x10] sm:$0xff]
        %v926 = vld [vmem:[%s2 + $0x18] sm:$0xff]
        %v927 = vld [vmem:[%s2 + $0x20] sm:$0xff]
        %v928 = vld [vmem:[%s2 + $0x28] sm:$0xff]
        %v929 = vld [vmem:[%s2 + $0x30] sm:$0xff]
        %v930 = vld [vmem:[%s2 + $0x38] sm:$0xff]
        %v931 = vld [vmem:[%s2 + $0x40] sm:$0xff]
        %v932 = vld [vmem:[%s2 + $0x48] sm:$0xff]
        %v933 = vld [vmem:[%s2 + $0x50] sm:$0xff]
        %v934 = vld [vmem:[%s2 + $0x58] sm:$0xff]
        %v935 = vld [vmem:[%s2 + $0x60] sm:$0xff]
        %v936 = vld [vmem:[%s2 + $0x68] sm:$0xff]
        %v937 = vld [vmem:[%s2 + $0x70] sm:$0xff]
        %v938 = vld [vmem:[%s2 + $0x78] sm:$0xff]
        %v939 = vld [vmem:[%s7] sm:$0xff]
        %v940 = vld [vmem:[%s7 + $0x8] sm:$0xff]
        %v941 = vld [vmem:[%s7 + $0x10] sm:$0xff]
        %v942 = vld [vmem:[%s7 + $0x18] sm:$0xff]
        %v943 = vld [vmem:[%s7 + $0x20] sm:$0xff]
        %v944 = vld [vmem:[%s7 + $0x28] sm:$0xff]
        %v945 = vld [vmem:[%s7 + $0x30] sm:$0xff]
        %v946 = vld [vmem:[%s7 + $0x38] sm:$0xff]
        %v948 = vsel %vm652, %v923, 0
        %v951 = vsel %vm652, %v924, 0
        %v954 = vsel %vm652, %v925, 0
        %v957 = vsel %vm652, %v926, 0
        %v960 = vsel %vm652, %v927, 0
        %v963 = vsel %vm652, %v928, 0
        %v966 = vsel %vm652, %v929, 0
        %v969 = vsel %vm652, %v930, 0
        %v972 = vsel %vm652, %v931, 0
        %v975 = vsel %vm652, %v932, 0
        %v978 = vsel %vm652, %v933, 0
        %v981 = vsel %vm652, %v934, 0
        %v984 = vsel %vm652, %v935, 0
        %v987 = vsel %vm652, %v936, 0
        %v990 = vsel %vm652, %v937, 0
        %v993 = vsel %vm652, %v938, 0
        %995 = vmatpush.msra.mxu0 0.0
        %996 = vmatpush.msra.mxu0 0.0
        %997 = vmatpush.msra.mxu0 0.0
        %998 = vmatpush.msra.mxu0 0.0
        %999 = vmatpush.msra.mxu0 0.0
        %1000 = vmatpush.msra.mxu0 0.0
        %1001 = vmatpush.msra.mxu0 0.0
        %1002 = vmatpush.msra.mxu0 0.0
        %1003 = vmatpush.msra.mxu0 %v946
        %1004 = vmatpush.msra.mxu0 %v945
        %1005 = vmatpush.msra.mxu0 %v944
        %1006 = vmatpush.msra.mxu0 %v943
        %1007 = vmatpush.msra.mxu0 %v942
        %1008 = vmatpush.msra.mxu0 %v941
        %1009 = vmatpush.msra.mxu0 %v940
        %1010 = vmatpush.msra.mxu0 %v939
        %1011 = vmatmul.f32.gmra.mxu0 %v948
        %v1012 = vpop.f32.mrf.mxu0
        %v1013 = vadd.f32 0.0, %v1012
        %1014 = vmatmul.f32.gmra.mxu0 %v951
        %v1015 = vpop.f32.mrf.mxu0
        %v1016 = vadd.f32 0.0, %v1015
        %1017 = vmatmul.f32.gmra.mxu0 %v954
        %v1018 = vpop.f32.mrf.mxu0
        %v1019 = vadd.f32 0.0, %v1018
        %1020 = vmatmul.f32.gmra.mxu0 %v957
        %v1021 = vpop.f32.mrf.mxu0
        %v1022 = vadd.f32 0.0, %v1021
        %1023 = vmatmul.f32.gmra.mxu0 %v960
        %v1024 = vpop.f32.mrf.mxu0
        %v1025 = vadd.f32 0.0, %v1024
        %1026 = vmatmul.f32.gmra.mxu0 %v963
        %v1027 = vpop.f32.mrf.mxu0
        %v1028 = vadd.f32 0.0, %v1027
        %1029 = vmatmul.f32.gmra.mxu0 %v966
        %v1030 = vpop.f32.mrf.mxu0
        %v1031 = vadd.f32 0.0, %v1030
        %1032 = vmatmul.f32.gmra.mxu0 %v969
        %v1033 = vpop.f32.mrf.mxu0
        %v1034 = vadd.f32 0.0, %v1033
        %1035 = vmatmul.f32.gmra.mxu0 %v972
        %v1036 = vpop.f32.mrf.mxu0
        %v1037 = vadd.f32 0.0, %v1036
        %1038 = vmatmul.f32.gmra.mxu0 %v975
        %v1039 = vpop.f32.mrf.mxu0
        %v1040 = vadd.f32 0.0, %v1039
        %1041 = vmatmul.f32.gmra.mxu0 %v978
        %v1042 = vpop.f32.mrf.mxu0
        %v1043 = vadd.f32 0.0, %v1042
        %1044 = vmatmul.f32.gmra.mxu0 %v981
        %v1045 = vpop.f32.mrf.mxu0
        %v1046 = vadd.f32 0.0, %v1045
        %1047 = vmatmul.f32.gmra.mxu0 %v984
        %v1048 = vpop.f32.mrf.mxu0
        %v1049 = vadd.f32 0.0, %v1048
        %1050 = vmatmul.f32.gmra.mxu0 %v987
        %v1051 = vpop.f32.mrf.mxu0
        %v1052 = vadd.f32 0.0, %v1051
        %1053 = vmatmul.f32.gmra.mxu0 %v990
        %v1054 = vpop.f32.mrf.mxu0
        %v1055 = vadd.f32 0.0, %v1054
        %1056 = vmatmul.f32.gmra.mxu0 %v993
        %v1057 = vpop.f32.mrf.mxu0
        %v1058 = vadd.f32 0.0, %v1057
        %1059 = vdwg.mxu0
        %v1060 = vld [vmem:[%s644] sm:$0xff]
        %v1061 = vld [vmem:[%s644 + $0x8] sm:$0xf]
        %v1062 = vld [vmem:[%s6] sm:$0xff]
        %v1063 = vld [vmem:[%s6 + $0x8] sm:$0xff]
        %v1064 = vld [vmem:[%s6 + $0x10] sm:$0xff]
        %v1065 = vld [vmem:[%s6 + $0x18] sm:$0xff]
        %v1066 = vld [vmem:[%s6 + $0x20] sm:$0xff]
        %v1067 = vld [vmem:[%s6 + $0x28] sm:$0xff]
        %v1068 = vld [vmem:[%s6 + $0x30] sm:$0xff]
        %v1069 = vld [vmem:[%s6 + $0x38] sm:$0xff]
        %v1071 = vsel %vm652, %v1060, 0
        %v1074 = vsel %vm652, %v1061, 0
        %1076 = vmatpush.msra.mxu0 0.0
        %1077 = vmatpush.msra.mxu0 0.0
        %1078 = vmatpush.msra.mxu0 0.0
        %1079 = vmatpush.msra.mxu0 0.0
        %1080 = vmatpush.msra.mxu0 0.0
        %1081 = vmatpush.msra.mxu0 0.0
        %1082 = vmatpush.msra.mxu0 0.0
        %1083 = vmatpush.msra.mxu0 0.0
        %1084 = vmatpush.msra.mxu0 %v1069
        %1085 = vmatpush.msra.mxu0 %v1068
        %1086 = vmatpush.msra.mxu0 %v1067
        %1087 = vmatpush.msra.mxu0 %v1066
        %1088 = vmatpush.msra.mxu0 %v1065
        %1089 = vmatpush.msra.mxu0 %v1064
        %1090 = vmatpush.msra.mxu0 %v1063
        %1091 = vmatpush.msra.mxu0 %v1062
        %1092 = vmatmul.f32.gmra.mxu0 %v1071
        %v1093 = vpop.f32.mrf.mxu0
        %v1094 = vadd.f32 0.0, %v1093
        %1095 = vmatmul.f32.gmra.mxu0 %v1074
        %v1096 = vpop.f32.mrf.mxu0
        %v1097 = vadd.f32 0.0, %v1096
        %1098 = vdwg.mxu0
        %1099 = vst [vmem:[#allocation2] sm:$0xff] %v1094
        %1100 = vst [vmem:[#allocation2 + $0x8] sm:$0xf] %v1097
        %s1101 = scalar_lea.vmem %s644, 16
        %v1102 = vld [vmem:[%s1101] sm:$0xff]
        %v1103 = vld [vmem:[%s1101 + $0x8] sm:$0xf]
        %v1104 = vld [vmem:[%s6] sm:$0xff]
        %v1105 = vld [vmem:[%s6 + $0x8] sm:$0xff]
        %v1106 = vld [vmem:[%s6 + $0x10] sm:$0xff]
        %v1107 = vld [vmem:[%s6 + $0x18] sm:$0xff]
        %v1108 = vld [vmem:[%s6 + $0x20] sm:$0xff]
        %v1109 = vld [vmem:[%s6 + $0x28] sm:$0xff]
        %v1110 = vld [vmem:[%s6 + $0x30] sm:$0xff]
        %v1111 = vld [vmem:[%s6 + $0x38] sm:$0xff]
        %v1113 = vsel %vm652, %v1102, 0
        %v1116 = vsel %vm652, %v1103, 0
        %1118 = vmatpush.msra.mxu0 0.0
        %1119 = vmatpush.msra.mxu0 0.0
        %1120 = vmatpush.msra.mxu0 0.0
        %1121 = vmatpush.msra.mxu0 0.0
        %1122 = vmatpush.msra.mxu0 0.0
        %1123 = vmatpush.msra.mxu0 0.0
        %1124 = vmatpush.msra.mxu0 0.0
        %1125 = vmatpush.msra.mxu0 0.0
        %1126 = vmatpush.msra.mxu0 %v1111
        %1127 = vmatpush.msra.mxu0 %v1110
        %1128 = vmatpush.msra.mxu0 %v1109
        %1129 = vmatpush.msra.mxu0 %v1108
        %1130 = vmatpush.msra.mxu0 %v1107
        %1131 = vmatpush.msra.mxu0 %v1106
        %1132 = vmatpush.msra.mxu0 %v1105
        %1133 = vmatpush.msra.mxu0 %v1104
        %1134 = vmatmul.f32.gmra.mxu0 %v1113
        %v1135 = vpop.f32.mrf.mxu0
        %v1136 = vadd.f32 0.0, %v1135
        %1137 = vmatmul.f32.gmra.mxu0 %v1116
        %v1138 = vpop.f32.mrf.mxu0
        %v1139 = vadd.f32 0.0, %v1138
        %1140 = vdwg.mxu0
        %s1141 = scalar_lea.vmem [#allocation2], 16
        %1142 = vst [vmem:[%s1141] sm:$0xff] %v1136
        %1143 = vst [vmem:[%s1141 + $0x8] sm:$0xf] %v1139
        %v1144 = vld [vmem:[#allocation8 + $0x5] sm:$0x1]
        %v1145 = vperm.slane %v1144, 0
        %v1146 = vadd.f32 %v918, %v1145
        %v1147 = vadd.f32 %v921, %v1145
        %v1148 = vld [vmem:[#allocation8 + $0x6] sm:$0x1]
        %v1149 = vperm.slane %v1148, 0
        %v1150 = vadd.f32 %v918, %v1149
        %v1151 = vadd.f32 %v921, %v1149
        %v1152 = vlaneseq
        %v1153 = vshrl.u32 %v1152, 7
        %v1154 = vlaneseq
        %v1155 = vand.u32 %v1154, 127
        %v1156 = vsub.s32 %v1155, %v1153
        %vm1157 = vcmp.le.s32.totalorder %v1156, 4
        %v1158 = vadd.s32 %v1153, 8
        %vm1159 = vcmp.lt.s32.totalorder %v1153, 0
        %v1160 = vsub.s32 0, %v1153
        %v1161 = vsel %vm1159, %v1160, %v1153
        %v1162 = vshrl.u32 %v1161, 3
        %v1163 = vand.u32 %v1161, 7
        %v1164 = vsub.s32 0, %v1163
        %v1165 = vsel %vm1159, %v1164, %v1163
        %vm1166 = vcmp.lt.s32.totalorder %v1158, 0
        %v1167 = vsub.s32 0, %v1158
        %v1168 = vsel %vm1166, %v1167, %v1158
        %v1169 = vshrl.u32 %v1168, 3
        %v1170 = vand.u32 %v1168, 7
        %v1171 = vsub.s32 0, %v1170
        %v1172 = vsel %vm1166, %v1171, %v1170
        %vm1173 = vcmp.ne.s32.totalorder %v1165, 0
        %vm1174 = vcmp.ne.s32.totalorder %v1172, 0
        %vm1175 = vcmp.lt.s32.totalorder %v1165, 0
        %vm1176 = vcmp.lt.s32.totalorder %v1172, 0
        %vm1177 = vmand %vm1175, %vm1173
        %vm1178 = vmand %vm1176, %vm1174
        %v1179 = vadd.s32 %v1165, 8
        %v1180 = vadd.s32 %v1172, 8
        %v1181 = vsel %vm1177, %v1179, %v1165
        %v1182 = vsel %vm1178, %v1180, %v1172
        %v1183 = vsub.s32 7, %v1181
        %v1184 = vsub.s32 7, %v1182
        %v1185 = vld [vmem:[#allocation2] sm:$0xff]
        %v1186 = vld [vmem:[#allocation2 + $0x8] sm:$0xf]
        %v1187 = vld [vmem:[#allocation2 + $0x10] sm:$0xff]
        %v1188 = vld [vmem:[#allocation2 + $0x18] sm:$0xf]
        %vm1189 = vcmask 130048
        %v1191 = vsel %vm1189, %v1150, 0
        %v1194 = vsel %vm1189, %v1151, 0
        %v1197 = vsel %vm1189, %v1013, 0
        %v1200 = vsel %vm1189, %v1016, 0
        %v1203 = vsel %vm1189, %v1019, 0
        %v1206 = vsel %vm1189, %v1022, 0
        %v1209 = vsel %vm1189, %v1025, 0
        %v1212 = vsel %vm1189, %v1028, 0
        %v1215 = vsel %vm1189, %v1031, 0
        %v1218 = vsel %vm1189, %v1034, 0
        %v1221 = vsel %vm1189, %v1037, 0
        %v1224 = vsel %vm1189, %v1040, 0
        %v1227 = vsel %vm1189, %v1043, 0
        %v1230 = vsel %vm1189, %v1046, 0
        %v1233 = vsel %vm1189, %v1049, 0
        %v1236 = vsel %vm1189, %v1052, 0
        %v1239 = vsel %vm1189, %v1055, 0
        %v1242 = vsel %vm1189, %v1058, 0
        %1244 = vmatpush.xpose.msra.mxu0 %v1242
        %1245 = vmatpush.xpose.msra.mxu0 %v1239
        %1246 = vmatpush.xpose.msra.mxu0 %v1236
        %1247 = vmatpush.xpose.msra.mxu0 %v1233
        %1248 = vmatpush.xpose.msra.mxu0 %v1230
        %1249 = vmatpush.xpose.msra.mxu0 %v1227
        %1250 = vmatpush.xpose.msra.mxu0 %v1224
        %1251 = vmatpush.xpose.msra.mxu0 %v1221
        %1252 = vmatpush.xpose.msra.mxu0 %v1218
        %1253 = vmatpush.xpose.msra.mxu0 %v1215
        %1254 = vmatpush.xpose.msra.mxu0 %v1212
        %1255 = vmatpush.xpose.msra.mxu0 %v1209
        %1256 = vmatpush.xpose.msra.mxu0 %v1206
        %1257 = vmatpush.xpose.msra.mxu0 %v1203
        %1258 = vmatpush.xpose.msra.mxu0 %v1200
        %1259 = vmatpush.xpose.msra.mxu0 %v1197
        %1260 = vmatmul.f32.gmra.mxu0 %v1191
        %v1261 = vpop.f32.mrf.mxu0
        %v1262 = vadd.f32 0.0, %v1261
        %1263 = vmatmul.f32.gmra.mxu0 %v1194
        %v1264 = vpop.f32.mrf.mxu0
        %v1265 = vadd.f32 0.0, %v1264
        %1266 = vdwg.mxu0
        %1267 = vrot.lane.b32.xlu0 %v1262, 127
        %v1268 = vpop.permute.xlu0 %1267
        %1269 = vrot.lane.b32.xlu0 %v1265, 127
        %v1270 = vpop.permute.xlu0 %1269
        %v1271 = vand.u32 %v1183, 1
        %v1272 = vand.u32 %v1184, 1
        %vm1273 = vcmp.gt.s32.totalorder %v1271, 0
        %vm1274 = vcmp.gt.s32.totalorder %v1272, 0
        %v1275 = vsel %vm1273, 1, 0
        %v1276 = vsel %vm1274, 1, 0
        %vm1277 = vcmp.eq.s32.totalorder %v1275, 1
        %vm1278 = vcmp.eq.s32.totalorder %v1276, 1
        %v1279 = vsel %vm1277, %v1268, %v1262
        %v1280 = vsel %vm1278, %v1270, %v1265
        %1281 = vrot.lane.b32.xlu0 %v1279, 126
        %v1282 = vpop.permute.xlu0 %1281
        %1283 = vrot.lane.b32.xlu0 %v1280, 126
        %v1284 = vpop.permute.xlu0 %1283
        %v1285 = vand.u32 %v1183, 2
        %v1286 = vand.u32 %v1184, 2
        %vm1287 = vcmp.gt.s32.totalorder %v1285, 0
        %vm1288 = vcmp.gt.s32.totalorder %v1286, 0
        %v1289 = vsel %vm1287, 1, 0
        %v1290 = vsel %vm1288, 1, 0
        %vm1291 = vcmp.eq.s32.totalorder %v1289, 1
        %vm1292 = vcmp.eq.s32.totalorder %v1290, 1
        %v1293 = vsel %vm1291, %v1282, %v1279
        %v1294 = vsel %vm1292, %v1284, %v1280
        %1295 = vrot.lane.b32.xlu0 %v1293, 124
        %v1296 = vpop.permute.xlu0 %1295
        %1297 = vrot.lane.b32.xlu0 %v1294, 124
        %v1298 = vpop.permute.xlu0 %1297
        %v1299 = vand.u32 %v1183, 4
        %v1300 = vand.u32 %v1184, 4
        %vm1301 = vcmp.gt.s32.totalorder %v1299, 0
        %vm1302 = vcmp.gt.s32.totalorder %v1300, 0
        %v1303 = vsel %vm1301, 1, 0
        %v1304 = vsel %vm1302, 1, 0
        %vm1305 = vcmp.eq.s32.totalorder %v1303, 1
        %vm1306 = vcmp.eq.s32.totalorder %v1304, 1
        %v1307 = vsel %vm1305, %v1296, %v1293
        %v1308 = vsel %vm1306, %v1298, %v1294
        %v1309 = vsel %vm1157, 1, 0
        %vm1310 = vcmp.eq.s32.totalorder %v1309, 1
        %v1311 = vsel %vm1310, %v1307, 0.0
        %v1312 = vsel %vm1310, %v1308, 0.0
        %v1314 = vsel %vm1189, %v1146, 0
        %v1317 = vsel %vm1189, %v1185, 0
        %v1320 = vsel %vm1189, %v1186, 0
        %1322 = vmatpush.xpose.msra.mxu0 0.0
        %1323 = vmatpush.xpose.msra.mxu0 0.0
        %1324 = vmatpush.xpose.msra.mxu0 0.0
        %1325 = vmatpush.xpose.msra.mxu0 0.0
        %1326 = vmatpush.xpose.msra.mxu0 0.0
        %1327 = vmatpush.xpose.msra.mxu0 0.0
        %1328 = vmatpush.xpose.msra.mxu0 0.0
        %1329 = vmatpush.xpose.msra.mxu0 0.0
        %1330 = vmatpush.xpose.msra.mxu0 0.0
        %1331 = vmatpush.xpose.msra.mxu0 0.0
        %1332 = vmatpush.xpose.msra.mxu0 0.0
        %1333 = vmatpush.xpose.msra.mxu0 0.0
        %1334 = vmatpush.xpose.msra.mxu0 0.0
        %1335 = vmatpush.xpose.msra.mxu0 0.0
        %1336 = vmatpush.xpose.msra.mxu0 %v1320
        %1337 = vmatpush.xpose.msra.mxu0 %v1317
        %1338 = vmatmul.f32.gmra.mxu0 %v1314
        %v1339 = vpop.f32.mrf.mxu0
        %v1340 = vadd.f32 %v1311, %v1339
        %1341 = vdwg.mxu0
        %v1343 = vsel %vm1189, %v1147, 0
        %v1346 = vsel %vm1189, %v1187, 0
        %v1349 = vsel %vm1189, %v1188, 0
        %1351 = vmatpush.xpose.msra.mxu0 0.0
        %1352 = vmatpush.xpose.msra.mxu0 0.0
        %1353 = vmatpush.xpose.msra.mxu0 0.0
        %1354 = vmatpush.xpose.msra.mxu0 0.0
        %1355 = vmatpush.xpose.msra.mxu0 0.0
        %1356 = vmatpush.xpose.msra.mxu0 0.0
        %1357 = vmatpush.xpose.msra.mxu0 0.0
        %1358 = vmatpush.xpose.msra.mxu0 0.0
        %1359 = vmatpush.xpose.msra.mxu0 0.0
        %1360 = vmatpush.xpose.msra.mxu0 0.0
        %1361 = vmatpush.xpose.msra.mxu0 0.0
        %1362 = vmatpush.xpose.msra.mxu0 0.0
        %1363 = vmatpush.xpose.msra.mxu0 0.0
        %1364 = vmatpush.xpose.msra.mxu0 0.0
        %1365 = vmatpush.xpose.msra.mxu0 %v1349
        %1366 = vmatpush.xpose.msra.mxu0 %v1346
        %1367 = vmatmul.f32.gmra.mxu0 %v1343
        %v1368 = vpop.f32.mrf.mxu0
        %v1369 = vadd.f32 %v1312, %v1368
        %1370 = vdwg.mxu0
        %v1371 = vmul.f32 %v1340, 0.125
        %v1372 = vmul.f32 %v1369, 0.125
        %vm1373 = vcmask 97280
        %v1374 = vsel %vm1373, %v1371, -inf
        %1375 = vmax.xlane.f32.xlu0 %v1374
        %v1376 = vpop.xlane.xlu0 %1375
        %v1377 = vsel %vm1373, %v1372, -inf
        %1378 = vmax.xlane.f32.xlu0 %v1377
        %v1379 = vpop.xlane.xlu0 %1378
        %v1380 = vsub.f32 %v1371, %v1376
        %v1381 = vsub.f32 %v1372, %v1379
        %v1382 = vmul.f32 %v1380, 1.442695
        %v1383 = vpow.pop %v1382
        %v1384 = vmul.f32 %v1381, 1.442695
        %v1385 = vpow.pop %v1384
        %v1386 = vsel %vm1373, %v1383, 0.0
        %1387 = vadd.xlane.f32.xlu0 %v1386
        %v1388 = vpop.xlane.xlu0 %1387
        %v1389 = vsel %vm1373, %v1385, 0.0
        %1390 = vadd.xlane.f32.xlu0 %v1389
        %v1391 = vpop.xlane.xlu0 %1390
        %v1392 = vrcp.pop %v1388
        %v1393 = vrcp.pop %v1391
        %v1394 = vmul.f32 %v1388, %v1392
        %v1395 = vmul.f32 %v1391, %v1393
        %v1396 = vsub.f32 2.0, %v1394
        %v1397 = vsub.f32 2.0, %v1395
        %v1398 = vmul.f32 %v1392, %v1396
        %v1399 = vmul.f32 %v1393, %v1397
        %v1400 = vmul.f32 %v1383, %v1398
        %v1401 = vmul.f32 %v1385, %v1399
        %1402 = vst.msk [vmem:[%s632] sm:$0xff] %vm1373, %v1400
        %1403 = vst.msk [vmem:[%s632 + $0x20] sm:$0xff] %vm1373, %v1401
        %1404 = vrot.lane.b32.xlu0 %v1185, 64
        %v1405 = vpop.permute.xlu0 %1404
        %1406 = vrot.lane.b32.xlu0 %v1186, 64
        %v1407 = vpop.permute.xlu0 %1406
        %v1410 = vsel %vm1373, %v1400, 0
        %vm1412 = vcmask 1043456
        %v1413 = vsel %vm1412, %v1407, 0
        %1415 = vmatpush.msra.mxu0 0.0
        %1416 = vmatpush.msra.mxu0 0.0
        %1417 = vmatpush.msra.mxu0 0.0
        %1418 = vmatpush.msra.mxu0 0.0
        %1419 = vmatpush.msra.mxu0 0.0
        %1420 = vmatpush.msra.mxu0 0.0
        %1421 = vmatpush.msra.mxu0 0.0
        %1422 = vmatpush.msra.mxu0 0.0
        %1423 = vmatpush.msra.mxu0 0.0
        %1424 = vmatpush.msra.mxu0 0.0
        %1425 = vmatpush.msra.mxu0 0.0
        %1426 = vmatpush.msra.mxu0 0.0
        %1427 = vmatpush.msra.mxu0 0.0
        %1428 = vmatpush.msra.mxu0 0.0
        %1429 = vmatpush.msra.mxu0 %v1413
        %1430 = vmatpush.msra.mxu0 %v1405
        %1431 = vmatmul.f32.gmra.mxu0 %v1410
        %v1432 = vpop.f32.mrf.mxu0
        %v1433 = vadd.f32 0.0, %v1432
        %1434 = vdwg.mxu0
        %1435 = vrot.lane.b32.xlu0 %v1187, 64
        %v1436 = vpop.permute.xlu0 %1435
        %1437 = vrot.lane.b32.xlu0 %v1188, 64
        %v1438 = vpop.permute.xlu0 %1437
        %v1441 = vsel %vm1373, %v1401, 0
        %v1443 = vsel %vm1412, %v1438, 0
        %1445 = vmatpush.msra.mxu0 0.0
        %1446 = vmatpush.msra.mxu0 0.0
        %1447 = vmatpush.msra.mxu0 0.0
        %1448 = vmatpush.msra.mxu0 0.0
        %1449 = vmatpush.msra.mxu0 0.0
        %1450 = vmatpush.msra.mxu0 0.0
        %1451 = vmatpush.msra.mxu0 0.0
        %1452 = vmatpush.msra.mxu0 0.0
        %1453 = vmatpush.msra.mxu0 0.0
        %1454 = vmatpush.msra.mxu0 0.0
        %1455 = vmatpush.msra.mxu0 0.0
        %1456 = vmatpush.msra.mxu0 0.0
        %1457 = vmatpush.msra.mxu0 0.0
        %1458 = vmatpush.msra.mxu0 0.0
        %1459 = vmatpush.msra.mxu0 %v1443
        %1460 = vmatpush.msra.mxu0 %v1436
        %1461 = vmatmul.f32.gmra.mxu0 %v1441
        %v1462 = vpop.f32.mrf.mxu0
        %v1463 = vadd.f32 0.0, %v1462
        %1464 = vdwg.mxu0
        %1465 = vst.msk [vmem:[#allocation3] sm:$0xff] %vm1189, %v1433
        %1466 = vst.msk [vmem:[#allocation3 + $0x8] sm:$0xff] %vm1189, %v1463
        %v1467 = vld [vmem:[#allocation2] sm:$0xff]
        %v1468 = vld [vmem:[#allocation2 + $0x8] sm:$0xf]
        %v1469 = vld [vmem:[#allocation2 + $0x10] sm:$0xff]
        %v1470 = vld [vmem:[#allocation2 + $0x18] sm:$0xf]
        %1471 = vrot.lane.b32.xlu0 %v1150, 112
        %v1472 = vpop.permute.xlu0 %1471
        %1473 = vrot.lane.b32.xlu0 %v1151, 112
        %v1474 = vpop.permute.xlu0 %1473
        %1475 = vrot.lane.b32.xlu0 %v1013, 112
        %v1476 = vpop.permute.xlu0 %1475
        %1477 = vrot.lane.b32.xlu0 %v1016, 112
        %v1478 = vpop.permute.xlu0 %1477
        %1479 = vrot.lane.b32.xlu0 %v1019, 112
        %v1480 = vpop.permute.xlu0 %1479
        %1481 = vrot.lane.b32.xlu0 %v1022, 112
        %v1482 = vpop.permute.xlu0 %1481
        %1483 = vrot.lane.b32.xlu0 %v1025, 112
        %v1484 = vpop.permute.xlu0 %1483
        %1485 = vrot.lane.b32.xlu0 %v1028, 112
        %v1486 = vpop.permute.xlu0 %1485
        %1487 = vrot.lane.b32.xlu0 %v1031, 112
        %v1488 = vpop.permute.xlu0 %1487
        %1489 = vrot.lane.b32.xlu0 %v1034, 112
        %v1490 = vpop.permute.xlu0 %1489
        %1491 = vrot.lane.b32.xlu0 %v1037, 112
        %v1492 = vpop.permute.xlu0 %1491
        %1493 = vrot.lane.b32.xlu0 %v1040, 112
        %v1494 = vpop.permute.xlu0 %1493
        %1495 = vrot.lane.b32.xlu0 %v1043, 112
        %v1496 = vpop.permute.xlu0 %1495
        %1497 = vrot.lane.b32.xlu0 %v1046, 112
        %v1498 = vpop.permute.xlu0 %1497
        %1499 = vrot.lane.b32.xlu0 %v1049, 112
        %v1500 = vpop.permute.xlu0 %1499
        %1501 = vrot.lane.b32.xlu0 %v1052, 112
        %v1502 = vpop.permute.xlu0 %1501
        %1503 = vrot.lane.b32.xlu0 %v1055, 112
        %v1504 = vpop.permute.xlu0 %1503
        %1505 = vrot.lane.b32.xlu0 %v1058, 112
        %v1506 = vpop.permute.xlu0 %1505
        %v1507 = vsel %vm1189, %v1472, 0
        %v1509 = vsel %vm1189, %v1474, 0
        %v1511 = vsel %vm1189, %v1476, 0
        %v1513 = vsel %vm1189, %v1478, 0
        %v1515 = vsel %vm1189, %v1480, 0
        %v1517 = vsel %vm1189, %v1482, 0
        %v1519 = vsel %vm1189, %v1484, 0
        %v1521 = vsel %vm1189, %v1486, 0
        %v1523 = vsel %vm1189, %v1488, 0
        %v1525 = vsel %vm1189, %v1490, 0
        %v1527 = vsel %vm1189, %v1492, 0
        %v1529 = vsel %vm1189, %v1494, 0
        %v1531 = vsel %vm1189, %v1496, 0
        %v1533 = vsel %vm1189, %v1498, 0
        %v1535 = vsel %vm1189, %v1500, 0
        %v1537 = vsel %vm1189, %v1502, 0
        %v1539 = vsel %vm1189, %v1504, 0
        %v1541 = vsel %vm1189, %v1506, 0
        %1543 = vmatpush.xpose.msra.mxu0 %v1541
        %1544 = vmatpush.xpose.msra.mxu0 %v1539
        %1545 = vmatpush.xpose.msra.mxu0 %v1537
        %1546 = vmatpush.xpose.msra.mxu0 %v1535
        %1547 = vmatpush.xpose.msra.mxu0 %v1533
        %1548 = vmatpush.xpose.msra.mxu0 %v1531
        %1549 = vmatpush.xpose.msra.mxu0 %v1529
        %1550 = vmatpush.xpose.msra.mxu0 %v1527
        %1551 = vmatpush.xpose.msra.mxu0 %v1525
        %1552 = vmatpush.xpose.msra.mxu0 %v1523
        %1553 = vmatpush.xpose.msra.mxu0 %v1521
        %1554 = vmatpush.xpose.msra.mxu0 %v1519
        %1555 = vmatpush.xpose.msra.mxu0 %v1517
        %1556 = vmatpush.xpose.msra.mxu0 %v1515
        %1557 = vmatpush.xpose.msra.mxu0 %v1513
        %1558 = vmatpush.xpose.msra.mxu0 %v1511
        %1559 = vmatmul.f32.gmra.mxu0 %v1507
        %v1560 = vpop.f32.mrf.mxu0
        %v1561 = vadd.f32 0.0, %v1560
        %1562 = vmatmul.f32.gmra.mxu0 %v1509
        %v1563 = vpop.f32.mrf.mxu0
        %v1564 = vadd.f32 0.0, %v1563
        %1565 = vdwg.mxu0
        %1566 = vrot.lane.b32.xlu0 %v1561, 127
        %v1567 = vpop.permute.xlu0 %1566
        %1568 = vrot.lane.b32.xlu0 %v1564, 127
        %v1569 = vpop.permute.xlu0 %1568
        %v1570 = vsel %vm1277, %v1567, %v1561
        %v1571 = vsel %vm1278, %v1569, %v1564
        %1572 = vrot.lane.b32.xlu0 %v1570, 126
        %v1573 = vpop.permute.xlu0 %1572
        %1574 = vrot.lane.b32.xlu0 %v1571, 126
        %v1575 = vpop.permute.xlu0 %1574
        %v1576 = vsel %vm1291, %v1573, %v1570
        %v1577 = vsel %vm1292, %v1575, %v1571
        %1578 = vrot.lane.b32.xlu0 %v1576, 124
        %v1579 = vpop.permute.xlu0 %1578
        %1580 = vrot.lane.b32.xlu0 %v1577, 124
        %v1581 = vpop.permute.xlu0 %1580
        %v1582 = vsel %vm1305, %v1579, %v1576
        %v1583 = vsel %vm1306, %v1581, %v1577
        %v1584 = vsel %vm1310, %v1582, 0.0
        %v1585 = vsel %vm1310, %v1583, 0.0
        %1586 = vrot.lane.b32.xlu0 %v1146, 112
        %v1587 = vpop.permute.xlu0 %1586
        %1590 = vrot.lane.b32.xlu0 %v1467, 112
        %v1591 = vpop.permute.xlu0 %1590
        %1592 = vrot.lane.b32.xlu0 %v1468, 112
        %v1593 = vpop.permute.xlu0 %1592
        %v1594 = vsel %vm1189, %v1587, 0
        %v1596 = vsel %vm1189, %v1591, 0
        %v1598 = vsel %vm1189, %v1593, 0
        %1600 = vmatpush.xpose.msra.mxu0 0.0
        %1601 = vmatpush.xpose.msra.mxu0 0.0
        %1602 = vmatpush.xpose.msra.mxu0 0.0
        %1603 = vmatpush.xpose.msra.mxu0 0.0
        %1604 = vmatpush.xpose.msra.mxu0 0.0
        %1605 = vmatpush.xpose.msra.mxu0 0.0
        %1606 = vmatpush.xpose.msra.mxu0 0.0
        %1607 = vmatpush.xpose.msra.mxu0 0.0
        %1608 = vmatpush.xpose.msra.mxu0 0.0
        %1609 = vmatpush.xpose.msra.mxu0 0.0
        %1610 = vmatpush.xpose.msra.mxu0 0.0
        %1611 = vmatpush.xpose.msra.mxu0 0.0
        %1612 = vmatpush.xpose.msra.mxu0 0.0
        %1613 = vmatpush.xpose.msra.mxu0 0.0
        %1614 = vmatpush.xpose.msra.mxu0 %v1598
        %1615 = vmatpush.xpose.msra.mxu0 %v1596
        %1616 = vmatmul.f32.gmra.mxu0 %v1594
        %v1617 = vpop.f32.mrf.mxu0
        %v1618 = vadd.f32 %v1584, %v1617
        %1619 = vdwg.mxu0
        %1620 = vrot.lane.b32.xlu0 %v1147, 112
        %v1621 = vpop.permute.xlu0 %1620
        %1624 = vrot.lane.b32.xlu0 %v1469, 112
        %v1625 = vpop.permute.xlu0 %1624
        %1626 = vrot.lane.b32.xlu0 %v1470, 112
        %v1627 = vpop.permute.xlu0 %1626
        %v1628 = vsel %vm1189, %v1621, 0
        %v1630 = vsel %vm1189, %v1625, 0
        %v1632 = vsel %vm1189, %v1627, 0
        %1634 = vmatpush.xpose.msra.mxu0 0.0
        %1635 = vmatpush.xpose.msra.mxu0 0.0
        %1636 = vmatpush.xpose.msra.mxu0 0.0
        %1637 = vmatpush.xpose.msra.mxu0 0.0
        %1638 = vmatpush.xpose.msra.mxu0 0.0
        %1639 = vmatpush.xpose.msra.mxu0 0.0
        %1640 = vmatpush.xpose.msra.mxu0 0.0
        %1641 = vmatpush.xpose.msra.mxu0 0.0
        %1642 = vmatpush.xpose.msra.mxu0 0.0
        %1643 = vmatpush.xpose.msra.mxu0 0.0
        %1644 = vmatpush.xpose.msra.mxu0 0.0
        %1645 = vmatpush.xpose.msra.mxu0 0.0
        %1646 = vmatpush.xpose.msra.mxu0 0.0
        %1647 = vmatpush.xpose.msra.mxu0 0.0
        %1648 = vmatpush.xpose.msra.mxu0 %v1632
        %1649 = vmatpush.xpose.msra.mxu0 %v1630
        %1650 = vmatmul.f32.gmra.mxu0 %v1628
        %v1651 = vpop.f32.mrf.mxu0
        %v1652 = vadd.f32 %v1585, %v1651
        %1653 = vdwg.mxu0
        %v1654 = vmul.f32 %v1618, 0.125
        %v1655 = vmul.f32 %v1652, 0.125
        %v1656 = vsel %vm1373, %v1654, -inf
        %1657 = vmax.xlane.f32.xlu0 %v1656
        %v1658 = vpop.xlane.xlu0 %1657
        %v1659 = vsel %vm1373, %v1655, -inf
        %1660 = vmax.xlane.f32.xlu0 %v1659
        %v1661 = vpop.xlane.xlu0 %1660
        %v1662 = vsub.f32 %v1654, %v1658
        %v1663 = vsub.f32 %v1655, %v1661
        %v1664 = vmul.f32 %v1662, 1.442695
        %v1665 = vpow.pop %v1664
        %v1666 = vmul.f32 %v1663, 1.442695
        %v1667 = vpow.pop %v1666
        %v1668 = vsel %vm1373, %v1665, 0.0
        %1669 = vadd.xlane.f32.xlu0 %v1668
        %v1670 = vpop.xlane.xlu0 %1669
        %v1671 = vsel %vm1373, %v1667, 0.0
        %1672 = vadd.xlane.f32.xlu0 %v1671
        %v1673 = vpop.xlane.xlu0 %1672
        %v1674 = vrcp.pop %v1670
        %v1675 = vrcp.pop %v1673
        %v1676 = vmul.f32 %v1670, %v1674
        %v1677 = vmul.f32 %v1673, %v1675
        %v1678 = vsub.f32 2.0, %v1676
        %v1679 = vsub.f32 2.0, %v1677
        %v1680 = vmul.f32 %v1674, %v1678
        %v1681 = vmul.f32 %v1675, %v1679
        %v1682 = vmul.f32 %v1665, %v1680
        %v1683 = vmul.f32 %v1667, %v1681
        %s1684 = scalar_lea.vmem %s632, 8 [#allocation11]
        %1685 = vst.msk [vmem:[%s1684] sm:$0xff] %vm1373, %v1682
        %1686 = vst.msk [vmem:[%s1684 + $0x20] sm:$0xff] %vm1373, %v1683
        %1687 = vrot.lane.b32.xlu0 %v1467, 48
        %v1688 = vpop.permute.xlu0 %1687
        %1689 = vrot.lane.b32.xlu0 %v1468, 48
        %v1690 = vpop.permute.xlu0 %1689
        %v1693 = vsel %vm1373, %v1682, 0
        %v1695 = vsel %vm1412, %v1690, 0
        %1697 = vmatpush.msra.mxu0 0.0
        %1698 = vmatpush.msra.mxu0 0.0
        %1699 = vmatpush.msra.mxu0 0.0
        %1700 = vmatpush.msra.mxu0 0.0
        %1701 = vmatpush.msra.mxu0 0.0
        %1702 = vmatpush.msra.mxu0 0.0
        %1703 = vmatpush.msra.mxu0 0.0
        %1704 = vmatpush.msra.mxu0 0.0
        %1705 = vmatpush.msra.mxu0 0.0
        %1706 = vmatpush.msra.mxu0 0.0
        %1707 = vmatpush.msra.mxu0 0.0
        %1708 = vmatpush.msra.mxu0 0.0
        %1709 = vmatpush.msra.mxu0 0.0
        %1710 = vmatpush.msra.mxu0 0.0
        %1711 = vmatpush.msra.mxu0 %v1695
        %1712 = vmatpush.msra.mxu0 %v1688
        %1713 = vmatmul.f32.gmra.mxu0 %v1693
        %v1714 = vpop.f32.mrf.mxu0
        %v1715 = vadd.f32 0.0, %v1714
        %1716 = vdwg.mxu0
        %1717 = vrot.lane.b32.xlu0 %v1469, 48
        %v1718 = vpop.permute.xlu0 %1717
        %1719 = vrot.lane.b32.xlu0 %v1470, 48
        %v1720 = vpop.permute.xlu0 %1719
        %v1723 = vsel %vm1373, %v1683, 0
        %v1725 = vsel %vm1412, %v1720, 0
        %1727 = vmatpush.msra.mxu0 0.0
        %1728 = vmatpush.msra.mxu0 0.0
        %1729 = vmatpush.msra.mxu0 0.0
        %1730 = vmatpush.msra.mxu0 0.0
        %1731 = vmatpush.msra.mxu0 0.0
        %1732 = vmatpush.msra.mxu0 0.0
        %1733 = vmatpush.msra.mxu0 0.0
        %1734 = vmatpush.msra.mxu0 0.0
        %1735 = vmatpush.msra.mxu0 0.0
        %1736 = vmatpush.msra.mxu0 0.0
        %1737 = vmatpush.msra.mxu0 0.0
        %1738 = vmatpush.msra.mxu0 0.0
        %1739 = vmatpush.msra.mxu0 0.0
        %1740 = vmatpush.msra.mxu0 0.0
        %1741 = vmatpush.msra.mxu0 %v1725
        %1742 = vmatpush.msra.mxu0 %v1718
        %1743 = vmatmul.f32.gmra.mxu0 %v1723
        %v1744 = vpop.f32.mrf.mxu0
        %v1745 = vadd.f32 0.0, %v1744
        %1746 = vdwg.mxu0
        %1749 = vrot.lane.b32.xlu0 %v1715, 16
        %v1750 = vpop.permute.xlu0 %1749
        %1751 = vrot.lane.b32.xlu0 %v1745, 16
        %v1752 = vpop.permute.xlu0 %1751
        %vm1755 = vcmask 261248
        %1756 = vst.msk [vmem:[#allocation3] sm:$0xff] %vm1755, %v1750
        %1757 = vst.msk [vmem:[#allocation3 + $0x8] sm:$0xff] %vm1755, %v1752
        %v1758 = vld [vmem:[#allocation2] sm:$0xff]
        %v1759 = vld [vmem:[#allocation2 + $0x8] sm:$0xf]
        %v1760 = vld [vmem:[#allocation2 + $0x10] sm:$0xff]
        %v1761 = vld [vmem:[#allocation2 + $0x18] sm:$0xf]
        %1762 = vrot.lane.b32.xlu0 %v1150, 96
        %v1763 = vpop.permute.xlu0 %1762
        %1764 = vrot.lane.b32.xlu0 %v1151, 96
        %v1765 = vpop.permute.xlu0 %1764
        %1766 = vrot.lane.b32.xlu0 %v1013, 96
        %v1767 = vpop.permute.xlu0 %1766
        %1768 = vrot.lane.b32.xlu0 %v1016, 96
        %v1769 = vpop.permute.xlu0 %1768
        %1770 = vrot.lane.b32.xlu0 %v1019, 96
        %v1771 = vpop.permute.xlu0 %1770
        %1772 = vrot.lane.b32.xlu0 %v1022, 96
        %v1773 = vpop.permute.xlu0 %1772
        %1774 = vrot.lane.b32.xlu0 %v1025, 96
        %v1775 = vpop.permute.xlu0 %1774
        %1776 = vrot.lane.b32.xlu0 %v1028, 96
        %v1777 = vpop.permute.xlu0 %1776
        %1778 = vrot.lane.b32.xlu0 %v1031, 96
        %v1779 = vpop.permute.xlu0 %1778
        %1780 = vrot.lane.b32.xlu0 %v1034, 96
        %v1781 = vpop.permute.xlu0 %1780
        %1782 = vrot.lane.b32.xlu0 %v1037, 96
        %v1783 = vpop.permute.xlu0 %1782
        %1784 = vrot.lane.b32.xlu0 %v1040, 96
        %v1785 = vpop.permute.xlu0 %1784
        %1786 = vrot.lane.b32.xlu0 %v1043, 96
        %v1787 = vpop.permute.xlu0 %1786
        %1788 = vrot.lane.b32.xlu0 %v1046, 96
        %v1789 = vpop.permute.xlu0 %1788
        %1790 = vrot.lane.b32.xlu0 %v1049, 96
        %v1791 = vpop.permute.xlu0 %1790
        %1792 = vrot.lane.b32.xlu0 %v1052, 96
        %v1793 = vpop.permute.xlu0 %1792
        %1794 = vrot.lane.b32.xlu0 %v1055, 96
        %v1795 = vpop.permute.xlu0 %1794
        %1796 = vrot.lane.b32.xlu0 %v1058, 96
        %v1797 = vpop.permute.xlu0 %1796
        %v1798 = vsel %vm1189, %v1763, 0
        %v1800 = vsel %vm1189, %v1765, 0
        %v1802 = vsel %vm1189, %v1767, 0
        %v1804 = vsel %vm1189, %v1769, 0
        %v1806 = vsel %vm1189, %v1771, 0
        %v1808 = vsel %vm1189, %v1773, 0
        %v1810 = vsel %vm1189, %v1775, 0
        %v1812 = vsel %vm1189, %v1777, 0
        %v1814 = vsel %vm1189, %v1779, 0
        %v1816 = vsel %vm1189, %v1781, 0
        %v1818 = vsel %vm1189, %v1783, 0
        %v1820 = vsel %vm1189, %v1785, 0
        %v1822 = vsel %vm1189, %v1787, 0
        %v1824 = vsel %vm1189, %v1789, 0
        %v1826 = vsel %vm1189, %v1791, 0
        %v1828 = vsel %vm1189, %v1793, 0
        %v1830 = vsel %vm1189, %v1795, 0
        %v1832 = vsel %vm1189, %v1797, 0
        %1834 = vmatpush.xpose.msra.mxu0 %v1832
        %1835 = vmatpush.xpose.msra.mxu0 %v1830
        %1836 = vmatpush.xpose.msra.mxu0 %v1828
        %1837 = vmatpush.xpose.msra.mxu0 %v1826
        %1838 = vmatpush.xpose.msra.mxu0 %v1824
        %1839 = vmatpush.xpose.msra.mxu0 %v1822
        %1840 = vmatpush.xpose.msra.mxu0 %v1820
        %1841 = vmatpush.xpose.msra.mxu0 %v1818
        %1842 = vmatpush.xpose.msra.mxu0 %v1816
        %1843 = vmatpush.xpose.msra.mxu0 %v1814
        %1844 = vmatpush.xpose.msra.mxu0 %v1812
        %1845 = vmatpush.xpose.msra.mxu0 %v1810
        %1846 = vmatpush.xpose.msra.mxu0 %v1808
        %1847 = vmatpush.xpose.msra.mxu0 %v1806
        %1848 = vmatpush.xpose.msra.mxu0 %v1804
        %1849 = vmatpush.xpose.msra.mxu0 %v1802
        %1850 = vmatmul.f32.gmra.mxu0 %v1798
        %v1851 = vpop.f32.mrf.mxu0
        %v1852 = vadd.f32 0.0, %v1851
        %1853 = vmatmul.f32.gmra.mxu0 %v1800
        %v1854 = vpop.f32.mrf.mxu0
        %v1855 = vadd.f32 0.0, %v1854
        %1856 = vdwg.mxu0
        %1857 = vrot.lane.b32.xlu0 %v1852, 127
        %v1858 = vpop.permute.xlu0 %1857
        %1859 = vrot.lane.b32.xlu0 %v1855, 127
        %v1860 = vpop.permute.xlu0 %1859
        %v1861 = vsel %vm1277, %v1858, %v1852
        %v1862 = vsel %vm1278, %v1860, %v1855
        %1863 = vrot.lane.b32.xlu0 %v1861, 126
        %v1864 = vpop.permute.xlu0 %1863
        %1865 = vrot.lane.b32.xlu0 %v1862, 126
        %v1866 = vpop.permute.xlu0 %1865
        %v1867 = vsel %vm1291, %v1864, %v1861
        %v1868 = vsel %vm1292, %v1866, %v1862
        %1869 = vrot.lane.b32.xlu0 %v1867, 124
        %v1870 = vpop.permute.xlu0 %1869
        %1871 = vrot.lane.b32.xlu0 %v1868, 124
        %v1872 = vpop.permute.xlu0 %1871
        %v1873 = vsel %vm1305, %v1870, %v1867
        %v1874 = vsel %vm1306, %v1872, %v1868
        %v1875 = vsel %vm1310, %v1873, 0.0
        %v1876 = vsel %vm1310, %v1874, 0.0
        %1877 = vrot.lane.b32.xlu0 %v1146, 96
        %v1878 = vpop.permute.xlu0 %1877
        %1881 = vrot.lane.b32.xlu0 %v1758, 96
        %v1882 = vpop.permute.xlu0 %1881
        %1883 = vrot.lane.b32.xlu0 %v1759, 96
        %v1884 = vpop.permute.xlu0 %1883
        %v1885 = vsel %vm1189, %v1878, 0
        %v1887 = vsel %vm1189, %v1882, 0
        %v1889 = vsel %vm1189, %v1884, 0
        %1891 = vmatpush.xpose.msra.mxu0 0.0
        %1892 = vmatpush.xpose.msra.mxu0 0.0
        %1893 = vmatpush.xpose.msra.mxu0 0.0
        %1894 = vmatpush.xpose.msra.mxu0 0.0
        %1895 = vmatpush.xpose.msra.mxu0 0.0
        %1896 = vmatpush.xpose.msra.mxu0 0.0
        %1897 = vmatpush.xpose.msra.mxu0 0.0
        %1898 = vmatpush.xpose.msra.mxu0 0.0
        %1899 = vmatpush.xpose.msra.mxu0 0.0
        %1900 = vmatpush.xpose.msra.mxu0 0.0
        %1901 = vmatpush.xpose.msra.mxu0 0.0
        %1902 = vmatpush.xpose.msra.mxu0 0.0
        %1903 = vmatpush.xpose.msra.mxu0 0.0
        %1904 = vmatpush.xpose.msra.mxu0 0.0
        %1905 = vmatpush.xpose.msra.mxu0 %v1889
        %1906 = vmatpush.xpose.msra.mxu0 %v1887
        %1907 = vmatmul.f32.gmra.mxu0 %v1885
        %v1908 = vpop.f32.mrf.mxu0
        %v1909 = vadd.f32 %v1875, %v1908
        %1910 = vdwg.mxu0
        %1911 = vrot.lane.b32.xlu0 %v1147, 96
        %v1912 = vpop.permute.xlu0 %1911
        %1915 = vrot.lane.b32.xlu0 %v1760, 96
        %v1916 = vpop.permute.xlu0 %1915
        %1917 = vrot.lane.b32.xlu0 %v1761, 96
        %v1918 = vpop.permute.xlu0 %1917
        %v1919 = vsel %vm1189, %v1912, 0
        %v1921 = vsel %vm1189, %v1916, 0
        %v1923 = vsel %vm1189, %v1918, 0
        %1925 = vmatpush.xpose.msra.mxu0 0.0
        %1926 = vmatpush.xpose.msra.mxu0 0.0
        %1927 = vmatpush.xpose.msra.mxu0 0.0
        %1928 = vmatpush.xpose.msra.mxu0 0.0
        %1929 = vmatpush.xpose.msra.mxu0 0.0
        %1930 = vmatpush.xpose.msra.mxu0 0.0
        %1931 = vmatpush.xpose.msra.mxu0 0.0
        %1932 = vmatpush.xpose.msra.mxu0 0.0
        %1933 = vmatpush.xpose.msra.mxu0 0.0
        %1934 = vmatpush.xpose.msra.mxu0 0.0
        %1935 = vmatpush.xpose.msra.mxu0 0.0
        %1936 = vmatpush.xpose.msra.mxu0 0.0
        %1937 = vmatpush.xpose.msra.mxu0 0.0
        %1938 = vmatpush.xpose.msra.mxu0 0.0
        %1939 = vmatpush.xpose.msra.mxu0 %v1923
        %1940 = vmatpush.xpose.msra.mxu0 %v1921
        %1941 = vmatmul.f32.gmra.mxu0 %v1919
        %v1942 = vpop.f32.mrf.mxu0
        %v1943 = vadd.f32 %v1876, %v1942
        %1944 = vdwg.mxu0
        %v1945 = vmul.f32 %v1909, 0.125
        %v1946 = vmul.f32 %v1943, 0.125
        %v1947 = vsel %vm1373, %v1945, -inf
        %1948 = vmax.xlane.f32.xlu0 %v1947
        %v1949 = vpop.xlane.xlu0 %1948
        %v1950 = vsel %vm1373, %v1946, -inf
        %1951 = vmax.xlane.f32.xlu0 %v1950
        %v1952 = vpop.xlane.xlu0 %1951
        %v1953 = vsub.f32 %v1945, %v1949
        %v1954 = vsub.f32 %v1946, %v1952
        %v1955 = vmul.f32 %v1953, 1.442695
        %v1956 = vpow.pop %v1955
        %v1957 = vmul.f32 %v1954, 1.442695
        %v1958 = vpow.pop %v1957
        %v1959 = vsel %vm1373, %v1956, 0.0
        %1960 = vadd.xlane.f32.xlu0 %v1959
        %v1961 = vpop.xlane.xlu0 %1960
        %v1962 = vsel %vm1373, %v1958, 0.0
        %1963 = vadd.xlane.f32.xlu0 %v1962
        %v1964 = vpop.xlane.xlu0 %1963
        %v1965 = vrcp.pop %v1961
        %v1966 = vrcp.pop %v1964
        %v1967 = vmul.f32 %v1961, %v1965
        %v1968 = vmul.f32 %v1964, %v1966
        %v1969 = vsub.f32 2.0, %v1967
        %v1970 = vsub.f32 2.0, %v1968
        %v1971 = vmul.f32 %v1965, %v1969
        %v1972 = vmul.f32 %v1966, %v1970
        %v1973 = vmul.f32 %v1956, %v1971
        %v1974 = vmul.f32 %v1958, %v1972
        %s1975 = scalar_lea.vmem %s632, 16 [#allocation11]
        %1976 = vst.msk [vmem:[%s1975] sm:$0xff] %vm1373, %v1973
        %1977 = vst.msk [vmem:[%s1975 + $0x20] sm:$0xff] %vm1373, %v1974
        %1978 = vrot.lane.b32.xlu0 %v1758, 32
        %v1979 = vpop.permute.xlu0 %1978
        %1980 = vrot.lane.b32.xlu0 %v1759, 32
        %v1981 = vpop.permute.xlu0 %1980
        %v1984 = vsel %vm1373, %v1973, 0
        %v1986 = vsel %vm1412, %v1981, 0
        %1988 = vmatpush.msra.mxu0 0.0
        %1989 = vmatpush.msra.mxu0 0.0
        %1990 = vmatpush.msra.mxu0 0.0
        %1991 = vmatpush.msra.mxu0 0.0
        %1992 = vmatpush.msra.mxu0 0.0
        %1993 = vmatpush.msra.mxu0 0.0
        %1994 = vmatpush.msra.mxu0 0.0
        %1995 = vmatpush.msra.mxu0 0.0
        %1996 = vmatpush.msra.mxu0 0.0
        %1997 = vmatpush.msra.mxu0 0.0
        %1998 = vmatpush.msra.mxu0 0.0
        %1999 = vmatpush.msra.mxu0 0.0
        %2000 = vmatpush.msra.mxu0 0.0
        %2001 = vmatpush.msra.mxu0 0.0
        %2002 = vmatpush.msra.mxu0 %v1986
        %2003 = vmatpush.msra.mxu0 %v1979
        %2004 = vmatmul.f32.gmra.mxu0 %v1984
        %v2005 = vpop.f32.mrf.mxu0
        %v2006 = vadd.f32 0.0, %v2005
        %2007 = vdwg.mxu0
        %2008 = vrot.lane.b32.xlu0 %v1760, 32
        %v2009 = vpop.permute.xlu0 %2008
        %2010 = vrot.lane.b32.xlu0 %v1761, 32
        %v2011 = vpop.permute.xlu0 %2010
        %v2014 = vsel %vm1373, %v1974, 0
        %v2016 = vsel %vm1412, %v2011, 0
        %2018 = vmatpush.msra.mxu0 0.0
        %2019 = vmatpush.msra.mxu0 0.0
        %2020 = vmatpush.msra.mxu0 0.0
        %2021 = vmatpush.msra.mxu0 0.0
        %2022 = vmatpush.msra.mxu0 0.0
        %2023 = vmatpush.msra.mxu0 0.0
        %2024 = vmatpush.msra.mxu0 0.0
        %2025 = vmatpush.msra.mxu0 0.0
        %2026 = vmatpush.msra.mxu0 0.0
        %2027 = vmatpush.msra.mxu0 0.0
        %2028 = vmatpush.msra.mxu0 0.0
        %2029 = vmatpush.msra.mxu0 0.0
        %2030 = vmatpush.msra.mxu0 0.0
        %2031 = vmatpush.msra.mxu0 0.0
        %2032 = vmatpush.msra.mxu0 %v2016
        %2033 = vmatpush.msra.mxu0 %v2009
        %2034 = vmatmul.f32.gmra.mxu0 %v2014
        %v2035 = vpop.f32.mrf.mxu0
        %v2036 = vadd.f32 0.0, %v2035
        %2037 = vdwg.mxu0
        %2040 = vrot.lane.b32.xlu0 %v2006, 32
        %v2041 = vpop.permute.xlu0 %2040
        %2042 = vrot.lane.b32.xlu0 %v2036, 32
        %v2043 = vpop.permute.xlu0 %2042
        %vm2046 = vcmask 392448
        %2047 = vst.msk [vmem:[#allocation3] sm:$0xff] %vm2046, %v2041
        %2048 = vst.msk [vmem:[#allocation3 + $0x8] sm:$0xff] %vm2046, %v2043
        %v2049 = vld [vmem:[#allocation2] sm:$0xff]
        %v2050 = vld [vmem:[#allocation2 + $0x8] sm:$0xf]
        %v2051 = vld [vmem:[#allocation2 + $0x10] sm:$0xff]
        %v2052 = vld [vmem:[#allocation2 + $0x18] sm:$0xf]
        %2053 = vrot.lane.b32.xlu0 %v1150, 80
        %v2054 = vpop.permute.xlu0 %2053
        %2055 = vrot.lane.b32.xlu0 %v1151, 80
        %v2056 = vpop.permute.xlu0 %2055
        %2057 = vrot.lane.b32.xlu0 %v1013, 80
        %v2058 = vpop.permute.xlu0 %2057
        %2059 = vrot.lane.b32.xlu0 %v1016, 80
        %v2060 = vpop.permute.xlu0 %2059
        %2061 = vrot.lane.b32.xlu0 %v1019, 80
        %v2062 = vpop.permute.xlu0 %2061
        %2063 = vrot.lane.b32.xlu0 %v1022, 80
        %v2064 = vpop.permute.xlu0 %2063
        %2065 = vrot.lane.b32.xlu0 %v1025, 80
        %v2066 = vpop.permute.xlu0 %2065
        %2067 = vrot.lane.b32.xlu0 %v1028, 80
        %v2068 = vpop.permute.xlu0 %2067
        %2069 = vrot.lane.b32.xlu0 %v1031, 80
        %v2070 = vpop.permute.xlu0 %2069
        %2071 = vrot.lane.b32.xlu0 %v1034, 80
        %v2072 = vpop.permute.xlu0 %2071
        %2073 = vrot.lane.b32.xlu0 %v1037, 80
        %v2074 = vpop.permute.xlu0 %2073
        %2075 = vrot.lane.b32.xlu0 %v1040, 80
        %v2076 = vpop.permute.xlu0 %2075
        %2077 = vrot.lane.b32.xlu0 %v1043, 80
        %v2078 = vpop.permute.xlu0 %2077
        %2079 = vrot.lane.b32.xlu0 %v1046, 80
        %v2080 = vpop.permute.xlu0 %2079
        %2081 = vrot.lane.b32.xlu0 %v1049, 80
        %v2082 = vpop.permute.xlu0 %2081
        %2083 = vrot.lane.b32.xlu0 %v1052, 80
        %v2084 = vpop.permute.xlu0 %2083
        %2085 = vrot.lane.b32.xlu0 %v1055, 80
        %v2086 = vpop.permute.xlu0 %2085
        %2087 = vrot.lane.b32.xlu0 %v1058, 80
        %v2088 = vpop.permute.xlu0 %2087
        %v2089 = vsel %vm1189, %v2054, 0
        %v2091 = vsel %vm1189, %v2056, 0
        %v2093 = vsel %vm1189, %v2058, 0
        %v2095 = vsel %vm1189, %v2060, 0
        %v2097 = vsel %vm1189, %v2062, 0
        %v2099 = vsel %vm1189, %v2064, 0
        %v2101 = vsel %vm1189, %v2066, 0
        %v2103 = vsel %vm1189, %v2068, 0
        %v2105 = vsel %vm1189, %v2070, 0
        %v2107 = vsel %vm1189, %v2072, 0
        %v2109 = vsel %vm1189, %v2074, 0
        %v2111 = vsel %vm1189, %v2076, 0
        %v2113 = vsel %vm1189, %v2078, 0
        %v2115 = vsel %vm1189, %v2080, 0
        %v2117 = vsel %vm1189, %v2082, 0
        %v2119 = vsel %vm1189, %v2084, 0
        %v2121 = vsel %vm1189, %v2086, 0
        %v2123 = vsel %vm1189, %v2088, 0
        %2125 = vmatpush.xpose.msra.mxu0 %v2123
        %2126 = vmatpush.xpose.msra.mxu0 %v2121
        %2127 = vmatpush.xpose.msra.mxu0 %v2119
        %2128 = vmatpush.xpose.msra.mxu0 %v2117
        %2129 = vmatpush.xpose.msra.mxu0 %v2115
        %2130 = vmatpush.xpose.msra.mxu0 %v2113
        %2131 = vmatpush.xpose.msra.mxu0 %v2111
        %2132 = vmatpush.xpose.msra.mxu0 %v2109
        %2133 = vmatpush.xpose.msra.mxu0 %v2107
        %2134 = vmatpush.xpose.msra.mxu0 %v2105
        %2135 = vmatpush.xpose.msra.mxu0 %v2103
        %2136 = vmatpush.xpose.msra.mxu0 %v2101
        %2137 = vmatpush.xpose.msra.mxu0 %v2099
        %2138 = vmatpush.xpose.msra.mxu0 %v2097
        %2139 = vmatpush.xpose.msra.mxu0 %v2095
        %2140 = vmatpush.xpose.msra.mxu0 %v2093
        %2141 = vmatmul.f32.gmra.mxu0 %v2089
        %v2142 = vpop.f32.mrf.mxu0
        %v2143 = vadd.f32 0.0, %v2142
        %2144 = vmatmul.f32.gmra.mxu0 %v2091
        %v2145 = vpop.f32.mrf.mxu0
        %v2146 = vadd.f32 0.0, %v2145
        %2147 = vdwg.mxu0
        %2148 = vrot.lane.b32.xlu0 %v2143, 127
        %v2149 = vpop.permute.xlu0 %2148
        %2150 = vrot.lane.b32.xlu0 %v2146, 127
        %v2151 = vpop.permute.xlu0 %2150
        %v2152 = vsel %vm1277, %v2149, %v2143
        %v2153 = vsel %vm1278, %v2151, %v2146
        %2154 = vrot.lane.b32.xlu0 %v2152, 126
        %v2155 = vpop.permute.xlu0 %2154
        %2156 = vrot.lane.b32.xlu0 %v2153, 126
        %v2157 = vpop.permute.xlu0 %2156
        %v2158 = vsel %vm1291, %v2155, %v2152
        %v2159 = vsel %vm1292, %v2157, %v2153
        %2160 = vrot.lane.b32.xlu0 %v2158, 124
        %v2161 = vpop.permute.xlu0 %2160
        %2162 = vrot.lane.b32.xlu0 %v2159, 124
        %v2163 = vpop.permute.xlu0 %2162
        %v2164 = vsel %vm1305, %v2161, %v2158
        %v2165 = vsel %vm1306, %v2163, %v2159
        %v2166 = vsel %vm1310, %v2164, 0.0
        %v2167 = vsel %vm1310, %v2165, 0.0
        %2168 = vrot.lane.b32.xlu0 %v1146, 80
        %v2169 = vpop.permute.xlu0 %2168
        %2172 = vrot.lane.b32.xlu0 %v2049, 80
        %v2173 = vpop.permute.xlu0 %2172
        %2174 = vrot.lane.b32.xlu0 %v2050, 80
        %v2175 = vpop.permute.xlu0 %2174
        %v2176 = vsel %vm1189, %v2169, 0
        %v2178 = vsel %vm1189, %v2173, 0
        %v2180 = vsel %vm1189, %v2175, 0
        %2182 = vmatpush.xpose.msra.mxu0 0.0
        %2183 = vmatpush.xpose.msra.mxu0 0.0
        %2184 = vmatpush.xpose.msra.mxu0 0.0
        %2185 = vmatpush.xpose.msra.mxu0 0.0
        %2186 = vmatpush.xpose.msra.mxu0 0.0
        %2187 = vmatpush.xpose.msra.mxu0 0.0
        %2188 = vmatpush.xpose.msra.mxu0 0.0
        %2189 = vmatpush.xpose.msra.mxu0 0.0
        %2190 = vmatpush.xpose.msra.mxu0 0.0
        %2191 = vmatpush.xpose.msra.mxu0 0.0
        %2192 = vmatpush.xpose.msra.mxu0 0.0
        %2193 = vmatpush.xpose.msra.mxu0 0.0
        %2194 = vmatpush.xpose.msra.mxu0 0.0
        %2195 = vmatpush.xpose.msra.mxu0 0.0
        %2196 = vmatpush.xpose.msra.mxu0 %v2180
        %2197 = vmatpush.xpose.msra.mxu0 %v2178
        %2198 = vmatmul.f32.gmra.mxu0 %v2176
        %v2199 = vpop.f32.mrf.mxu0
        %v2200 = vadd.f32 %v2166, %v2199
        %2201 = vdwg.mxu0
        %2202 = vrot.lane.b32.xlu0 %v1147, 80
        %v2203 = vpop.permute.xlu0 %2202
        %2206 = vrot.lane.b32.xlu0 %v2051, 80
        %v2207 = vpop.permute.xlu0 %2206
        %2208 = vrot.lane.b32.xlu0 %v2052, 80
        %v2209 = vpop.permute.xlu0 %2208
        %v2210 = vsel %vm1189, %v2203, 0
        %v2212 = vsel %vm1189, %v2207, 0
        %v2214 = vsel %vm1189, %v2209, 0
        %2216 = vmatpush.xpose.msra.mxu0 0.0
        %2217 = vmatpush.xpose.msra.mxu0 0.0
        %2218 = vmatpush.xpose.msra.mxu0 0.0
        %2219 = vmatpush.xpose.msra.mxu0 0.0
        %2220 = vmatpush.xpose.msra.mxu0 0.0
        %2221 = vmatpush.xpose.msra.mxu0 0.0
        %2222 = vmatpush.xpose.msra.mxu0 0.0
        %2223 = vmatpush.xpose.msra.mxu0 0.0
        %2224 = vmatpush.xpose.msra.mxu0 0.0
        %2225 = vmatpush.xpose.msra.mxu0 0.0
        %2226 = vmatpush.xpose.msra.mxu0 0.0
        %2227 = vmatpush.xpose.msra.mxu0 0.0
        %2228 = vmatpush.xpose.msra.mxu0 0.0
        %2229 = vmatpush.xpose.msra.mxu0 0.0
        %2230 = vmatpush.xpose.msra.mxu0 %v2214
        %2231 = vmatpush.xpose.msra.mxu0 %v2212
        %2232 = vmatmul.f32.gmra.mxu0 %v2210
        %v2233 = vpop.f32.mrf.mxu0
        %v2234 = vadd.f32 %v2167, %v2233
        %2235 = vdwg.mxu0
        %v2236 = vmul.f32 %v2200, 0.125
        %v2237 = vmul.f32 %v2234, 0.125
        %v2238 = vsel %vm1373, %v2236, -inf
        %2239 = vmax.xlane.f32.xlu0 %v2238
        %v2240 = vpop.xlane.xlu0 %2239
        %v2241 = vsel %vm1373, %v2237, -inf
        %2242 = vmax.xlane.f32.xlu0 %v2241
        %v2243 = vpop.xlane.xlu0 %2242
        %v2244 = vsub.f32 %v2236, %v2240
        %v2245 = vsub.f32 %v2237, %v2243
        %v2246 = vmul.f32 %v2244, 1.442695
        %v2247 = vpow.pop %v2246
        %v2248 = vmul.f32 %v2245, 1.442695
        %v2249 = vpow.pop %v2248
        %v2250 = vsel %vm1373, %v2247, 0.0
        %2251 = vadd.xlane.f32.xlu0 %v2250
        %v2252 = vpop.xlane.xlu0 %2251
        %v2253 = vsel %vm1373, %v2249, 0.0
        %2254 = vadd.xlane.f32.xlu0 %v2253
        %v2255 = vpop.xlane.xlu0 %2254
        %v2256 = vrcp.pop %v2252
        %v2257 = vrcp.pop %v2255
        %v2258 = vmul.f32 %v2252, %v2256
        %v2259 = vmul.f32 %v2255, %v2257
        %v2260 = vsub.f32 2.0, %v2258
        %v2261 = vsub.f32 2.0, %v2259
        %v2262 = vmul.f32 %v2256, %v2260
        %v2263 = vmul.f32 %v2257, %v2261
        %v2264 = vmul.f32 %v2247, %v2262
        %v2265 = vmul.f32 %v2249, %v2263
        %s2266 = scalar_lea.vmem %s632, 24 [#allocation11]
        %2267 = vst.msk [vmem:[%s2266] sm:$0xff] %vm1373, %v2264
        %2268 = vst.msk [vmem:[%s2266 + $0x20] sm:$0xff] %vm1373, %v2265
        %2269 = vrot.lane.b32.xlu0 %v2049, 16
        %v2270 = vpop.permute.xlu0 %2269
        %2271 = vrot.lane.b32.xlu0 %v2050, 16
        %v2272 = vpop.permute.xlu0 %2271
        %v2275 = vsel %vm1373, %v2264, 0
        %v2277 = vsel %vm1412, %v2272, 0
        %2279 = vmatpush.msra.mxu0 0.0
        %2280 = vmatpush.msra.mxu0 0.0
        %2281 = vmatpush.msra.mxu0 0.0
        %2282 = vmatpush.msra.mxu0 0.0
        %2283 = vmatpush.msra.mxu0 0.0
        %2284 = vmatpush.msra.mxu0 0.0
        %2285 = vmatpush.msra.mxu0 0.0
        %2286 = vmatpush.msra.mxu0 0.0
        %2287 = vmatpush.msra.mxu0 0.0
        %2288 = vmatpush.msra.mxu0 0.0
        %2289 = vmatpush.msra.mxu0 0.0
        %2290 = vmatpush.msra.mxu0 0.0
        %2291 = vmatpush.msra.mxu0 0.0
        %2292 = vmatpush.msra.mxu0 0.0
        %2293 = vmatpush.msra.mxu0 %v2277
        %2294 = vmatpush.msra.mxu0 %v2270
        %2295 = vmatmul.f32.gmra.mxu0 %v2275
        %v2296 = vpop.f32.mrf.mxu0
        %v2297 = vadd.f32 0.0, %v2296
        %2298 = vdwg.mxu0
        %2299 = vrot.lane.b32.xlu0 %v2051, 16
        %v2300 = vpop.permute.xlu0 %2299
        %2301 = vrot.lane.b32.xlu0 %v2052, 16
        %v2302 = vpop.permute.xlu0 %2301
        %v2305 = vsel %vm1373, %v2265, 0
        %v2307 = vsel %vm1412, %v2302, 0
        %2309 = vmatpush.msra.mxu0 0.0
        %2310 = vmatpush.msra.mxu0 0.0
        %2311 = vmatpush.msra.mxu0 0.0
        %2312 = vmatpush.msra.mxu0 0.0
        %2313 = vmatpush.msra.mxu0 0.0
        %2314 = vmatpush.msra.mxu0 0.0
        %2315 = vmatpush.msra.mxu0 0.0
        %2316 = vmatpush.msra.mxu0 0.0
        %2317 = vmatpush.msra.mxu0 0.0
        %2318 = vmatpush.msra.mxu0 0.0
        %2319 = vmatpush.msra.mxu0 0.0
        %2320 = vmatpush.msra.mxu0 0.0
        %2321 = vmatpush.msra.mxu0 0.0
        %2322 = vmatpush.msra.mxu0 0.0
        %2323 = vmatpush.msra.mxu0 %v2307
        %2324 = vmatpush.msra.mxu0 %v2300
        %2325 = vmatmul.f32.gmra.mxu0 %v2305
        %v2326 = vpop.f32.mrf.mxu0
        %v2327 = vadd.f32 0.0, %v2326
        %2328 = vdwg.mxu0
        %2331 = vrot.lane.b32.xlu0 %v2297, 48
        %v2332 = vpop.permute.xlu0 %2331
        %2333 = vrot.lane.b32.xlu0 %v2327, 48
        %v2334 = vpop.permute.xlu0 %2333
        %vm2337 = vcmask 523648
        %2338 = vst.msk [vmem:[#allocation3] sm:$0xff] %vm2337, %v2332
        %2339 = vst.msk [vmem:[#allocation3 + $0x8] sm:$0xff] %vm2337, %v2334
        %v2340 = vld [vmem:[#allocation3] sm:$0xff]
        %v2341 = vld [vmem:[#allocation3 + $0x8] sm:$0xff]
        %v2342 = vld [vmem:[#allocation8 + $0x7] sm:$0x1]
        %v2343 = vld [vmem:[%s8] sm:$0xff]
        %v2344 = vld [vmem:[%s8 + $0x8] sm:$0xff]
        %v2345 = vld [vmem:[%s8 + $0x10] sm:$0xff]
        %v2346 = vld [vmem:[%s8 + $0x18] sm:$0xff]
        %v2347 = vld [vmem:[%s8 + $0x20] sm:$0xff]
        %v2348 = vld [vmem:[%s8 + $0x28] sm:$0xff]
        %v2349 = vld [vmem:[%s8 + $0x30] sm:$0xff]
        %v2350 = vld [vmem:[%s8 + $0x38] sm:$0xff]
        %v2351 = vperm.slane %v2342, 0
        %v2353 = vsel %vm652, %v2340, 0
        %v2356 = vsel %vm652, %v2341, 0
        %2358 = vmatpush.msra.mxu0 0.0
        %2359 = vmatpush.msra.mxu0 0.0
        %2360 = vmatpush.msra.mxu0 0.0
        %2361 = vmatpush.msra.mxu0 0.0
        %2362 = vmatpush.msra.mxu0 0.0
        %2363 = vmatpush.msra.mxu0 0.0
        %2364 = vmatpush.msra.mxu0 0.0
        %2365 = vmatpush.msra.mxu0 0.0
        %2366 = vmatpush.msra.mxu0 %v2350
        %2367 = vmatpush.msra.mxu0 %v2349
        %2368 = vmatpush.msra.mxu0 %v2348
        %2369 = vmatpush.msra.mxu0 %v2347
        %2370 = vmatpush.msra.mxu0 %v2346
        %2371 = vmatpush.msra.mxu0 %v2345
        %2372 = vmatpush.msra.mxu0 %v2344
        %2373 = vmatpush.msra.mxu0 %v2343
        %2374 = vmatmul.f32.gmra.mxu0 %v2353
        %v2375 = vpop.f32.mrf.mxu0
        %v2376 = vadd.f32 %v2351, %v2375
        %2377 = vmatmul.f32.gmra.mxu0 %v2356
        %v2378 = vpop.f32.mrf.mxu0
        %v2379 = vadd.f32 %v2351, %v2378
        %2380 = vdwg.mxu0
        %v2381 = vadd.f32 %v2376, %v832
        %v2382 = vadd.f32 %v2379, %v833
        %v2383 = vld [vmem:[#allocation8 + $0x8] sm:$0x1]
        %v2384 = vld [vmem:[#allocation8 + $0x9] sm:$0x1]
        %v2385 = vsel %vm652, %v2381, 0.0
        %2386 = vadd.xlane.f32.xlu0 %v2385
        %v2387 = vpop.xlane.xlu0 %2386
        %v2388 = vsel %vm652, %v2382, 0.0
        %2389 = vadd.xlane.f32.xlu0 %v2388
        %v2390 = vpop.xlane.xlu0 %2389
        %v2391 = vmul.f32 %v2387, %v665
        %v2392 = vmul.f32 %v2390, %v665
        %v2393 = vsub.f32 %v2381, %v2391
        %v2394 = vsub.f32 %v2382, %v2392
        %v2395 = vmul.f32 %v2393, %v2393
        %v2396 = vmul.f32 %v2394, %v2394
        %v2397 = vsel %vm652, %v2395, 0.0
        %2398 = vadd.xlane.f32.xlu0 %v2397
        %v2399 = vpop.xlane.xlu0 %2398
        %v2400 = vsel %vm652, %v2396, 0.0
        %2401 = vadd.xlane.f32.xlu0 %v2400
        %v2402 = vpop.xlane.xlu0 %2401
        %v2403 = vmul.f32 %v2399, %v665
        %v2404 = vmul.f32 %v2402, %v665
        %v2405 = vadd.f32 %v2403, 1e-05
        %v2406 = vadd.f32 %v2404, 1e-05
        %v2407 = vrsqrt.pop %v2405
        %v2408 = vmul.f32 %v2407, %v2405
        %v2409 = vmul.f32 %v2408, %v2407
        %v2410 = vmul.f32 0.5, %v2409
        %v2411 = vsub.f32 1.5, %v2410
        %v2412 = vmul.f32 %v2407, %v2411
        %vm2413 = vweird.f32 %v2405
        %vm2414 = vweird.f32 %v2407
        %vm2415 = vmor %vm2413, %vm2414
        %v2416 = vsel %vm2415, %v2407, %v2412
        %v2417 = vrsqrt.pop %v2406
        %v2418 = vmul.f32 %v2417, %v2406
        %v2419 = vmul.f32 %v2418, %v2417
        %v2420 = vmul.f32 0.5, %v2419
        %v2421 = vsub.f32 1.5, %v2420
        %v2422 = vmul.f32 %v2417, %v2421
        %vm2423 = vweird.f32 %v2406
        %vm2424 = vweird.f32 %v2417
        %vm2425 = vmor %vm2423, %vm2424
        %v2426 = vsel %vm2425, %v2417, %v2422
        %v2427 = vmul.f32 %v2393, %v2416
        %v2428 = vmul.f32 %v2394, %v2426
        %v2429 = vperm.slane %v2383, 0
        %v2430 = vmul.f32 %v2427, %v2429
        %v2431 = vmul.f32 %v2428, %v2429
        %v2432 = vperm.slane %v2384, 0
        %v2433 = vadd.f32 %v2430, %v2432
        %v2434 = vadd.f32 %v2431, %v2432
        %v2435 = vld [vmem:[%s16] sm:$0x1]
        %v2436 = vld [vmem:[%s9] sm:$0xff]
        %v2437 = vld [vmem:[%s9 + $0x8] sm:$0xff]
        %v2438 = vld [vmem:[%s9 + $0x10] sm:$0xff]
        %v2439 = vld [vmem:[%s9 + $0x18] sm:$0xff]
        %v2440 = vld [vmem:[%s9 + $0x20] sm:$0xff]
        %v2441 = vld [vmem:[%s9 + $0x28] sm:$0xff]
        %v2442 = vld [vmem:[%s9 + $0x30] sm:$0xff]
        %v2443 = vld [vmem:[%s9 + $0x38] sm:$0xff]
        %v2445 = vperm.slane %v2435, 0
        %v2448 = vsel %vm652, %v2433, 0
        %v2451 = vsel %vm652, %v2434, 0
        %2453 = vmatpush.msra.mxu0 0.0
        %2454 = vmatpush.msra.mxu0 0.0
        %2455 = vmatpush.msra.mxu0 0.0
        %2456 = vmatpush.msra.mxu0 0.0
        %2457 = vmatpush.msra.mxu0 0.0
        %2458 = vmatpush.msra.mxu0 0.0
        %2459 = vmatpush.msra.mxu0 0.0
        %2460 = vmatpush.msra.mxu0 0.0
        %2461 = vmatpush.msra.mxu0 %v2443
        %2462 = vmatpush.msra.mxu0 %v2442
        %2463 = vmatpush.msra.mxu0 %v2441
        %2464 = vmatpush.msra.mxu0 %v2440
        %2465 = vmatpush.msra.mxu0 %v2439
        %2466 = vmatpush.msra.mxu0 %v2438
        %2467 = vmatpush.msra.mxu0 %v2437
        %2468 = vmatpush.msra.mxu0 %v2436
        %2469 = vmatmul.f32.gmra.mxu0 %v2448
        %v2470 = vpop.f32.mrf.mxu0
        %v2471 = vadd.f32 %v2445, %v2470
        %2472 = vmatmul.f32.gmra.mxu0 %v2451
        %v2473 = vpop.f32.mrf.mxu0
        %v2474 = vadd.f32 %v2445, %v2473
        %2475 = vdwg.mxu0
        %v2476 = vxor.u32 %v2471, 2147483648
        %v2477 = vxor.u32 %v2474, 2147483648
        %v2478 = vmul.f32 %v2476, 1.442695
        %v2479 = vpow.pop %v2478
        %v2480 = vmul.f32 %v2477, 1.442695
        %v2481 = vpow.pop %v2480
        %v2482 = vadd.f32 %v2479, 1.0
        %v2483 = vadd.f32 %v2481, 1.0
        %v2484 = vrcp.pop %v2482
        %v2485 = vmul.f32 %v2482, %v2484
        %v2486 = vsub.f32 1.0, %v2485
        %v2487 = vmul.f32 %v2484, %v2486
        %v2488 = vadd.f32 %v2484, %v2487
        %vm2489 = vweird.f32 %v2482
        %vm2490 = vweird.f32 %v2484
        %vm2491 = vmor %vm2489, %vm2490
        %v2492 = vsel %vm2491, %v2484, %v2488
        %v2493 = vand.u32 2147483647, %v2482
        %vm2494 = vcmp.eq.f32.partialorder %v2493, 8.507059e+37
        %v2495 = vand.u32 %v2482, 2147483648
        %v2496 = vor.u32 1.1754944e-38, %v2495
        %v2497 = vsel %vm2494, %v2496, %v2492
        %v2498 = vmul.f32 1.0, %v2497
        %v2499 = vrcp.pop %v2483
        %v2500 = vmul.f32 %v2483, %v2499
        %v2501 = vsub.f32 1.0, %v2500
        %v2502 = vmul.f32 %v2499, %v2501
        %v2503 = vadd.f32 %v2499, %v2502
        %vm2504 = vweird.f32 %v2483
        %vm2505 = vweird.f32 %v2499
        %vm2506 = vmor %vm2504, %vm2505
        %v2507 = vsel %vm2506, %v2499, %v2503
        %v2508 = vand.u32 2147483647, %v2483
        %vm2509 = vcmp.eq.f32.partialorder %v2508, 8.507059e+37
        %v2510 = vand.u32 %v2483, 2147483648
        %v2511 = vor.u32 1.1754944e-38, %v2510
        %v2512 = vsel %vm2509, %v2511, %v2507
        %v2513 = vmul.f32 1.0, %v2512
        %2516 = vrot.lane.b32.xlu0 %v2498, 64
        %v2517 = vpop.permute.xlu0 %2516
        %2518 = vrot.lane.b32.xlu0 %v2513, 64
        %v2519 = vpop.permute.xlu0 %2518
        %v2522 = vmul.f32 %v2471, %v2517
        %v2523 = vmul.f32 %v2474, %v2519
        %vm2524 = vcmask 517120
        %2525 = vst.msk [vmem:[#allocation4] sm:$0x3] %vm2524, 0.0
        %2526 = vst.msk [vmem:[#allocation4 + $0x10] sm:$0x3] %vm2524, 0.0
        %2527 = vst.msk [vmem:[#allocation4 + $0x2] sm:$0xff] %vm652, %v2522
        %2528 = vst.msk [vmem:[#allocation4 + $0x12] sm:$0xff] %vm652, %v2523
        %v2529 = vld [vmem:[#allocation4] sm:$0xff]
        %v2530 = vld [vmem:[#allocation4 + $0x10] sm:$0xff]
        %v2531 = vld [vmem:[%s10] sm:$0x1]
        %v2532 = vperm.slane %v2531, 0
        %v2533 = vmul.f32 %v2529, %v2532
        %v2534 = vmul.f32 %v2530, %v2532
        %v2535 = vadd.f32 %v2533, 0.0
        %v2536 = vadd.f32 %v2534, 0.0
        %v2537 = vld [vmem:[#allocation4 + $0x1] sm:$0xff]
        %v2538 = vld [vmem:[#allocation4 + $0x11] sm:$0xff]
        %v2539 = vld [vmem:[%s10 + $0x1] sm:$0x1]
        %v2540 = vperm.slane %v2539, 0
        %v2541 = vmul.f32 %v2537, %v2540
        %v2542 = vmul.f32 %v2538, %v2540
        %v2543 = vadd.f32 %v2535, %v2541
        %v2544 = vadd.f32 %v2536, %v2542
        %v2545 = vld [vmem:[#allocation4 + $0x2] sm:$0xff]
        %v2546 = vld [vmem:[#allocation4 + $0x12] sm:$0xff]
        %v2547 = vld [vmem:[%s10 + $0x2] sm:$0x1]
        %v2548 = vperm.slane %v2547, 0
        %v2549 = vmul.f32 %v2545, %v2548
        %v2550 = vmul.f32 %v2546, %v2548
        %v2551 = vadd.f32 %v2543, %v2549
        %v2552 = vadd.f32 %v2544, %v2550
        %v2553 = vld [vmem:[#allocation8 + $0xa] sm:$0x1]
        %v2554 = vperm.slane %v2553, 0
        %v2555 = vadd.f32 %v2551, %v2554
        %v2556 = vadd.f32 %v2552, %v2554
        %v2557 = vld [vmem:[#allocation8 + $0xb] sm:$0x1]
        %v2558 = vld [vmem:[#allocation8 + $0xc] sm:$0x1]
        %v2559 = vsel %vm652, %v2555, 0.0
        %2560 = vadd.xlane.f32.xlu0 %v2559
        %v2561 = vpop.xlane.xlu0 %2560
        %v2562 = vsel %vm652, %v2556, 0.0
        %2563 = vadd.xlane.f32.xlu0 %v2562
        %v2564 = vpop.xlane.xlu0 %2563
        %v2565 = vmul.f32 %v2561, %v665
        %v2566 = vmul.f32 %v2564, %v665
        %v2567 = vsub.f32 %v2555, %v2565
        %v2568 = vsub.f32 %v2556, %v2566
        %v2569 = vmul.f32 %v2567, %v2567
        %v2570 = vmul.f32 %v2568, %v2568
        %v2571 = vsel %vm652, %v2569, 0.0
        %2572 = vadd.xlane.f32.xlu0 %v2571
        %v2573 = vpop.xlane.xlu0 %2572
        %v2574 = vsel %vm652, %v2570, 0.0
        %2575 = vadd.xlane.f32.xlu0 %v2574
        %v2576 = vpop.xlane.xlu0 %2575
        %v2577 = vmul.f32 %v2573, %v665
        %v2578 = vmul.f32 %v2576, %v665
        %v2579 = vadd.f32 %v2577, 1e-05
        %v2580 = vadd.f32 %v2578, 1e-05
        %v2581 = vrsqrt.pop %v2579
        %v2582 = vmul.f32 %v2581, %v2579
        %v2583 = vmul.f32 %v2582, %v2581
        %v2584 = vmul.f32 0.5, %v2583
        %v2585 = vsub.f32 1.5, %v2584
        %v2586 = vmul.f32 %v2581, %v2585
        %vm2587 = vweird.f32 %v2579
        %vm2588 = vweird.f32 %v2581
        %vm2589 = vmor %vm2587, %vm2588
        %v2590 = vsel %vm2589, %v2581, %v2586
        %v2591 = vrsqrt.pop %v2580
        %v2592 = vmul.f32 %v2591, %v2580
        %v2593 = vmul.f32 %v2592, %v2591
        %v2594 = vmul.f32 0.5, %v2593
        %v2595 = vsub.f32 1.5, %v2594
        %v2596 = vmul.f32 %v2591, %v2595
        %vm2597 = vweird.f32 %v2580
        %vm2598 = vweird.f32 %v2591
        %vm2599 = vmor %vm2597, %vm2598
        %v2600 = vsel %vm2599, %v2591, %v2596
        %v2601 = vmul.f32 %v2567, %v2590
        %v2602 = vmul.f32 %v2568, %v2600
        %v2603 = vperm.slane %v2557, 0
        %v2604 = vmul.f32 %v2601, %v2603
        %v2605 = vmul.f32 %v2602, %v2603
        %v2606 = vperm.slane %v2558, 0
        %v2607 = vadd.f32 %v2604, %v2606
        %v2608 = vadd.f32 %v2605, %v2606
        %v2609 = vxor.u32 %v2607, 2147483648
        %v2610 = vxor.u32 %v2608, 2147483648
        %v2611 = vmul.f32 %v2609, 1.442695
        %v2612 = vpow.pop %v2611
        %v2613 = vmul.f32 %v2610, 1.442695
        %v2614 = vpow.pop %v2613
        %v2615 = vadd.f32 %v2612, 1.0
        %v2616 = vadd.f32 %v2614, 1.0
        %v2617 = vrcp.pop %v2615
        %v2618 = vmul.f32 %v2615, %v2617
        %v2619 = vsub.f32 1.0, %v2618
        %v2620 = vmul.f32 %v2617, %v2619
        %v2621 = vadd.f32 %v2617, %v2620
        %vm2622 = vweird.f32 %v2615
        %vm2623 = vweird.f32 %v2617
        %vm2624 = vmor %vm2622, %vm2623
        %v2625 = vsel %vm2624, %v2617, %v2621
        %v2626 = vand.u32 2147483647, %v2615
        %vm2627 = vcmp.eq.f32.partialorder %v2626, 8.507059e+37
        %v2628 = vand.u32 %v2615, 2147483648
        %v2629 = vor.u32 1.1754944e-38, %v2628
        %v2630 = vsel %vm2627, %v2629, %v2625
        %v2631 = vmul.f32 1.0, %v2630
        %v2632 = vrcp.pop %v2616
        %v2633 = vmul.f32 %v2616, %v2632
        %v2634 = vsub.f32 1.0, %v2633
        %v2635 = vmul.f32 %v2632, %v2634
        %v2636 = vadd.f32 %v2632, %v2635
        %vm2637 = vweird.f32 %v2616
        %vm2638 = vweird.f32 %v2632
        %vm2639 = vmor %vm2637, %vm2638
        %v2640 = vsel %vm2639, %v2632, %v2636
        %v2641 = vand.u32 2147483647, %v2616
        %vm2642 = vcmp.eq.f32.partialorder %v2641, 8.507059e+37
        %v2643 = vand.u32 %v2616, 2147483648
        %v2644 = vor.u32 1.1754944e-38, %v2643
        %v2645 = vsel %vm2642, %v2644, %v2640
        %v2646 = vmul.f32 1.0, %v2645
        %v2647 = vmul.f32 %v2607, %v2631
        %v2648 = vmul.f32 %v2608, %v2646
        %v2649 = vld [vmem:[#allocation8 + $0xd] sm:$0x1]
        %v2650 = vld [vmem:[%s11] sm:$0xff]
        %v2651 = vld [vmem:[%s11 + $0x8] sm:$0xff]
        %v2652 = vld [vmem:[%s11 + $0x10] sm:$0xff]
        %v2653 = vld [vmem:[%s11 + $0x18] sm:$0xff]
        %v2654 = vld [vmem:[%s11 + $0x20] sm:$0xff]
        %v2655 = vld [vmem:[%s11 + $0x28] sm:$0xff]
        %v2656 = vld [vmem:[%s11 + $0x30] sm:$0xff]
        %v2657 = vld [vmem:[%s11 + $0x38] sm:$0xff]
        %v2658 = vperm.slane %v2649, 0
        %v2660 = vsel %vm652, %v2647, 0
        %v2663 = vsel %vm652, %v2648, 0
        %2665 = vmatpush.msra.mxu0 0.0
        %2666 = vmatpush.msra.mxu0 0.0
        %2667 = vmatpush.msra.mxu0 0.0
        %2668 = vmatpush.msra.mxu0 0.0
        %2669 = vmatpush.msra.mxu0 0.0
        %2670 = vmatpush.msra.mxu0 0.0
        %2671 = vmatpush.msra.mxu0 0.0
        %2672 = vmatpush.msra.mxu0 0.0
        %2673 = vmatpush.msra.mxu0 %v2657
        %2674 = vmatpush.msra.mxu0 %v2656
        %2675 = vmatpush.msra.mxu0 %v2655
        %2676 = vmatpush.msra.mxu0 %v2654
        %2677 = vmatpush.msra.mxu0 %v2653
        %2678 = vmatpush.msra.mxu0 %v2652
        %2679 = vmatpush.msra.mxu0 %v2651
        %2680 = vmatpush.msra.mxu0 %v2650
        %2681 = vmatmul.f32.gmra.mxu0 %v2660
        %v2682 = vpop.f32.mrf.mxu0
        %v2683 = vadd.f32 %v2658, %v2682
        %2684 = vmatmul.f32.gmra.mxu0 %v2663
        %v2685 = vpop.f32.mrf.mxu0
        %v2686 = vadd.f32 %v2658, %v2685
        %2687 = vdwg.mxu0
        %v2688 = vadd.f32 %v2381, %v2683
        %v2689 = vadd.f32 %v2382, %v2686
        %v2690 = vld [vmem:[#allocation8 + $0xe] sm:$0x1]
        %v2691 = vld [vmem:[#allocation8 + $0xf] sm:$0x1]
        %v2692 = vsel %vm652, %v2688, 0.0
        %2693 = vadd.xlane.f32.xlu0 %v2692
        %v2694 = vpop.xlane.xlu0 %2693
        %v2695 = vsel %vm652, %v2689, 0.0
        %2696 = vadd.xlane.f32.xlu0 %v2695
        %v2697 = vpop.xlane.xlu0 %2696
        %v2698 = vmul.f32 %v2694, %v665
        %v2699 = vmul.f32 %v2697, %v665
        %v2700 = vsub.f32 %v2688, %v2698
        %v2701 = vsub.f32 %v2689, %v2699
        %v2702 = vmul.f32 %v2700, %v2700
        %v2703 = vmul.f32 %v2701, %v2701
        %v2704 = vsel %vm652, %v2702, 0.0
        %2705 = vadd.xlane.f32.xlu0 %v2704
        %v2706 = vpop.xlane.xlu0 %2705
        %v2707 = vsel %vm652, %v2703, 0.0
        %2708 = vadd.xlane.f32.xlu0 %v2707
        %v2709 = vpop.xlane.xlu0 %2708
        %v2710 = vmul.f32 %v2706, %v665
        %v2711 = vmul.f32 %v2709, %v665
        %v2712 = vadd.f32 %v2710, 1e-05
        %v2713 = vadd.f32 %v2711, 1e-05
        %v2714 = vrsqrt.pop %v2712
        %v2715 = vmul.f32 %v2714, %v2712
        %v2716 = vmul.f32 %v2715, %v2714
        %v2717 = vmul.f32 0.5, %v2716
        %v2718 = vsub.f32 1.5, %v2717
        %v2719 = vmul.f32 %v2714, %v2718
        %vm2720 = vweird.f32 %v2712
        %vm2721 = vweird.f32 %v2714
        %vm2722 = vmor %vm2720, %vm2721
        %v2723 = vsel %vm2722, %v2714, %v2719
        %v2724 = vrsqrt.pop %v2713
        %v2725 = vmul.f32 %v2724, %v2713
        %v2726 = vmul.f32 %v2725, %v2724
        %v2727 = vmul.f32 0.5, %v2726
        %v2728 = vsub.f32 1.5, %v2727
        %v2729 = vmul.f32 %v2724, %v2728
        %vm2730 = vweird.f32 %v2713
        %vm2731 = vweird.f32 %v2724
        %vm2732 = vmor %vm2730, %vm2731
        %v2733 = vsel %vm2732, %v2724, %v2729
        %v2734 = vmul.f32 %v2700, %v2723
        %v2735 = vmul.f32 %v2701, %v2733
        %v2736 = vperm.slane %v2690, 0
        %v2737 = vmul.f32 %v2734, %v2736
        %v2738 = vmul.f32 %v2735, %v2736
        %v2739 = vperm.slane %v2691, 0
        %v2740 = vadd.f32 %v2737, %v2739
        %v2741 = vadd.f32 %v2738, %v2739
        %v2742 = vld [vmem:[%s15 + $0x1] sm:$0x1]
        %v2743 = vld [vmem:[#allocation5] sm:$0xff]
        %v2744 = vld [vmem:[#allocation5 + $0x8] sm:$0xff]
        %v2745 = vld [vmem:[#allocation5 + $0x10] sm:$0xff]
        %v2746 = vld [vmem:[#allocation5 + $0x18] sm:$0xff]
        %v2747 = vld [vmem:[#allocation5 + $0x20] sm:$0xff]
        %v2748 = vld [vmem:[#allocation5 + $0x28] sm:$0xff]
        %v2749 = vld [vmem:[#allocation5 + $0x30] sm:$0xff]
        %v2750 = vld [vmem:[#allocation5 + $0x38] sm:$0xff]
        %v2751 = vperm.slane %v2742, 0
        %v2753 = vsel %vm652, %v2740, 0
        %v2756 = vsel %vm652, %v2741, 0
        %2758 = vmatpush.msra.mxu0 0.0
        %2759 = vmatpush.msra.mxu0 0.0
        %2760 = vmatpush.msra.mxu0 0.0
        %2761 = vmatpush.msra.mxu0 0.0
        %2762 = vmatpush.msra.mxu0 0.0
        %2763 = vmatpush.msra.mxu0 0.0
        %2764 = vmatpush.msra.mxu0 0.0
        %2765 = vmatpush.msra.mxu0 0.0
        %2766 = vmatpush.msra.mxu0 %v2750
        %2767 = vmatpush.msra.mxu0 %v2749
        %2768 = vmatpush.msra.mxu0 %v2748
        %2769 = vmatpush.msra.mxu0 %v2747
        %2770 = vmatpush.msra.mxu0 %v2746
        %2771 = vmatpush.msra.mxu0 %v2745
        %2772 = vmatpush.msra.mxu0 %v2744
        %2773 = vmatpush.msra.mxu0 %v2743
        %2774 = vmatmul.f32.gmra.mxu0 %v2753
        %v2775 = vpop.f32.mrf.mxu0
        %v2776 = vadd.f32 %v2751, %v2775
        %2777 = vmatmul.f32.gmra.mxu0 %v2756
        %v2778 = vpop.f32.mrf.mxu0
        %v2779 = vadd.f32 %v2751, %v2778
        %2780 = vdwg.mxu0
        %v2781 = vxor.u32 %v2776, 2147483648
        %v2782 = vxor.u32 %v2779, 2147483648
        %v2783 = vmul.f32 %v2781, 1.442695
        %v2784 = vpow.pop %v2783
        %v2785 = vmul.f32 %v2782, 1.442695
        %v2786 = vpow.pop %v2785
        %v2787 = vadd.f32 %v2784, 1.0
        %v2788 = vadd.f32 %v2786, 1.0
        %v2789 = vrcp.pop %v2787
        %v2790 = vmul.f32 %v2787, %v2789
        %v2791 = vsub.f32 1.0, %v2790
        %v2792 = vmul.f32 %v2789, %v2791
        %v2793 = vadd.f32 %v2789, %v2792
        %vm2794 = vweird.f32 %v2787
        %vm2795 = vweird.f32 %v2789
        %vm2796 = vmor %vm2794, %vm2795
        %v2797 = vsel %vm2796, %v2789, %v2793
        %v2798 = vand.u32 2147483647, %v2787
        %vm2799 = vcmp.eq.f32.partialorder %v2798, 8.507059e+37
        %v2800 = vand.u32 %v2787, 2147483648
        %v2801 = vor.u32 1.1754944e-38, %v2800
        %v2802 = vsel %vm2799, %v2801, %v2797
        %v2803 = vmul.f32 1.0, %v2802
        %v2804 = vrcp.pop %v2788
        %v2805 = vmul.f32 %v2788, %v2804
        %v2806 = vsub.f32 1.0, %v2805
        %v2807 = vmul.f32 %v2804, %v2806
        %v2808 = vadd.f32 %v2804, %v2807
        %vm2809 = vweird.f32 %v2788
        %vm2810 = vweird.f32 %v2804
        %vm2811 = vmor %vm2809, %vm2810
        %v2812 = vsel %vm2811, %v2804, %v2808
        %v2813 = vand.u32 2147483647, %v2788
        %vm2814 = vcmp.eq.f32.partialorder %v2813, 8.507059e+37
        %v2815 = vand.u32 %v2788, 2147483648
        %v2816 = vor.u32 1.1754944e-38, %v2815
        %v2817 = vsel %vm2814, %v2816, %v2812
        %v2818 = vmul.f32 1.0, %v2817
        %v2819 = vmul.f32 %v2776, %v2803
        %v2820 = vmul.f32 %v2779, %v2818
        %v2821 = vld [vmem:[#allocation8 + $0x10] sm:$0x1]
        %v2822 = vld [vmem:[%s13] sm:$0xff]
        %v2823 = vld [vmem:[%s13 + $0x8] sm:$0xff]
        %v2824 = vld [vmem:[%s13 + $0x10] sm:$0xff]
        %v2825 = vld [vmem:[%s13 + $0x18] sm:$0xff]
        %v2826 = vld [vmem:[%s13 + $0x20] sm:$0xff]
        %v2827 = vld [vmem:[%s13 + $0x28] sm:$0xff]
        %v2828 = vld [vmem:[%s13 + $0x30] sm:$0xff]
        %v2829 = vld [vmem:[%s13 + $0x38] sm:$0xff]
        %v2830 = vld [vmem:[%s13 + $0x40] sm:$0xff]
        %v2831 = vld [vmem:[%s13 + $0x48] sm:$0xff]
        %v2832 = vld [vmem:[%s13 + $0x50] sm:$0xff]
        %v2833 = vld [vmem:[%s13 + $0x58] sm:$0xff]
        %v2834 = vld [vmem:[%s13 + $0x60] sm:$0xff]
        %v2835 = vld [vmem:[%s13 + $0x68] sm:$0xff]
        %v2836 = vld [vmem:[%s13 + $0x70] sm:$0xff]
        %v2837 = vld [vmem:[%s13 + $0x78] sm:$0xff]
        %v2838 = vperm.slane %v2821, 0
        %2839 = vmatpush.msra.mxu0 %v2837
        %2840 = vmatpush.msra.mxu0 %v2836
        %2841 = vmatpush.msra.mxu0 %v2835
        %2842 = vmatpush.msra.mxu0 %v2834
        %2843 = vmatpush.msra.mxu0 %v2833
        %2844 = vmatpush.msra.mxu0 %v2832
        %2845 = vmatpush.msra.mxu0 %v2831
        %2846 = vmatpush.msra.mxu0 %v2830
        %2847 = vmatpush.msra.mxu0 %v2829
        %2848 = vmatpush.msra.mxu0 %v2828
        %2849 = vmatpush.msra.mxu0 %v2827
        %2850 = vmatpush.msra.mxu0 %v2826
        %2851 = vmatpush.msra.mxu0 %v2825
        %2852 = vmatpush.msra.mxu0 %v2824
        %2853 = vmatpush.msra.mxu0 %v2823
        %2854 = vmatpush.msra.mxu0 %v2822
        %2855 = vmatmul.f32.gmra.mxu0 %v2819
        %v2856 = vpop.f32.mrf.mxu0
        %v2857 = vadd.f32 %v2838, %v2856
        %2858 = vmatmul.f32.gmra.mxu0 %v2820
        %v2859 = vpop.f32.mrf.mxu0
        %v2860 = vadd.f32 %v2838, %v2859
        %2861 = vdwg.mxu0
        %v2862 = vmul.f32 %v2857, 0.5
        %v2863 = vmul.f32 %v2860, 0.5
        %v2864 = vadd.f32 %v2688, %v2862
        %v2865 = vadd.f32 %v2689, %v2863
        %v2866 = vld [vmem:[#allocation8 + $0x11] sm:$0x1]
        %v2867 = vld [vmem:[#allocation8 + $0x12] sm:$0x1]
        %v2868 = vsel %vm652, %v2864, 0.0
        %2869 = vadd.xlane.f32.xlu0 %v2868
        %v2870 = vpop.xlane.xlu0 %2869
        %v2871 = vsel %vm652, %v2865, 0.0
        %2872 = vadd.xlane.f32.xlu0 %v2871
        %v2873 = vpop.xlane.xlu0 %2872
        %v2874 = vmul.f32 %v2870, %v665
        %v2875 = vmul.f32 %v2873, %v665
        %v2876 = vsub.f32 %v2864, %v2874
        %v2877 = vsub.f32 %v2865, %v2875
        %v2878 = vmul.f32 %v2876, %v2876
        %v2879 = vmul.f32 %v2877, %v2877
        %v2880 = vsel %vm652, %v2878, 0.0
        %2881 = vadd.xlane.f32.xlu0 %v2880
        %v2882 = vpop.xlane.xlu0 %2881
        %v2883 = vsel %vm652, %v2879, 0.0
        %2884 = vadd.xlane.f32.xlu0 %v2883
        %v2885 = vpop.xlane.xlu0 %2884
        %v2886 = vmul.f32 %v2882, %v665
        %v2887 = vmul.f32 %v2885, %v665
        %v2888 = vadd.f32 %v2886, 1e-05
        %v2889 = vadd.f32 %v2887, 1e-05
        %v2890 = vrsqrt.pop %v2888
        %v2891 = vmul.f32 %v2890, %v2888
        %v2892 = vmul.f32 %v2891, %v2890
        %v2893 = vmul.f32 0.5, %v2892
        %v2894 = vsub.f32 1.5, %v2893
        %v2895 = vmul.f32 %v2890, %v2894
        %vm2896 = vweird.f32 %v2888
        %vm2897 = vweird.f32 %v2890
        %vm2898 = vmor %vm2896, %vm2897
        %v2899 = vsel %vm2898, %v2890, %v2895
        %v2900 = vrsqrt.pop %v2889
        %v2901 = vmul.f32 %v2900, %v2889
        %v2902 = vmul.f32 %v2901, %v2900
        %v2903 = vmul.f32 0.5, %v2902
        %v2904 = vsub.f32 1.5, %v2903
        %v2905 = vmul.f32 %v2900, %v2904
        %vm2906 = vweird.f32 %v2889
        %vm2907 = vweird.f32 %v2900
        %vm2908 = vmor %vm2906, %vm2907
        %v2909 = vsel %vm2908, %v2900, %v2905
        %v2910 = vmul.f32 %v2876, %v2899
        %v2911 = vmul.f32 %v2877, %v2909
        %v2912 = vperm.slane %v2866, 0
        %v2913 = vmul.f32 %v2910, %v2912
        %v2914 = vmul.f32 %v2911, %v2912
        %v2915 = vperm.slane %v2867, 0
        %v2916 = vadd.f32 %v2913, %v2915
        %v2917 = vadd.f32 %v2914, %v2915
        %2918 = vst.msk [vmem:[%s625] sm:$0xff] %vm652, %v2916
        %2919 = vst.msk [vmem:[%s625 + $0x8] sm:$0xff] %vm652, %v2917
        %s2920 = sand.u32 %s413, 1
        %s2921 = scalar_lea.sflag [#allocation7], %s2920
        %s2922 = sand.u32 %s413, 1
        %s2923 = smul.addr %s2922, 16
        %s2924 = scalar_lea.vmem [#allocation10], %s2923
        %s2925 = sand.u32 %s439, 1
        %s2926 = scalar_lea.sflag [#allocation12], %s2925
        %s2927 = sand.u32 %s439, 1
        %s2928 = smul.addr %s2927, 64
        %s2929 = scalar_lea.vmem [#allocation11], %s2928
        // Predicated region
        $region97: #{tpu_custom_call.1} parent=87 // pred_check
          %p2930 = pneg %p423
        $region98: #{tpu_custom_call.1} parent=87 // pred_check_branch
          %2932 = sbr.rel (%p2930) target = $region100
        $region99: #{tpu_custom_call.1} parent=87 // pred_region
          %s2933 = smul.u32 2, %s38
          %2935 = vsyncadd %s2921, 0
          %s2936 = smul.addr %s2933, 8
          %s2937 = scalar_lea.hbm %s17, %s2936
          %s2938 = sshll.u32 %s2924, 4
          %s2939 = int_to_ptr.vmem [resolvable:$true] %s2938
          %s2940 = sshll.u32 %s2937, 4
          %s2941 = int_to_ptr.hbm [resolvable:$true] %s2940
          %2946 = dma.vmem_to_hbm [thread:$0]  %s2939, 256, %s2941, %s2921, 128, 128, 8
        $region100: #{tpu_custom_call.1} parent=87 // pred_fallthru
          _
        // Predicated region
        $region101: #{tpu_custom_call.1} parent=87 // pred_check
          %p2947 = pneg %p449
        $region102: #{tpu_custom_call.1} parent=87 // pred_check_branch
          %2949 = sbr.rel (%p2947) target = $region104
        $region103: #{tpu_custom_call.1} parent=87 // pred_region
          %s2950 = smul.u32 2, %s38
          %2952 = vsyncadd %s2926, 0
          %s2953 = smul.addr %s2950, 4
          %s2954 = smul.addr %s2953, 8
          %s2955 = scalar_lea.hbm %s18, %s2954
          %s2956 = sshll.u32 %s2929, 4
          %s2957 = int_to_ptr.vmem [resolvable:$true] %s2956
          %s2958 = sshll.u32 %s2955, 4
          %s2959 = int_to_ptr.hbm [resolvable:$true] %s2958
          %2964 = dma.vmem_to_hbm [thread:$0]  %s2957, 1024, %s2959, %s2926, 128, 128, 8
        $region104: #{tpu_custom_call.1} parent=87 // pred_fallthru
          _
      $region88: #{tpu_custom_call.1} parent=5 // pred_fallthru
        _
      %p2965 = scmp.le.s32.totalorder 2, %s33
      // Predicated region
      $region105: #{tpu_custom_call.1} parent=5 // pred_check
        %p2966 = pneg %p2965
      $region106: #{tpu_custom_call.1} parent=5 // pred_check_branch
        %2968 = sbr.rel (%p2966) target = $region108
      $region107: #{tpu_custom_call.1} parent=5 // pred_region
        %s2969 = ssub.s32 %s33, 2
        // Predicated region
        $region109: #{tpu_custom_call.1} parent=107 // pred_check
          %p2970 = pneg %p429
        $region110: #{tpu_custom_call.1} parent=107 // pred_check_branch
          %2972 = sbr.rel (%p2970) target = $region112
        $region111: #{tpu_custom_call.1} parent=107 // pred_region
          %s2973 = sand.u32 %s414, 1
          %s2974 = scalar_lea.sflag [#allocation7], %s2973
          %s2975 = sand.u32 %s414, 1
          %s2976 = smul.addr %s2975, 16
          %s2977 = scalar_lea.vmem [#allocation10], %s2976
          %2979 = dma.done %s2974, 256
        $region112: #{tpu_custom_call.1} parent=107 // pred_fallthru
          _
        // Predicated region
        $region113: #{tpu_custom_call.1} parent=107 // pred_check
          %p2980 = pneg %p455
        $region114: #{tpu_custom_call.1} parent=107 // pred_check_branch
          %2982 = sbr.rel (%p2980) target = $region116
        $region115: #{tpu_custom_call.1} parent=107 // pred_region
          %s2983 = sand.u32 %s440, 1
          %s2984 = scalar_lea.sflag [#allocation12], %s2983
          %s2985 = sand.u32 %s440, 1
          %s2986 = smul.addr %s2985, 64
          %s2987 = scalar_lea.vmem [#allocation11], %s2986
          %2989 = dma.done %s2984, 1024
        $region116: #{tpu_custom_call.1} parent=107 // pred_fallthru
          _
      $region108: #{tpu_custom_call.1} parent=5 // pred_fallthru
        _
    $region6: #{tpu_custom_call.1} parent=1 // loop_footer
      %s37 = sadd.s32 1, %s33
    $region7: #{tpu_custom_call.1} parent=1 // loop_footer_branch
      %32 = sbr.rel target = $region3
    $region8: #{tpu_custom_call.1} parent=1 // loop_exit
      _
    %2990 = vsyncpa [#allocation6], 1
    %s2991 = scalar_lea.sflag [#allocation6], 1
    %2992 = vsyncpa %s2991, 1
    %2993 = vsyncpa [#allocation9], 1
    %2994 = vsyncpa [#allocation7], 1
    %s2995 = scalar_lea.sflag [#allocation7], 1
    %2996 = vsyncpa %s2995, 1
    %2997 = vsyncpa [#allocation12], 1
    %s2998 = scalar_lea.sflag [#allocation12], 1
    %2999 = vsyncpa %s2998, 1

</llo_original>
